<compile_context>
chip_gen: v7x
topology: tpu7x:2x2x1
jax: 0.10.0
libtpu: 0.0.40
codegen_flags: <defaults>
</compile_context>

<pallas_src>
import functools

import jax
import jax.numpy as jnp
from jax.experimental import pallas as pl
from jax.experimental.pallas import tpu as pltpu


# ------------------------------ Pallas kernel ------------------------------ #
def _fused_forward_kernel(p0_ref, w1_ref, w2_ref, b2_ref, wc_ref, bc_ref,
                          mask_ref, o_ref, a_buf, b_buf, *, hp, guard, n_convs):
    """One grid step = one slayer conv; step 0 additionally runs conv1 + conv2.

    Activations stay resident in the two VMEM ping-pong scratch buffers; rows =
    (n, h, w) over the zero-padded hp x hp grid plus `guard` zero rows on both ends.
    """
    step = pl.program_id(0)
    R = o_ref.shape[0]            # N * hp * hp   (288 for the test shapes)
    C = o_ref.shape[1]            # 32
    G = guard
    last = n_convs - 1

    mask = mask_ref[...]          # (R, 1): 1.0 inside the 10x10 region, 0.0 on the ring

    # -- step 0: zero resident buffers, run first_conv + second_conv ----------
    @pl.when(step == 0)
    def _():
        # Zero once: the padding ring / guard rows must stay 0 for the 3x3 convs.
        a_buf[...] = jnp.zeros_like(a_buf)
        b_buf[...] = jnp.zeros_like(b_buf)

        # first_conv: 3x3 s2 p1 (no bias) + BN(eval, folded into w1) + ReLU.
        # p0 already holds the im2col patches placed at their padded-flat rows.
        y1 = jnp.dot(p0_ref[...], w1_ref[...], preferred_element_type=jnp.float32)
        a_buf[G:G + R, :] = jnp.maximum(y1, 0.0)

        # second_conv: 1x1 s1 p1 + bias + ReLU; mask keeps the zero ring zero.
        y2 = jnp.dot(a_buf[G:G + R, :], w2_ref[...],
                     preferred_element_type=jnp.float32)
        y2 = jnp.maximum(y2 + b2_ref[...], 0.0)
        b_buf[G:G + R, :] = y2 * mask

    # -- slayer conv for this step: single K=9*C im2col matmul ----------------
    def conv3x3(src_ref):
        # 9 row-shifted views (zero ring = padding), lane-concatenated to (R, 9*C).
        cols = [src_ref[G + di * hp + dj: G + di * hp + dj + R, :]
                for di in (-1, 0, 1) for dj in (-1, 0, 1)]
        lhs = jnp.concatenate(cols, axis=-1)
        return jnp.dot(lhs, wc_ref[0],
                       preferred_element_type=jnp.float32) + bc_ref[0]

    # Ping-pong by step parity: even steps read B / write A, odd steps read A / write B.
    @pl.when((step % 2 == 0) & (step != last))
    def _():
        a_buf[G:G + R, :] = conv3x3(b_buf) * mask

    @pl.when((step % 2 == 1) & (step != last))
    def _():
        b_buf[G:G + R, :] = conv3x3(a_buf) * mask

    @pl.when(step == last)
    def _():
        # No mask on the final conv: the wrapper slices the 10x10 interior.
        o_ref[...] = conv3x3(b_buf if last % 2 == 0 else a_buf)


# --------------------------------- wrapper --------------------------------- #
def searchable_model_forward(params, x_nchw):
    x = jnp.transpose(x_nchw, (0, 2, 3, 1)).astype(jnp.float32)   # NCHW -> NHWC
    N, H, W, Cin = x.shape
    assert H == W, "square inputs only"
    C = 32
    OH = (H + 2 - 3) // 2 + 1       # first conv output size  (k3 s2 p1)
    S2 = OH + 2                     # second conv output size (k1 s1 p1)
    HP = S2 + 2                     # zero-padded grid used by the 3x3 convs
    R = N * HP * HP
    G = ((HP + 1 + 7) // 8) * 8     # guard rows (>= max row shift, 8-aligned)
    assert R % 8 == 0

    # conv1 im2col patches (on the raw input), placed in padded-flat row order.
    K = 9 * Cin
    Kp = ((K + 7) // 8) * 8
    xp = jnp.pad(x, ((0, 0), (1, 1), (1, 1), (0, 0)))
    cols = [xp[:, i:i + 2 * OH:2, j:j + 2 * OH:2, :]
            for i in range(3) for j in range(3)]
    p0 = jnp.concatenate(cols, axis=-1)                       # (N, OH, OH, K)
    p0 = jnp.pad(p0, ((0, 0), (2, HP - OH - 2), (2, HP - OH - 2), (0, Kp - K)))
    p0 = p0.reshape(R, Kp)

    # per-row mask (R, 1) selecting the 10x10 output region inside the padded grid.
    idx = jnp.arange(HP)
    valid = (idx >= 1) & (idx <= S2)
    m2d = (valid[:, None] & valid[None, :]).astype(jnp.float32)
    mask = jnp.broadcast_to(m2d[None], (N, HP, HP)).reshape(R, 1)

    # weights: BN (eval stats mean=0 / var=1 / gamma=1 / beta=0) folded into conv1.
    eps = 1e-5
    w1 = params["first_w"].reshape(K, C) * (1.0 / jnp.sqrt(1.0 + eps))
    w1 = jnp.pad(w1, ((0, Kp - K), (0, 0)))
    w2 = params["second_w"].reshape(C, C)
    b2 = params["second_b"].reshape(1, C)
    # slayer weights reshaped to (n_convs, 9*C, C): tap (kh,kw) row-major matches the
    # in-kernel lane-concat order (di, dj) row-major over (-1,0,1)x(-1,0,1).
    ws = jnp.stack([params[f"s{l}_op{o}_w"].reshape(9 * C, C)
                    for l in range(3) for o in range(3)])     # (9, 288, 32)
    bs = jnp.stack([params[f"s{l}_op{o}_b"]
                    for l in range(3) for o in range(3)]).reshape(9, 1, C)

    n_convs = 9
    kernel = functools.partial(_fused_forward_kernel, hp=HP, guard=G,
                               n_convs=n_convs)
    out_flat = pl.pallas_call(
        kernel,
        out_shape=jax.ShapeDtypeStruct((R, C), jnp.float32),
        grid_spec=pltpu.PrefetchScalarGridSpec(
            num_scalar_prefetch=0,
            grid=(n_convs,),
            in_specs=[
                pl.BlockSpec((R, Kp), lambda i: (0, 0)),              # conv1 patches
                pl.BlockSpec((Kp, C), lambda i: (0, 0)),              # conv1 weight (BN folded)
                pl.BlockSpec((C, C), lambda i: (0, 0)),               # conv2 weight
                pl.BlockSpec((1, C), lambda i: (0, 0)),               # conv2 bias
                pl.BlockSpec((1, 9 * C, C), lambda i: (i, 0, 0)),     # streamed slayer weight
                pl.BlockSpec((1, 1, C), lambda i: (i, 0, 0)),         # streamed slayer bias
                pl.BlockSpec((R, 1), lambda i: (0, 0)),               # interior row mask
            ],
            out_specs=pl.BlockSpec((R, C), lambda i: (0, 0)),
            scratch_shapes=[
                pltpu.VMEM((R + 2 * G, C), jnp.float32),              # activation ping
                pltpu.VMEM((R + 2 * G, C), jnp.float32),              # activation pong
            ],
        ),
        compiler_params=pltpu.CompilerParams(
            dimension_semantics=("arbitrary",)),
    )(p0, w1, w2, b2, ws, bs, mask)

    out = out_flat.reshape(N, HP, HP, C)[:, 1:S2 + 1, 1:S2 + 1, :]
    return jnp.transpose(out, (0, 3, 1, 2))                   # NHWC -> NCHW


# ------------------------------ parameters --------------------------------- #
def init_params(key):
    def conv_w(k, kh, kw, cin, cout):
        fan_in = kh * kw * cin
        return jax.random.normal(k, (kh, kw, cin, cout), jnp.float32) / jnp.sqrt(fan_in)

    keys = list(jax.random.split(key, 32))
    ki = iter(keys)
    p = {}
    p["first_w"] = conv_w(next(ki), 3, 3, 3, 32)               # bias=False (has norm)
    p["second_w"] = conv_w(next(ki), 1, 1, 32, 32)
    p["second_b"] = jax.random.normal(next(ki), (32,), jnp.float32) * 0.01
    for layer in range(3):
        for op in range(3):
            p[f"s{layer}_op{op}_w"] = conv_w(next(ki), 3, 3, 32, 32)
            p[f"s{layer}_op{op}_b"] = jax.random.normal(next(ki), (32,), jnp.float32) * 0.01
    return p


# --------------------------- pure-JAX reference ----------------------------- #
def _ref_conv(x, w, b, stride, pad, bn, relu, eps=1e-5):
    y = jax.lax.conv_general_dilated(
        x, w, (stride, stride), ((pad, pad), (pad, pad)),
        dimension_numbers=("NHWC", "HWIO", "NHWC"))
    if bn:
        y = y / jnp.sqrt(1.0 + eps)
        if b is not None:
            y = y + b / jnp.sqrt(1.0 + eps)
    elif b is not None:
        y = y + b
    if relu:
        y = jnp.maximum(y, 0.0)
    return y


def reference_forward(params, x_nchw):
    x = jnp.transpose(x_nchw, (0, 2, 3, 1))
    x = _ref_conv(x, params["first_w"], None, 2, 1, True, True)
    x = _ref_conv(x, params["second_w"], params["second_b"], 1, 1, False, True)
    for layer in range(3):
        for op in range(3):
            x = _ref_conv(x, params[f"s{layer}_op{op}_w"],
                          params[f"s{layer}_op{op}_b"], 1, 1, False, False)
    return jnp.transpose(x, (0, 3, 1, 2))


if __name__ == "__main__":
    key = jax.random.PRNGKey(0)
    kp, kx = jax.random.split(key)
    params = init_params(kp)
    x = jax.random.normal(kx, (2, 3, 16, 16), jnp.float32)     # NCHW input

    fwd = jax.jit(searchable_model_forward)
    out = jax.block_until_ready(fwd(params, x))

    assert out.shape == (2, 32, 10, 10), out.shape
    ref = reference_forward(params, x)
    err = float(jnp.max(jnp.abs(out - ref)))
    assert jnp.allclose(out, ref, rtol=1e-3, atol=1e-3), err

    print("KERNEL_OK")
</pallas_src>

<mosaic_0001>
module attributes {stable_mosaic.version = 11 : i64} {
  func.func @_fused_forward_kernel(%arg0: i32, %arg1: memref<288x32xf32, #tpu.memory_space<vmem>>, %arg2: memref<32x32xf32, #tpu.memory_space<vmem>>, %arg3: memref<32x32xf32, #tpu.memory_space<vmem>>, %arg4: memref<1x32xf32, #tpu.memory_space<vmem>>, %arg5: memref<1x288x32xf32, #tpu.memory_space<vmem>>, %arg6: memref<1x1x32xf32, #tpu.memory_space<vmem>>, %arg7: memref<288x1xf32, #tpu.memory_space<vmem>>, %arg8: memref<288x32xf32, #tpu.memory_space<vmem>>, %arg9: memref<320x32xf32, #tpu.memory_space<vmem>>, %arg10: memref<320x32xf32, #tpu.memory_space<vmem>>) attributes {dimension_semantics = [#tpu.dimension_semantics<arbitrary>], iteration_bounds = array<i64: 9>, scalar_prefetch = 0 : i64, scratch_operands = 2 : i64, tpu.core_type = #tpu.core_type<tc>, window_params = [{pipeline_mode = #tpu.pipeline_mode<synchronous>, transform_indices = @transform_0, window_bounds = array<i64: 288, 32>}, {pipeline_mode = #tpu.pipeline_mode<synchronous>, transform_indices = @transform_1, window_bounds = array<i64: 32, 32>}, {pipeline_mode = #tpu.pipeline_mode<synchronous>, transform_indices = @transform_2, window_bounds = array<i64: 32, 32>}, {pipeline_mode = #tpu.pipeline_mode<synchronous>, transform_indices = @transform_3, window_bounds = array<i64: 1, 32>}, {transform_indices = @transform_4, window_bounds = array<i64: 1, 288, 32>}, {transform_indices = @transform_5, window_bounds = array<i64: 1, 1, 32>}, {pipeline_mode = #tpu.pipeline_mode<synchronous>, transform_indices = @transform_6, window_bounds = array<i64: 288, 1>}, {pipeline_mode = #tpu.pipeline_mode<synchronous>, transform_indices = @transform_7, window_bounds = array<i64: 288, 32>}]} {
    %c0 = arith.constant 0 : index
    %c0_0 = arith.constant 0 : index
    %0 = vector.load %arg7[%c0, %c0_0] : memref<288x1xf32, #tpu.memory_space<vmem>>, vector<288x1xf32>
    %c0_i32 = arith.constant 0 : i32
    %1 = arith.cmpi eq, %arg0, %c0_i32 : i32
    %2 = arith.extui %1 : i1 to i32
    %c0_i32_1 = arith.constant 0 : i32
    %3 = arith.cmpi ne, %2, %c0_i32_1 : i32
    scf.if %3 {
      %cst = arith.constant 0.000000e+00 : f32
      %37 = vector.broadcast %cst : f32 to vector<320x32xf32>
      %c0_19 = arith.constant 0 : index
      %c0_20 = arith.constant 0 : index
      %38 = vector.load %arg9[%c0_19, %c0_20] : memref<320x32xf32, #tpu.memory_space<vmem>>, vector<320x32xf32>
      tpu.vector_store %arg9[%c0_19, %c0_20], %37 {strides = array<i32>} : memref<320x32xf32, #tpu.memory_space<vmem>>, vector<320x32xf32>,
      %cst_21 = arith.constant 0.000000e+00 : f32
      %39 = vector.broadcast %cst_21 : f32 to vector<320x32xf32>
      %c0_22 = arith.constant 0 : index
      %c0_23 = arith.constant 0 : index
      %40 = vector.load %arg10[%c0_22, %c0_23] : memref<320x32xf32, #tpu.memory_space<vmem>>, vector<320x32xf32>
      tpu.vector_store %arg10[%c0_22, %c0_23], %39 {strides = array<i32>} : memref<320x32xf32, #tpu.memory_space<vmem>>, vector<320x32xf32>,
      %c0_24 = arith.constant 0 : index
      %c0_25 = arith.constant 0 : index
      %41 = vector.load %arg1[%c0_24, %c0_25] : memref<288x32xf32, #tpu.memory_space<vmem>>, vector<288x32xf32>
      %c0_26 = arith.constant 0 : index
      %c0_27 = arith.constant 0 : index
      %42 = vector.load %arg2[%c0_26, %c0_27] : memref<32x32xf32, #tpu.memory_space<vmem>>, vector<32x32xf32>
      %cst_28 = arith.constant dense<0.000000e+00> : vector<288x32xf32>
      %43 = tpu.matmul %41, %42, %cst_28 {dimension_numbers = #tpu.dot_dimension_numbers<[1], [0], [0], [1], [0, 0, 1, 1], [], []>} : vector<288x32xf32>, vector<32x32xf32>, vector<288x32xf32> -> vector<288x32xf32>
      %cst_29 = arith.constant 0.000000e+00 : f32
      %44 = vector.broadcast %cst_29 : f32 to vector<288x32xf32>
      %45 = arith.maximumf %43, %44 : vector<288x32xf32>
      %c16 = arith.constant 16 : index
      %c0_30 = arith.constant 0 : index
      %46 = vector.load %arg9[%c16, %c0_30] : memref<320x32xf32, #tpu.memory_space<vmem>>, vector<288x32xf32>
      tpu.vector_store %arg9[%c16, %c0_30], %45 {strides = array<i32>} : memref<320x32xf32, #tpu.memory_space<vmem>>, vector<288x32xf32>,
      %c16_31 = arith.constant 16 : index
      %c0_32 = arith.constant 0 : index
      %47 = vector.load %arg9[%c16_31, %c0_32] : memref<320x32xf32, #tpu.memory_space<vmem>>, vector<288x32xf32>
      %c0_33 = arith.constant 0 : index
      %c0_34 = arith.constant 0 : index
      %48 = vector.load %arg3[%c0_33, %c0_34] : memref<32x32xf32, #tpu.memory_space<vmem>>, vector<32x32xf32>
      %cst_35 = arith.constant dense<0.000000e+00> : vector<288x32xf32>
      %49 = tpu.matmul %47, %48, %cst_35 {dimension_numbers = #tpu.dot_dimension_numbers<[1], [0], [0], [1], [0, 0, 1, 1], [], []>} : vector<288x32xf32>, vector<32x32xf32>, vector<288x32xf32> -> vector<288x32xf32>
      %c0_36 = arith.constant 0 : index
      %c0_37 = arith.constant 0 : index
      %50 = vector.load %arg4[%c0_36, %c0_37] : memref<1x32xf32, #tpu.memory_space<vmem>>, vector<1x32xf32>
      %51 = vector.broadcast %50 : vector<1x32xf32> to vector<288x32xf32>
      %52 = arith.addf %49, %51 : vector<288x32xf32>
      %cst_38 = arith.constant 0.000000e+00 : f32
      %53 = vector.broadcast %cst_38 : f32 to vector<288x32xf32>
      %54 = arith.maximumf %52, %53 : vector<288x32xf32>
      %55 = vector.broadcast %0 : vector<288x1xf32> to vector<288x32xf32>
      %56 = arith.mulf %54, %55 : vector<288x32xf32>
      %c16_39 = arith.constant 16 : index
      %c0_40 = arith.constant 0 : index
      %57 = vector.load %arg10[%c16_39, %c0_40] : memref<320x32xf32, #tpu.memory_space<vmem>>, vector<288x32xf32>
      tpu.vector_store %arg10[%c16_39, %c0_40], %56 {strides = array<i32>} : memref<320x32xf32, #tpu.memory_space<vmem>>, vector<288x32xf32>,
    } else {
    }
    %c2_i32 = arith.constant 2 : i32
    %c0_i32_2 = arith.constant 0 : i32
    %4 = arith.cmpi eq, %c2_i32, %c0_i32_2 : i32
    %c1_i32 = arith.constant 1 : i32
    %5 = arith.select %4, %c1_i32, %c2_i32 : i32
    %6 = arith.remsi %arg0, %5 : i32
    %c0_i32_3 = arith.constant 0 : i32
    %7 = arith.cmpi ne, %6, %c0_i32_3 : i32
    %c0_i32_4 = arith.constant 0 : i32
    %8 = arith.cmpi slt, %6, %c0_i32_4 : i32
    %c0_i32_5 = arith.constant 0 : i32
    %9 = arith.cmpi slt, %5, %c0_i32_5 : i32
    %10 = arith.xori %8, %9 : i1
    %11 = arith.andi %10, %7 : i1
    %12 = arith.addi %6, %5 : i32
    %13 = arith.select %11, %12, %6 : i32
    %c0_i32_6 = arith.constant 0 : i32
    %14 = arith.cmpi eq, %13, %c0_i32_6 : i32
    %c8_i32 = arith.constant 8 : i32
    %15 = arith.cmpi ne, %arg0, %c8_i32 : i32
    %16 = arith.andi %14, %15 : i1
    %17 = arith.extui %16 : i1 to i32
    %c0_i32_7 = arith.constant 0 : i32
    %18 = arith.cmpi ne, %17, %c0_i32_7 : i32
    scf.if %18 {
      %c3 = arith.constant 3 : index
      %c0_19 = arith.constant 0 : index
      %37 = vector.load %arg10[%c3, %c0_19] : memref<320x32xf32, #tpu.memory_space<vmem>>, vector<288x32xf32>
      %c4 = arith.constant 4 : index
      %c0_20 = arith.constant 0 : index
      %38 = vector.load %arg10[%c4, %c0_20] : memref<320x32xf32, #tpu.memory_space<vmem>>, vector<288x32xf32>
      %c5 = arith.constant 5 : index
      %c0_21 = arith.constant 0 : index
      %39 = vector.load %arg10[%c5, %c0_21] : memref<320x32xf32, #tpu.memory_space<vmem>>, vector<288x32xf32>
      %c15 = arith.constant 15 : index
      %c0_22 = arith.constant 0 : index
      %40 = vector.load %arg10[%c15, %c0_22] : memref<320x32xf32, #tpu.memory_space<vmem>>, vector<288x32xf32>
      %c16 = arith.constant 16 : index
      %c0_23 = arith.constant 0 : index
      %41 = vector.load %arg10[%c16, %c0_23] : memref<320x32xf32, #tpu.memory_space<vmem>>, vector<288x32xf32>
      %c17 = arith.constant 17 : index
      %c0_24 = arith.constant 0 : index
      %42 = vector.load %arg10[%c17, %c0_24] : memref<320x32xf32, #tpu.memory_space<vmem>>, vector<288x32xf32>
      %c27 = arith.constant 27 : index
      %c0_25 = arith.constant 0 : index
      %43 = vector.load %arg10[%c27, %c0_25] : memref<320x32xf32, #tpu.memory_space<vmem>>, vector<288x32xf32>
      %c28 = arith.constant 28 : index
      %c0_26 = arith.constant 0 : index
      %44 = vector.load %arg10[%c28, %c0_26] : memref<320x32xf32, #tpu.memory_space<vmem>>, vector<288x32xf32>
      %c29 = arith.constant 29 : index
      %c0_27 = arith.constant 0 : index
      %45 = vector.load %arg10[%c29, %c0_27] : memref<320x32xf32, #tpu.memory_space<vmem>>, vector<288x32xf32>
      %46 = tpu.concatenate %37, %38, %39, %40, %41, %42, %43, %44, %45 in 1 : vector<288x32xf32>, vector<288x32xf32>, vector<288x32xf32>, vector<288x32xf32>, vector<288x32xf32>, vector<288x32xf32>, vector<288x32xf32>, vector<288x32xf32>, vector<288x32xf32> -> vector<288x288xf32>
      %c0_28 = arith.constant 0 : index
      %c0_29 = arith.constant 0 : index
      %c0_30 = arith.constant 0 : index
      %47 = vector.load %arg5[%c0_28, %c0_29, %c0_30] : memref<1x288x32xf32, #tpu.memory_space<vmem>>, vector<1x288x32xf32>
      %48 = vector.shape_cast %47 : vector<1x288x32xf32> to vector<288x32xf32>
      %cst = arith.constant dense<0.000000e+00> : vector<288x32xf32>
      %49 = tpu.matmul %46, %48, %cst {dimension_numbers = #tpu.dot_dimension_numbers<[1], [0], [0], [1], [0, 0, 1, 1], [], []>} : vector<288x288xf32>, vector<288x32xf32>, vector<288x32xf32> -> vector<288x32xf32>
      %c0_31 = arith.constant 0 : index
      %c0_32 = arith.constant 0 : index
      %c0_33 = arith.constant 0 : index
      %50 = vector.load %arg6[%c0_31, %c0_32, %c0_33] : memref<1x1x32xf32, #tpu.memory_space<vmem>>, vector<1x1x32xf32>
      %51 = vector.shape_cast %50 : vector<1x1x32xf32> to vector<1x32xf32>
      %52 = vector.broadcast %51 : vector<1x32xf32> to vector<288x32xf32>
      %53 = arith.addf %49, %52 : vector<288x32xf32>
      %54 = vector.broadcast %0 : vector<288x1xf32> to vector<288x32xf32>
      %55 = arith.mulf %53, %54 : vector<288x32xf32>
      %c16_34 = arith.constant 16 : index
      %c0_35 = arith.constant 0 : index
      %56 = vector.load %arg9[%c16_34, %c0_35] : memref<320x32xf32, #tpu.memory_space<vmem>>, vector<288x32xf32>
      tpu.vector_store %arg9[%c16_34, %c0_35], %55 {strides = array<i32>} : memref<320x32xf32, #tpu.memory_space<vmem>>, vector<288x32xf32>,
    } else {
    }
    %c2_i32_8 = arith.constant 2 : i32
    %c0_i32_9 = arith.constant 0 : i32
    %19 = arith.cmpi eq, %c2_i32_8, %c0_i32_9 : i32
    %c1_i32_10 = arith.constant 1 : i32
    %20 = arith.select %19, %c1_i32_10, %c2_i32_8 : i32
    %21 = arith.remsi %arg0, %20 : i32
    %c0_i32_11 = arith.constant 0 : i32
    %22 = arith.cmpi ne, %21, %c0_i32_11 : i32
    %c0_i32_12 = arith.constant 0 : i32
    %23 = arith.cmpi slt, %21, %c0_i32_12 : i32
    %c0_i32_13 = arith.constant 0 : i32
    %24 = arith.cmpi slt, %20, %c0_i32_13 : i32
    %25 = arith.xori %23, %24 : i1
    %26 = arith.andi %25, %22 : i1
    %27 = arith.addi %21, %20 : i32
    %28 = arith.select %26, %27, %21 : i32
    %c1_i32_14 = arith.constant 1 : i32
    %29 = arith.cmpi eq, %28, %c1_i32_14 : i32
    %c8_i32_15 = arith.constant 8 : i32
    %30 = arith.cmpi ne, %arg0, %c8_i32_15 : i32
    %31 = arith.andi %29, %30 : i1
    %32 = arith.extui %31 : i1 to i32
    %c0_i32_16 = arith.constant 0 : i32
    %33 = arith.cmpi ne, %32, %c0_i32_16 : i32
    scf.if %33 {
      %c3 = arith.constant 3 : index
      %c0_19 = arith.constant 0 : index
      %37 = vector.load %arg9[%c3, %c0_19] : memref<320x32xf32, #tpu.memory_space<vmem>>, vector<288x32xf32>
      %c4 = arith.constant 4 : index
      %c0_20 = arith.constant 0 : index
      %38 = vector.load %arg9[%c4, %c0_20] : memref<320x32xf32, #tpu.memory_space<vmem>>, vector<288x32xf32>
      %c5 = arith.constant 5 : index
      %c0_21 = arith.constant 0 : index
      %39 = vector.load %arg9[%c5, %c0_21] : memref<320x32xf32, #tpu.memory_space<vmem>>, vector<288x32xf32>
      %c15 = arith.constant 15 : index
      %c0_22 = arith.constant 0 : index
      %40 = vector.load %arg9[%c15, %c0_22] : memref<320x32xf32, #tpu.memory_space<vmem>>, vector<288x32xf32>
      %c16 = arith.constant 16 : index
      %c0_23 = arith.constant 0 : index
      %41 = vector.load %arg9[%c16, %c0_23] : memref<320x32xf32, #tpu.memory_space<vmem>>, vector<288x32xf32>
      %c17 = arith.constant 17 : index
      %c0_24 = arith.constant 0 : index
      %42 = vector.load %arg9[%c17, %c0_24] : memref<320x32xf32, #tpu.memory_space<vmem>>, vector<288x32xf32>
      %c27 = arith.constant 27 : index
      %c0_25 = arith.constant 0 : index
      %43 = vector.load %arg9[%c27, %c0_25] : memref<320x32xf32, #tpu.memory_space<vmem>>, vector<288x32xf32>
      %c28 = arith.constant 28 : index
      %c0_26 = arith.constant 0 : index
      %44 = vector.load %arg9[%c28, %c0_26] : memref<320x32xf32, #tpu.memory_space<vmem>>, vector<288x32xf32>
      %c29 = arith.constant 29 : index
      %c0_27 = arith.constant 0 : index
      %45 = vector.load %arg9[%c29, %c0_27] : memref<320x32xf32, #tpu.memory_space<vmem>>, vector<288x32xf32>
      %46 = tpu.concatenate %37, %38, %39, %40, %41, %42, %43, %44, %45 in 1 : vector<288x32xf32>, vector<288x32xf32>, vector<288x32xf32>, vector<288x32xf32>, vector<288x32xf32>, vector<288x32xf32>, vector<288x32xf32>, vector<288x32xf32>, vector<288x32xf32> -> vector<288x288xf32>
      %c0_28 = arith.constant 0 : index
      %c0_29 = arith.constant 0 : index
      %c0_30 = arith.constant 0 : index
      %47 = vector.load %arg5[%c0_28, %c0_29, %c0_30] : memref<1x288x32xf32, #tpu.memory_space<vmem>>, vector<1x288x32xf32>
      %48 = vector.shape_cast %47 : vector<1x288x32xf32> to vector<288x32xf32>
      %cst = arith.constant dense<0.000000e+00> : vector<288x32xf32>
      %49 = tpu.matmul %46, %48, %cst {dimension_numbers = #tpu.dot_dimension_numbers<[1], [0], [0], [1], [0, 0, 1, 1], [], []>} : vector<288x288xf32>, vector<288x32xf32>, vector<288x32xf32> -> vector<288x32xf32>
      %c0_31 = arith.constant 0 : index
      %c0_32 = arith.constant 0 : index
      %c0_33 = arith.constant 0 : index
      %50 = vector.load %arg6[%c0_31, %c0_32, %c0_33] : memref<1x1x32xf32, #tpu.memory_space<vmem>>, vector<1x1x32xf32>
      %51 = vector.shape_cast %50 : vector<1x1x32xf32> to vector<1x32xf32>
      %52 = vector.broadcast %51 : vector<1x32xf32> to vector<288x32xf32>
      %53 = arith.addf %49, %52 : vector<288x32xf32>
      %54 = vector.broadcast %0 : vector<288x1xf32> to vector<288x32xf32>
      %55 = arith.mulf %53, %54 : vector<288x32xf32>
      %c16_34 = arith.constant 16 : index
      %c0_35 = arith.constant 0 : index
      %56 = vector.load %arg10[%c16_34, %c0_35] : memref<320x32xf32, #tpu.memory_space<vmem>>, vector<288x32xf32>
      tpu.vector_store %arg10[%c16_34, %c0_35], %55 {strides = array<i32>} : memref<320x32xf32, #tpu.memory_space<vmem>>, vector<288x32xf32>,
    } else {
    }
    %c8_i32_17 = arith.constant 8 : i32
    %34 = arith.cmpi eq, %arg0, %c8_i32_17 : i32
    %35 = arith.extui %34 : i1 to i32
    %c0_i32_18 = arith.constant 0 : i32
    %36 = arith.cmpi ne, %35, %c0_i32_18 : i32
    scf.if %36 {
      %c3 = arith.constant 3 : index
      %c0_19 = arith.constant 0 : index
      %37 = vector.load %arg10[%c3, %c0_19] : memref<320x32xf32, #tpu.memory_space<vmem>>, vector<288x32xf32>
      %c4 = arith.constant 4 : index
      %c0_20 = arith.constant 0 : index
      %38 = vector.load %arg10[%c4, %c0_20] : memref<320x32xf32, #tpu.memory_space<vmem>>, vector<288x32xf32>
      %c5 = arith.constant 5 : index
      %c0_21 = arith.constant 0 : index
      %39 = vector.load %arg10[%c5, %c0_21] : memref<320x32xf32, #tpu.memory_space<vmem>>, vector<288x32xf32>
      %c15 = arith.constant 15 : index
      %c0_22 = arith.constant 0 : index
      %40 = vector.load %arg10[%c15, %c0_22] : memref<320x32xf32, #tpu.memory_space<vmem>>, vector<288x32xf32>
      %c16 = arith.constant 16 : index
      %c0_23 = arith.constant 0 : index
      %41 = vector.load %arg10[%c16, %c0_23] : memref<320x32xf32, #tpu.memory_space<vmem>>, vector<288x32xf32>
      %c17 = arith.constant 17 : index
      %c0_24 = arith.constant 0 : index
      %42 = vector.load %arg10[%c17, %c0_24] : memref<320x32xf32, #tpu.memory_space<vmem>>, vector<288x32xf32>
      %c27 = arith.constant 27 : index
      %c0_25 = arith.constant 0 : index
      %43 = vector.load %arg10[%c27, %c0_25] : memref<320x32xf32, #tpu.memory_space<vmem>>, vector<288x32xf32>
      %c28 = arith.constant 28 : index
      %c0_26 = arith.constant 0 : index
      %44 = vector.load %arg10[%c28, %c0_26] : memref<320x32xf32, #tpu.memory_space<vmem>>, vector<288x32xf32>
      %c29 = arith.constant 29 : index
      %c0_27 = arith.constant 0 : index
      %45 = vector.load %arg10[%c29, %c0_27] : memref<320x32xf32, #tpu.memory_space<vmem>>, vector<288x32xf32>
      %46 = tpu.concatenate %37, %38, %39, %40, %41, %42, %43, %44, %45 in 1 : vector<288x32xf32>, vector<288x32xf32>, vector<288x32xf32>, vector<288x32xf32>, vector<288x32xf32>, vector<288x32xf32>, vector<288x32xf32>, vector<288x32xf32>, vector<288x32xf32> -> vector<288x288xf32>
      %c0_28 = arith.constant 0 : index
      %c0_29 = arith.constant 0 : index
      %c0_30 = arith.constant 0 : index
      %47 = vector.load %arg5[%c0_28, %c0_29, %c0_30] : memref<1x288x32xf32, #tpu.memory_space<vmem>>, vector<1x288x32xf32>
      %48 = vector.shape_cast %47 : vector<1x288x32xf32> to vector<288x32xf32>
      %cst = arith.constant dense<0.000000e+00> : vector<288x32xf32>
      %49 = tpu.matmul %46, %48, %cst {dimension_numbers = #tpu.dot_dimension_numbers<[1], [0], [0], [1], [0, 0, 1, 1], [], []>} : vector<288x288xf32>, vector<288x32xf32>, vector<288x32xf32> -> vector<288x32xf32>
      %c0_31 = arith.constant 0 : index
      %c0_32 = arith.constant 0 : index
      %c0_33 = arith.constant 0 : index
      %50 = vector.load %arg6[%c0_31, %c0_32, %c0_33] : memref<1x1x32xf32, #tpu.memory_space<vmem>>, vector<1x1x32xf32>
      %51 = vector.shape_cast %50 : vector<1x1x32xf32> to vector<1x32xf32>
      %52 = vector.broadcast %51 : vector<1x32xf32> to vector<288x32xf32>
      %53 = arith.addf %49, %52 : vector<288x32xf32>
      %c0_34 = arith.constant 0 : index
      %c0_35 = arith.constant 0 : index
      %54 = vector.load %arg8[%c0_34, %c0_35] : memref<288x32xf32, #tpu.memory_space<vmem>>, vector<288x32xf32>
      tpu.vector_store %arg8[%c0_34, %c0_35], %53 {strides = array<i32>} : memref<288x32xf32, #tpu.memory_space<vmem>>, vector<288x32xf32>,
    } else {
    }
    return
  }
  func.func @transform_0(%arg0: i32) -> (i32, i32) {
    %c0_i32 = arith.constant 0 : i32
    %c0_i32_0 = arith.constant 0 : i32
    %c0_i32_1 = arith.constant 0 : i32
    return %c0_i32, %c0_i32_0 : i32, i32
  }
  func.func @transform_1(%arg0: i32) -> (i32, i32) {
    %c0_i32 = arith.constant 0 : i32
    %c0_i32_0 = arith.constant 0 : i32
    %c0_i32_1 = arith.constant 0 : i32
    return %c0_i32, %c0_i32_0 : i32, i32
  }
  func.func @transform_2(%arg0: i32) -> (i32, i32) {
    %c0_i32 = arith.constant 0 : i32
    %c0_i32_0 = arith.constant 0 : i32
    %c0_i32_1 = arith.constant 0 : i32
    return %c0_i32, %c0_i32_0 : i32, i32
  }
  func.func @transform_3(%arg0: i32) -> (i32, i32) {
    %c0_i32 = arith.constant 0 : i32
    %c0_i32_0 = arith.constant 0 : i32
    %c0_i32_1 = arith.constant 0 : i32
    return %c0_i32, %c0_i32_0 : i32, i32
  }
  func.func @transform_4(%arg0: i32) -> (i32, i32, i32) {
    %c0_i32 = arith.constant 0 : i32
    %c0_i32_0 = arith.constant 0 : i32
    %c0_i32_1 = arith.constant 0 : i32
    return %arg0, %c0_i32, %c0_i32_0 : i32, i32, i32
  }
  func.func @transform_5(%arg0: i32) -> (i32, i32, i32) {
    %c0_i32 = arith.constant 0 : i32
    %c0_i32_0 = arith.constant 0 : i32
    %c0_i32_1 = arith.constant 0 : i32
    return %arg0, %c0_i32, %c0_i32_0 : i32, i32, i32
  }
  func.func @transform_6(%arg0: i32) -> (i32, i32) {
    %c0_i32 = arith.constant 0 : i32
    %c0_i32_0 = arith.constant 0 : i32
    %c0_i32_1 = arith.constant 0 : i32
    return %c0_i32, %c0_i32_0 : i32, i32
  }
  func.func @transform_7(%arg0: i32) -> (i32, i32) {
    %c0_i32 = arith.constant 0 : i32
    %c0_i32_0 = arith.constant 0 : i32
    %c0_i32_1 = arith.constant 0 : i32
    return %c0_i32, %c0_i32_0 : i32, i32
  }
}

</mosaic_0001>

<llo_original>
// kernel: searchable_model_forward.1
$region0: #{searchable_model_forward.1}
  #allocation0 [shape = 'u32[]', space=smem, size = 0x4, offset = 0x4, fixed_abs, tag = 'smem constant byte address 0x4 - core index']
  #allocation1 [shape = 'u32[144,128]{1,0:T(1,128)}', space=vmem, size = 0x12000, scoped, tag = 'internal scratch']
  #allocation2 [shape = 'f32[320,32]{1,0:T(8,128)}', space=vmem, size = 0x28000, scoped, tag = 'scratch operand']
  #allocation3 [shape = 'f32[320,32]{1,0:T(8,128)}', space=vmem, size = 0x28000, scoped, tag = 'scratch operand']
  %s0 = inlined_call_operand.vmem [shape: f32[288,32], index: 0, kind: input, shape index: {}]
  %s1 = inlined_call_operand.vmem [shape: f32[32,32], index: 1, kind: input, shape index: {}]
  %s2 = inlined_call_operand.vmem [shape: f32[32,32], index: 2, kind: input, shape index: {}]
  %s3 = inlined_call_operand.vmem [shape: f32[1,32], index: 3, kind: input, shape index: {}]
  %s4 = inlined_call_operand.vmem [shape: f32[9,288,32], index: 4, kind: input, shape index: {}]
  %s5 = inlined_call_operand.vmem [shape: f32[9,1,32], index: 5, kind: input, shape index: {}]
  %s6 = inlined_call_operand.vmem [shape: f32[288,1], index: 6, kind: input, shape index: {}]
  %s7 = inlined_call_operand.vmem [shape: f32[288,32], index: 7, kind: output, shape index: {}]
  %s8 = sld [smem:[#allocation0]]
  $region77: #{searchable_model_forward.1} parent=0
    _
  %s10 = ssub.s32 1, %s8
  %s11 = scalar_select 0, %s10, %s8
  loop: start=0, step=1, limit=11
  $region2: #{searchable_model_forward.1} parent=0 // loop_pre_header
    _
  $region3: #{searchable_model_forward.1} parent=0 // loop_header
    %s13 = sphi 0, %s17
    %p14 = scmp.ge.s32.totalorder %s13, 11
    %s21 = sphi 0, %s21
    %s23 = sphi 0, %s21
    %s24 = sphi 0, %s23
    %s38 = sphi 0, %s24
    %s42 = sphi 0, %s42
    %s44 = sphi 0, %s42
    %s45 = sphi 0, %s44
    %s59 = sphi 0, %s45
    %s63 = sphi 0, %s63
    %s65 = sphi 0, %s63
    %s66 = sphi 0, %s65
    %s80 = sphi 0, %s66
    %s84 = sphi 0, %s84
    %s86 = sphi 0, %s84
    %s87 = sphi 0, %s86
    %s101 = sphi 0, %s87
    %s107 = sphi 0, %s109
    %s110 = sphi 0, %s107
    %s111 = sphi 0, %s110
    %s127 = sphi 0, %s111
    %s133 = sphi 0, %s135
    %s136 = sphi 0, %s133
    %s137 = sphi 0, %s136
    %s153 = sphi 0, %s137
    %s157 = sphi 0, %s157
    %s159 = sphi 0, %s157
    %s160 = sphi 0, %s159
    %s174 = sphi 0, %s160
    %s178 = sphi 0, %s178
    %s180 = sphi 0, %s178
    %s181 = sphi 0, %s180
    %s195 = sphi 0, %s181
  $region4: #{searchable_model_forward.1} parent=0 // loop_header_branch
    %16 = sbr.rel (%p14) target = $region8
  $region5: #{searchable_model_forward.1} parent=0 // loop_body
    %s18 = ssub.s32 %s13, 1
    %s19 = ssub.s32 %s13, 2
    %s20 = sadd.s32 %s13, 1
    %s22 = sadd.s32 %s21, 1
    %p25 = scmp.eq.s32.totalorder %s13, 8
    %p26 = scmp.ne.s32.totalorder %s21, %s23
    %p27 = scmp.eq.s32.totalorder %s13, 0
    %p28 = por %p26, %p27
    %p29 = scmp.ne.s32.totalorder %s21, %s23
    %p30 = scmp.eq.s32.totalorder %s18, 8
    %p31 = por %p29, %p30
    %p32 = scmp.ne.s32.totalorder %s23, %s24
    %p33 = scmp.eq.s32.totalorder %s18, 0
    %p34 = por %p32, %p33
    %p35 = scmp.ne.s32.totalorder %s23, %s24
    %p36 = scmp.eq.s32.totalorder %s19, 8
    %p37 = por %p35, %p36
    %p39 = scmp.ne.s32.totalorder %s24, %s38
    %p40 = scmp.eq.s32.totalorder %s19, 0
    %p41 = por %p39, %p40
    %s43 = sadd.s32 %s42, 1
    %p46 = scmp.eq.s32.totalorder %s13, 8
    %p47 = scmp.ne.s32.totalorder %s42, %s44
    %p48 = scmp.eq.s32.totalorder %s13, 0
    %p49 = por %p47, %p48
    %p50 = scmp.ne.s32.totalorder %s42, %s44
    %p51 = scmp.eq.s32.totalorder %s18, 8
    %p52 = por %p50, %p51
    %p53 = scmp.ne.s32.totalorder %s44, %s45
    %p54 = scmp.eq.s32.totalorder %s18, 0
    %p55 = por %p53, %p54
    %p56 = scmp.ne.s32.totalorder %s44, %s45
    %p57 = scmp.eq.s32.totalorder %s19, 8
    %p58 = por %p56, %p57
    %p60 = scmp.ne.s32.totalorder %s45, %s59
    %p61 = scmp.eq.s32.totalorder %s19, 0
    %p62 = por %p60, %p61
    %s64 = sadd.s32 %s63, 1
    %p67 = scmp.eq.s32.totalorder %s13, 8
    %p68 = scmp.ne.s32.totalorder %s63, %s65
    %p69 = scmp.eq.s32.totalorder %s13, 0
    %p70 = por %p68, %p69
    %p71 = scmp.ne.s32.totalorder %s63, %s65
    %p72 = scmp.eq.s32.totalorder %s18, 8
    %p73 = por %p71, %p72
    %p74 = scmp.ne.s32.totalorder %s65, %s66
    %p75 = scmp.eq.s32.totalorder %s18, 0
    %p76 = por %p74, %p75
    %p77 = scmp.ne.s32.totalorder %s65, %s66
    %p78 = scmp.eq.s32.totalorder %s19, 8
    %p79 = por %p77, %p78
    %p81 = scmp.ne.s32.totalorder %s66, %s80
    %p82 = scmp.eq.s32.totalorder %s19, 0
    %p83 = por %p81, %p82
    %s85 = sadd.s32 %s84, 1
    %p88 = scmp.eq.s32.totalorder %s13, 8
    %p89 = scmp.ne.s32.totalorder %s84, %s86
    %p90 = scmp.eq.s32.totalorder %s13, 0
    %p91 = por %p89, %p90
    %p92 = scmp.ne.s32.totalorder %s84, %s86
    %p93 = scmp.eq.s32.totalorder %s18, 8
    %p94 = por %p92, %p93
    %p95 = scmp.ne.s32.totalorder %s86, %s87
    %p96 = scmp.eq.s32.totalorder %s18, 0
    %p97 = por %p95, %p96
    %p98 = scmp.ne.s32.totalorder %s86, %s87
    %p99 = scmp.eq.s32.totalorder %s19, 8
    %p100 = por %p98, %p99
    %p102 = scmp.ne.s32.totalorder %s87, %s101
    %p103 = scmp.eq.s32.totalorder %s19, 0
    %p104 = por %p102, %p103
    %s105 = ssub.s32 %s13, %s20
    %p106 = scmp.eq.s32.totalorder %s105, 0
    %s108 = sadd.s32 %s107, 1
    %s109 = scalar_select %p106, %s107, %s108
    %p112 = pneg %p106
    %p113 = scmp.eq.s32.totalorder %s13, 8
    %p114 = por %p112, %p113
    %p115 = scmp.ne.s32.totalorder %s107, %s110
    %p116 = scmp.eq.s32.totalorder %s13, 0
    %p117 = por %p115, %p116
    %p118 = scmp.ne.s32.totalorder %s107, %s110
    %p119 = scmp.eq.s32.totalorder %s18, 8
    %p120 = por %p118, %p119
    %p121 = scmp.ne.s32.totalorder %s110, %s111
    %p122 = scmp.eq.s32.totalorder %s18, 0
    %p123 = por %p121, %p122
    %p124 = scmp.ne.s32.totalorder %s110, %s111
    %p125 = scmp.eq.s32.totalorder %s19, 8
    %p126 = por %p124, %p125
    %p128 = scmp.ne.s32.totalorder %s111, %s127
    %p129 = scmp.eq.s32.totalorder %s19, 0
    %p130 = por %p128, %p129
    %s131 = ssub.s32 %s13, %s20
    %p132 = scmp.eq.s32.totalorder %s131, 0
    %s134 = sadd.s32 %s133, 1
    %s135 = scalar_select %p132, %s133, %s134
    %p138 = pneg %p132
    %p139 = scmp.eq.s32.totalorder %s13, 8
    %p140 = por %p138, %p139
    %p141 = scmp.ne.s32.totalorder %s133, %s136
    %p142 = scmp.eq.s32.totalorder %s13, 0
    %p143 = por %p141, %p142
    %p144 = scmp.ne.s32.totalorder %s133, %s136
    %p145 = scmp.eq.s32.totalorder %s18, 8
    %p146 = por %p144, %p145
    %p147 = scmp.ne.s32.totalorder %s136, %s137
    %p148 = scmp.eq.s32.totalorder %s18, 0
    %p149 = por %p147, %p148
    %p150 = scmp.ne.s32.totalorder %s136, %s137
    %p151 = scmp.eq.s32.totalorder %s19, 8
    %p152 = por %p150, %p151
    %p154 = scmp.ne.s32.totalorder %s137, %s153
    %p155 = scmp.eq.s32.totalorder %s19, 0
    %p156 = por %p154, %p155
    %s158 = sadd.s32 %s157, 1
    %p161 = scmp.eq.s32.totalorder %s13, 8
    %p162 = scmp.ne.s32.totalorder %s157, %s159
    %p163 = scmp.eq.s32.totalorder %s13, 0
    %p164 = por %p162, %p163
    %p165 = scmp.ne.s32.totalorder %s157, %s159
    %p166 = scmp.eq.s32.totalorder %s18, 8
    %p167 = por %p165, %p166
    %p168 = scmp.ne.s32.totalorder %s159, %s160
    %p169 = scmp.eq.s32.totalorder %s18, 0
    %p170 = por %p168, %p169
    %p171 = scmp.ne.s32.totalorder %s159, %s160
    %p172 = scmp.eq.s32.totalorder %s19, 8
    %p173 = por %p171, %p172
    %p175 = scmp.ne.s32.totalorder %s160, %s174
    %p176 = scmp.eq.s32.totalorder %s19, 0
    %p177 = por %p175, %p176
    %s179 = sadd.s32 %s178, 1
    %p182 = scmp.eq.s32.totalorder %s13, 8
    %p183 = scmp.ne.s32.totalorder %s178, %s180
    %p184 = scmp.eq.s32.totalorder %s13, 0
    %p185 = por %p183, %p184
    %p186 = scmp.ne.s32.totalorder %s178, %s180
    %p187 = scmp.eq.s32.totalorder %s18, 8
    %p188 = por %p186, %p187
    %p189 = scmp.ne.s32.totalorder %s180, %s181
    %p190 = scmp.eq.s32.totalorder %s18, 0
    %p191 = por %p189, %p190
    %p192 = scmp.ne.s32.totalorder %s180, %s181
    %p193 = scmp.eq.s32.totalorder %s19, 8
    %p194 = por %p192, %p193
    %p196 = scmp.ne.s32.totalorder %s181, %s195
    %p197 = scmp.eq.s32.totalorder %s19, 0
    %p198 = por %p196, %p197
    %p199 = scmp.le.s32.totalorder 1, %s13
    %p200 = scmp.lt.s32.totalorder %s13, 10
    %p201 = pnand %p199, %p200
    %p202 = pneg %p201
    // Predicated region
    $region9: #{searchable_model_forward.1} parent=5 // pred_check
      _
    $region10: #{searchable_model_forward.1} parent=5 // pred_check_branch
      %204 = sbr.rel (%p201) target = $region12
    $region11: #{searchable_model_forward.1} parent=5 // pred_region
      %s205 = ssub.s32 %s13, 1
      // Predicated region
      $region13: #{searchable_model_forward.1} parent=11 // pred_check
        %p206 = pneg %p34
      $region14: #{searchable_model_forward.1} parent=11 // pred_check_branch
        %208 = sbr.rel (%p206) target = $region16
      $region15: #{searchable_model_forward.1} parent=11 // pred_region
        _
      $region16: #{searchable_model_forward.1} parent=11 // pred_fallthru
        _
      // Predicated region
      $region17: #{searchable_model_forward.1} parent=11 // pred_check
        %p209 = pneg %p55
      $region18: #{searchable_model_forward.1} parent=11 // pred_check_branch
        %211 = sbr.rel (%p209) target = $region20
      $region19: #{searchable_model_forward.1} parent=11 // pred_region
        _
      $region20: #{searchable_model_forward.1} parent=11 // pred_fallthru
        _
      // Predicated region
      $region21: #{searchable_model_forward.1} parent=11 // pred_check
        %p212 = pneg %p76
      $region22: #{searchable_model_forward.1} parent=11 // pred_check_branch
        %214 = sbr.rel (%p212) target = $region24
      $region23: #{searchable_model_forward.1} parent=11 // pred_region
        _
      $region24: #{searchable_model_forward.1} parent=11 // pred_fallthru
        _
      // Predicated region
      $region25: #{searchable_model_forward.1} parent=11 // pred_check
        %p215 = pneg %p97
      $region26: #{searchable_model_forward.1} parent=11 // pred_check_branch
        %217 = sbr.rel (%p215) target = $region28
      $region27: #{searchable_model_forward.1} parent=11 // pred_region
        _
      $region28: #{searchable_model_forward.1} parent=11 // pred_fallthru
        _
      // Predicated region
      $region29: #{searchable_model_forward.1} parent=11 // pred_check
        %p218 = pneg %p170
      $region30: #{searchable_model_forward.1} parent=11 // pred_check_branch
        %220 = sbr.rel (%p218) target = $region32
      $region31: #{searchable_model_forward.1} parent=11 // pred_region
        _
      $region32: #{searchable_model_forward.1} parent=11 // pred_fallthru
        _
    $region12: #{searchable_model_forward.1} parent=5 // pred_fallthru
      _
    %p221 = scmp.lt.s32.totalorder %s13, 9
    // Predicated region
    $region33: #{searchable_model_forward.1} parent=5 // pred_check
      %p222 = pneg %p221
    $region34: #{searchable_model_forward.1} parent=5 // pred_check_branch
      %224 = sbr.rel (%p222) target = $region36
    $region35: #{searchable_model_forward.1} parent=5 // pred_region
      // Predicated region
      $region37: #{searchable_model_forward.1} parent=35 // pred_check
        %p225 = pneg %p117
      $region38: #{searchable_model_forward.1} parent=35 // pred_check_branch
        %227 = sbr.rel (%p225) target = $region40
      $region39: #{searchable_model_forward.1} parent=35 // pred_region
        %p228 = scmp.lt.s32.totalorder %s13, 8
        %s229 = scalar_select %p228, %s13, 8
        %s230 = smul.addr %s229, 36
        %s231 = smul.addr %s230, 8
        %s232 = scalar_lea.vmem %s4, %s231
      $region40: #{searchable_model_forward.1} parent=35 // pred_fallthru
        _
      // Predicated region
      $region41: #{searchable_model_forward.1} parent=35 // pred_check
        %p233 = pneg %p143
      $region42: #{searchable_model_forward.1} parent=35 // pred_check_branch
        %235 = sbr.rel (%p233) target = $region44
      $region43: #{searchable_model_forward.1} parent=35 // pred_region
        %p236 = scmp.lt.s32.totalorder %s13, 8
        %s237 = scalar_select %p236, %s13, 8
        %s238 = scalar_lea.vmem %s5, %s237
      $region44: #{searchable_model_forward.1} parent=35 // pred_fallthru
        _
    $region36: #{searchable_model_forward.1} parent=5 // pred_fallthru
      _
    %p239 = scmp.le.s32.totalorder 1, %s13
    %p240 = scmp.lt.s32.totalorder %s13, 10
    %p241 = pnand %p239, %p240
    %p242 = pneg %p241
    // Predicated region
    $region45: #{searchable_model_forward.1} parent=5 // pred_check
      _
    $region46: #{searchable_model_forward.1} parent=5 // pred_check_branch
      %244 = sbr.rel (%p241) target = $region48
    $region47: #{searchable_model_forward.1} parent=5 // pred_region
      %s245 = ssub.s32 %s13, 1
      %p246 = pneg %p34
      %p247 = pneg %p31
      %p248 = pneg %p55
      %p249 = pneg %p52
      %p250 = pneg %p76
      %p251 = pneg %p73
      %p252 = pneg %p97
      %p253 = pneg %p94
      %p254 = scmp.lt.s32.totalorder %s18, 8
      %s255 = scalar_select %p254, %s18, 8
      %s256 = smul.addr %s255, 36
      %s257 = smul.addr %s256, 8
      %s258 = scalar_lea.vmem %s4, %s257
      %p259 = pneg %p123
      %p260 = pneg %p120
      %p261 = scmp.lt.s32.totalorder %s18, 8
      %s262 = scalar_select %p261, %s18, 8
      %s263 = scalar_lea.vmem %s5, %s262
      %p264 = pneg %p149
      %p265 = pneg %p146
      %p266 = pneg %p170
      %p267 = pneg %p167
      %p268 = pneg %p191
      %p269 = pneg %p188
      %p270 = scmp.lt.s32.totalorder %s18, 8
      %s271 = scalar_select %p270, %s18, 8
      %s272 = smul.addr %s271, 36
      %s273 = smul.addr %s272, 8
      %s274 = scalar_lea.vmem %s4, %s273
      %p275 = scmp.lt.s32.totalorder %s18, 8
      %s276 = scalar_select %p275, %s18, 8
      %s277 = scalar_lea.vmem %s5, %s276
      %v278 = vld [vmem:[%s6] sm:$0xff]
      %v279 = vld [vmem:[%s6 + $0x8] sm:$0xff]
      %v280 = vld [vmem:[%s6 + $0x10] sm:$0xff]
      %v281 = vld [vmem:[%s6 + $0x18] sm:$0xff]
      %v282 = vld [vmem:[%s6 + $0x20] sm:$0xff]
      %v283 = vld [vmem:[%s6 + $0x28] sm:$0xff]
      %v284 = vld [vmem:[%s6 + $0x30] sm:$0xff]
      %v285 = vld [vmem:[%s6 + $0x38] sm:$0xff]
      %v286 = vld [vmem:[%s6 + $0x40] sm:$0xff]
      %v287 = vld [vmem:[%s6 + $0x48] sm:$0xff]
      %v288 = vld [vmem:[%s6 + $0x50] sm:$0xff]
      %v289 = vld [vmem:[%s6 + $0x58] sm:$0xff]
      %v290 = vld [vmem:[%s6 + $0x60] sm:$0xff]
      %v291 = vld [vmem:[%s6 + $0x68] sm:$0xff]
      %v292 = vld [vmem:[%s6 + $0x70] sm:$0xff]
      %v293 = vld [vmem:[%s6 + $0x78] sm:$0xff]
      %v294 = vld [vmem:[%s6 + $0x80] sm:$0xff]
      %v295 = vld [vmem:[%s6 + $0x88] sm:$0xff]
      %v296 = vld [vmem:[%s6 + $0x90] sm:$0xff]
      %v297 = vld [vmem:[%s6 + $0x98] sm:$0xff]
      %v298 = vld [vmem:[%s6 + $0xa0] sm:$0xff]
      %v299 = vld [vmem:[%s6 + $0xa8] sm:$0xff]
      %v300 = vld [vmem:[%s6 + $0xb0] sm:$0xff]
      %v301 = vld [vmem:[%s6 + $0xb8] sm:$0xff]
      %v302 = vld [vmem:[%s6 + $0xc0] sm:$0xff]
      %v303 = vld [vmem:[%s6 + $0xc8] sm:$0xff]
      %v304 = vld [vmem:[%s6 + $0xd0] sm:$0xff]
      %v305 = vld [vmem:[%s6 + $0xd8] sm:$0xff]
      %v306 = vld [vmem:[%s6 + $0xe0] sm:$0xff]
      %v307 = vld [vmem:[%s6 + $0xe8] sm:$0xff]
      %v308 = vld [vmem:[%s6 + $0xf0] sm:$0xff]
      %v309 = vld [vmem:[%s6 + $0xf8] sm:$0xff]
      %v310 = vld [vmem:[%s6 + $0x100] sm:$0xff]
      %v311 = vld [vmem:[%s6 + $0x108] sm:$0xff]
      %v312 = vld [vmem:[%s6 + $0x110] sm:$0xff]
      %v313 = vld [vmem:[%s6 + $0x118] sm:$0xff]
      %p314 = scmp.eq.s32.totalorder %s18, 0
      // Predicated region
      $region49: #{searchable_model_forward.1} parent=47 // pred_check
        %p315 = pneg %p314
      $region50: #{searchable_model_forward.1} parent=47 // pred_check_branch
        %317 = sbr.rel (%p315) target = $region52
      $region51: #{searchable_model_forward.1} parent=47 // pred_region
        %vm318 = vcmask 261120
        %319 = vst.msk [vmem:[#allocation2] sm:$0xff] %vm318, 0.0
        %320 = vst.msk [vmem:[#allocation2 + $0x8] sm:$0xff] %vm318, 0.0
        %321 = vst.msk [vmem:[#allocation2 + $0x10] sm:$0xff] %vm318, 0.0
        %322 = vst.msk [vmem:[#allocation2 + $0x18] sm:$0xff] %vm318, 0.0
        %323 = vst.msk [vmem:[#allocation2 + $0x20] sm:$0xff] %vm318, 0.0
        %324 = vst.msk [vmem:[#allocation2 + $0x28] sm:$0xff] %vm318, 0.0
        %325 = vst.msk [vmem:[#allocation2 + $0x30] sm:$0xff] %vm318, 0.0
        %326 = vst.msk [vmem:[#allocation2 + $0x38] sm:$0xff] %vm318, 0.0
        %327 = vst.msk [vmem:[#allocation2 + $0x40] sm:$0xff] %vm318, 0.0
        %328 = vst.msk [vmem:[#allocation2 + $0x48] sm:$0xff] %vm318, 0.0
        %329 = vst.msk [vmem:[#allocation2 + $0x50] sm:$0xff] %vm318, 0.0
        %330 = vst.msk [vmem:[#allocation2 + $0x58] sm:$0xff] %vm318, 0.0
        %331 = vst.msk [vmem:[#allocation2 + $0x60] sm:$0xff] %vm318, 0.0
        %332 = vst.msk [vmem:[#allocation2 + $0x68] sm:$0xff] %vm318, 0.0
        %333 = vst.msk [vmem:[#allocation2 + $0x70] sm:$0xff] %vm318, 0.0
        %334 = vst.msk [vmem:[#allocation2 + $0x78] sm:$0xff] %vm318, 0.0
        %335 = vst.msk [vmem:[#allocation2 + $0x80] sm:$0xff] %vm318, 0.0
        %336 = vst.msk [vmem:[#allocation2 + $0x88] sm:$0xff] %vm318, 0.0
        %337 = vst.msk [vmem:[#allocation2 + $0x90] sm:$0xff] %vm318, 0.0
        %338 = vst.msk [vmem:[#allocation2 + $0x98] sm:$0xff] %vm318, 0.0
        %339 = vst.msk [vmem:[#allocation2 + $0xa0] sm:$0xff] %vm318, 0.0
        %340 = vst.msk [vmem:[#allocation2 + $0xa8] sm:$0xff] %vm318, 0.0
        %341 = vst.msk [vmem:[#allocation2 + $0xb0] sm:$0xff] %vm318, 0.0
        %342 = vst.msk [vmem:[#allocation2 + $0xb8] sm:$0xff] %vm318, 0.0
        %343 = vst.msk [vmem:[#allocation2 + $0xc0] sm:$0xff] %vm318, 0.0
        %344 = vst.msk [vmem:[#allocation2 + $0xc8] sm:$0xff] %vm318, 0.0
        %345 = vst.msk [vmem:[#allocation2 + $0xd0] sm:$0xff] %vm318, 0.0
        %346 = vst.msk [vmem:[#allocation2 + $0xd8] sm:$0xff] %vm318, 0.0
        %347 = vst.msk [vmem:[#allocation2 + $0xe0] sm:$0xff] %vm318, 0.0
        %348 = vst.msk [vmem:[#allocation2 + $0xe8] sm:$0xff] %vm318, 0.0
        %349 = vst.msk [vmem:[#allocation2 + $0xf0] sm:$0xff] %vm318, 0.0
        %350 = vst.msk [vmem:[#allocation2 + $0xf8] sm:$0xff] %vm318, 0.0
        %351 = vst.msk [vmem:[#allocation2 + $0x100] sm:$0xff] %vm318, 0.0
        %352 = vst.msk [vmem:[#allocation2 + $0x108] sm:$0xff] %vm318, 0.0
        %353 = vst.msk [vmem:[#allocation2 + $0x110] sm:$0xff] %vm318, 0.0
        %354 = vst.msk [vmem:[#allocation2 + $0x118] sm:$0xff] %vm318, 0.0
        %355 = vst.msk [vmem:[#allocation2 + $0x120] sm:$0xff] %vm318, 0.0
        %356 = vst.msk [vmem:[#allocation2 + $0x128] sm:$0xff] %vm318, 0.0
        %357 = vst.msk [vmem:[#allocation2 + $0x130] sm:$0xff] %vm318, 0.0
        %358 = vst.msk [vmem:[#allocation2 + $0x138] sm:$0xff] %vm318, 0.0
        %359 = vst.msk [vmem:[#allocation3] sm:$0xff] %vm318, 0.0
        %360 = vst.msk [vmem:[#allocation3 + $0x8] sm:$0xff] %vm318, 0.0
        %361 = vst.msk [vmem:[#allocation3 + $0x10] sm:$0xff] %vm318, 0.0
        %362 = vst.msk [vmem:[#allocation3 + $0x18] sm:$0xff] %vm318, 0.0
        %363 = vst.msk [vmem:[#allocation3 + $0x20] sm:$0xff] %vm318, 0.0
        %364 = vst.msk [vmem:[#allocation3 + $0x28] sm:$0xff] %vm318, 0.0
        %365 = vst.msk [vmem:[#allocation3 + $0x30] sm:$0xff] %vm318, 0.0
        %366 = vst.msk [vmem:[#allocation3 + $0x38] sm:$0xff] %vm318, 0.0
        %367 = vst.msk [vmem:[#allocation3 + $0x40] sm:$0xff] %vm318, 0.0
        %368 = vst.msk [vmem:[#allocation3 + $0x48] sm:$0xff] %vm318, 0.0
        %369 = vst.msk [vmem:[#allocation3 + $0x50] sm:$0xff] %vm318, 0.0
        %370 = vst.msk [vmem:[#allocation3 + $0x58] sm:$0xff] %vm318, 0.0
        %371 = vst.msk [vmem:[#allocation3 + $0x60] sm:$0xff] %vm318, 0.0
        %372 = vst.msk [vmem:[#allocation3 + $0x68] sm:$0xff] %vm318, 0.0
        %373 = vst.msk [vmem:[#allocation3 + $0x70] sm:$0xff] %vm318, 0.0
        %374 = vst.msk [vmem:[#allocation3 + $0x78] sm:$0xff] %vm318, 0.0
        %375 = vst.msk [vmem:[#allocation3 + $0x80] sm:$0xff] %vm318, 0.0
        %376 = vst.msk [vmem:[#allocation3 + $0x88] sm:$0xff] %vm318, 0.0
        %377 = vst.msk [vmem:[#allocation3 + $0x90] sm:$0xff] %vm318, 0.0
        %378 = vst.msk [vmem:[#allocation3 + $0x98] sm:$0xff] %vm318, 0.0
        %379 = vst.msk [vmem:[#allocation3 + $0xa0] sm:$0xff] %vm318, 0.0
        %380 = vst.msk [vmem:[#allocation3 + $0xa8] sm:$0xff] %vm318, 0.0
        %381 = vst.msk [vmem:[#allocation3 + $0xb0] sm:$0xff] %vm318, 0.0
        %382 = vst.msk [vmem:[#allocation3 + $0xb8] sm:$0xff] %vm318, 0.0
        %383 = vst.msk [vmem:[#allocation3 + $0xc0] sm:$0xff] %vm318, 0.0
        %384 = vst.msk [vmem:[#allocation3 + $0xc8] sm:$0xff] %vm318, 0.0
        %385 = vst.msk [vmem:[#allocation3 + $0xd0] sm:$0xff] %vm318, 0.0
        %386 = vst.msk [vmem:[#allocation3 + $0xd8] sm:$0xff] %vm318, 0.0
        %387 = vst.msk [vmem:[#allocation3 + $0xe0] sm:$0xff] %vm318, 0.0
        %388 = vst.msk [vmem:[#allocation3 + $0xe8] sm:$0xff] %vm318, 0.0
        %389 = vst.msk [vmem:[#allocation3 + $0xf0] sm:$0xff] %vm318, 0.0
        %390 = vst.msk [vmem:[#allocation3 + $0xf8] sm:$0xff] %vm318, 0.0
        %391 = vst.msk [vmem:[#allocation3 + $0x100] sm:$0xff] %vm318, 0.0
        %392 = vst.msk [vmem:[#allocation3 + $0x108] sm:$0xff] %vm318, 0.0
        %393 = vst.msk [vmem:[#allocation3 + $0x110] sm:$0xff] %vm318, 0.0
        %394 = vst.msk [vmem:[#allocation3 + $0x118] sm:$0xff] %vm318, 0.0
        %395 = vst.msk [vmem:[#allocation3 + $0x120] sm:$0xff] %vm318, 0.0
        %396 = vst.msk [vmem:[#allocation3 + $0x128] sm:$0xff] %vm318, 0.0
        %397 = vst.msk [vmem:[#allocation3 + $0x130] sm:$0xff] %vm318, 0.0
        %398 = vst.msk [vmem:[#allocation3 + $0x138] sm:$0xff] %vm318, 0.0
        %v399 = vld [vmem:[%s0] sm:$0xff]
        %v400 = vld [vmem:[%s0 + $0x8] sm:$0xff]
        %v401 = vld [vmem:[%s0 + $0x10] sm:$0xff]
        %v402 = vld [vmem:[%s0 + $0x18] sm:$0xff]
        %v403 = vld [vmem:[%s0 + $0x20] sm:$0xff]
        %v404 = vld [vmem:[%s0 + $0x28] sm:$0xff]
        %v405 = vld [vmem:[%s0 + $0x30] sm:$0xff]
        %v406 = vld [vmem:[%s0 + $0x38] sm:$0xff]
        %v407 = vld [vmem:[%s0 + $0x40] sm:$0xff]
        %v408 = vld [vmem:[%s0 + $0x48] sm:$0xff]
        %v409 = vld [vmem:[%s0 + $0x50] sm:$0xff]
        %v410 = vld [vmem:[%s0 + $0x58] sm:$0xff]
        %v411 = vld [vmem:[%s0 + $0x60] sm:$0xff]
        %v412 = vld [vmem:[%s0 + $0x68] sm:$0xff]
        %v413 = vld [vmem:[%s0 + $0x70] sm:$0xff]
        %v414 = vld [vmem:[%s0 + $0x78] sm:$0xff]
        %v415 = vld [vmem:[%s0 + $0x80] sm:$0xff]
        %v416 = vld [vmem:[%s0 + $0x88] sm:$0xff]
        %v417 = vld [vmem:[%s0 + $0x90] sm:$0xff]
        %v418 = vld [vmem:[%s0 + $0x98] sm:$0xff]
        %v419 = vld [vmem:[%s0 + $0xa0] sm:$0xff]
        %v420 = vld [vmem:[%s0 + $0xa8] sm:$0xff]
        %v421 = vld [vmem:[%s0 + $0xb0] sm:$0xff]
        %v422 = vld [vmem:[%s0 + $0xb8] sm:$0xff]
        %v423 = vld [vmem:[%s0 + $0xc0] sm:$0xff]
        %v424 = vld [vmem:[%s0 + $0xc8] sm:$0xff]
        %v425 = vld [vmem:[%s0 + $0xd0] sm:$0xff]
        %v426 = vld [vmem:[%s0 + $0xd8] sm:$0xff]
        %v427 = vld [vmem:[%s0 + $0xe0] sm:$0xff]
        %v428 = vld [vmem:[%s0 + $0xe8] sm:$0xff]
        %v429 = vld [vmem:[%s0 + $0xf0] sm:$0xff]
        %v430 = vld [vmem:[%s0 + $0xf8] sm:$0xff]
        %v431 = vld [vmem:[%s0 + $0x100] sm:$0xff]
        %v432 = vld [vmem:[%s0 + $0x108] sm:$0xff]
        %v433 = vld [vmem:[%s0 + $0x110] sm:$0xff]
        %v434 = vld [vmem:[%s0 + $0x118] sm:$0xff]
        %v435 = vld [vmem:[%s1] sm:$0xff]
        %v436 = vld [vmem:[%s1 + $0x8] sm:$0xff]
        %v437 = vld [vmem:[%s1 + $0x10] sm:$0xff]
        %v438 = vld [vmem:[%s1 + $0x18] sm:$0xff]
        %v440 = vsel %vm318, %v399, 0
        %v443 = vsel %vm318, %v400, 0
        %v446 = vsel %vm318, %v401, 0
        %v449 = vsel %vm318, %v402, 0
        %v452 = vsel %vm318, %v403, 0
        %v455 = vsel %vm318, %v404, 0
        %v458 = vsel %vm318, %v405, 0
        %v461 = vsel %vm318, %v406, 0
        %v464 = vsel %vm318, %v407, 0
        %v467 = vsel %vm318, %v408, 0
        %v470 = vsel %vm318, %v409, 0
        %v473 = vsel %vm318, %v410, 0
        %v476 = vsel %vm318, %v411, 0
        %v479 = vsel %vm318, %v412, 0
        %v482 = vsel %vm318, %v413, 0
        %v485 = vsel %vm318, %v414, 0
        %v488 = vsel %vm318, %v415, 0
        %v491 = vsel %vm318, %v416, 0
        %v494 = vsel %vm318, %v417, 0
        %v497 = vsel %vm318, %v418, 0
        %v500 = vsel %vm318, %v419, 0
        %v503 = vsel %vm318, %v420, 0
        %v506 = vsel %vm318, %v421, 0
        %v509 = vsel %vm318, %v422, 0
        %v512 = vsel %vm318, %v423, 0
        %v515 = vsel %vm318, %v424, 0
        %v518 = vsel %vm318, %v425, 0
        %v521 = vsel %vm318, %v426, 0
        %v524 = vsel %vm318, %v427, 0
        %v527 = vsel %vm318, %v428, 0
        %v530 = vsel %vm318, %v429, 0
        %v533 = vsel %vm318, %v430, 0
        %v536 = vsel %vm318, %v431, 0
        %v539 = vsel %vm318, %v432, 0
        %v542 = vsel %vm318, %v433, 0
        %v545 = vsel %vm318, %v434, 0
        %547 = vmatprep.subr.mxu0 0.0
        %548 = vmatpush1.msra.mxu0 %v435
        %549 = vmatprep.subr.mxu0 0.0
        %550 = vmatpush1.msra.mxu0 %v436
        %551 = vmatprep.subr.mxu0 0.0
        %552 = vmatpush1.msra.mxu0 %v437
        %553 = vmatprep.subr.mxu0 0.0
        %554 = vmatpush1.msra.mxu0 %v438
        %555 = vmatprep.subr.mxu0 0.0
        %556 = vmatpush1.msra.mxu0 0.0
        %557 = vmatprep.subr.mxu0 0.0
        %558 = vmatpush1.msra.mxu0 0.0
        %559 = vmatprep.subr.mxu0 0.0
        %560 = vmatpush1.msra.mxu0 0.0
        %561 = vmatprep.subr.mxu0 0.0
        %562 = vmatpush1.msra.mxu0 0.0
        %563 = vmatprep.subr.mxu0 0.0
        %564 = vmatpush1.msra.mxu0 0.0
        %565 = vmatprep.subr.mxu0 0.0
        %566 = vmatpush1.msra.mxu0 0.0
        %567 = vmatprep.subr.mxu0 0.0
        %568 = vmatpush1.msra.mxu0 0.0
        %569 = vmatprep.subr.mxu0 0.0
        %570 = vmatpush1.msra.mxu0 0.0
        %571 = vmatprep.subr.mxu0 0.0
        %572 = vmatpush1.msra.mxu0 0.0
        %573 = vmatprep.subr.mxu0 0.0
        %574 = vmatpush1.msra.mxu0 0.0
        %575 = vmatprep.subr.mxu0 0.0
        %576 = vmatpush1.msra.mxu0 0.0
        %577 = vmatprep.subr.mxu0 0.0
        %578 = vmatpush1.msra.mxu0 0.0
        %579 = vmatprep.subr.mxu0 0.0
        %580 = vmatpush1.msra.mxu0 0.0
        %581 = vmatprep.subr.mxu0 0.0
        %582 = vmatpush1.msra.mxu0 0.0
        %583 = vmatprep.subr.mxu0 0.0
        %584 = vmatpush1.msra.mxu0 0.0
        %585 = vmatprep.subr.mxu0 0.0
        %586 = vmatpush1.msra.mxu0 0.0
        %587 = vmatprep.subr.mxu0 0.0
        %588 = vmatpush1.msra.mxu0 0.0
        %589 = vmatprep.subr.mxu0 0.0
        %590 = vmatpush1.msra.mxu0 0.0
        %591 = vmatprep.subr.mxu0 0.0
        %592 = vmatpush1.msra.mxu0 0.0
        %593 = vmatprep.subr.mxu0 0.0
        %594 = vmatpush1.msra.mxu0 0.0
        %595 = vmatprep.subr.mxu0 0.0
        %596 = vmatpush1.msra.mxu0 0.0
        %597 = vmatprep.subr.mxu0 0.0
        %598 = vmatpush1.msra.mxu0 0.0
        %599 = vmatprep.subr.mxu0 0.0
        %600 = vmatpush1.msra.mxu0 0.0
        %601 = vmatprep.subr.mxu0 0.0
        %602 = vmatpush1.msra.mxu0 0.0
        %603 = vmatprep.subr.mxu0 0.0
        %604 = vmatpush1.msra.mxu0 0.0
        %605 = vmatprep.subr.mxu0 0.0
        %606 = vmatpush1.msra.mxu0 0.0
        %607 = vmatprep.subr.mxu0 0.0
        %608 = vmatpush1.msra.mxu0 0.0
        %609 = vmatprep.subr.mxu0 0.0
        %610 = vmatpush1.msra.mxu0 0.0
        %611 = vmatprep.mubr.f32.mxu0 0.0
        %612 = vmatmul.mubr.f32.gmra.mrb[0].mxu0 %v440
        %v613 = vpop.f32.mrb[0].mxu0
        %v614 = vadd.f32 0.0, %v613
        %v615 = vpop.f32.mrb[0].mxu0
        %616 = vmatprep.mubr.f32.mxu0 0.0
        %617 = vmatmul.mubr.f32.gmra.mrb[0].mxu0 %v443
        %v618 = vpop.f32.mrb[0].mxu0
        %v619 = vadd.f32 0.0, %v618
        %v620 = vpop.f32.mrb[0].mxu0
        %621 = vmatprep.mubr.f32.mxu0 0.0
        %622 = vmatmul.mubr.f32.gmra.mrb[0].mxu0 %v446
        %v623 = vpop.f32.mrb[0].mxu0
        %v624 = vadd.f32 0.0, %v623
        %v625 = vpop.f32.mrb[0].mxu0
        %626 = vmatprep.mubr.f32.mxu0 0.0
        %627 = vmatmul.mubr.f32.gmra.mrb[0].mxu0 %v449
        %v628 = vpop.f32.mrb[0].mxu0
        %v629 = vadd.f32 0.0, %v628
        %v630 = vpop.f32.mrb[0].mxu0
        %631 = vmatprep.mubr.f32.mxu0 0.0
        %632 = vmatmul.mubr.f32.gmra.mrb[0].mxu0 %v452
        %v633 = vpop.f32.mrb[0].mxu0
        %v634 = vadd.f32 0.0, %v633
        %v635 = vpop.f32.mrb[0].mxu0
        %636 = vmatprep.mubr.f32.mxu0 0.0
        %637 = vmatmul.mubr.f32.gmra.mrb[0].mxu0 %v455
        %v638 = vpop.f32.mrb[0].mxu0
        %v639 = vadd.f32 0.0, %v638
        %v640 = vpop.f32.mrb[0].mxu0
        %641 = vmatprep.mubr.f32.mxu0 0.0
        %642 = vmatmul.mubr.f32.gmra.mrb[0].mxu0 %v458
        %v643 = vpop.f32.mrb[0].mxu0
        %v644 = vadd.f32 0.0, %v643
        %v645 = vpop.f32.mrb[0].mxu0
        %646 = vmatprep.mubr.f32.mxu0 0.0
        %647 = vmatmul.mubr.f32.gmra.mrb[0].mxu0 %v461
        %v648 = vpop.f32.mrb[0].mxu0
        %v649 = vadd.f32 0.0, %v648
        %v650 = vpop.f32.mrb[0].mxu0
        %651 = vmatprep.mubr.f32.mxu0 0.0
        %652 = vmatmul.mubr.f32.gmra.mrb[0].mxu0 %v464
        %v653 = vpop.f32.mrb[0].mxu0
        %v654 = vadd.f32 0.0, %v653
        %v655 = vpop.f32.mrb[0].mxu0
        %656 = vmatprep.mubr.f32.mxu0 0.0
        %657 = vmatmul.mubr.f32.gmra.mrb[0].mxu0 %v467
        %v658 = vpop.f32.mrb[0].mxu0
        %v659 = vadd.f32 0.0, %v658
        %v660 = vpop.f32.mrb[0].mxu0
        %661 = vmatprep.mubr.f32.mxu0 0.0
        %662 = vmatmul.mubr.f32.gmra.mrb[0].mxu0 %v470
        %v663 = vpop.f32.mrb[0].mxu0
        %v664 = vadd.f32 0.0, %v663
        %v665 = vpop.f32.mrb[0].mxu0
        %666 = vmatprep.mubr.f32.mxu0 0.0
        %667 = vmatmul.mubr.f32.gmra.mrb[0].mxu0 %v473
        %v668 = vpop.f32.mrb[0].mxu0
        %v669 = vadd.f32 0.0, %v668
        %v670 = vpop.f32.mrb[0].mxu0
        %671 = vmatprep.mubr.f32.mxu0 0.0
        %672 = vmatmul.mubr.f32.gmra.mrb[0].mxu0 %v476
        %v673 = vpop.f32.mrb[0].mxu0
        %v674 = vadd.f32 0.0, %v673
        %v675 = vpop.f32.mrb[0].mxu0
        %676 = vmatprep.mubr.f32.mxu0 0.0
        %677 = vmatmul.mubr.f32.gmra.mrb[0].mxu0 %v479
        %v678 = vpop.f32.mrb[0].mxu0
        %v679 = vadd.f32 0.0, %v678
        %v680 = vpop.f32.mrb[0].mxu0
        %681 = vmatprep.mubr.f32.mxu0 0.0
        %682 = vmatmul.mubr.f32.gmra.mrb[0].mxu0 %v482
        %v683 = vpop.f32.mrb[0].mxu0
        %v684 = vadd.f32 0.0, %v683
        %v685 = vpop.f32.mrb[0].mxu0
        %686 = vmatprep.mubr.f32.mxu0 0.0
        %687 = vmatmul.mubr.f32.gmra.mrb[0].mxu0 %v485
        %v688 = vpop.f32.mrb[0].mxu0
        %v689 = vadd.f32 0.0, %v688
        %v690 = vpop.f32.mrb[0].mxu0
        %691 = vmatprep.mubr.f32.mxu0 0.0
        %692 = vmatmul.mubr.f32.gmra.mrb[0].mxu0 %v488
        %v693 = vpop.f32.mrb[0].mxu0
        %v694 = vadd.f32 0.0, %v693
        %v695 = vpop.f32.mrb[0].mxu0
        %696 = vmatprep.mubr.f32.mxu0 0.0
        %697 = vmatmul.mubr.f32.gmra.mrb[0].mxu0 %v491
        %v698 = vpop.f32.mrb[0].mxu0
        %v699 = vadd.f32 0.0, %v698
        %v700 = vpop.f32.mrb[0].mxu0
        %701 = vmatprep.mubr.f32.mxu0 0.0
        %702 = vmatmul.mubr.f32.gmra.mrb[0].mxu0 %v494
        %v703 = vpop.f32.mrb[0].mxu0
        %v704 = vadd.f32 0.0, %v703
        %v705 = vpop.f32.mrb[0].mxu0
        %706 = vmatprep.mubr.f32.mxu0 0.0
        %707 = vmatmul.mubr.f32.gmra.mrb[0].mxu0 %v497
        %v708 = vpop.f32.mrb[0].mxu0
        %v709 = vadd.f32 0.0, %v708
        %v710 = vpop.f32.mrb[0].mxu0
        %711 = vmatprep.mubr.f32.mxu0 0.0
        %712 = vmatmul.mubr.f32.gmra.mrb[0].mxu0 %v500
        %v713 = vpop.f32.mrb[0].mxu0
        %v714 = vadd.f32 0.0, %v713
        %v715 = vpop.f32.mrb[0].mxu0
        %716 = vmatprep.mubr.f32.mxu0 0.0
        %717 = vmatmul.mubr.f32.gmra.mrb[0].mxu0 %v503
        %v718 = vpop.f32.mrb[0].mxu0
        %v719 = vadd.f32 0.0, %v718
        %v720 = vpop.f32.mrb[0].mxu0
        %721 = vmatprep.mubr.f32.mxu0 0.0
        %722 = vmatmul.mubr.f32.gmra.mrb[0].mxu0 %v506
        %v723 = vpop.f32.mrb[0].mxu0
        %v724 = vadd.f32 0.0, %v723
        %v725 = vpop.f32.mrb[0].mxu0
        %726 = vmatprep.mubr.f32.mxu0 0.0
        %727 = vmatmul.mubr.f32.gmra.mrb[0].mxu0 %v509
        %v728 = vpop.f32.mrb[0].mxu0
        %v729 = vadd.f32 0.0, %v728
        %v730 = vpop.f32.mrb[0].mxu0
        %731 = vmatprep.mubr.f32.mxu0 0.0
        %732 = vmatmul.mubr.f32.gmra.mrb[0].mxu0 %v512
        %v733 = vpop.f32.mrb[0].mxu0
        %v734 = vadd.f32 0.0, %v733
        %v735 = vpop.f32.mrb[0].mxu0
        %736 = vmatprep.mubr.f32.mxu0 0.0
        %737 = vmatmul.mubr.f32.gmra.mrb[0].mxu0 %v515
        %v738 = vpop.f32.mrb[0].mxu0
        %v739 = vadd.f32 0.0, %v738
        %v740 = vpop.f32.mrb[0].mxu0
        %741 = vmatprep.mubr.f32.mxu0 0.0
        %742 = vmatmul.mubr.f32.gmra.mrb[0].mxu0 %v518
        %v743 = vpop.f32.mrb[0].mxu0
        %v744 = vadd.f32 0.0, %v743
        %v745 = vpop.f32.mrb[0].mxu0
        %746 = vmatprep.mubr.f32.mxu0 0.0
        %747 = vmatmul.mubr.f32.gmra.mrb[0].mxu0 %v521
        %v748 = vpop.f32.mrb[0].mxu0
        %v749 = vadd.f32 0.0, %v748
        %v750 = vpop.f32.mrb[0].mxu0
        %751 = vmatprep.mubr.f32.mxu0 0.0
        %752 = vmatmul.mubr.f32.gmra.mrb[0].mxu0 %v524
        %v753 = vpop.f32.mrb[0].mxu0
        %v754 = vadd.f32 0.0, %v753
        %v755 = vpop.f32.mrb[0].mxu0
        %756 = vmatprep.mubr.f32.mxu0 0.0
        %757 = vmatmul.mubr.f32.gmra.mrb[0].mxu0 %v527
        %v758 = vpop.f32.mrb[0].mxu0
        %v759 = vadd.f32 0.0, %v758
        %v760 = vpop.f32.mrb[0].mxu0
        %761 = vmatprep.mubr.f32.mxu0 0.0
        %762 = vmatmul.mubr.f32.gmra.mrb[0].mxu0 %v530
        %v763 = vpop.f32.mrb[0].mxu0
        %v764 = vadd.f32 0.0, %v763
        %v765 = vpop.f32.mrb[0].mxu0
        %766 = vmatprep.mubr.f32.mxu0 0.0
        %767 = vmatmul.mubr.f32.gmra.mrb[0].mxu0 %v533
        %v768 = vpop.f32.mrb[0].mxu0
        %v769 = vadd.f32 0.0, %v768
        %v770 = vpop.f32.mrb[0].mxu0
        %771 = vmatprep.mubr.f32.mxu0 0.0
        %772 = vmatmul.mubr.f32.gmra.mrb[0].mxu0 %v536
        %v773 = vpop.f32.mrb[0].mxu0
        %v774 = vadd.f32 0.0, %v773
        %v775 = vpop.f32.mrb[0].mxu0
        %776 = vmatprep.mubr.f32.mxu0 0.0
        %777 = vmatmul.mubr.f32.gmra.mrb[0].mxu0 %v539
        %v778 = vpop.f32.mrb[0].mxu0
        %v779 = vadd.f32 0.0, %v778
        %v780 = vpop.f32.mrb[0].mxu0
        %781 = vmatprep.mubr.f32.mxu0 0.0
        %782 = vmatmul.mubr.f32.gmra.mrb[0].mxu0 %v542
        %v783 = vpop.f32.mrb[0].mxu0
        %v784 = vadd.f32 0.0, %v783
        %v785 = vpop.f32.mrb[0].mxu0
        %786 = vmatprep.mubr.f32.mxu0 0.0
        %787 = vmatmul.mubr.f32.gmra.mrb[0].mxu0 %v545
        %v788 = vpop.f32.mrb[0].mxu0
        %v789 = vadd.f32 0.0, %v788
        %v790 = vpop.f32.mrb[0].mxu0
        %791 = vdwg.mxu0
        %v792 = vmax.f32 %v614, 0.0
        %v793 = vmax.f32 %v619, 0.0
        %v794 = vmax.f32 %v624, 0.0
        %v795 = vmax.f32 %v629, 0.0
        %v796 = vmax.f32 %v634, 0.0
        %v797 = vmax.f32 %v639, 0.0
        %v798 = vmax.f32 %v644, 0.0
        %v799 = vmax.f32 %v649, 0.0
        %v800 = vmax.f32 %v654, 0.0
        %v801 = vmax.f32 %v659, 0.0
        %v802 = vmax.f32 %v664, 0.0
        %v803 = vmax.f32 %v669, 0.0
        %v804 = vmax.f32 %v674, 0.0
        %v805 = vmax.f32 %v679, 0.0
        %v806 = vmax.f32 %v684, 0.0
        %v807 = vmax.f32 %v689, 0.0
        %v808 = vmax.f32 %v694, 0.0
        %v809 = vmax.f32 %v699, 0.0
        %v810 = vmax.f32 %v704, 0.0
        %v811 = vmax.f32 %v709, 0.0
        %v812 = vmax.f32 %v714, 0.0
        %v813 = vmax.f32 %v719, 0.0
        %v814 = vmax.f32 %v724, 0.0
        %v815 = vmax.f32 %v729, 0.0
        %v816 = vmax.f32 %v734, 0.0
        %v817 = vmax.f32 %v739, 0.0
        %v818 = vmax.f32 %v744, 0.0
        %v819 = vmax.f32 %v749, 0.0
        %v820 = vmax.f32 %v754, 0.0
        %v821 = vmax.f32 %v759, 0.0
        %v822 = vmax.f32 %v764, 0.0
        %v823 = vmax.f32 %v769, 0.0
        %v824 = vmax.f32 %v774, 0.0
        %v825 = vmax.f32 %v779, 0.0
        %v826 = vmax.f32 %v784, 0.0
        %v827 = vmax.f32 %v789, 0.0
        %828 = vst.msk [vmem:[#allocation2 + $0x10] sm:$0xff] %vm318, %v792
        %829 = vst.msk [vmem:[#allocation2 + $0x18] sm:$0xff] %vm318, %v793
        %830 = vst.msk [vmem:[#allocation2 + $0x20] sm:$0xff] %vm318, %v794
        %831 = vst.msk [vmem:[#allocation2 + $0x28] sm:$0xff] %vm318, %v795
        %832 = vst.msk [vmem:[#allocation2 + $0x30] sm:$0xff] %vm318, %v796
        %833 = vst.msk [vmem:[#allocation2 + $0x38] sm:$0xff] %vm318, %v797
        %834 = vst.msk [vmem:[#allocation2 + $0x40] sm:$0xff] %vm318, %v798
        %835 = vst.msk [vmem:[#allocation2 + $0x48] sm:$0xff] %vm318, %v799
        %836 = vst.msk [vmem:[#allocation2 + $0x50] sm:$0xff] %vm318, %v800
        %837 = vst.msk [vmem:[#allocation2 + $0x58] sm:$0xff] %vm318, %v801
        %838 = vst.msk [vmem:[#allocation2 + $0x60] sm:$0xff] %vm318, %v802
        %839 = vst.msk [vmem:[#allocation2 + $0x68] sm:$0xff] %vm318, %v803
        %840 = vst.msk [vmem:[#allocation2 + $0x70] sm:$0xff] %vm318, %v804
        %841 = vst.msk [vmem:[#allocation2 + $0x78] sm:$0xff] %vm318, %v805
        %842 = vst.msk [vmem:[#allocation2 + $0x80] sm:$0xff] %vm318, %v806
        %843 = vst.msk [vmem:[#allocation2 + $0x88] sm:$0xff] %vm318, %v807
        %844 = vst.msk [vmem:[#allocation2 + $0x90] sm:$0xff] %vm318, %v808
        %845 = vst.msk [vmem:[#allocation2 + $0x98] sm:$0xff] %vm318, %v809
        %846 = vst.msk [vmem:[#allocation2 + $0xa0] sm:$0xff] %vm318, %v810
        %847 = vst.msk [vmem:[#allocation2 + $0xa8] sm:$0xff] %vm318, %v811
        %848 = vst.msk [vmem:[#allocation2 + $0xb0] sm:$0xff] %vm318, %v812
        %849 = vst.msk [vmem:[#allocation2 + $0xb8] sm:$0xff] %vm318, %v813
        %850 = vst.msk [vmem:[#allocation2 + $0xc0] sm:$0xff] %vm318, %v814
        %851 = vst.msk [vmem:[#allocation2 + $0xc8] sm:$0xff] %vm318, %v815
        %852 = vst.msk [vmem:[#allocation2 + $0xd0] sm:$0xff] %vm318, %v816
        %853 = vst.msk [vmem:[#allocation2 + $0xd8] sm:$0xff] %vm318, %v817
        %854 = vst.msk [vmem:[#allocation2 + $0xe0] sm:$0xff] %vm318, %v818
        %855 = vst.msk [vmem:[#allocation2 + $0xe8] sm:$0xff] %vm318, %v819
        %856 = vst.msk [vmem:[#allocation2 + $0xf0] sm:$0xff] %vm318, %v820
        %857 = vst.msk [vmem:[#allocation2 + $0xf8] sm:$0xff] %vm318, %v821
        %858 = vst.msk [vmem:[#allocation2 + $0x100] sm:$0xff] %vm318, %v822
        %859 = vst.msk [vmem:[#allocation2 + $0x108] sm:$0xff] %vm318, %v823
        %860 = vst.msk [vmem:[#allocation2 + $0x110] sm:$0xff] %vm318, %v824
        %861 = vst.msk [vmem:[#allocation2 + $0x118] sm:$0xff] %vm318, %v825
        %862 = vst.msk [vmem:[#allocation2 + $0x120] sm:$0xff] %vm318, %v826
        %863 = vst.msk [vmem:[#allocation2 + $0x128] sm:$0xff] %vm318, %v827
        %v864 = vld [vmem:[#allocation2 + $0x10] sm:$0xff]
        %v865 = vld [vmem:[#allocation2 + $0x18] sm:$0xff]
        %v866 = vld [vmem:[#allocation2 + $0x20] sm:$0xff]
        %v867 = vld [vmem:[#allocation2 + $0x28] sm:$0xff]
        %v868 = vld [vmem:[#allocation2 + $0x30] sm:$0xff]
        %v869 = vld [vmem:[#allocation2 + $0x38] sm:$0xff]
        %v870 = vld [vmem:[#allocation2 + $0x40] sm:$0xff]
        %v871 = vld [vmem:[#allocation2 + $0x48] sm:$0xff]
        %v872 = vld [vmem:[#allocation2 + $0x50] sm:$0xff]
        %v873 = vld [vmem:[#allocation2 + $0x58] sm:$0xff]
        %v874 = vld [vmem:[#allocation2 + $0x60] sm:$0xff]
        %v875 = vld [vmem:[#allocation2 + $0x68] sm:$0xff]
        %v876 = vld [vmem:[#allocation2 + $0x70] sm:$0xff]
        %v877 = vld [vmem:[#allocation2 + $0x78] sm:$0xff]
        %v878 = vld [vmem:[#allocation2 + $0x80] sm:$0xff]
        %v879 = vld [vmem:[#allocation2 + $0x88] sm:$0xff]
        %v880 = vld [vmem:[#allocation2 + $0x90] sm:$0xff]
        %v881 = vld [vmem:[#allocation2 + $0x98] sm:$0xff]
        %v882 = vld [vmem:[#allocation2 + $0xa0] sm:$0xff]
        %v883 = vld [vmem:[#allocation2 + $0xa8] sm:$0xff]
        %v884 = vld [vmem:[#allocation2 + $0xb0] sm:$0xff]
        %v885 = vld [vmem:[#allocation2 + $0xb8] sm:$0xff]
        %v886 = vld [vmem:[#allocation2 + $0xc0] sm:$0xff]
        %v887 = vld [vmem:[#allocation2 + $0xc8] sm:$0xff]
        %v888 = vld [vmem:[#allocation2 + $0xd0] sm:$0xff]
        %v889 = vld [vmem:[#allocation2 + $0xd8] sm:$0xff]
        %v890 = vld [vmem:[#allocation2 + $0xe0] sm:$0xff]
        %v891 = vld [vmem:[#allocation2 + $0xe8] sm:$0xff]
        %v892 = vld [vmem:[#allocation2 + $0xf0] sm:$0xff]
        %v893 = vld [vmem:[#allocation2 + $0xf8] sm:$0xff]
        %v894 = vld [vmem:[#allocation2 + $0x100] sm:$0xff]
        %v895 = vld [vmem:[#allocation2 + $0x108] sm:$0xff]
        %v896 = vld [vmem:[#allocation2 + $0x110] sm:$0xff]
        %v897 = vld [vmem:[#allocation2 + $0x118] sm:$0xff]
        %v898 = vld [vmem:[#allocation2 + $0x120] sm:$0xff]
        %v899 = vld [vmem:[#allocation2 + $0x128] sm:$0xff]
        %v900 = vld [vmem:[%s2] sm:$0xff]
        %v901 = vld [vmem:[%s2 + $0x8] sm:$0xff]
        %v902 = vld [vmem:[%s2 + $0x10] sm:$0xff]
        %v903 = vld [vmem:[%s2 + $0x18] sm:$0xff]
        %v904 = vld [vmem:[%s3] sm:$0x1]
        %v906 = vlaneseq
        %v907 = vshrl.u32 %v906, 7
        %v908 = vsub.s32 0, %v907
        %v909 = vrot.slane %v904, %v908
        %v912 = vsel %vm318, %v864, 0
        %v915 = vsel %vm318, %v865, 0
        %v918 = vsel %vm318, %v866, 0
        %v921 = vsel %vm318, %v867, 0
        %v924 = vsel %vm318, %v868, 0
        %v927 = vsel %vm318, %v869, 0
        %v930 = vsel %vm318, %v870, 0
        %v933 = vsel %vm318, %v871, 0
        %v936 = vsel %vm318, %v872, 0
        %v939 = vsel %vm318, %v873, 0
        %v942 = vsel %vm318, %v874, 0
        %v945 = vsel %vm318, %v875, 0
        %v948 = vsel %vm318, %v876, 0
        %v951 = vsel %vm318, %v877, 0
        %v954 = vsel %vm318, %v878, 0
        %v957 = vsel %vm318, %v879, 0
        %v960 = vsel %vm318, %v880, 0
        %v963 = vsel %vm318, %v881, 0
        %v966 = vsel %vm318, %v882, 0
        %v969 = vsel %vm318, %v883, 0
        %v972 = vsel %vm318, %v884, 0
        %v975 = vsel %vm318, %v885, 0
        %v978 = vsel %vm318, %v886, 0
        %v981 = vsel %vm318, %v887, 0
        %v984 = vsel %vm318, %v888, 0
        %v987 = vsel %vm318, %v889, 0
        %v990 = vsel %vm318, %v890, 0
        %v993 = vsel %vm318, %v891, 0
        %v996 = vsel %vm318, %v892, 0
        %v999 = vsel %vm318, %v893, 0
        %v1002 = vsel %vm318, %v894, 0
        %v1005 = vsel %vm318, %v895, 0
        %v1008 = vsel %vm318, %v896, 0
        %v1011 = vsel %vm318, %v897, 0
        %v1014 = vsel %vm318, %v898, 0
        %v1017 = vsel %vm318, %v899, 0
        %1019 = vmatprep.subr.mxu0 0.0
        %1020 = vmatpush1.msra.mxu0 %v900
        %1021 = vmatprep.subr.mxu0 0.0
        %1022 = vmatpush1.msra.mxu0 %v901
        %1023 = vmatprep.subr.mxu0 0.0
        %1024 = vmatpush1.msra.mxu0 %v902
        %1025 = vmatprep.subr.mxu0 0.0
        %1026 = vmatpush1.msra.mxu0 %v903
        %1027 = vmatprep.subr.mxu0 0.0
        %1028 = vmatpush1.msra.mxu0 0.0
        %1029 = vmatprep.subr.mxu0 0.0
        %1030 = vmatpush1.msra.mxu0 0.0
        %1031 = vmatprep.subr.mxu0 0.0
        %1032 = vmatpush1.msra.mxu0 0.0
        %1033 = vmatprep.subr.mxu0 0.0
        %1034 = vmatpush1.msra.mxu0 0.0
        %1035 = vmatprep.subr.mxu0 0.0
        %1036 = vmatpush1.msra.mxu0 0.0
        %1037 = vmatprep.subr.mxu0 0.0
        %1038 = vmatpush1.msra.mxu0 0.0
        %1039 = vmatprep.subr.mxu0 0.0
        %1040 = vmatpush1.msra.mxu0 0.0
        %1041 = vmatprep.subr.mxu0 0.0
        %1042 = vmatpush1.msra.mxu0 0.0
        %1043 = vmatprep.subr.mxu0 0.0
        %1044 = vmatpush1.msra.mxu0 0.0
        %1045 = vmatprep.subr.mxu0 0.0
        %1046 = vmatpush1.msra.mxu0 0.0
        %1047 = vmatprep.subr.mxu0 0.0
        %1048 = vmatpush1.msra.mxu0 0.0
        %1049 = vmatprep.subr.mxu0 0.0
        %1050 = vmatpush1.msra.mxu0 0.0
        %1051 = vmatprep.subr.mxu0 0.0
        %1052 = vmatpush1.msra.mxu0 0.0
        %1053 = vmatprep.subr.mxu0 0.0
        %1054 = vmatpush1.msra.mxu0 0.0
        %1055 = vmatprep.subr.mxu0 0.0
        %1056 = vmatpush1.msra.mxu0 0.0
        %1057 = vmatprep.subr.mxu0 0.0
        %1058 = vmatpush1.msra.mxu0 0.0
        %1059 = vmatprep.subr.mxu0 0.0
        %1060 = vmatpush1.msra.mxu0 0.0
        %1061 = vmatprep.subr.mxu0 0.0
        %1062 = vmatpush1.msra.mxu0 0.0
        %1063 = vmatprep.subr.mxu0 0.0
        %1064 = vmatpush1.msra.mxu0 0.0
        %1065 = vmatprep.subr.mxu0 0.0
        %1066 = vmatpush1.msra.mxu0 0.0
        %1067 = vmatprep.subr.mxu0 0.0
        %1068 = vmatpush1.msra.mxu0 0.0
        %1069 = vmatprep.subr.mxu0 0.0
        %1070 = vmatpush1.msra.mxu0 0.0
        %1071 = vmatprep.subr.mxu0 0.0
        %1072 = vmatpush1.msra.mxu0 0.0
        %1073 = vmatprep.subr.mxu0 0.0
        %1074 = vmatpush1.msra.mxu0 0.0
        %1075 = vmatprep.subr.mxu0 0.0
        %1076 = vmatpush1.msra.mxu0 0.0
        %1077 = vmatprep.subr.mxu0 0.0
        %1078 = vmatpush1.msra.mxu0 0.0
        %1079 = vmatprep.subr.mxu0 0.0
        %1080 = vmatpush1.msra.mxu0 0.0
        %1081 = vmatprep.subr.mxu0 0.0
        %1082 = vmatpush1.msra.mxu0 0.0
        %1083 = vmatprep.mubr.f32.mxu0 0.0
        %1084 = vmatmul.mubr.f32.gmra.mrb[0].mxu0 %v912
        %v1085 = vpop.f32.mrb[0].mxu0
        %v1086 = vadd.f32 %v909, %v1085
        %v1087 = vpop.f32.mrb[0].mxu0
        %1088 = vmatprep.mubr.f32.mxu0 0.0
        %1089 = vmatmul.mubr.f32.gmra.mrb[0].mxu0 %v915
        %v1090 = vpop.f32.mrb[0].mxu0
        %v1091 = vadd.f32 %v909, %v1090
        %v1092 = vpop.f32.mrb[0].mxu0
        %1093 = vmatprep.mubr.f32.mxu0 0.0
        %1094 = vmatmul.mubr.f32.gmra.mrb[0].mxu0 %v918
        %v1095 = vpop.f32.mrb[0].mxu0
        %v1096 = vadd.f32 %v909, %v1095
        %v1097 = vpop.f32.mrb[0].mxu0
        %1098 = vmatprep.mubr.f32.mxu0 0.0
        %1099 = vmatmul.mubr.f32.gmra.mrb[0].mxu0 %v921
        %v1100 = vpop.f32.mrb[0].mxu0
        %v1101 = vadd.f32 %v909, %v1100
        %v1102 = vpop.f32.mrb[0].mxu0
        %1103 = vmatprep.mubr.f32.mxu0 0.0
        %1104 = vmatmul.mubr.f32.gmra.mrb[0].mxu0 %v924
        %v1105 = vpop.f32.mrb[0].mxu0
        %v1106 = vadd.f32 %v909, %v1105
        %v1107 = vpop.f32.mrb[0].mxu0
        %1108 = vmatprep.mubr.f32.mxu0 0.0
        %1109 = vmatmul.mubr.f32.gmra.mrb[0].mxu0 %v927
        %v1110 = vpop.f32.mrb[0].mxu0
        %v1111 = vadd.f32 %v909, %v1110
        %v1112 = vpop.f32.mrb[0].mxu0
        %1113 = vmatprep.mubr.f32.mxu0 0.0
        %1114 = vmatmul.mubr.f32.gmra.mrb[0].mxu0 %v930
        %v1115 = vpop.f32.mrb[0].mxu0
        %v1116 = vadd.f32 %v909, %v1115
        %v1117 = vpop.f32.mrb[0].mxu0
        %1118 = vmatprep.mubr.f32.mxu0 0.0
        %1119 = vmatmul.mubr.f32.gmra.mrb[0].mxu0 %v933
        %v1120 = vpop.f32.mrb[0].mxu0
        %v1121 = vadd.f32 %v909, %v1120
        %v1122 = vpop.f32.mrb[0].mxu0
        %1123 = vmatprep.mubr.f32.mxu0 0.0
        %1124 = vmatmul.mubr.f32.gmra.mrb[0].mxu0 %v936
        %v1125 = vpop.f32.mrb[0].mxu0
        %v1126 = vadd.f32 %v909, %v1125
        %v1127 = vpop.f32.mrb[0].mxu0
        %1128 = vmatprep.mubr.f32.mxu0 0.0
        %1129 = vmatmul.mubr.f32.gmra.mrb[0].mxu0 %v939
        %v1130 = vpop.f32.mrb[0].mxu0
        %v1131 = vadd.f32 %v909, %v1130
        %v1132 = vpop.f32.mrb[0].mxu0
        %1133 = vmatprep.mubr.f32.mxu0 0.0
        %1134 = vmatmul.mubr.f32.gmra.mrb[0].mxu0 %v942
        %v1135 = vpop.f32.mrb[0].mxu0
        %v1136 = vadd.f32 %v909, %v1135
        %v1137 = vpop.f32.mrb[0].mxu0
        %1138 = vmatprep.mubr.f32.mxu0 0.0
        %1139 = vmatmul.mubr.f32.gmra.mrb[0].mxu0 %v945
        %v1140 = vpop.f32.mrb[0].mxu0
        %v1141 = vadd.f32 %v909, %v1140
        %v1142 = vpop.f32.mrb[0].mxu0
        %1143 = vmatprep.mubr.f32.mxu0 0.0
        %1144 = vmatmul.mubr.f32.gmra.mrb[0].mxu0 %v948
        %v1145 = vpop.f32.mrb[0].mxu0
        %v1146 = vadd.f32 %v909, %v1145
        %v1147 = vpop.f32.mrb[0].mxu0
        %1148 = vmatprep.mubr.f32.mxu0 0.0
        %1149 = vmatmul.mubr.f32.gmra.mrb[0].mxu0 %v951
        %v1150 = vpop.f32.mrb[0].mxu0
        %v1151 = vadd.f32 %v909, %v1150
        %v1152 = vpop.f32.mrb[0].mxu0
        %1153 = vmatprep.mubr.f32.mxu0 0.0
        %1154 = vmatmul.mubr.f32.gmra.mrb[0].mxu0 %v954
        %v1155 = vpop.f32.mrb[0].mxu0
        %v1156 = vadd.f32 %v909, %v1155
        %v1157 = vpop.f32.mrb[0].mxu0
        %1158 = vmatprep.mubr.f32.mxu0 0.0
        %1159 = vmatmul.mubr.f32.gmra.mrb[0].mxu0 %v957
        %v1160 = vpop.f32.mrb[0].mxu0
        %v1161 = vadd.f32 %v909, %v1160
        %v1162 = vpop.f32.mrb[0].mxu0
        %1163 = vmatprep.mubr.f32.mxu0 0.0
        %1164 = vmatmul.mubr.f32.gmra.mrb[0].mxu0 %v960
        %v1165 = vpop.f32.mrb[0].mxu0
        %v1166 = vadd.f32 %v909, %v1165
        %v1167 = vpop.f32.mrb[0].mxu0
        %1168 = vmatprep.mubr.f32.mxu0 0.0
        %1169 = vmatmul.mubr.f32.gmra.mrb[0].mxu0 %v963
        %v1170 = vpop.f32.mrb[0].mxu0
        %v1171 = vadd.f32 %v909, %v1170
        %v1172 = vpop.f32.mrb[0].mxu0
        %1173 = vmatprep.mubr.f32.mxu0 0.0
        %1174 = vmatmul.mubr.f32.gmra.mrb[0].mxu0 %v966
        %v1175 = vpop.f32.mrb[0].mxu0
        %v1176 = vadd.f32 %v909, %v1175
        %v1177 = vpop.f32.mrb[0].mxu0
        %1178 = vmatprep.mubr.f32.mxu0 0.0
        %1179 = vmatmul.mubr.f32.gmra.mrb[0].mxu0 %v969
        %v1180 = vpop.f32.mrb[0].mxu0
        %v1181 = vadd.f32 %v909, %v1180
        %v1182 = vpop.f32.mrb[0].mxu0
        %1183 = vmatprep.mubr.f32.mxu0 0.0
        %1184 = vmatmul.mubr.f32.gmra.mrb[0].mxu0 %v972
        %v1185 = vpop.f32.mrb[0].mxu0
        %v1186 = vadd.f32 %v909, %v1185
        %v1187 = vpop.f32.mrb[0].mxu0
        %1188 = vmatprep.mubr.f32.mxu0 0.0
        %1189 = vmatmul.mubr.f32.gmra.mrb[0].mxu0 %v975
        %v1190 = vpop.f32.mrb[0].mxu0
        %v1191 = vadd.f32 %v909, %v1190
        %v1192 = vpop.f32.mrb[0].mxu0
        %1193 = vmatprep.mubr.f32.mxu0 0.0
        %1194 = vmatmul.mubr.f32.gmra.mrb[0].mxu0 %v978
        %v1195 = vpop.f32.mrb[0].mxu0
        %v1196 = vadd.f32 %v909, %v1195
        %v1197 = vpop.f32.mrb[0].mxu0
        %1198 = vmatprep.mubr.f32.mxu0 0.0
        %1199 = vmatmul.mubr.f32.gmra.mrb[0].mxu0 %v981
        %v1200 = vpop.f32.mrb[0].mxu0
        %v1201 = vadd.f32 %v909, %v1200
        %v1202 = vpop.f32.mrb[0].mxu0
        %1203 = vmatprep.mubr.f32.mxu0 0.0
        %1204 = vmatmul.mubr.f32.gmra.mrb[0].mxu0 %v984
        %v1205 = vpop.f32.mrb[0].mxu0
        %v1206 = vadd.f32 %v909, %v1205
        %v1207 = vpop.f32.mrb[0].mxu0
        %1208 = vmatprep.mubr.f32.mxu0 0.0
        %1209 = vmatmul.mubr.f32.gmra.mrb[0].mxu0 %v987
        %v1210 = vpop.f32.mrb[0].mxu0
        %v1211 = vadd.f32 %v909, %v1210
        %v1212 = vpop.f32.mrb[0].mxu0
        %1213 = vmatprep.mubr.f32.mxu0 0.0
        %1214 = vmatmul.mubr.f32.gmra.mrb[0].mxu0 %v990
        %v1215 = vpop.f32.mrb[0].mxu0
        %v1216 = vadd.f32 %v909, %v1215
        %v1217 = vpop.f32.mrb[0].mxu0
        %1218 = vmatprep.mubr.f32.mxu0 0.0
        %1219 = vmatmul.mubr.f32.gmra.mrb[0].mxu0 %v993
        %v1220 = vpop.f32.mrb[0].mxu0
        %v1221 = vadd.f32 %v909, %v1220
        %v1222 = vpop.f32.mrb[0].mxu0
        %1223 = vmatprep.mubr.f32.mxu0 0.0
        %1224 = vmatmul.mubr.f32.gmra.mrb[0].mxu0 %v996
        %v1225 = vpop.f32.mrb[0].mxu0
        %v1226 = vadd.f32 %v909, %v1225
        %v1227 = vpop.f32.mrb[0].mxu0
        %1228 = vmatprep.mubr.f32.mxu0 0.0
        %1229 = vmatmul.mubr.f32.gmra.mrb[0].mxu0 %v999
        %v1230 = vpop.f32.mrb[0].mxu0
        %v1231 = vadd.f32 %v909, %v1230
        %v1232 = vpop.f32.mrb[0].mxu0
        %1233 = vmatprep.mubr.f32.mxu0 0.0
        %1234 = vmatmul.mubr.f32.gmra.mrb[0].mxu0 %v1002
        %v1235 = vpop.f32.mrb[0].mxu0
        %v1236 = vadd.f32 %v909, %v1235
        %v1237 = vpop.f32.mrb[0].mxu0
        %1238 = vmatprep.mubr.f32.mxu0 0.0
        %1239 = vmatmul.mubr.f32.gmra.mrb[0].mxu0 %v1005
        %v1240 = vpop.f32.mrb[0].mxu0
        %v1241 = vadd.f32 %v909, %v1240
        %v1242 = vpop.f32.mrb[0].mxu0
        %1243 = vmatprep.mubr.f32.mxu0 0.0
        %1244 = vmatmul.mubr.f32.gmra.mrb[0].mxu0 %v1008
        %v1245 = vpop.f32.mrb[0].mxu0
        %v1246 = vadd.f32 %v909, %v1245
        %v1247 = vpop.f32.mrb[0].mxu0
        %1248 = vmatprep.mubr.f32.mxu0 0.0
        %1249 = vmatmul.mubr.f32.gmra.mrb[0].mxu0 %v1011
        %v1250 = vpop.f32.mrb[0].mxu0
        %v1251 = vadd.f32 %v909, %v1250
        %v1252 = vpop.f32.mrb[0].mxu0
        %1253 = vmatprep.mubr.f32.mxu0 0.0
        %1254 = vmatmul.mubr.f32.gmra.mrb[0].mxu0 %v1014
        %v1255 = vpop.f32.mrb[0].mxu0
        %v1256 = vadd.f32 %v909, %v1255
        %v1257 = vpop.f32.mrb[0].mxu0
        %1258 = vmatprep.mubr.f32.mxu0 0.0
        %1259 = vmatmul.mubr.f32.gmra.mrb[0].mxu0 %v1017
        %v1260 = vpop.f32.mrb[0].mxu0
        %v1261 = vadd.f32 %v909, %v1260
        %v1262 = vpop.f32.mrb[0].mxu0
        %1263 = vdwg.mxu0
        %v1264 = vmax.f32 %v1086, 0.0
        %v1265 = vmax.f32 %v1091, 0.0
        %v1266 = vmax.f32 %v1096, 0.0
        %v1267 = vmax.f32 %v1101, 0.0
        %v1268 = vmax.f32 %v1106, 0.0
        %v1269 = vmax.f32 %v1111, 0.0
        %v1270 = vmax.f32 %v1116, 0.0
        %v1271 = vmax.f32 %v1121, 0.0
        %v1272 = vmax.f32 %v1126, 0.0
        %v1273 = vmax.f32 %v1131, 0.0
        %v1274 = vmax.f32 %v1136, 0.0
        %v1275 = vmax.f32 %v1141, 0.0
        %v1276 = vmax.f32 %v1146, 0.0
        %v1277 = vmax.f32 %v1151, 0.0
        %v1278 = vmax.f32 %v1156, 0.0
        %v1279 = vmax.f32 %v1161, 0.0
        %v1280 = vmax.f32 %v1166, 0.0
        %v1281 = vmax.f32 %v1171, 0.0
        %v1282 = vmax.f32 %v1176, 0.0
        %v1283 = vmax.f32 %v1181, 0.0
        %v1284 = vmax.f32 %v1186, 0.0
        %v1285 = vmax.f32 %v1191, 0.0
        %v1286 = vmax.f32 %v1196, 0.0
        %v1287 = vmax.f32 %v1201, 0.0
        %v1288 = vmax.f32 %v1206, 0.0
        %v1289 = vmax.f32 %v1211, 0.0
        %v1290 = vmax.f32 %v1216, 0.0
        %v1291 = vmax.f32 %v1221, 0.0
        %v1292 = vmax.f32 %v1226, 0.0
        %v1293 = vmax.f32 %v1231, 0.0
        %v1294 = vmax.f32 %v1236, 0.0
        %v1295 = vmax.f32 %v1241, 0.0
        %v1296 = vmax.f32 %v1246, 0.0
        %v1297 = vmax.f32 %v1251, 0.0
        %v1298 = vmax.f32 %v1256, 0.0
        %v1299 = vmax.f32 %v1261, 0.0
        %1301 = vset.pattern.permute.xlu0 0
        %1302 = vperm.xlu0 %1301, %v278
        %v1303 = vpop.permute.xlu0 %1302
        %1306 = vset.pattern.permute.xlu0 0
        %1307 = vperm.xlu0 %1306, %v279
        %v1308 = vpop.permute.xlu0 %1307
        %1311 = vset.pattern.permute.xlu0 0
        %1312 = vperm.xlu0 %1311, %v280
        %v1313 = vpop.permute.xlu0 %1312
        %1316 = vset.pattern.permute.xlu0 0
        %1317 = vperm.xlu0 %1316, %v281
        %v1318 = vpop.permute.xlu0 %1317
        %1321 = vset.pattern.permute.xlu0 0
        %1322 = vperm.xlu0 %1321, %v282
        %v1323 = vpop.permute.xlu0 %1322
        %1326 = vset.pattern.permute.xlu0 0
        %1327 = vperm.xlu0 %1326, %v283
        %v1328 = vpop.permute.xlu0 %1327
        %1331 = vset.pattern.permute.xlu0 0
        %1332 = vperm.xlu0 %1331, %v284
        %v1333 = vpop.permute.xlu0 %1332
        %1336 = vset.pattern.permute.xlu0 0
        %1337 = vperm.xlu0 %1336, %v285
        %v1338 = vpop.permute.xlu0 %1337
        %1341 = vset.pattern.permute.xlu0 0
        %1342 = vperm.xlu0 %1341, %v286
        %v1343 = vpop.permute.xlu0 %1342
        %1346 = vset.pattern.permute.xlu0 0
        %1347 = vperm.xlu0 %1346, %v287
        %v1348 = vpop.permute.xlu0 %1347
        %1351 = vset.pattern.permute.xlu0 0
        %1352 = vperm.xlu0 %1351, %v288
        %v1353 = vpop.permute.xlu0 %1352
        %1356 = vset.pattern.permute.xlu0 0
        %1357 = vperm.xlu0 %1356, %v289
        %v1358 = vpop.permute.xlu0 %1357
        %1361 = vset.pattern.permute.xlu0 0
        %1362 = vperm.xlu0 %1361, %v290
        %v1363 = vpop.permute.xlu0 %1362
        %1366 = vset.pattern.permute.xlu0 0
        %1367 = vperm.xlu0 %1366, %v291
        %v1368 = vpop.permute.xlu0 %1367
        %1371 = vset.pattern.permute.xlu0 0
        %1372 = vperm.xlu0 %1371, %v292
        %v1373 = vpop.permute.xlu0 %1372
        %1376 = vset.pattern.permute.xlu0 0
        %1377 = vperm.xlu0 %1376, %v293
        %v1378 = vpop.permute.xlu0 %1377
        %1381 = vset.pattern.permute.xlu0 0
        %1382 = vperm.xlu0 %1381, %v294
        %v1383 = vpop.permute.xlu0 %1382
        %1386 = vset.pattern.permute.xlu0 0
        %1387 = vperm.xlu0 %1386, %v295
        %v1388 = vpop.permute.xlu0 %1387
        %1391 = vset.pattern.permute.xlu0 0
        %1392 = vperm.xlu0 %1391, %v296
        %v1393 = vpop.permute.xlu0 %1392
        %1396 = vset.pattern.permute.xlu0 0
        %1397 = vperm.xlu0 %1396, %v297
        %v1398 = vpop.permute.xlu0 %1397
        %1401 = vset.pattern.permute.xlu0 0
        %1402 = vperm.xlu0 %1401, %v298
        %v1403 = vpop.permute.xlu0 %1402
        %1406 = vset.pattern.permute.xlu0 0
        %1407 = vperm.xlu0 %1406, %v299
        %v1408 = vpop.permute.xlu0 %1407
        %1411 = vset.pattern.permute.xlu0 0
        %1412 = vperm.xlu0 %1411, %v300
        %v1413 = vpop.permute.xlu0 %1412
        %1416 = vset.pattern.permute.xlu0 0
        %1417 = vperm.xlu0 %1416, %v301
        %v1418 = vpop.permute.xlu0 %1417
        %1421 = vset.pattern.permute.xlu0 0
        %1422 = vperm.xlu0 %1421, %v302
        %v1423 = vpop.permute.xlu0 %1422
        %1426 = vset.pattern.permute.xlu0 0
        %1427 = vperm.xlu0 %1426, %v303
        %v1428 = vpop.permute.xlu0 %1427
        %1431 = vset.pattern.permute.xlu0 0
        %1432 = vperm.xlu0 %1431, %v304
        %v1433 = vpop.permute.xlu0 %1432
        %1436 = vset.pattern.permute.xlu0 0
        %1437 = vperm.xlu0 %1436, %v305
        %v1438 = vpop.permute.xlu0 %1437
        %1441 = vset.pattern.permute.xlu0 0
        %1442 = vperm.xlu0 %1441, %v306
        %v1443 = vpop.permute.xlu0 %1442
        %1446 = vset.pattern.permute.xlu0 0
        %1447 = vperm.xlu0 %1446, %v307
        %v1448 = vpop.permute.xlu0 %1447
        %1451 = vset.pattern.permute.xlu0 0
        %1452 = vperm.xlu0 %1451, %v308
        %v1453 = vpop.permute.xlu0 %1452
        %1456 = vset.pattern.permute.xlu0 0
        %1457 = vperm.xlu0 %1456, %v309
        %v1458 = vpop.permute.xlu0 %1457
        %1461 = vset.pattern.permute.xlu0 0
        %1462 = vperm.xlu0 %1461, %v310
        %v1463 = vpop.permute.xlu0 %1462
        %1466 = vset.pattern.permute.xlu0 0
        %1467 = vperm.xlu0 %1466, %v311
        %v1468 = vpop.permute.xlu0 %1467
        %1471 = vset.pattern.permute.xlu0 0
        %1472 = vperm.xlu0 %1471, %v312
        %v1473 = vpop.permute.xlu0 %1472
        %1476 = vset.pattern.permute.xlu0 0
        %1477 = vperm.xlu0 %1476, %v313
        %v1478 = vpop.permute.xlu0 %1477
        %v1480 = vmul.f32 %v1264, %v1303
        %v1481 = vmul.f32 %v1265, %v1308
        %v1482 = vmul.f32 %v1266, %v1313
        %v1483 = vmul.f32 %v1267, %v1318
        %v1484 = vmul.f32 %v1268, %v1323
        %v1485 = vmul.f32 %v1269, %v1328
        %v1486 = vmul.f32 %v1270, %v1333
        %v1487 = vmul.f32 %v1271, %v1338
        %v1488 = vmul.f32 %v1272, %v1343
        %v1489 = vmul.f32 %v1273, %v1348
        %v1490 = vmul.f32 %v1274, %v1353
        %v1491 = vmul.f32 %v1275, %v1358
        %v1492 = vmul.f32 %v1276, %v1363
        %v1493 = vmul.f32 %v1277, %v1368
        %v1494 = vmul.f32 %v1278, %v1373
        %v1495 = vmul.f32 %v1279, %v1378
        %v1496 = vmul.f32 %v1280, %v1383
        %v1497 = vmul.f32 %v1281, %v1388
        %v1498 = vmul.f32 %v1282, %v1393
        %v1499 = vmul.f32 %v1283, %v1398
        %v1500 = vmul.f32 %v1284, %v1403
        %v1501 = vmul.f32 %v1285, %v1408
        %v1502 = vmul.f32 %v1286, %v1413
        %v1503 = vmul.f32 %v1287, %v1418
        %v1504 = vmul.f32 %v1288, %v1423
        %v1505 = vmul.f32 %v1289, %v1428
        %v1506 = vmul.f32 %v1290, %v1433
        %v1507 = vmul.f32 %v1291, %v1438
        %v1508 = vmul.f32 %v1292, %v1443
        %v1509 = vmul.f32 %v1293, %v1448
        %v1510 = vmul.f32 %v1294, %v1453
        %v1511 = vmul.f32 %v1295, %v1458
        %v1512 = vmul.f32 %v1296, %v1463
        %v1513 = vmul.f32 %v1297, %v1468
        %v1514 = vmul.f32 %v1298, %v1473
        %v1515 = vmul.f32 %v1299, %v1478
        %1516 = vst.msk [vmem:[#allocation3 + $0x10] sm:$0xff] %vm318, %v1480
        %1517 = vst.msk [vmem:[#allocation3 + $0x18] sm:$0xff] %vm318, %v1481
        %1518 = vst.msk [vmem:[#allocation3 + $0x20] sm:$0xff] %vm318, %v1482
        %1519 = vst.msk [vmem:[#allocation3 + $0x28] sm:$0xff] %vm318, %v1483
        %1520 = vst.msk [vmem:[#allocation3 + $0x30] sm:$0xff] %vm318, %v1484
        %1521 = vst.msk [vmem:[#allocation3 + $0x38] sm:$0xff] %vm318, %v1485
        %1522 = vst.msk [vmem:[#allocation3 + $0x40] sm:$0xff] %vm318, %v1486
        %1523 = vst.msk [vmem:[#allocation3 + $0x48] sm:$0xff] %vm318, %v1487
        %1524 = vst.msk [vmem:[#allocation3 + $0x50] sm:$0xff] %vm318, %v1488
        %1525 = vst.msk [vmem:[#allocation3 + $0x58] sm:$0xff] %vm318, %v1489
        %1526 = vst.msk [vmem:[#allocation3 + $0x60] sm:$0xff] %vm318, %v1490
        %1527 = vst.msk [vmem:[#allocation3 + $0x68] sm:$0xff] %vm318, %v1491
        %1528 = vst.msk [vmem:[#allocation3 + $0x70] sm:$0xff] %vm318, %v1492
        %1529 = vst.msk [vmem:[#allocation3 + $0x78] sm:$0xff] %vm318, %v1493
        %1530 = vst.msk [vmem:[#allocation3 + $0x80] sm:$0xff] %vm318, %v1494
        %1531 = vst.msk [vmem:[#allocation3 + $0x88] sm:$0xff] %vm318, %v1495
        %1532 = vst.msk [vmem:[#allocation3 + $0x90] sm:$0xff] %vm318, %v1496
        %1533 = vst.msk [vmem:[#allocation3 + $0x98] sm:$0xff] %vm318, %v1497
        %1534 = vst.msk [vmem:[#allocation3 + $0xa0] sm:$0xff] %vm318, %v1498
        %1535 = vst.msk [vmem:[#allocation3 + $0xa8] sm:$0xff] %vm318, %v1499
        %1536 = vst.msk [vmem:[#allocation3 + $0xb0] sm:$0xff] %vm318, %v1500
        %1537 = vst.msk [vmem:[#allocation3 + $0xb8] sm:$0xff] %vm318, %v1501
        %1538 = vst.msk [vmem:[#allocation3 + $0xc0] sm:$0xff] %vm318, %v1502
        %1539 = vst.msk [vmem:[#allocation3 + $0xc8] sm:$0xff] %vm318, %v1503
        %1540 = vst.msk [vmem:[#allocation3 + $0xd0] sm:$0xff] %vm318, %v1504
        %1541 = vst.msk [vmem:[#allocation3 + $0xd8] sm:$0xff] %vm318, %v1505
        %1542 = vst.msk [vmem:[#allocation3 + $0xe0] sm:$0xff] %vm318, %v1506
        %1543 = vst.msk [vmem:[#allocation3 + $0xe8] sm:$0xff] %vm318, %v1507
        %1544 = vst.msk [vmem:[#allocation3 + $0xf0] sm:$0xff] %vm318, %v1508
        %1545 = vst.msk [vmem:[#allocation3 + $0xf8] sm:$0xff] %vm318, %v1509
        %1546 = vst.msk [vmem:[#allocation3 + $0x100] sm:$0xff] %vm318, %v1510
        %1547 = vst.msk [vmem:[#allocation3 + $0x108] sm:$0xff] %vm318, %v1511
        %1548 = vst.msk [vmem:[#allocation3 + $0x110] sm:$0xff] %vm318, %v1512
        %1549 = vst.msk [vmem:[#allocation3 + $0x118] sm:$0xff] %vm318, %v1513
        %1550 = vst.msk [vmem:[#allocation3 + $0x120] sm:$0xff] %vm318, %v1514
        %1551 = vst.msk [vmem:[#allocation3 + $0x128] sm:$0xff] %vm318, %v1515
      $region52: #{searchable_model_forward.1} parent=47 // pred_fallthru
        _
      %p1552 = scmp.lt.s32.totalorder %s18, 0
      %s1553 = ssub.s32 0, %s18
      %s1554 = scalar_select %p1552, %s1553, %s18
      %s1555 = sand.u32 %s1554, 1
      %s1556 = ssub.s32 0, %s1555
      %s1557 = scalar_select %p1552, %s1556, %s1555
      %p1558 = scmp.ne.s32.totalorder %s1557, 0
      %p1559 = scmp.lt.s32.totalorder %s1557, 0
      %p1560 = pnand %p1559, %p1558
      %p1561 = pneg %p1560
      %s1562 = sadd.s32 %s1557, 2
      %s1563 = scalar_select %p1561, %s1562, %s1557
      %p1564 = scmp.eq.s32.totalorder %s1563, 0
      %p1565 = scmp.ne.s32.totalorder %s18, 8
      %p1566 = pnand %p1564, %p1565
      %p1567 = pneg %p1566
      // Predicated region
      $region53: #{searchable_model_forward.1} parent=47 // pred_check
        _
      $region54: #{searchable_model_forward.1} parent=47 // pred_check_branch
        %1569 = sbr.rel (%p1566) target = $region56
      $region55: #{searchable_model_forward.1} parent=47 // pred_region
        %v1570 = vld [vmem:[#allocation3 + $0x3] sm:$0xff]
        %v1571 = vld [vmem:[#allocation3 + $0xb] sm:$0xff]
        %v1572 = vld [vmem:[#allocation3 + $0x13] sm:$0xff]
        %v1573 = vld [vmem:[#allocation3 + $0x1b] sm:$0xff]
        %v1574 = vld [vmem:[#allocation3 + $0x23] sm:$0xff]
        %v1575 = vld [vmem:[#allocation3 + $0x2b] sm:$0xff]
        %v1576 = vld [vmem:[#allocation3 + $0x33] sm:$0xff]
        %v1577 = vld [vmem:[#allocation3 + $0x3b] sm:$0xff]
        %v1578 = vld [vmem:[#allocation3 + $0x43] sm:$0xff]
        %v1579 = vld [vmem:[#allocation3 + $0x4b] sm:$0xff]
        %v1580 = vld [vmem:[#allocation3 + $0x53] sm:$0xff]
        %v1581 = vld [vmem:[#allocation3 + $0x5b] sm:$0xff]
        %v1582 = vld [vmem:[#allocation3 + $0x63] sm:$0xff]
        %v1583 = vld [vmem:[#allocation3 + $0x6b] sm:$0xff]
        %v1584 = vld [vmem:[#allocation3 + $0x73] sm:$0xff]
        %v1585 = vld [vmem:[#allocation3 + $0x7b] sm:$0xff]
        %v1586 = vld [vmem:[#allocation3 + $0x83] sm:$0xff]
        %v1587 = vld [vmem:[#allocation3 + $0x8b] sm:$0xff]
        %v1588 = vld [vmem:[#allocation3 + $0x93] sm:$0xff]
        %v1589 = vld [vmem:[#allocation3 + $0x9b] sm:$0xff]
        %v1590 = vld [vmem:[#allocation3 + $0xa3] sm:$0xff]
        %v1591 = vld [vmem:[#allocation3 + $0xab] sm:$0xff]
        %v1592 = vld [vmem:[#allocation3 + $0xb3] sm:$0xff]
        %v1593 = vld [vmem:[#allocation3 + $0xbb] sm:$0xff]
        %v1594 = vld [vmem:[#allocation3 + $0xc3] sm:$0xff]
        %v1595 = vld [vmem:[#allocation3 + $0xcb] sm:$0xff]
        %v1596 = vld [vmem:[#allocation3 + $0xd3] sm:$0xff]
        %v1597 = vld [vmem:[#allocation3 + $0xdb] sm:$0xff]
        %v1598 = vld [vmem:[#allocation3 + $0xe3] sm:$0xff]
        %v1599 = vld [vmem:[#allocation3 + $0xeb] sm:$0xff]
        %v1600 = vld [vmem:[#allocation3 + $0xf3] sm:$0xff]
        %v1601 = vld [vmem:[#allocation3 + $0xfb] sm:$0xff]
        %v1602 = vld [vmem:[#allocation3 + $0x103] sm:$0xff]
        %v1603 = vld [vmem:[#allocation3 + $0x10b] sm:$0xff]
        %v1604 = vld [vmem:[#allocation3 + $0x113] sm:$0xff]
        %v1605 = vld [vmem:[#allocation3 + $0x11b] sm:$0xff]
        %v1606 = vld [vmem:[#allocation3 + $0x4] sm:$0xff]
        %v1607 = vld [vmem:[#allocation3 + $0xc] sm:$0xff]
        %v1608 = vld [vmem:[#allocation3 + $0x14] sm:$0xff]
        %v1609 = vld [vmem:[#allocation3 + $0x1c] sm:$0xff]
        %v1610 = vld [vmem:[#allocation3 + $0x24] sm:$0xff]
        %v1611 = vld [vmem:[#allocation3 + $0x2c] sm:$0xff]
        %v1612 = vld [vmem:[#allocation3 + $0x34] sm:$0xff]
        %v1613 = vld [vmem:[#allocation3 + $0x3c] sm:$0xff]
        %v1614 = vld [vmem:[#allocation3 + $0x44] sm:$0xff]
        %v1615 = vld [vmem:[#allocation3 + $0x4c] sm:$0xff]
        %v1616 = vld [vmem:[#allocation3 + $0x54] sm:$0xff]
        %v1617 = vld [vmem:[#allocation3 + $0x5c] sm:$0xff]
        %v1618 = vld [vmem:[#allocation3 + $0x64] sm:$0xff]
        %v1619 = vld [vmem:[#allocation3 + $0x6c] sm:$0xff]
        %v1620 = vld [vmem:[#allocation3 + $0x74] sm:$0xff]
        %v1621 = vld [vmem:[#allocation3 + $0x7c] sm:$0xff]
        %v1622 = vld [vmem:[#allocation3 + $0x84] sm:$0xff]
        %v1623 = vld [vmem:[#allocation3 + $0x8c] sm:$0xff]
        %v1624 = vld [vmem:[#allocation3 + $0x94] sm:$0xff]
        %v1625 = vld [vmem:[#allocation3 + $0x9c] sm:$0xff]
        %v1626 = vld [vmem:[#allocation3 + $0xa4] sm:$0xff]
        %v1627 = vld [vmem:[#allocation3 + $0xac] sm:$0xff]
        %v1628 = vld [vmem:[#allocation3 + $0xb4] sm:$0xff]
        %v1629 = vld [vmem:[#allocation3 + $0xbc] sm:$0xff]
        %v1630 = vld [vmem:[#allocation3 + $0xc4] sm:$0xff]
        %v1631 = vld [vmem:[#allocation3 + $0xcc] sm:$0xff]
        %v1632 = vld [vmem:[#allocation3 + $0xd4] sm:$0xff]
        %v1633 = vld [vmem:[#allocation3 + $0xdc] sm:$0xff]
        %v1634 = vld [vmem:[#allocation3 + $0xe4] sm:$0xff]
        %v1635 = vld [vmem:[#allocation3 + $0xec] sm:$0xff]
        %v1636 = vld [vmem:[#allocation3 + $0xf4] sm:$0xff]
        %v1637 = vld [vmem:[#allocation3 + $0xfc] sm:$0xff]
        %v1638 = vld [vmem:[#allocation3 + $0x104] sm:$0xff]
        %v1639 = vld [vmem:[#allocation3 + $0x10c] sm:$0xff]
        %v1640 = vld [vmem:[#allocation3 + $0x114] sm:$0xff]
        %v1641 = vld [vmem:[#allocation3 + $0x11c] sm:$0xff]
        %v1642 = vld [vmem:[#allocation3 + $0x5] sm:$0xff]
        %v1643 = vld [vmem:[#allocation3 + $0xd] sm:$0xff]
        %v1644 = vld [vmem:[#allocation3 + $0x15] sm:$0xff]
        %v1645 = vld [vmem:[#allocation3 + $0x1d] sm:$0xff]
        %v1646 = vld [vmem:[#allocation3 + $0x25] sm:$0xff]
        %v1647 = vld [vmem:[#allocation3 + $0x2d] sm:$0xff]
        %v1648 = vld [vmem:[#allocation3 + $0x35] sm:$0xff]
        %v1649 = vld [vmem:[#allocation3 + $0x3d] sm:$0xff]
        %v1650 = vld [vmem:[#allocation3 + $0x45] sm:$0xff]
        %v1651 = vld [vmem:[#allocation3 + $0x4d] sm:$0xff]
        %v1652 = vld [vmem:[#allocation3 + $0x55] sm:$0xff]
        %v1653 = vld [vmem:[#allocation3 + $0x5d] sm:$0xff]
        %v1654 = vld [vmem:[#allocation3 + $0x65] sm:$0xff]
        %v1655 = vld [vmem:[#allocation3 + $0x6d] sm:$0xff]
        %v1656 = vld [vmem:[#allocation3 + $0x75] sm:$0xff]
        %v1657 = vld [vmem:[#allocation3 + $0x7d] sm:$0xff]
        %v1658 = vld [vmem:[#allocation3 + $0x85] sm:$0xff]
        %v1659 = vld [vmem:[#allocation3 + $0x8d] sm:$0xff]
        %v1660 = vld [vmem:[#allocation3 + $0x95] sm:$0xff]
        %v1661 = vld [vmem:[#allocation3 + $0x9d] sm:$0xff]
        %v1662 = vld [vmem:[#allocation3 + $0xa5] sm:$0xff]
        %v1663 = vld [vmem:[#allocation3 + $0xad] sm:$0xff]
        %v1664 = vld [vmem:[#allocation3 + $0xb5] sm:$0xff]
        %v1665 = vld [vmem:[#allocation3 + $0xbd] sm:$0xff]
        %v1666 = vld [vmem:[#allocation3 + $0xc5] sm:$0xff]
        %v1667 = vld [vmem:[#allocation3 + $0xcd] sm:$0xff]
        %v1668 = vld [vmem:[#allocation3 + $0xd5] sm:$0xff]
        %v1669 = vld [vmem:[#allocation3 + $0xdd] sm:$0xff]
        %v1670 = vld [vmem:[#allocation3 + $0xe5] sm:$0xff]
        %v1671 = vld [vmem:[#allocation3 + $0xed] sm:$0xff]
        %v1672 = vld [vmem:[#allocation3 + $0xf5] sm:$0xff]
        %v1673 = vld [vmem:[#allocation3 + $0xfd] sm:$0xff]
        %v1674 = vld [vmem:[#allocation3 + $0x105] sm:$0xff]
        %v1675 = vld [vmem:[#allocation3 + $0x10d] sm:$0xff]
        %v1676 = vld [vmem:[#allocation3 + $0x115] sm:$0xff]
        %v1677 = vld [vmem:[#allocation3 + $0x11d] sm:$0xff]
        %v1678 = vld [vmem:[#allocation3 + $0xf] sm:$0xff]
        %v1679 = vld [vmem:[#allocation3 + $0x17] sm:$0xff]
        %v1680 = vld [vmem:[#allocation3 + $0x1f] sm:$0xff]
        %v1681 = vld [vmem:[#allocation3 + $0x27] sm:$0xff]
        %v1682 = vld [vmem:[#allocation3 + $0x2f] sm:$0xff]
        %v1683 = vld [vmem:[#allocation3 + $0x37] sm:$0xff]
        %v1684 = vld [vmem:[#allocation3 + $0x3f] sm:$0xff]
        %v1685 = vld [vmem:[#allocation3 + $0x47] sm:$0xff]
        %v1686 = vld [vmem:[#allocation3 + $0x4f] sm:$0xff]
        %v1687 = vld [vmem:[#allocation3 + $0x57] sm:$0xff]
        %v1688 = vld [vmem:[#allocation3 + $0x5f] sm:$0xff]
        %v1689 = vld [vmem:[#allocation3 + $0x67] sm:$0xff]
        %v1690 = vld [vmem:[#allocation3 + $0x6f] sm:$0xff]
        %v1691 = vld [vmem:[#allocation3 + $0x77] sm:$0xff]
        %v1692 = vld [vmem:[#allocation3 + $0x7f] sm:$0xff]
        %v1693 = vld [vmem:[#allocation3 + $0x87] sm:$0xff]
        %v1694 = vld [vmem:[#allocation3 + $0x8f] sm:$0xff]
        %v1695 = vld [vmem:[#allocation3 + $0x97] sm:$0xff]
        %v1696 = vld [vmem:[#allocation3 + $0x9f] sm:$0xff]
        %v1697 = vld [vmem:[#allocation3 + $0xa7] sm:$0xff]
        %v1698 = vld [vmem:[#allocation3 + $0xaf] sm:$0xff]
        %v1699 = vld [vmem:[#allocation3 + $0xb7] sm:$0xff]
        %v1700 = vld [vmem:[#allocation3 + $0xbf] sm:$0xff]
        %v1701 = vld [vmem:[#allocation3 + $0xc7] sm:$0xff]
        %v1702 = vld [vmem:[#allocation3 + $0xcf] sm:$0xff]
        %v1703 = vld [vmem:[#allocation3 + $0xd7] sm:$0xff]
        %v1704 = vld [vmem:[#allocation3 + $0xdf] sm:$0xff]
        %v1705 = vld [vmem:[#allocation3 + $0xe7] sm:$0xff]
        %v1706 = vld [vmem:[#allocation3 + $0xef] sm:$0xff]
        %v1707 = vld [vmem:[#allocation3 + $0xf7] sm:$0xff]
        %v1708 = vld [vmem:[#allocation3 + $0xff] sm:$0xff]
        %v1709 = vld [vmem:[#allocation3 + $0x107] sm:$0xff]
        %v1710 = vld [vmem:[#allocation3 + $0x10f] sm:$0xff]
        %v1711 = vld [vmem:[#allocation3 + $0x117] sm:$0xff]
        %v1712 = vld [vmem:[#allocation3 + $0x11f] sm:$0xff]
        %v1713 = vld [vmem:[#allocation3 + $0x127] sm:$0xff]
        %v1714 = vld [vmem:[#allocation3 + $0x10] sm:$0xff]
        %v1715 = vld [vmem:[#allocation3 + $0x18] sm:$0xff]
        %v1716 = vld [vmem:[#allocation3 + $0x20] sm:$0xff]
        %v1717 = vld [vmem:[#allocation3 + $0x28] sm:$0xff]
        %v1718 = vld [vmem:[#allocation3 + $0x30] sm:$0xff]
        %v1719 = vld [vmem:[#allocation3 + $0x38] sm:$0xff]
        %v1720 = vld [vmem:[#allocation3 + $0x40] sm:$0xff]
        %v1721 = vld [vmem:[#allocation3 + $0x48] sm:$0xff]
        %v1722 = vld [vmem:[#allocation3 + $0x50] sm:$0xff]
        %v1723 = vld [vmem:[#allocation3 + $0x58] sm:$0xff]
        %v1724 = vld [vmem:[#allocation3 + $0x60] sm:$0xff]
        %v1725 = vld [vmem:[#allocation3 + $0x68] sm:$0xff]
        %v1726 = vld [vmem:[#allocation3 + $0x70] sm:$0xff]
        %v1727 = vld [vmem:[#allocation3 + $0x78] sm:$0xff]
        %v1728 = vld [vmem:[#allocation3 + $0x80] sm:$0xff]
        %v1729 = vld [vmem:[#allocation3 + $0x88] sm:$0xff]
        %v1730 = vld [vmem:[#allocation3 + $0x90] sm:$0xff]
        %v1731 = vld [vmem:[#allocation3 + $0x98] sm:$0xff]
        %v1732 = vld [vmem:[#allocation3 + $0xa0] sm:$0xff]
        %v1733 = vld [vmem:[#allocation3 + $0xa8] sm:$0xff]
        %v1734 = vld [vmem:[#allocation3 + $0xb0] sm:$0xff]
        %v1735 = vld [vmem:[#allocation3 + $0xb8] sm:$0xff]
        %v1736 = vld [vmem:[#allocation3 + $0xc0] sm:$0xff]
        %v1737 = vld [vmem:[#allocation3 + $0xc8] sm:$0xff]
        %v1738 = vld [vmem:[#allocation3 + $0xd0] sm:$0xff]
        %v1739 = vld [vmem:[#allocation3 + $0xd8] sm:$0xff]
        %v1740 = vld [vmem:[#allocation3 + $0xe0] sm:$0xff]
        %v1741 = vld [vmem:[#allocation3 + $0xe8] sm:$0xff]
        %v1742 = vld [vmem:[#allocation3 + $0xf0] sm:$0xff]
        %v1743 = vld [vmem:[#allocation3 + $0xf8] sm:$0xff]
        %v1744 = vld [vmem:[#allocation3 + $0x100] sm:$0xff]
        %v1745 = vld [vmem:[#allocation3 + $0x108] sm:$0xff]
        %v1746 = vld [vmem:[#allocation3 + $0x110] sm:$0xff]
        %v1747 = vld [vmem:[#allocation3 + $0x118] sm:$0xff]
        %v1748 = vld [vmem:[#allocation3 + $0x120] sm:$0xff]
        %v1749 = vld [vmem:[#allocation3 + $0x128] sm:$0xff]
        %v1750 = vld [vmem:[#allocation3 + $0x11] sm:$0xff]
        %v1751 = vld [vmem:[#allocation3 + $0x19] sm:$0xff]
        %v1752 = vld [vmem:[#allocation3 + $0x21] sm:$0xff]
        %v1753 = vld [vmem:[#allocation3 + $0x29] sm:$0xff]
        %v1754 = vld [vmem:[#allocation3 + $0x31] sm:$0xff]
        %v1755 = vld [vmem:[#allocation3 + $0x39] sm:$0xff]
        %v1756 = vld [vmem:[#allocation3 + $0x41] sm:$0xff]
        %v1757 = vld [vmem:[#allocation3 + $0x49] sm:$0xff]
        %v1758 = vld [vmem:[#allocation3 + $0x51] sm:$0xff]
        %v1759 = vld [vmem:[#allocation3 + $0x59] sm:$0xff]
        %v1760 = vld [vmem:[#allocation3 + $0x61] sm:$0xff]
        %v1761 = vld [vmem:[#allocation3 + $0x69] sm:$0xff]
        %v1762 = vld [vmem:[#allocation3 + $0x71] sm:$0xff]
        %v1763 = vld [vmem:[#allocation3 + $0x79] sm:$0xff]
        %v1764 = vld [vmem:[#allocation3 + $0x81] sm:$0xff]
        %v1765 = vld [vmem:[#allocation3 + $0x89] sm:$0xff]
        %v1766 = vld [vmem:[#allocation3 + $0x91] sm:$0xff]
        %v1767 = vld [vmem:[#allocation3 + $0x99] sm:$0xff]
        %v1768 = vld [vmem:[#allocation3 + $0xa1] sm:$0xff]
        %v1769 = vld [vmem:[#allocation3 + $0xa9] sm:$0xff]
        %v1770 = vld [vmem:[#allocation3 + $0xb1] sm:$0xff]
        %v1771 = vld [vmem:[#allocation3 + $0xb9] sm:$0xff]
        %v1772 = vld [vmem:[#allocation3 + $0xc1] sm:$0xff]
        %v1773 = vld [vmem:[#allocation3 + $0xc9] sm:$0xff]
        %v1774 = vld [vmem:[#allocation3 + $0xd1] sm:$0xff]
        %v1775 = vld [vmem:[#allocation3 + $0xd9] sm:$0xff]
        %v1776 = vld [vmem:[#allocation3 + $0xe1] sm:$0xff]
        %v1777 = vld [vmem:[#allocation3 + $0xe9] sm:$0xff]
        %v1778 = vld [vmem:[#allocation3 + $0xf1] sm:$0xff]
        %v1779 = vld [vmem:[#allocation3 + $0xf9] sm:$0xff]
        %v1780 = vld [vmem:[#allocation3 + $0x101] sm:$0xff]
        %v1781 = vld [vmem:[#allocation3 + $0x109] sm:$0xff]
        %v1782 = vld [vmem:[#allocation3 + $0x111] sm:$0xff]
        %v1783 = vld [vmem:[#allocation3 + $0x119] sm:$0xff]
        %v1784 = vld [vmem:[#allocation3 + $0x121] sm:$0xff]
        %v1785 = vld [vmem:[#allocation3 + $0x129] sm:$0xff]
        %v1786 = vld [vmem:[#allocation3 + $0x123] sm:$0xff]
        %v1787 = vld [vmem:[#allocation3 + $0x12b] sm:$0xff]
        %v1788 = vld [vmem:[#allocation3 + $0x133] sm:$0xff]
        %v1789 = vld [vmem:[#allocation3 + $0x124] sm:$0xff]
        %v1790 = vld [vmem:[#allocation3 + $0x12c] sm:$0xff]
        %v1791 = vld [vmem:[#allocation3 + $0x134] sm:$0xff]
        %v1792 = vld [vmem:[#allocation3 + $0x125] sm:$0xff]
        %v1793 = vld [vmem:[#allocation3 + $0x12d] sm:$0xff]
        %v1794 = vld [vmem:[#allocation3 + $0x135] sm:$0xff]
        %1831 = vrot.lane.b32.xlu0 %v1606, 32
        %v1832 = vpop.permute.xlu0 %1831
        %1833 = vrot.lane.b32.xlu0 %v1607, 32
        %v1834 = vpop.permute.xlu0 %1833
        %1835 = vrot.lane.b32.xlu0 %v1608, 32
        %v1836 = vpop.permute.xlu0 %1835
        %1837 = vrot.lane.b32.xlu0 %v1609, 32
        %v1838 = vpop.permute.xlu0 %1837
        %1839 = vrot.lane.b32.xlu0 %v1610, 32
        %v1840 = vpop.permute.xlu0 %1839
        %1841 = vrot.lane.b32.xlu0 %v1611, 32
        %v1842 = vpop.permute.xlu0 %1841
        %1843 = vrot.lane.b32.xlu0 %v1612, 32
        %v1844 = vpop.permute.xlu0 %1843
        %1845 = vrot.lane.b32.xlu0 %v1613, 32
        %v1846 = vpop.permute.xlu0 %1845
        %1847 = vrot.lane.b32.xlu0 %v1614, 32
        %v1848 = vpop.permute.xlu0 %1847
        %1849 = vrot.lane.b32.xlu0 %v1615, 32
        %v1850 = vpop.permute.xlu0 %1849
        %1851 = vrot.lane.b32.xlu0 %v1616, 32
        %v1852 = vpop.permute.xlu0 %1851
        %1853 = vrot.lane.b32.xlu0 %v1617, 32
        %v1854 = vpop.permute.xlu0 %1853
        %1855 = vrot.lane.b32.xlu0 %v1618, 32
        %v1856 = vpop.permute.xlu0 %1855
        %1857 = vrot.lane.b32.xlu0 %v1619, 32
        %v1858 = vpop.permute.xlu0 %1857
        %1859 = vrot.lane.b32.xlu0 %v1620, 32
        %v1860 = vpop.permute.xlu0 %1859
        %1861 = vrot.lane.b32.xlu0 %v1621, 32
        %v1862 = vpop.permute.xlu0 %1861
        %1863 = vrot.lane.b32.xlu0 %v1622, 32
        %v1864 = vpop.permute.xlu0 %1863
        %1865 = vrot.lane.b32.xlu0 %v1623, 32
        %v1866 = vpop.permute.xlu0 %1865
        %1867 = vrot.lane.b32.xlu0 %v1624, 32
        %v1868 = vpop.permute.xlu0 %1867
        %1869 = vrot.lane.b32.xlu0 %v1625, 32
        %v1870 = vpop.permute.xlu0 %1869
        %1871 = vrot.lane.b32.xlu0 %v1626, 32
        %v1872 = vpop.permute.xlu0 %1871
        %1873 = vrot.lane.b32.xlu0 %v1627, 32
        %v1874 = vpop.permute.xlu0 %1873
        %1875 = vrot.lane.b32.xlu0 %v1628, 32
        %v1876 = vpop.permute.xlu0 %1875
        %1877 = vrot.lane.b32.xlu0 %v1629, 32
        %v1878 = vpop.permute.xlu0 %1877
        %1879 = vrot.lane.b32.xlu0 %v1630, 32
        %v1880 = vpop.permute.xlu0 %1879
        %1881 = vrot.lane.b32.xlu0 %v1631, 32
        %v1882 = vpop.permute.xlu0 %1881
        %1883 = vrot.lane.b32.xlu0 %v1632, 32
        %v1884 = vpop.permute.xlu0 %1883
        %1885 = vrot.lane.b32.xlu0 %v1633, 32
        %v1886 = vpop.permute.xlu0 %1885
        %1887 = vrot.lane.b32.xlu0 %v1634, 32
        %v1888 = vpop.permute.xlu0 %1887
        %1889 = vrot.lane.b32.xlu0 %v1635, 32
        %v1890 = vpop.permute.xlu0 %1889
        %1891 = vrot.lane.b32.xlu0 %v1636, 32
        %v1892 = vpop.permute.xlu0 %1891
        %1893 = vrot.lane.b32.xlu0 %v1637, 32
        %v1894 = vpop.permute.xlu0 %1893
        %1895 = vrot.lane.b32.xlu0 %v1638, 32
        %v1896 = vpop.permute.xlu0 %1895
        %1897 = vrot.lane.b32.xlu0 %v1639, 32
        %v1898 = vpop.permute.xlu0 %1897
        %1899 = vrot.lane.b32.xlu0 %v1640, 32
        %v1900 = vpop.permute.xlu0 %1899
        %1901 = vrot.lane.b32.xlu0 %v1641, 32
        %v1902 = vpop.permute.xlu0 %1901
        %1975 = vrot.lane.b32.xlu0 %v1642, 64
        %v1976 = vpop.permute.xlu0 %1975
        %1977 = vrot.lane.b32.xlu0 %v1643, 64
        %v1978 = vpop.permute.xlu0 %1977
        %1979 = vrot.lane.b32.xlu0 %v1644, 64
        %v1980 = vpop.permute.xlu0 %1979
        %1981 = vrot.lane.b32.xlu0 %v1645, 64
        %v1982 = vpop.permute.xlu0 %1981
        %1983 = vrot.lane.b32.xlu0 %v1646, 64
        %v1984 = vpop.permute.xlu0 %1983
        %1985 = vrot.lane.b32.xlu0 %v1647, 64
        %v1986 = vpop.permute.xlu0 %1985
        %1987 = vrot.lane.b32.xlu0 %v1648, 64
        %v1988 = vpop.permute.xlu0 %1987
        %1989 = vrot.lane.b32.xlu0 %v1649, 64
        %v1990 = vpop.permute.xlu0 %1989
        %1991 = vrot.lane.b32.xlu0 %v1650, 64
        %v1992 = vpop.permute.xlu0 %1991
        %1993 = vrot.lane.b32.xlu0 %v1651, 64
        %v1994 = vpop.permute.xlu0 %1993
        %1995 = vrot.lane.b32.xlu0 %v1652, 64
        %v1996 = vpop.permute.xlu0 %1995
        %1997 = vrot.lane.b32.xlu0 %v1653, 64
        %v1998 = vpop.permute.xlu0 %1997
        %1999 = vrot.lane.b32.xlu0 %v1654, 64
        %v2000 = vpop.permute.xlu0 %1999
        %2001 = vrot.lane.b32.xlu0 %v1655, 64
        %v2002 = vpop.permute.xlu0 %2001
        %2003 = vrot.lane.b32.xlu0 %v1656, 64
        %v2004 = vpop.permute.xlu0 %2003
        %2005 = vrot.lane.b32.xlu0 %v1657, 64
        %v2006 = vpop.permute.xlu0 %2005
        %2007 = vrot.lane.b32.xlu0 %v1658, 64
        %v2008 = vpop.permute.xlu0 %2007
        %2009 = vrot.lane.b32.xlu0 %v1659, 64
        %v2010 = vpop.permute.xlu0 %2009
        %2011 = vrot.lane.b32.xlu0 %v1660, 64
        %v2012 = vpop.permute.xlu0 %2011
        %2013 = vrot.lane.b32.xlu0 %v1661, 64
        %v2014 = vpop.permute.xlu0 %2013
        %2015 = vrot.lane.b32.xlu0 %v1662, 64
        %v2016 = vpop.permute.xlu0 %2015
        %2017 = vrot.lane.b32.xlu0 %v1663, 64
        %v2018 = vpop.permute.xlu0 %2017
        %2019 = vrot.lane.b32.xlu0 %v1664, 64
        %v2020 = vpop.permute.xlu0 %2019
        %2021 = vrot.lane.b32.xlu0 %v1665, 64
        %v2022 = vpop.permute.xlu0 %2021
        %2023 = vrot.lane.b32.xlu0 %v1666, 64
        %v2024 = vpop.permute.xlu0 %2023
        %2025 = vrot.lane.b32.xlu0 %v1667, 64
        %v2026 = vpop.permute.xlu0 %2025
        %2027 = vrot.lane.b32.xlu0 %v1668, 64
        %v2028 = vpop.permute.xlu0 %2027
        %2029 = vrot.lane.b32.xlu0 %v1669, 64
        %v2030 = vpop.permute.xlu0 %2029
        %2031 = vrot.lane.b32.xlu0 %v1670, 64
        %v2032 = vpop.permute.xlu0 %2031
        %2033 = vrot.lane.b32.xlu0 %v1671, 64
        %v2034 = vpop.permute.xlu0 %2033
        %2035 = vrot.lane.b32.xlu0 %v1672, 64
        %v2036 = vpop.permute.xlu0 %2035
        %2037 = vrot.lane.b32.xlu0 %v1673, 64
        %v2038 = vpop.permute.xlu0 %2037
        %2039 = vrot.lane.b32.xlu0 %v1674, 64
        %v2040 = vpop.permute.xlu0 %2039
        %2041 = vrot.lane.b32.xlu0 %v1675, 64
        %v2042 = vpop.permute.xlu0 %2041
        %2043 = vrot.lane.b32.xlu0 %v1676, 64
        %v2044 = vpop.permute.xlu0 %2043
        %2045 = vrot.lane.b32.xlu0 %v1677, 64
        %v2046 = vpop.permute.xlu0 %2045
        %2119 = vrot.lane.b32.xlu0 %v1678, 96
        %v2120 = vpop.permute.xlu0 %2119
        %2121 = vrot.lane.b32.xlu0 %v1679, 96
        %v2122 = vpop.permute.xlu0 %2121
        %2123 = vrot.lane.b32.xlu0 %v1680, 96
        %v2124 = vpop.permute.xlu0 %2123
        %2125 = vrot.lane.b32.xlu0 %v1681, 96
        %v2126 = vpop.permute.xlu0 %2125
        %2127 = vrot.lane.b32.xlu0 %v1682, 96
        %v2128 = vpop.permute.xlu0 %2127
        %2129 = vrot.lane.b32.xlu0 %v1683, 96
        %v2130 = vpop.permute.xlu0 %2129
        %2131 = vrot.lane.b32.xlu0 %v1684, 96
        %v2132 = vpop.permute.xlu0 %2131
        %2133 = vrot.lane.b32.xlu0 %v1685, 96
        %v2134 = vpop.permute.xlu0 %2133
        %2135 = vrot.lane.b32.xlu0 %v1686, 96
        %v2136 = vpop.permute.xlu0 %2135
        %2137 = vrot.lane.b32.xlu0 %v1687, 96
        %v2138 = vpop.permute.xlu0 %2137
        %2139 = vrot.lane.b32.xlu0 %v1688, 96
        %v2140 = vpop.permute.xlu0 %2139
        %2141 = vrot.lane.b32.xlu0 %v1689, 96
        %v2142 = vpop.permute.xlu0 %2141
        %2143 = vrot.lane.b32.xlu0 %v1690, 96
        %v2144 = vpop.permute.xlu0 %2143
        %2145 = vrot.lane.b32.xlu0 %v1691, 96
        %v2146 = vpop.permute.xlu0 %2145
        %2147 = vrot.lane.b32.xlu0 %v1692, 96
        %v2148 = vpop.permute.xlu0 %2147
        %2149 = vrot.lane.b32.xlu0 %v1693, 96
        %v2150 = vpop.permute.xlu0 %2149
        %2151 = vrot.lane.b32.xlu0 %v1694, 96
        %v2152 = vpop.permute.xlu0 %2151
        %2153 = vrot.lane.b32.xlu0 %v1695, 96
        %v2154 = vpop.permute.xlu0 %2153
        %2155 = vrot.lane.b32.xlu0 %v1696, 96
        %v2156 = vpop.permute.xlu0 %2155
        %2157 = vrot.lane.b32.xlu0 %v1697, 96
        %v2158 = vpop.permute.xlu0 %2157
        %2159 = vrot.lane.b32.xlu0 %v1698, 96
        %v2160 = vpop.permute.xlu0 %2159
        %2161 = vrot.lane.b32.xlu0 %v1699, 96
        %v2162 = vpop.permute.xlu0 %2161
        %2163 = vrot.lane.b32.xlu0 %v1700, 96
        %v2164 = vpop.permute.xlu0 %2163
        %2165 = vrot.lane.b32.xlu0 %v1701, 96
        %v2166 = vpop.permute.xlu0 %2165
        %2167 = vrot.lane.b32.xlu0 %v1702, 96
        %v2168 = vpop.permute.xlu0 %2167
        %2169 = vrot.lane.b32.xlu0 %v1703, 96
        %v2170 = vpop.permute.xlu0 %2169
        %2171 = vrot.lane.b32.xlu0 %v1704, 96
        %v2172 = vpop.permute.xlu0 %2171
        %2173 = vrot.lane.b32.xlu0 %v1705, 96
        %v2174 = vpop.permute.xlu0 %2173
        %2175 = vrot.lane.b32.xlu0 %v1706, 96
        %v2176 = vpop.permute.xlu0 %2175
        %2177 = vrot.lane.b32.xlu0 %v1707, 96
        %v2178 = vpop.permute.xlu0 %2177
        %2179 = vrot.lane.b32.xlu0 %v1708, 96
        %v2180 = vpop.permute.xlu0 %2179
        %2181 = vrot.lane.b32.xlu0 %v1709, 96
        %v2182 = vpop.permute.xlu0 %2181
        %2183 = vrot.lane.b32.xlu0 %v1710, 96
        %v2184 = vpop.permute.xlu0 %2183
        %2185 = vrot.lane.b32.xlu0 %v1711, 96
        %v2186 = vpop.permute.xlu0 %2185
        %2187 = vrot.lane.b32.xlu0 %v1712, 96
        %v2188 = vpop.permute.xlu0 %2187
        %2189 = vrot.lane.b32.xlu0 %v1713, 96
        %v2190 = vpop.permute.xlu0 %2189
        %2263 = vrot.lane.b32.xlu0 %v1750, 32
        %v2264 = vpop.permute.xlu0 %2263
        %2265 = vrot.lane.b32.xlu0 %v1751, 32
        %v2266 = vpop.permute.xlu0 %2265
        %2267 = vrot.lane.b32.xlu0 %v1752, 32
        %v2268 = vpop.permute.xlu0 %2267
        %2269 = vrot.lane.b32.xlu0 %v1753, 32
        %v2270 = vpop.permute.xlu0 %2269
        %2271 = vrot.lane.b32.xlu0 %v1754, 32
        %v2272 = vpop.permute.xlu0 %2271
        %2273 = vrot.lane.b32.xlu0 %v1755, 32
        %v2274 = vpop.permute.xlu0 %2273
        %2275 = vrot.lane.b32.xlu0 %v1756, 32
        %v2276 = vpop.permute.xlu0 %2275
        %2277 = vrot.lane.b32.xlu0 %v1757, 32
        %v2278 = vpop.permute.xlu0 %2277
        %2279 = vrot.lane.b32.xlu0 %v1758, 32
        %v2280 = vpop.permute.xlu0 %2279
        %2281 = vrot.lane.b32.xlu0 %v1759, 32
        %v2282 = vpop.permute.xlu0 %2281
        %2283 = vrot.lane.b32.xlu0 %v1760, 32
        %v2284 = vpop.permute.xlu0 %2283
        %2285 = vrot.lane.b32.xlu0 %v1761, 32
        %v2286 = vpop.permute.xlu0 %2285
        %2287 = vrot.lane.b32.xlu0 %v1762, 32
        %v2288 = vpop.permute.xlu0 %2287
        %2289 = vrot.lane.b32.xlu0 %v1763, 32
        %v2290 = vpop.permute.xlu0 %2289
        %2291 = vrot.lane.b32.xlu0 %v1764, 32
        %v2292 = vpop.permute.xlu0 %2291
        %2293 = vrot.lane.b32.xlu0 %v1765, 32
        %v2294 = vpop.permute.xlu0 %2293
        %2295 = vrot.lane.b32.xlu0 %v1766, 32
        %v2296 = vpop.permute.xlu0 %2295
        %2297 = vrot.lane.b32.xlu0 %v1767, 32
        %v2298 = vpop.permute.xlu0 %2297
        %2299 = vrot.lane.b32.xlu0 %v1768, 32
        %v2300 = vpop.permute.xlu0 %2299
        %2301 = vrot.lane.b32.xlu0 %v1769, 32
        %v2302 = vpop.permute.xlu0 %2301
        %2303 = vrot.lane.b32.xlu0 %v1770, 32
        %v2304 = vpop.permute.xlu0 %2303
        %2305 = vrot.lane.b32.xlu0 %v1771, 32
        %v2306 = vpop.permute.xlu0 %2305
        %2307 = vrot.lane.b32.xlu0 %v1772, 32
        %v2308 = vpop.permute.xlu0 %2307
        %2309 = vrot.lane.b32.xlu0 %v1773, 32
        %v2310 = vpop.permute.xlu0 %2309
        %2311 = vrot.lane.b32.xlu0 %v1774, 32
        %v2312 = vpop.permute.xlu0 %2311
        %2313 = vrot.lane.b32.xlu0 %v1775, 32
        %v2314 = vpop.permute.xlu0 %2313
        %2315 = vrot.lane.b32.xlu0 %v1776, 32
        %v2316 = vpop.permute.xlu0 %2315
        %2317 = vrot.lane.b32.xlu0 %v1777, 32
        %v2318 = vpop.permute.xlu0 %2317
        %2319 = vrot.lane.b32.xlu0 %v1778, 32
        %v2320 = vpop.permute.xlu0 %2319
        %2321 = vrot.lane.b32.xlu0 %v1779, 32
        %v2322 = vpop.permute.xlu0 %2321
        %2323 = vrot.lane.b32.xlu0 %v1780, 32
        %v2324 = vpop.permute.xlu0 %2323
        %2325 = vrot.lane.b32.xlu0 %v1781, 32
        %v2326 = vpop.permute.xlu0 %2325
        %2327 = vrot.lane.b32.xlu0 %v1782, 32
        %v2328 = vpop.permute.xlu0 %2327
        %2329 = vrot.lane.b32.xlu0 %v1783, 32
        %v2330 = vpop.permute.xlu0 %2329
        %2331 = vrot.lane.b32.xlu0 %v1784, 32
        %v2332 = vpop.permute.xlu0 %2331
        %2333 = vrot.lane.b32.xlu0 %v1785, 32
        %v2334 = vpop.permute.xlu0 %2333
        %2407 = vrot.lane.b32.xlu0 %v1573, 64
        %v2408 = vpop.permute.xlu0 %2407
        %2409 = vrot.lane.b32.xlu0 %v1574, 64
        %v2410 = vpop.permute.xlu0 %2409
        %2411 = vrot.lane.b32.xlu0 %v1575, 64
        %v2412 = vpop.permute.xlu0 %2411
        %2413 = vrot.lane.b32.xlu0 %v1576, 64
        %v2414 = vpop.permute.xlu0 %2413
        %2415 = vrot.lane.b32.xlu0 %v1577, 64
        %v2416 = vpop.permute.xlu0 %2415
        %2417 = vrot.lane.b32.xlu0 %v1578, 64
        %v2418 = vpop.permute.xlu0 %2417
        %2419 = vrot.lane.b32.xlu0 %v1579, 64
        %v2420 = vpop.permute.xlu0 %2419
        %2421 = vrot.lane.b32.xlu0 %v1580, 64
        %v2422 = vpop.permute.xlu0 %2421
        %2423 = vrot.lane.b32.xlu0 %v1581, 64
        %v2424 = vpop.permute.xlu0 %2423
        %2425 = vrot.lane.b32.xlu0 %v1582, 64
        %v2426 = vpop.permute.xlu0 %2425
        %2427 = vrot.lane.b32.xlu0 %v1583, 64
        %v2428 = vpop.permute.xlu0 %2427
        %2429 = vrot.lane.b32.xlu0 %v1584, 64
        %v2430 = vpop.permute.xlu0 %2429
        %2431 = vrot.lane.b32.xlu0 %v1585, 64
        %v2432 = vpop.permute.xlu0 %2431
        %2433 = vrot.lane.b32.xlu0 %v1586, 64
        %v2434 = vpop.permute.xlu0 %2433
        %2435 = vrot.lane.b32.xlu0 %v1587, 64
        %v2436 = vpop.permute.xlu0 %2435
        %2437 = vrot.lane.b32.xlu0 %v1588, 64
        %v2438 = vpop.permute.xlu0 %2437
        %2439 = vrot.lane.b32.xlu0 %v1589, 64
        %v2440 = vpop.permute.xlu0 %2439
        %2441 = vrot.lane.b32.xlu0 %v1590, 64
        %v2442 = vpop.permute.xlu0 %2441
        %2443 = vrot.lane.b32.xlu0 %v1591, 64
        %v2444 = vpop.permute.xlu0 %2443
        %2445 = vrot.lane.b32.xlu0 %v1592, 64
        %v2446 = vpop.permute.xlu0 %2445
        %2447 = vrot.lane.b32.xlu0 %v1593, 64
        %v2448 = vpop.permute.xlu0 %2447
        %2449 = vrot.lane.b32.xlu0 %v1594, 64
        %v2450 = vpop.permute.xlu0 %2449
        %2451 = vrot.lane.b32.xlu0 %v1595, 64
        %v2452 = vpop.permute.xlu0 %2451
        %2453 = vrot.lane.b32.xlu0 %v1596, 64
        %v2454 = vpop.permute.xlu0 %2453
        %2455 = vrot.lane.b32.xlu0 %v1597, 64
        %v2456 = vpop.permute.xlu0 %2455
        %2457 = vrot.lane.b32.xlu0 %v1598, 64
        %v2458 = vpop.permute.xlu0 %2457
        %2459 = vrot.lane.b32.xlu0 %v1599, 64
        %v2460 = vpop.permute.xlu0 %2459
        %2461 = vrot.lane.b32.xlu0 %v1600, 64
        %v2462 = vpop.permute.xlu0 %2461
        %2463 = vrot.lane.b32.xlu0 %v1601, 64
        %v2464 = vpop.permute.xlu0 %2463
        %2465 = vrot.lane.b32.xlu0 %v1602, 64
        %v2466 = vpop.permute.xlu0 %2465
        %2467 = vrot.lane.b32.xlu0 %v1603, 64
        %v2468 = vpop.permute.xlu0 %2467
        %2469 = vrot.lane.b32.xlu0 %v1604, 64
        %v2470 = vpop.permute.xlu0 %2469
        %2471 = vrot.lane.b32.xlu0 %v1605, 64
        %v2472 = vpop.permute.xlu0 %2471
        %2473 = vrot.lane.b32.xlu0 %v1786, 64
        %v2474 = vpop.permute.xlu0 %2473
        %2475 = vrot.lane.b32.xlu0 %v1787, 64
        %v2476 = vpop.permute.xlu0 %2475
        %2477 = vrot.lane.b32.xlu0 %v1788, 64
        %v2478 = vpop.permute.xlu0 %2477
        %2518 = vrot.lane.b32.xlu0 %v1609, 96
        %v2519 = vpop.permute.xlu0 %2518
        %2520 = vrot.lane.b32.xlu0 %v1610, 96
        %v2521 = vpop.permute.xlu0 %2520
        %2522 = vrot.lane.b32.xlu0 %v1611, 96
        %v2523 = vpop.permute.xlu0 %2522
        %2524 = vrot.lane.b32.xlu0 %v1612, 96
        %v2525 = vpop.permute.xlu0 %2524
        %2526 = vrot.lane.b32.xlu0 %v1613, 96
        %v2527 = vpop.permute.xlu0 %2526
        %2528 = vrot.lane.b32.xlu0 %v1614, 96
        %v2529 = vpop.permute.xlu0 %2528
        %2530 = vrot.lane.b32.xlu0 %v1615, 96
        %v2531 = vpop.permute.xlu0 %2530
        %2532 = vrot.lane.b32.xlu0 %v1616, 96
        %v2533 = vpop.permute.xlu0 %2532
        %2534 = vrot.lane.b32.xlu0 %v1617, 96
        %v2535 = vpop.permute.xlu0 %2534
        %2536 = vrot.lane.b32.xlu0 %v1618, 96
        %v2537 = vpop.permute.xlu0 %2536
        %2538 = vrot.lane.b32.xlu0 %v1619, 96
        %v2539 = vpop.permute.xlu0 %2538
        %2540 = vrot.lane.b32.xlu0 %v1620, 96
        %v2541 = vpop.permute.xlu0 %2540
        %2542 = vrot.lane.b32.xlu0 %v1621, 96
        %v2543 = vpop.permute.xlu0 %2542
        %2544 = vrot.lane.b32.xlu0 %v1622, 96
        %v2545 = vpop.permute.xlu0 %2544
        %2546 = vrot.lane.b32.xlu0 %v1623, 96
        %v2547 = vpop.permute.xlu0 %2546
        %2548 = vrot.lane.b32.xlu0 %v1624, 96
        %v2549 = vpop.permute.xlu0 %2548
        %2550 = vrot.lane.b32.xlu0 %v1625, 96
        %v2551 = vpop.permute.xlu0 %2550
        %2552 = vrot.lane.b32.xlu0 %v1626, 96
        %v2553 = vpop.permute.xlu0 %2552
        %2554 = vrot.lane.b32.xlu0 %v1627, 96
        %v2555 = vpop.permute.xlu0 %2554
        %2556 = vrot.lane.b32.xlu0 %v1628, 96
        %v2557 = vpop.permute.xlu0 %2556
        %2558 = vrot.lane.b32.xlu0 %v1629, 96
        %v2559 = vpop.permute.xlu0 %2558
        %2560 = vrot.lane.b32.xlu0 %v1630, 96
        %v2561 = vpop.permute.xlu0 %2560
        %2562 = vrot.lane.b32.xlu0 %v1631, 96
        %v2563 = vpop.permute.xlu0 %2562
        %2564 = vrot.lane.b32.xlu0 %v1632, 96
        %v2565 = vpop.permute.xlu0 %2564
        %2566 = vrot.lane.b32.xlu0 %v1633, 96
        %v2567 = vpop.permute.xlu0 %2566
        %2568 = vrot.lane.b32.xlu0 %v1634, 96
        %v2569 = vpop.permute.xlu0 %2568
        %2570 = vrot.lane.b32.xlu0 %v1635, 96
        %v2571 = vpop.permute.xlu0 %2570
        %2572 = vrot.lane.b32.xlu0 %v1636, 96
        %v2573 = vpop.permute.xlu0 %2572
        %2574 = vrot.lane.b32.xlu0 %v1637, 96
        %v2575 = vpop.permute.xlu0 %2574
        %2576 = vrot.lane.b32.xlu0 %v1638, 96
        %v2577 = vpop.permute.xlu0 %2576
        %2578 = vrot.lane.b32.xlu0 %v1639, 96
        %v2579 = vpop.permute.xlu0 %2578
        %2580 = vrot.lane.b32.xlu0 %v1640, 96
        %v2581 = vpop.permute.xlu0 %2580
        %2582 = vrot.lane.b32.xlu0 %v1641, 96
        %v2583 = vpop.permute.xlu0 %2582
        %2584 = vrot.lane.b32.xlu0 %v1789, 96
        %v2585 = vpop.permute.xlu0 %2584
        %2586 = vrot.lane.b32.xlu0 %v1790, 96
        %v2587 = vpop.permute.xlu0 %2586
        %2588 = vrot.lane.b32.xlu0 %v1791, 96
        %v2589 = vpop.permute.xlu0 %2588
        %vm2626 = vcmask 261120
        %v2627 = vsel %vm2626, %v1570, %v1832
        %v2628 = vsel %vm2626, %v1571, %v1834
        %v2629 = vsel %vm2626, %v1572, %v1836
        %v2630 = vsel %vm2626, %v1573, %v1838
        %v2631 = vsel %vm2626, %v1574, %v1840
        %v2632 = vsel %vm2626, %v1575, %v1842
        %v2633 = vsel %vm2626, %v1576, %v1844
        %v2634 = vsel %vm2626, %v1577, %v1846
        %v2635 = vsel %vm2626, %v1578, %v1848
        %v2636 = vsel %vm2626, %v1579, %v1850
        %v2637 = vsel %vm2626, %v1580, %v1852
        %v2638 = vsel %vm2626, %v1581, %v1854
        %v2639 = vsel %vm2626, %v1582, %v1856
        %v2640 = vsel %vm2626, %v1583, %v1858
        %v2641 = vsel %vm2626, %v1584, %v1860
        %v2642 = vsel %vm2626, %v1585, %v1862
        %v2643 = vsel %vm2626, %v1586, %v1864
        %v2644 = vsel %vm2626, %v1587, %v1866
        %v2645 = vsel %vm2626, %v1588, %v1868
        %v2646 = vsel %vm2626, %v1589, %v1870
        %v2647 = vsel %vm2626, %v1590, %v1872
        %v2648 = vsel %vm2626, %v1591, %v1874
        %v2649 = vsel %vm2626, %v1592, %v1876
        %v2650 = vsel %vm2626, %v1593, %v1878
        %v2651 = vsel %vm2626, %v1594, %v1880
        %v2652 = vsel %vm2626, %v1595, %v1882
        %v2653 = vsel %vm2626, %v1596, %v1884
        %v2654 = vsel %vm2626, %v1597, %v1886
        %v2655 = vsel %vm2626, %v1598, %v1888
        %v2656 = vsel %vm2626, %v1599, %v1890
        %v2657 = vsel %vm2626, %v1600, %v1892
        %v2658 = vsel %vm2626, %v1601, %v1894
        %v2659 = vsel %vm2626, %v1602, %v1896
        %v2660 = vsel %vm2626, %v1603, %v1898
        %v2661 = vsel %vm2626, %v1604, %v1900
        %v2662 = vsel %vm2626, %v1605, %v1902
        %vm2663 = vcmask 523264
        %v2664 = vsel %vm2663, %v2627, %v1976
        %v2665 = vsel %vm2663, %v2628, %v1978
        %v2666 = vsel %vm2663, %v2629, %v1980
        %v2667 = vsel %vm2663, %v2630, %v1982
        %v2668 = vsel %vm2663, %v2631, %v1984
        %v2669 = vsel %vm2663, %v2632, %v1986
        %v2670 = vsel %vm2663, %v2633, %v1988
        %v2671 = vsel %vm2663, %v2634, %v1990
        %v2672 = vsel %vm2663, %v2635, %v1992
        %v2673 = vsel %vm2663, %v2636, %v1994
        %v2674 = vsel %vm2663, %v2637, %v1996
        %v2675 = vsel %vm2663, %v2638, %v1998
        %v2676 = vsel %vm2663, %v2639, %v2000
        %v2677 = vsel %vm2663, %v2640, %v2002
        %v2678 = vsel %vm2663, %v2641, %v2004
        %v2679 = vsel %vm2663, %v2642, %v2006
        %v2680 = vsel %vm2663, %v2643, %v2008
        %v2681 = vsel %vm2663, %v2644, %v2010
        %v2682 = vsel %vm2663, %v2645, %v2012
        %v2683 = vsel %vm2663, %v2646, %v2014
        %v2684 = vsel %vm2663, %v2647, %v2016
        %v2685 = vsel %vm2663, %v2648, %v2018
        %v2686 = vsel %vm2663, %v2649, %v2020
        %v2687 = vsel %vm2663, %v2650, %v2022
        %v2688 = vsel %vm2663, %v2651, %v2024
        %v2689 = vsel %vm2663, %v2652, %v2026
        %v2690 = vsel %vm2663, %v2653, %v2028
        %v2691 = vsel %vm2663, %v2654, %v2030
        %v2692 = vsel %vm2663, %v2655, %v2032
        %v2693 = vsel %vm2663, %v2656, %v2034
        %v2694 = vsel %vm2663, %v2657, %v2036
        %v2695 = vsel %vm2663, %v2658, %v2038
        %v2696 = vsel %vm2663, %v2659, %v2040
        %v2697 = vsel %vm2663, %v2660, %v2042
        %v2698 = vsel %vm2663, %v2661, %v2044
        %v2699 = vsel %vm2663, %v2662, %v2046
        %vm2700 = vcmask 785408
        %v2701 = vsel %vm2700, %v2664, %v2120
        %v2702 = vsel %vm2700, %v2665, %v2122
        %v2703 = vsel %vm2700, %v2666, %v2124
        %v2704 = vsel %vm2700, %v2667, %v2126
        %v2705 = vsel %vm2700, %v2668, %v2128
        %v2706 = vsel %vm2700, %v2669, %v2130
        %v2707 = vsel %vm2700, %v2670, %v2132
        %v2708 = vsel %vm2700, %v2671, %v2134
        %v2709 = vsel %vm2700, %v2672, %v2136
        %v2710 = vsel %vm2700, %v2673, %v2138
        %v2711 = vsel %vm2700, %v2674, %v2140
        %v2712 = vsel %vm2700, %v2675, %v2142
        %v2713 = vsel %vm2700, %v2676, %v2144
        %v2714 = vsel %vm2700, %v2677, %v2146
        %v2715 = vsel %vm2700, %v2678, %v2148
        %v2716 = vsel %vm2700, %v2679, %v2150
        %v2717 = vsel %vm2700, %v2680, %v2152
        %v2718 = vsel %vm2700, %v2681, %v2154
        %v2719 = vsel %vm2700, %v2682, %v2156
        %v2720 = vsel %vm2700, %v2683, %v2158
        %v2721 = vsel %vm2700, %v2684, %v2160
        %v2722 = vsel %vm2700, %v2685, %v2162
        %v2723 = vsel %vm2700, %v2686, %v2164
        %v2724 = vsel %vm2700, %v2687, %v2166
        %v2725 = vsel %vm2700, %v2688, %v2168
        %v2726 = vsel %vm2700, %v2689, %v2170
        %v2727 = vsel %vm2700, %v2690, %v2172
        %v2728 = vsel %vm2700, %v2691, %v2174
        %v2729 = vsel %vm2700, %v2692, %v2176
        %v2730 = vsel %vm2700, %v2693, %v2178
        %v2731 = vsel %vm2700, %v2694, %v2180
        %v2732 = vsel %vm2700, %v2695, %v2182
        %v2733 = vsel %vm2700, %v2696, %v2184
        %v2734 = vsel %vm2700, %v2697, %v2186
        %v2735 = vsel %vm2700, %v2698, %v2188
        %v2736 = vsel %vm2700, %v2699, %v2190
        %v2737 = vsel %vm2626, %v1714, %v2264
        %v2738 = vsel %vm2626, %v1715, %v2266
        %v2739 = vsel %vm2626, %v1716, %v2268
        %v2740 = vsel %vm2626, %v1717, %v2270
        %v2741 = vsel %vm2626, %v1718, %v2272
        %v2742 = vsel %vm2626, %v1719, %v2274
        %v2743 = vsel %vm2626, %v1720, %v2276
        %v2744 = vsel %vm2626, %v1721, %v2278
        %v2745 = vsel %vm2626, %v1722, %v2280
        %v2746 = vsel %vm2626, %v1723, %v2282
        %v2747 = vsel %vm2626, %v1724, %v2284
        %v2748 = vsel %vm2626, %v1725, %v2286
        %v2749 = vsel %vm2626, %v1726, %v2288
        %v2750 = vsel %vm2626, %v1727, %v2290
        %v2751 = vsel %vm2626, %v1728, %v2292
        %v2752 = vsel %vm2626, %v1729, %v2294
        %v2753 = vsel %vm2626, %v1730, %v2296
        %v2754 = vsel %vm2626, %v1731, %v2298
        %v2755 = vsel %vm2626, %v1732, %v2300
        %v2756 = vsel %vm2626, %v1733, %v2302
        %v2757 = vsel %vm2626, %v1734, %v2304
        %v2758 = vsel %vm2626, %v1735, %v2306
        %v2759 = vsel %vm2626, %v1736, %v2308
        %v2760 = vsel %vm2626, %v1737, %v2310
        %v2761 = vsel %vm2626, %v1738, %v2312
        %v2762 = vsel %vm2626, %v1739, %v2314
        %v2763 = vsel %vm2626, %v1740, %v2316
        %v2764 = vsel %vm2626, %v1741, %v2318
        %v2765 = vsel %vm2626, %v1742, %v2320
        %v2766 = vsel %vm2626, %v1743, %v2322
        %v2767 = vsel %vm2626, %v1744, %v2324
        %v2768 = vsel %vm2626, %v1745, %v2326
        %v2769 = vsel %vm2626, %v1746, %v2328
        %v2770 = vsel %vm2626, %v1747, %v2330
        %v2771 = vsel %vm2626, %v1748, %v2332
        %v2772 = vsel %vm2626, %v1749, %v2334
        %v2773 = vsel %vm2663, %v2737, %v2408
        %v2774 = vsel %vm2663, %v2738, %v2410
        %v2775 = vsel %vm2663, %v2739, %v2412
        %v2776 = vsel %vm2663, %v2740, %v2414
        %v2777 = vsel %vm2663, %v2741, %v2416
        %v2778 = vsel %vm2663, %v2742, %v2418
        %v2779 = vsel %vm2663, %v2743, %v2420
        %v2780 = vsel %vm2663, %v2744, %v2422
        %v2781 = vsel %vm2663, %v2745, %v2424
        %v2782 = vsel %vm2663, %v2746, %v2426
        %v2783 = vsel %vm2663, %v2747, %v2428
        %v2784 = vsel %vm2663, %v2748, %v2430
        %v2785 = vsel %vm2663, %v2749, %v2432
        %v2786 = vsel %vm2663, %v2750, %v2434
        %v2787 = vsel %vm2663, %v2751, %v2436
        %v2788 = vsel %vm2663, %v2752, %v2438
        %v2789 = vsel %vm2663, %v2753, %v2440
        %v2790 = vsel %vm2663, %v2754, %v2442
        %v2791 = vsel %vm2663, %v2755, %v2444
        %v2792 = vsel %vm2663, %v2756, %v2446
        %v2793 = vsel %vm2663, %v2757, %v2448
        %v2794 = vsel %vm2663, %v2758, %v2450
        %v2795 = vsel %vm2663, %v2759, %v2452
        %v2796 = vsel %vm2663, %v2760, %v2454
        %v2797 = vsel %vm2663, %v2761, %v2456
        %v2798 = vsel %vm2663, %v2762, %v2458
        %v2799 = vsel %vm2663, %v2763, %v2460
        %v2800 = vsel %vm2663, %v2764, %v2462
        %v2801 = vsel %vm2663, %v2765, %v2464
        %v2802 = vsel %vm2663, %v2766, %v2466
        %v2803 = vsel %vm2663, %v2767, %v2468
        %v2804 = vsel %vm2663, %v2768, %v2470
        %v2805 = vsel %vm2663, %v2769, %v2472
        %v2806 = vsel %vm2663, %v2770, %v2474
        %v2807 = vsel %vm2663, %v2771, %v2476
        %v2808 = vsel %vm2663, %v2772, %v2478
        %v2809 = vsel %vm2700, %v2773, %v2519
        %v2810 = vsel %vm2700, %v2774, %v2521
        %v2811 = vsel %vm2700, %v2775, %v2523
        %v2812 = vsel %vm2700, %v2776, %v2525
        %v2813 = vsel %vm2700, %v2777, %v2527
        %v2814 = vsel %vm2700, %v2778, %v2529
        %v2815 = vsel %vm2700, %v2779, %v2531
        %v2816 = vsel %vm2700, %v2780, %v2533
        %v2817 = vsel %vm2700, %v2781, %v2535
        %v2818 = vsel %vm2700, %v2782, %v2537
        %v2819 = vsel %vm2700, %v2783, %v2539
        %v2820 = vsel %vm2700, %v2784, %v2541
        %v2821 = vsel %vm2700, %v2785, %v2543
        %v2822 = vsel %vm2700, %v2786, %v2545
        %v2823 = vsel %vm2700, %v2787, %v2547
        %v2824 = vsel %vm2700, %v2788, %v2549
        %v2825 = vsel %vm2700, %v2789, %v2551
        %v2826 = vsel %vm2700, %v2790, %v2553
        %v2827 = vsel %vm2700, %v2791, %v2555
        %v2828 = vsel %vm2700, %v2792, %v2557
        %v2829 = vsel %vm2700, %v2793, %v2559
        %v2830 = vsel %vm2700, %v2794, %v2561
        %v2831 = vsel %vm2700, %v2795, %v2563
        %v2832 = vsel %vm2700, %v2796, %v2565
        %v2833 = vsel %vm2700, %v2797, %v2567
        %v2834 = vsel %vm2700, %v2798, %v2569
        %v2835 = vsel %vm2700, %v2799, %v2571
        %v2836 = vsel %vm2700, %v2800, %v2573
        %v2837 = vsel %vm2700, %v2801, %v2575
        %v2838 = vsel %vm2700, %v2802, %v2577
        %v2839 = vsel %vm2700, %v2803, %v2579
        %v2840 = vsel %vm2700, %v2804, %v2581
        %v2841 = vsel %vm2700, %v2805, %v2583
        %v2842 = vsel %vm2700, %v2806, %v2585
        %v2843 = vsel %vm2700, %v2807, %v2587
        %v2844 = vsel %vm2700, %v2808, %v2589
        %v2845 = vld [vmem:[%s274] sm:$0xff]
        %v2846 = vld [vmem:[%s274 + $0x8] sm:$0xff]
        %v2847 = vld [vmem:[%s274 + $0x10] sm:$0xff]
        %v2848 = vld [vmem:[%s274 + $0x18] sm:$0xff]
        %v2849 = vld [vmem:[%s274 + $0x20] sm:$0xff]
        %v2850 = vld [vmem:[%s274 + $0x28] sm:$0xff]
        %v2851 = vld [vmem:[%s274 + $0x30] sm:$0xff]
        %v2852 = vld [vmem:[%s274 + $0x38] sm:$0xff]
        %v2853 = vld [vmem:[%s274 + $0x40] sm:$0xff]
        %v2854 = vld [vmem:[%s274 + $0x48] sm:$0xff]
        %v2855 = vld [vmem:[%s274 + $0x50] sm:$0xff]
        %v2856 = vld [vmem:[%s274 + $0x58] sm:$0xff]
        %v2857 = vld [vmem:[%s274 + $0x60] sm:$0xff]
        %v2858 = vld [vmem:[%s274 + $0x68] sm:$0xff]
        %v2859 = vld [vmem:[%s274 + $0x70] sm:$0xff]
        %v2860 = vld [vmem:[%s274 + $0x78] sm:$0xff]
        %v2861 = vld [vmem:[%s274 + $0x80] sm:$0xff]
        %v2862 = vld [vmem:[%s274 + $0x88] sm:$0xff]
        %v2863 = vld [vmem:[%s274 + $0x90] sm:$0xff]
        %v2864 = vld [vmem:[%s274 + $0x98] sm:$0xff]
        %v2865 = vld [vmem:[%s274 + $0xa0] sm:$0xff]
        %v2866 = vld [vmem:[%s274 + $0xa8] sm:$0xff]
        %v2867 = vld [vmem:[%s274 + $0xb0] sm:$0xff]
        %v2868 = vld [vmem:[%s274 + $0xb8] sm:$0xff]
        %v2869 = vld [vmem:[%s274 + $0xc0] sm:$0xff]
        %v2870 = vld [vmem:[%s274 + $0xc8] sm:$0xff]
        %v2871 = vld [vmem:[%s274 + $0xd0] sm:$0xff]
        %v2872 = vld [vmem:[%s274 + $0xd8] sm:$0xff]
        %v2873 = vld [vmem:[%s274 + $0xe0] sm:$0xff]
        %v2874 = vld [vmem:[%s274 + $0xe8] sm:$0xff]
        %v2875 = vld [vmem:[%s274 + $0xf0] sm:$0xff]
        %v2876 = vld [vmem:[%s274 + $0xf8] sm:$0xff]
        %v2877 = vld [vmem:[%s274 + $0x100] sm:$0xff]
        %v2878 = vld [vmem:[%s274 + $0x108] sm:$0xff]
        %v2879 = vld [vmem:[%s274 + $0x110] sm:$0xff]
        %v2880 = vld [vmem:[%s274 + $0x118] sm:$0xff]
        %v2881 = vld [vmem:[%s277] sm:$0x1]
        %v2883 = vlaneseq
        %v2884 = vshrl.u32 %v2883, 7
        %v2885 = vsub.s32 0, %v2884
        %v2886 = vrot.slane %v2881, %v2885
        %v2888 = vsel %vm2626, %v1645, 0
        %v2890 = vsel %vm2626, %v1646, 0
        %v2892 = vsel %vm2626, %v1647, 0
        %v2894 = vsel %vm2626, %v1648, 0
        %v2896 = vsel %vm2626, %v1649, 0
        %v2898 = vsel %vm2626, %v1650, 0
        %v2900 = vsel %vm2626, %v1651, 0
        %v2902 = vsel %vm2626, %v1652, 0
        %v2904 = vsel %vm2626, %v1653, 0
        %v2906 = vsel %vm2626, %v1654, 0
        %v2908 = vsel %vm2626, %v1655, 0
        %v2910 = vsel %vm2626, %v1656, 0
        %v2912 = vsel %vm2626, %v1657, 0
        %v2914 = vsel %vm2626, %v1658, 0
        %v2916 = vsel %vm2626, %v1659, 0
        %v2918 = vsel %vm2626, %v1660, 0
        %v2920 = vsel %vm2626, %v1661, 0
        %v2922 = vsel %vm2626, %v1662, 0
        %v2924 = vsel %vm2626, %v1663, 0
        %v2926 = vsel %vm2626, %v1664, 0
        %v2928 = vsel %vm2626, %v1665, 0
        %v2930 = vsel %vm2626, %v1666, 0
        %v2932 = vsel %vm2626, %v1667, 0
        %v2934 = vsel %vm2626, %v1668, 0
        %v2936 = vsel %vm2626, %v1669, 0
        %v2938 = vsel %vm2626, %v1670, 0
        %v2940 = vsel %vm2626, %v1671, 0
        %v2942 = vsel %vm2626, %v1672, 0
        %v2944 = vsel %vm2626, %v1673, 0
        %v2946 = vsel %vm2626, %v1674, 0
        %v2948 = vsel %vm2626, %v1675, 0
        %v2950 = vsel %vm2626, %v1676, 0
        %v2952 = vsel %vm2626, %v1677, 0
        %v2955 = vsel %vm2626, %v1792, 0
        %v2958 = vsel %vm2626, %v1793, 0
        %v2961 = vsel %vm2626, %v1794, 0
        %2963 = vmatprep.subr.mxu0 0.0
        %2964 = vmatpush1.msra.mxu0 %v2845
        %2965 = vmatprep.subr.mxu0 0.0
        %2966 = vmatpush1.msra.mxu0 %v2846
        %2967 = vmatprep.subr.mxu0 0.0
        %2968 = vmatpush1.msra.mxu0 %v2847
        %2969 = vmatprep.subr.mxu0 0.0
        %2970 = vmatpush1.msra.mxu0 %v2848
        %2971 = vmatprep.subr.mxu0 0.0
        %2972 = vmatpush1.msra.mxu0 %v2849
        %2973 = vmatprep.subr.mxu0 0.0
        %2974 = vmatpush1.msra.mxu0 %v2850
        %2975 = vmatprep.subr.mxu0 0.0
        %2976 = vmatpush1.msra.mxu0 %v2851
        %2977 = vmatprep.subr.mxu0 0.0
        %2978 = vmatpush1.msra.mxu0 %v2852
        %2979 = vmatprep.subr.mxu0 0.0
        %2980 = vmatpush1.msra.mxu0 %v2853
        %2981 = vmatprep.subr.mxu0 0.0
        %2982 = vmatpush1.msra.mxu0 %v2854
        %2983 = vmatprep.subr.mxu0 0.0
        %2984 = vmatpush1.msra.mxu0 %v2855
        %2985 = vmatprep.subr.mxu0 0.0
        %2986 = vmatpush1.msra.mxu0 %v2856
        %2987 = vmatprep.subr.mxu0 0.0
        %2988 = vmatpush1.msra.mxu0 %v2857
        %2989 = vmatprep.subr.mxu0 0.0
        %2990 = vmatpush1.msra.mxu0 %v2858
        %2991 = vmatprep.subr.mxu0 0.0
        %2992 = vmatpush1.msra.mxu0 %v2859
        %2993 = vmatprep.subr.mxu0 0.0
        %2994 = vmatpush1.msra.mxu0 %v2860
        %2995 = vmatprep.subr.mxu0 0.0
        %2996 = vmatpush1.msra.mxu0 %v2861
        %2997 = vmatprep.subr.mxu0 0.0
        %2998 = vmatpush1.msra.mxu0 %v2862
        %2999 = vmatprep.subr.mxu0 0.0
        %3000 = vmatpush1.msra.mxu0 %v2863
        %3001 = vmatprep.subr.mxu0 0.0
        %3002 = vmatpush1.msra.mxu0 %v2864
        %3003 = vmatprep.subr.mxu0 0.0
        %3004 = vmatpush1.msra.mxu0 %v2865
        %3005 = vmatprep.subr.mxu0 0.0
        %3006 = vmatpush1.msra.mxu0 %v2866
        %3007 = vmatprep.subr.mxu0 0.0
        %3008 = vmatpush1.msra.mxu0 %v2867
        %3009 = vmatprep.subr.mxu0 0.0
        %3010 = vmatpush1.msra.mxu0 %v2868
        %3011 = vmatprep.subr.mxu0 0.0
        %3012 = vmatpush1.msra.mxu0 %v2869
        %3013 = vmatprep.subr.mxu0 0.0
        %3014 = vmatpush1.msra.mxu0 %v2870
        %3015 = vmatprep.subr.mxu0 0.0
        %3016 = vmatpush1.msra.mxu0 %v2871
        %3017 = vmatprep.subr.mxu0 0.0
        %3018 = vmatpush1.msra.mxu0 %v2872
        %3019 = vmatprep.subr.mxu0 0.0
        %3020 = vmatpush1.msra.mxu0 %v2873
        %3021 = vmatprep.subr.mxu0 0.0
        %3022 = vmatpush1.msra.mxu0 %v2874
        %3023 = vmatprep.subr.mxu0 0.0
        %3024 = vmatpush1.msra.mxu0 %v2875
        %3025 = vmatprep.subr.mxu0 0.0
        %3026 = vmatpush1.msra.mxu0 %v2876
        %3027 = vmatprep.mubr.f32.mxu0 %v2809
        %3028 = vmatmul.mubr.f32.gmra.mrb[0].mxu0 %v2701
        %v3029 = vpop.f32.mrb[0].mxu0
        %v3030 = vadd.f32 %v2886, %v3029
        %v3031 = vpop.f32.mrb[0].mxu0
        %3032 = vmatprep.mubr.f32.mxu0 %v2810
        %3033 = vmatmul.mubr.f32.gmra.mrb[0].mxu0 %v2702
        %v3034 = vpop.f32.mrb[0].mxu0
        %v3035 = vadd.f32 %v2886, %v3034
        %v3036 = vpop.f32.mrb[0].mxu0
        %3037 = vmatprep.mubr.f32.mxu0 %v2811
        %3038 = vmatmul.mubr.f32.gmra.mrb[0].mxu0 %v2703
        %v3039 = vpop.f32.mrb[0].mxu0
        %v3040 = vadd.f32 %v2886, %v3039
        %v3041 = vpop.f32.mrb[0].mxu0
        %3042 = vmatprep.mubr.f32.mxu0 %v2812
        %3043 = vmatmul.mubr.f32.gmra.mrb[0].mxu0 %v2704
        %v3044 = vpop.f32.mrb[0].mxu0
        %v3045 = vadd.f32 %v2886, %v3044
        %v3046 = vpop.f32.mrb[0].mxu0
        %3047 = vmatprep.mubr.f32.mxu0 %v2813
        %3048 = vmatmul.mubr.f32.gmra.mrb[0].mxu0 %v2705
        %v3049 = vpop.f32.mrb[0].mxu0
        %v3050 = vadd.f32 %v2886, %v3049
        %v3051 = vpop.f32.mrb[0].mxu0
        %3052 = vmatprep.mubr.f32.mxu0 %v2814
        %3053 = vmatmul.mubr.f32.gmra.mrb[0].mxu0 %v2706
        %v3054 = vpop.f32.mrb[0].mxu0
        %v3055 = vadd.f32 %v2886, %v3054
        %v3056 = vpop.f32.mrb[0].mxu0
        %3057 = vmatprep.mubr.f32.mxu0 %v2815
        %3058 = vmatmul.mubr.f32.gmra.mrb[0].mxu0 %v2707
        %v3059 = vpop.f32.mrb[0].mxu0
        %v3060 = vadd.f32 %v2886, %v3059
        %v3061 = vpop.f32.mrb[0].mxu0
        %3062 = vmatprep.mubr.f32.mxu0 %v2816
        %3063 = vmatmul.mubr.f32.gmra.mrb[0].mxu0 %v2708
        %v3064 = vpop.f32.mrb[0].mxu0
        %v3065 = vadd.f32 %v2886, %v3064
        %v3066 = vpop.f32.mrb[0].mxu0
        %3067 = vmatprep.mubr.f32.mxu0 %v2817
        %3068 = vmatmul.mubr.f32.gmra.mrb[0].mxu0 %v2709
        %v3069 = vpop.f32.mrb[0].mxu0
        %v3070 = vadd.f32 %v2886, %v3069
        %v3071 = vpop.f32.mrb[0].mxu0
        %3072 = vmatprep.mubr.f32.mxu0 %v2818
        %3073 = vmatmul.mubr.f32.gmra.mrb[0].mxu0 %v2710
        %v3074 = vpop.f32.mrb[0].mxu0
        %v3075 = vadd.f32 %v2886, %v3074
        %v3076 = vpop.f32.mrb[0].mxu0
        %3077 = vmatprep.mubr.f32.mxu0 %v2819
        %3078 = vmatmul.mubr.f32.gmra.mrb[0].mxu0 %v2711
        %v3079 = vpop.f32.mrb[0].mxu0
        %v3080 = vadd.f32 %v2886, %v3079
        %v3081 = vpop.f32.mrb[0].mxu0
        %3082 = vmatprep.mubr.f32.mxu0 %v2820
        %3083 = vmatmul.mubr.f32.gmra.mrb[0].mxu0 %v2712
        %v3084 = vpop.f32.mrb[0].mxu0
        %v3085 = vadd.f32 %v2886, %v3084
        %v3086 = vpop.f32.mrb[0].mxu0
        %3087 = vmatprep.mubr.f32.mxu0 %v2821
        %3088 = vmatmul.mubr.f32.gmra.mrb[0].mxu0 %v2713
        %v3089 = vpop.f32.mrb[0].mxu0
        %v3090 = vadd.f32 %v2886, %v3089
        %v3091 = vpop.f32.mrb[0].mxu0
        %3092 = vmatprep.mubr.f32.mxu0 %v2822
        %3093 = vmatmul.mubr.f32.gmra.mrb[0].mxu0 %v2714
        %v3094 = vpop.f32.mrb[0].mxu0
        %v3095 = vadd.f32 %v2886, %v3094
        %v3096 = vpop.f32.mrb[0].mxu0
        %3097 = vmatprep.mubr.f32.mxu0 %v2823
        %3098 = vmatmul.mubr.f32.gmra.mrb[0].mxu0 %v2715
        %v3099 = vpop.f32.mrb[0].mxu0
        %v3100 = vadd.f32 %v2886, %v3099
        %v3101 = vpop.f32.mrb[0].mxu0
        %3102 = vmatprep.mubr.f32.mxu0 %v2824
        %3103 = vmatmul.mubr.f32.gmra.mrb[0].mxu0 %v2716
        %v3104 = vpop.f32.mrb[0].mxu0
        %v3105 = vadd.f32 %v2886, %v3104
        %v3106 = vpop.f32.mrb[0].mxu0
        %3107 = vmatprep.mubr.f32.mxu0 %v2825
        %3108 = vmatmul.mubr.f32.gmra.mrb[0].mxu0 %v2717
        %v3109 = vpop.f32.mrb[0].mxu0
        %v3110 = vadd.f32 %v2886, %v3109
        %v3111 = vpop.f32.mrb[0].mxu0
        %3112 = vmatprep.mubr.f32.mxu0 %v2826
        %3113 = vmatmul.mubr.f32.gmra.mrb[0].mxu0 %v2718
        %v3114 = vpop.f32.mrb[0].mxu0
        %v3115 = vadd.f32 %v2886, %v3114
        %v3116 = vpop.f32.mrb[0].mxu0
        %3117 = vmatprep.mubr.f32.mxu0 %v2827
        %3118 = vmatmul.mubr.f32.gmra.mrb[0].mxu0 %v2719
        %v3119 = vpop.f32.mrb[0].mxu0
        %v3120 = vadd.f32 %v2886, %v3119
        %v3121 = vpop.f32.mrb[0].mxu0
        %3122 = vmatprep.mubr.f32.mxu0 %v2828
        %3123 = vmatmul.mubr.f32.gmra.mrb[0].mxu0 %v2720
        %v3124 = vpop.f32.mrb[0].mxu0
        %v3125 = vadd.f32 %v2886, %v3124
        %v3126 = vpop.f32.mrb[0].mxu0
        %3127 = vmatprep.mubr.f32.mxu0 %v2829
        %3128 = vmatmul.mubr.f32.gmra.mrb[0].mxu0 %v2721
        %v3129 = vpop.f32.mrb[0].mxu0
        %v3130 = vadd.f32 %v2886, %v3129
        %v3131 = vpop.f32.mrb[0].mxu0
        %3132 = vmatprep.mubr.f32.mxu0 %v2830
        %3133 = vmatmul.mubr.f32.gmra.mrb[0].mxu0 %v2722
        %v3134 = vpop.f32.mrb[0].mxu0
        %v3135 = vadd.f32 %v2886, %v3134
        %v3136 = vpop.f32.mrb[0].mxu0
        %3137 = vmatprep.mubr.f32.mxu0 %v2831
        %3138 = vmatmul.mubr.f32.gmra.mrb[0].mxu0 %v2723
        %v3139 = vpop.f32.mrb[0].mxu0
        %v3140 = vadd.f32 %v2886, %v3139
        %v3141 = vpop.f32.mrb[0].mxu0
        %3142 = vmatprep.mubr.f32.mxu0 %v2832
        %3143 = vmatmul.mubr.f32.gmra.mrb[0].mxu0 %v2724
        %v3144 = vpop.f32.mrb[0].mxu0
        %v3145 = vadd.f32 %v2886, %v3144
        %v3146 = vpop.f32.mrb[0].mxu0
        %3147 = vmatprep.mubr.f32.mxu0 %v2833
        %3148 = vmatmul.mubr.f32.gmra.mrb[0].mxu0 %v2725
        %v3149 = vpop.f32.mrb[0].mxu0
        %v3150 = vadd.f32 %v2886, %v3149
        %v3151 = vpop.f32.mrb[0].mxu0
        %3152 = vmatprep.mubr.f32.mxu0 %v2834
        %3153 = vmatmul.mubr.f32.gmra.mrb[0].mxu0 %v2726
        %v3154 = vpop.f32.mrb[0].mxu0
        %v3155 = vadd.f32 %v2886, %v3154
        %v3156 = vpop.f32.mrb[0].mxu0
        %3157 = vmatprep.mubr.f32.mxu0 %v2835
        %3158 = vmatmul.mubr.f32.gmra.mrb[0].mxu0 %v2727
        %v3159 = vpop.f32.mrb[0].mxu0
        %v3160 = vadd.f32 %v2886, %v3159
        %v3161 = vpop.f32.mrb[0].mxu0
        %3162 = vmatprep.mubr.f32.mxu0 %v2836
        %3163 = vmatmul.mubr.f32.gmra.mrb[0].mxu0 %v2728
        %v3164 = vpop.f32.mrb[0].mxu0
        %v3165 = vadd.f32 %v2886, %v3164
        %v3166 = vpop.f32.mrb[0].mxu0
        %3167 = vmatprep.mubr.f32.mxu0 %v2837
        %3168 = vmatmul.mubr.f32.gmra.mrb[0].mxu0 %v2729
        %v3169 = vpop.f32.mrb[0].mxu0
        %v3170 = vadd.f32 %v2886, %v3169
        %v3171 = vpop.f32.mrb[0].mxu0
        %3172 = vmatprep.mubr.f32.mxu0 %v2838
        %3173 = vmatmul.mubr.f32.gmra.mrb[0].mxu0 %v2730
        %v3174 = vpop.f32.mrb[0].mxu0
        %v3175 = vadd.f32 %v2886, %v3174
        %v3176 = vpop.f32.mrb[0].mxu0
        %3177 = vmatprep.mubr.f32.mxu0 %v2839
        %3178 = vmatmul.mubr.f32.gmra.mrb[0].mxu0 %v2731
        %v3179 = vpop.f32.mrb[0].mxu0
        %v3180 = vadd.f32 %v2886, %v3179
        %v3181 = vpop.f32.mrb[0].mxu0
        %3182 = vmatprep.mubr.f32.mxu0 %v2840
        %3183 = vmatmul.mubr.f32.gmra.mrb[0].mxu0 %v2732
        %v3184 = vpop.f32.mrb[0].mxu0
        %v3185 = vadd.f32 %v2886, %v3184
        %v3186 = vpop.f32.mrb[0].mxu0
        %3187 = vmatprep.mubr.f32.mxu0 %v2841
        %3188 = vmatmul.mubr.f32.gmra.mrb[0].mxu0 %v2733
        %v3189 = vpop.f32.mrb[0].mxu0
        %v3190 = vadd.f32 %v2886, %v3189
        %v3191 = vpop.f32.mrb[0].mxu0
        %3192 = vmatprep.mubr.f32.mxu0 %v2842
        %3193 = vmatmul.mubr.f32.gmra.mrb[0].mxu0 %v2734
        %v3194 = vpop.f32.mrb[0].mxu0
        %v3195 = vadd.f32 %v2886, %v3194
        %v3196 = vpop.f32.mrb[0].mxu0
        %3197 = vmatprep.mubr.f32.mxu0 %v2843
        %3198 = vmatmul.mubr.f32.gmra.mrb[0].mxu0 %v2735
        %v3199 = vpop.f32.mrb[0].mxu0
        %v3200 = vadd.f32 %v2886, %v3199
        %v3201 = vpop.f32.mrb[0].mxu0
        %3202 = vmatprep.mubr.f32.mxu0 %v2844
        %3203 = vmatmul.mubr.f32.gmra.mrb[0].mxu0 %v2736
        %v3204 = vpop.f32.mrb[0].mxu0
        %v3205 = vadd.f32 %v2886, %v3204
        %v3206 = vpop.f32.mrb[0].mxu0
        %3207 = vdwg.mxu0
        %3208 = vmatprep.subr.mxu0 0.0
        %3209 = vmatpush1.msra.mxu0 %v2877
        %3210 = vmatprep.subr.mxu0 0.0
        %3211 = vmatpush1.msra.mxu0 %v2878
        %3212 = vmatprep.subr.mxu0 0.0
        %3213 = vmatpush1.msra.mxu0 %v2879
        %3214 = vmatprep.subr.mxu0 0.0
        %3215 = vmatpush1.msra.mxu0 %v2880
        %3216 = vmatprep.subr.mxu0 0.0
        %3217 = vmatpush1.msra.mxu0 0.0
        %3218 = vmatprep.subr.mxu0 0.0
        %3219 = vmatpush1.msra.mxu0 0.0
        %3220 = vmatprep.subr.mxu0 0.0
        %3221 = vmatpush1.msra.mxu0 0.0
        %3222 = vmatprep.subr.mxu0 0.0
        %3223 = vmatpush1.msra.mxu0 0.0
        %3224 = vmatprep.subr.mxu0 0.0
        %3225 = vmatpush1.msra.mxu0 0.0
        %3226 = vmatprep.subr.mxu0 0.0
        %3227 = vmatpush1.msra.mxu0 0.0
        %3228 = vmatprep.subr.mxu0 0.0
        %3229 = vmatpush1.msra.mxu0 0.0
        %3230 = vmatprep.subr.mxu0 0.0
        %3231 = vmatpush1.msra.mxu0 0.0
        %3232 = vmatprep.subr.mxu0 0.0
        %3233 = vmatpush1.msra.mxu0 0.0
        %3234 = vmatprep.subr.mxu0 0.0
        %3235 = vmatpush1.msra.mxu0 0.0
        %3236 = vmatprep.subr.mxu0 0.0
        %3237 = vmatpush1.msra.mxu0 0.0
        %3238 = vmatprep.subr.mxu0 0.0
        %3239 = vmatpush1.msra.mxu0 0.0
        %3240 = vmatprep.subr.mxu0 0.0
        %3241 = vmatpush1.msra.mxu0 0.0
        %3242 = vmatprep.subr.mxu0 0.0
        %3243 = vmatpush1.msra.mxu0 0.0
        %3244 = vmatprep.subr.mxu0 0.0
        %3245 = vmatpush1.msra.mxu0 0.0
        %3246 = vmatprep.subr.mxu0 0.0
        %3247 = vmatpush1.msra.mxu0 0.0
        %3248 = vmatprep.subr.mxu0 0.0
        %3249 = vmatpush1.msra.mxu0 0.0
        %3250 = vmatprep.subr.mxu0 0.0
        %3251 = vmatpush1.msra.mxu0 0.0
        %3252 = vmatprep.subr.mxu0 0.0
        %3253 = vmatpush1.msra.mxu0 0.0
        %3254 = vmatprep.subr.mxu0 0.0
        %3255 = vmatpush1.msra.mxu0 0.0
        %3256 = vmatprep.subr.mxu0 0.0
        %3257 = vmatpush1.msra.mxu0 0.0
        %3258 = vmatprep.subr.mxu0 0.0
        %3259 = vmatpush1.msra.mxu0 0.0
        %3260 = vmatprep.subr.mxu0 0.0
        %3261 = vmatpush1.msra.mxu0 0.0
        %3262 = vmatprep.subr.mxu0 0.0
        %3263 = vmatpush1.msra.mxu0 0.0
        %3264 = vmatprep.subr.mxu0 0.0
        %3265 = vmatpush1.msra.mxu0 0.0
        %3266 = vmatprep.subr.mxu0 0.0
        %3267 = vmatpush1.msra.mxu0 0.0
        %3268 = vmatprep.subr.mxu0 0.0
        %3269 = vmatpush1.msra.mxu0 0.0
        %3270 = vmatprep.subr.mxu0 0.0
        %3271 = vmatpush1.msra.mxu0 0.0
        %3272 = vmatprep.mubr.f32.mxu0 0.0
        %3273 = vmatmul.mubr.f32.gmra.mrb[0].mxu0 %v2888
        %v3274 = vpop.f32.mrb[0].mxu0
        %v3275 = vadd.f32 %v3030, %v3274
        %v3276 = vpop.f32.mrb[0].mxu0
        %3277 = vmatprep.mubr.f32.mxu0 0.0
        %3278 = vmatmul.mubr.f32.gmra.mrb[0].mxu0 %v2890
        %v3279 = vpop.f32.mrb[0].mxu0
        %v3280 = vadd.f32 %v3035, %v3279
        %v3281 = vpop.f32.mrb[0].mxu0
        %3282 = vmatprep.mubr.f32.mxu0 0.0
        %3283 = vmatmul.mubr.f32.gmra.mrb[0].mxu0 %v2892
        %v3284 = vpop.f32.mrb[0].mxu0
        %v3285 = vadd.f32 %v3040, %v3284
        %v3286 = vpop.f32.mrb[0].mxu0
        %3287 = vmatprep.mubr.f32.mxu0 0.0
        %3288 = vmatmul.mubr.f32.gmra.mrb[0].mxu0 %v2894
        %v3289 = vpop.f32.mrb[0].mxu0
        %v3290 = vadd.f32 %v3045, %v3289
        %v3291 = vpop.f32.mrb[0].mxu0
        %3292 = vmatprep.mubr.f32.mxu0 0.0
        %3293 = vmatmul.mubr.f32.gmra.mrb[0].mxu0 %v2896
        %v3294 = vpop.f32.mrb[0].mxu0
        %v3295 = vadd.f32 %v3050, %v3294
        %v3296 = vpop.f32.mrb[0].mxu0
        %3297 = vmatprep.mubr.f32.mxu0 0.0
        %3298 = vmatmul.mubr.f32.gmra.mrb[0].mxu0 %v2898
        %v3299 = vpop.f32.mrb[0].mxu0
        %v3300 = vadd.f32 %v3055, %v3299
        %v3301 = vpop.f32.mrb[0].mxu0
        %3302 = vmatprep.mubr.f32.mxu0 0.0
        %3303 = vmatmul.mubr.f32.gmra.mrb[0].mxu0 %v2900
        %v3304 = vpop.f32.mrb[0].mxu0
        %v3305 = vadd.f32 %v3060, %v3304
        %v3306 = vpop.f32.mrb[0].mxu0
        %3307 = vmatprep.mubr.f32.mxu0 0.0
        %3308 = vmatmul.mubr.f32.gmra.mrb[0].mxu0 %v2902
        %v3309 = vpop.f32.mrb[0].mxu0
        %v3310 = vadd.f32 %v3065, %v3309
        %v3311 = vpop.f32.mrb[0].mxu0
        %3312 = vmatprep.mubr.f32.mxu0 0.0
        %3313 = vmatmul.mubr.f32.gmra.mrb[0].mxu0 %v2904
        %v3314 = vpop.f32.mrb[0].mxu0
        %v3315 = vadd.f32 %v3070, %v3314
        %v3316 = vpop.f32.mrb[0].mxu0
        %3317 = vmatprep.mubr.f32.mxu0 0.0
        %3318 = vmatmul.mubr.f32.gmra.mrb[0].mxu0 %v2906
        %v3319 = vpop.f32.mrb[0].mxu0
        %v3320 = vadd.f32 %v3075, %v3319
        %v3321 = vpop.f32.mrb[0].mxu0
        %3322 = vmatprep.mubr.f32.mxu0 0.0
        %3323 = vmatmul.mubr.f32.gmra.mrb[0].mxu0 %v2908
        %v3324 = vpop.f32.mrb[0].mxu0
        %v3325 = vadd.f32 %v3080, %v3324
        %v3326 = vpop.f32.mrb[0].mxu0
        %3327 = vmatprep.mubr.f32.mxu0 0.0
        %3328 = vmatmul.mubr.f32.gmra.mrb[0].mxu0 %v2910
        %v3329 = vpop.f32.mrb[0].mxu0
        %v3330 = vadd.f32 %v3085, %v3329
        %v3331 = vpop.f32.mrb[0].mxu0
        %3332 = vmatprep.mubr.f32.mxu0 0.0
        %3333 = vmatmul.mubr.f32.gmra.mrb[0].mxu0 %v2912
        %v3334 = vpop.f32.mrb[0].mxu0
        %v3335 = vadd.f32 %v3090, %v3334
        %v3336 = vpop.f32.mrb[0].mxu0
        %3337 = vmatprep.mubr.f32.mxu0 0.0
        %3338 = vmatmul.mubr.f32.gmra.mrb[0].mxu0 %v2914
        %v3339 = vpop.f32.mrb[0].mxu0
        %v3340 = vadd.f32 %v3095, %v3339
        %v3341 = vpop.f32.mrb[0].mxu0
        %3342 = vmatprep.mubr.f32.mxu0 0.0
        %3343 = vmatmul.mubr.f32.gmra.mrb[0].mxu0 %v2916
        %v3344 = vpop.f32.mrb[0].mxu0
        %v3345 = vadd.f32 %v3100, %v3344
        %v3346 = vpop.f32.mrb[0].mxu0
        %3347 = vmatprep.mubr.f32.mxu0 0.0
        %3348 = vmatmul.mubr.f32.gmra.mrb[0].mxu0 %v2918
        %v3349 = vpop.f32.mrb[0].mxu0
        %v3350 = vadd.f32 %v3105, %v3349
        %v3351 = vpop.f32.mrb[0].mxu0
        %3352 = vmatprep.mubr.f32.mxu0 0.0
        %3353 = vmatmul.mubr.f32.gmra.mrb[0].mxu0 %v2920
        %v3354 = vpop.f32.mrb[0].mxu0
        %v3355 = vadd.f32 %v3110, %v3354
        %v3356 = vpop.f32.mrb[0].mxu0
        %3357 = vmatprep.mubr.f32.mxu0 0.0
        %3358 = vmatmul.mubr.f32.gmra.mrb[0].mxu0 %v2922
        %v3359 = vpop.f32.mrb[0].mxu0
        %v3360 = vadd.f32 %v3115, %v3359
        %v3361 = vpop.f32.mrb[0].mxu0
        %3362 = vmatprep.mubr.f32.mxu0 0.0
        %3363 = vmatmul.mubr.f32.gmra.mrb[0].mxu0 %v2924
        %v3364 = vpop.f32.mrb[0].mxu0
        %v3365 = vadd.f32 %v3120, %v3364
        %v3366 = vpop.f32.mrb[0].mxu0
        %3367 = vmatprep.mubr.f32.mxu0 0.0
        %3368 = vmatmul.mubr.f32.gmra.mrb[0].mxu0 %v2926
        %v3369 = vpop.f32.mrb[0].mxu0
        %v3370 = vadd.f32 %v3125, %v3369
        %v3371 = vpop.f32.mrb[0].mxu0
        %3372 = vmatprep.mubr.f32.mxu0 0.0
        %3373 = vmatmul.mubr.f32.gmra.mrb[0].mxu0 %v2928
        %v3374 = vpop.f32.mrb[0].mxu0
        %v3375 = vadd.f32 %v3130, %v3374
        %v3376 = vpop.f32.mrb[0].mxu0
        %3377 = vmatprep.mubr.f32.mxu0 0.0
        %3378 = vmatmul.mubr.f32.gmra.mrb[0].mxu0 %v2930
        %v3379 = vpop.f32.mrb[0].mxu0
        %v3380 = vadd.f32 %v3135, %v3379
        %v3381 = vpop.f32.mrb[0].mxu0
        %3382 = vmatprep.mubr.f32.mxu0 0.0
        %3383 = vmatmul.mubr.f32.gmra.mrb[0].mxu0 %v2932
        %v3384 = vpop.f32.mrb[0].mxu0
        %v3385 = vadd.f32 %v3140, %v3384
        %v3386 = vpop.f32.mrb[0].mxu0
        %3387 = vmatprep.mubr.f32.mxu0 0.0
        %3388 = vmatmul.mubr.f32.gmra.mrb[0].mxu0 %v2934
        %v3389 = vpop.f32.mrb[0].mxu0
        %v3390 = vadd.f32 %v3145, %v3389
        %v3391 = vpop.f32.mrb[0].mxu0
        %3392 = vmatprep.mubr.f32.mxu0 0.0
        %3393 = vmatmul.mubr.f32.gmra.mrb[0].mxu0 %v2936
        %v3394 = vpop.f32.mrb[0].mxu0
        %v3395 = vadd.f32 %v3150, %v3394
        %v3396 = vpop.f32.mrb[0].mxu0
        %3397 = vmatprep.mubr.f32.mxu0 0.0
        %3398 = vmatmul.mubr.f32.gmra.mrb[0].mxu0 %v2938
        %v3399 = vpop.f32.mrb[0].mxu0
        %v3400 = vadd.f32 %v3155, %v3399
        %v3401 = vpop.f32.mrb[0].mxu0
        %3402 = vmatprep.mubr.f32.mxu0 0.0
        %3403 = vmatmul.mubr.f32.gmra.mrb[0].mxu0 %v2940
        %v3404 = vpop.f32.mrb[0].mxu0
        %v3405 = vadd.f32 %v3160, %v3404
        %v3406 = vpop.f32.mrb[0].mxu0
        %3407 = vmatprep.mubr.f32.mxu0 0.0
        %3408 = vmatmul.mubr.f32.gmra.mrb[0].mxu0 %v2942
        %v3409 = vpop.f32.mrb[0].mxu0
        %v3410 = vadd.f32 %v3165, %v3409
        %v3411 = vpop.f32.mrb[0].mxu0
        %3412 = vmatprep.mubr.f32.mxu0 0.0
        %3413 = vmatmul.mubr.f32.gmra.mrb[0].mxu0 %v2944
        %v3414 = vpop.f32.mrb[0].mxu0
        %v3415 = vadd.f32 %v3170, %v3414
        %v3416 = vpop.f32.mrb[0].mxu0
        %3417 = vmatprep.mubr.f32.mxu0 0.0
        %3418 = vmatmul.mubr.f32.gmra.mrb[0].mxu0 %v2946
        %v3419 = vpop.f32.mrb[0].mxu0
        %v3420 = vadd.f32 %v3175, %v3419
        %v3421 = vpop.f32.mrb[0].mxu0
        %3422 = vmatprep.mubr.f32.mxu0 0.0
        %3423 = vmatmul.mubr.f32.gmra.mrb[0].mxu0 %v2948
        %v3424 = vpop.f32.mrb[0].mxu0
        %v3425 = vadd.f32 %v3180, %v3424
        %v3426 = vpop.f32.mrb[0].mxu0
        %3427 = vmatprep.mubr.f32.mxu0 0.0
        %3428 = vmatmul.mubr.f32.gmra.mrb[0].mxu0 %v2950
        %v3429 = vpop.f32.mrb[0].mxu0
        %v3430 = vadd.f32 %v3185, %v3429
        %v3431 = vpop.f32.mrb[0].mxu0
        %3432 = vmatprep.mubr.f32.mxu0 0.0
        %3433 = vmatmul.mubr.f32.gmra.mrb[0].mxu0 %v2952
        %v3434 = vpop.f32.mrb[0].mxu0
        %v3435 = vadd.f32 %v3190, %v3434
        %v3436 = vpop.f32.mrb[0].mxu0
        %3437 = vmatprep.mubr.f32.mxu0 0.0
        %3438 = vmatmul.mubr.f32.gmra.mrb[0].mxu0 %v2955
        %v3439 = vpop.f32.mrb[0].mxu0
        %v3440 = vadd.f32 %v3195, %v3439
        %v3441 = vpop.f32.mrb[0].mxu0
        %3442 = vmatprep.mubr.f32.mxu0 0.0
        %3443 = vmatmul.mubr.f32.gmra.mrb[0].mxu0 %v2958
        %v3444 = vpop.f32.mrb[0].mxu0
        %v3445 = vadd.f32 %v3200, %v3444
        %v3446 = vpop.f32.mrb[0].mxu0
        %3447 = vmatprep.mubr.f32.mxu0 0.0
        %3448 = vmatmul.mubr.f32.gmra.mrb[0].mxu0 %v2961
        %v3449 = vpop.f32.mrb[0].mxu0
        %v3450 = vadd.f32 %v3205, %v3449
        %v3451 = vpop.f32.mrb[0].mxu0
        %3452 = vdwg.mxu0
        %3454 = vset.pattern.permute.xlu0 0
        %3455 = vperm.xlu0 %3454, %v278
        %v3456 = vpop.permute.xlu0 %3455
        %3459 = vset.pattern.permute.xlu0 0
        %3460 = vperm.xlu0 %3459, %v279
        %v3461 = vpop.permute.xlu0 %3460
        %3464 = vset.pattern.permute.xlu0 0
        %3465 = vperm.xlu0 %3464, %v280
        %v3466 = vpop.permute.xlu0 %3465
        %3469 = vset.pattern.permute.xlu0 0
        %3470 = vperm.xlu0 %3469, %v281
        %v3471 = vpop.permute.xlu0 %3470
        %3474 = vset.pattern.permute.xlu0 0
        %3475 = vperm.xlu0 %3474, %v282
        %v3476 = vpop.permute.xlu0 %3475
        %3479 = vset.pattern.permute.xlu0 0
        %3480 = vperm.xlu0 %3479, %v283
        %v3481 = vpop.permute.xlu0 %3480
        %3484 = vset.pattern.permute.xlu0 0
        %3485 = vperm.xlu0 %3484, %v284
        %v3486 = vpop.permute.xlu0 %3485
        %3489 = vset.pattern.permute.xlu0 0
        %3490 = vperm.xlu0 %3489, %v285
        %v3491 = vpop.permute.xlu0 %3490
        %3494 = vset.pattern.permute.xlu0 0
        %3495 = vperm.xlu0 %3494, %v286
        %v3496 = vpop.permute.xlu0 %3495
        %3499 = vset.pattern.permute.xlu0 0
        %3500 = vperm.xlu0 %3499, %v287
        %v3501 = vpop.permute.xlu0 %3500
        %3504 = vset.pattern.permute.xlu0 0
        %3505 = vperm.xlu0 %3504, %v288
        %v3506 = vpop.permute.xlu0 %3505
        %3509 = vset.pattern.permute.xlu0 0
        %3510 = vperm.xlu0 %3509, %v289
        %v3511 = vpop.permute.xlu0 %3510
        %3514 = vset.pattern.permute.xlu0 0
        %3515 = vperm.xlu0 %3514, %v290
        %v3516 = vpop.permute.xlu0 %3515
        %3519 = vset.pattern.permute.xlu0 0
        %3520 = vperm.xlu0 %3519, %v291
        %v3521 = vpop.permute.xlu0 %3520
        %3524 = vset.pattern.permute.xlu0 0
        %3525 = vperm.xlu0 %3524, %v292
        %v3526 = vpop.permute.xlu0 %3525
        %3529 = vset.pattern.permute.xlu0 0
        %3530 = vperm.xlu0 %3529, %v293
        %v3531 = vpop.permute.xlu0 %3530
        %3534 = vset.pattern.permute.xlu0 0
        %3535 = vperm.xlu0 %3534, %v294
        %v3536 = vpop.permute.xlu0 %3535
        %3539 = vset.pattern.permute.xlu0 0
        %3540 = vperm.xlu0 %3539, %v295
        %v3541 = vpop.permute.xlu0 %3540
        %3544 = vset.pattern.permute.xlu0 0
        %3545 = vperm.xlu0 %3544, %v296
        %v3546 = vpop.permute.xlu0 %3545
        %3549 = vset.pattern.permute.xlu0 0
        %3550 = vperm.xlu0 %3549, %v297
        %v3551 = vpop.permute.xlu0 %3550
        %3554 = vset.pattern.permute.xlu0 0
        %3555 = vperm.xlu0 %3554, %v298
        %v3556 = vpop.permute.xlu0 %3555
        %3559 = vset.pattern.permute.xlu0 0
        %3560 = vperm.xlu0 %3559, %v299
        %v3561 = vpop.permute.xlu0 %3560
        %3564 = vset.pattern.permute.xlu0 0
        %3565 = vperm.xlu0 %3564, %v300
        %v3566 = vpop.permute.xlu0 %3565
        %3569 = vset.pattern.permute.xlu0 0
        %3570 = vperm.xlu0 %3569, %v301
        %v3571 = vpop.permute.xlu0 %3570
        %3574 = vset.pattern.permute.xlu0 0
        %3575 = vperm.xlu0 %3574, %v302
        %v3576 = vpop.permute.xlu0 %3575
        %3579 = vset.pattern.permute.xlu0 0
        %3580 = vperm.xlu0 %3579, %v303
        %v3581 = vpop.permute.xlu0 %3580
        %3584 = vset.pattern.permute.xlu0 0
        %3585 = vperm.xlu0 %3584, %v304
        %v3586 = vpop.permute.xlu0 %3585
        %3589 = vset.pattern.permute.xlu0 0
        %3590 = vperm.xlu0 %3589, %v305
        %v3591 = vpop.permute.xlu0 %3590
        %3594 = vset.pattern.permute.xlu0 0
        %3595 = vperm.xlu0 %3594, %v306
        %v3596 = vpop.permute.xlu0 %3595
        %3599 = vset.pattern.permute.xlu0 0
        %3600 = vperm.xlu0 %3599, %v307
        %v3601 = vpop.permute.xlu0 %3600
        %3604 = vset.pattern.permute.xlu0 0
        %3605 = vperm.xlu0 %3604, %v308
        %v3606 = vpop.permute.xlu0 %3605
        %3609 = vset.pattern.permute.xlu0 0
        %3610 = vperm.xlu0 %3609, %v309
        %v3611 = vpop.permute.xlu0 %3610
        %3614 = vset.pattern.permute.xlu0 0
        %3615 = vperm.xlu0 %3614, %v310
        %v3616 = vpop.permute.xlu0 %3615
        %3619 = vset.pattern.permute.xlu0 0
        %3620 = vperm.xlu0 %3619, %v311
        %v3621 = vpop.permute.xlu0 %3620
        %3624 = vset.pattern.permute.xlu0 0
        %3625 = vperm.xlu0 %3624, %v312
        %v3626 = vpop.permute.xlu0 %3625
        %3629 = vset.pattern.permute.xlu0 0
        %3630 = vperm.xlu0 %3629, %v313
        %v3631 = vpop.permute.xlu0 %3630
        %v3633 = vmul.f32 %v3275, %v3456
        %v3634 = vmul.f32 %v3280, %v3461
        %v3635 = vmul.f32 %v3285, %v3466
        %v3636 = vmul.f32 %v3290, %v3471
        %v3637 = vmul.f32 %v3295, %v3476
        %v3638 = vmul.f32 %v3300, %v3481
        %v3639 = vmul.f32 %v3305, %v3486
        %v3640 = vmul.f32 %v3310, %v3491
        %v3641 = vmul.f32 %v3315, %v3496
        %v3642 = vmul.f32 %v3320, %v3501
        %v3643 = vmul.f32 %v3325, %v3506
        %v3644 = vmul.f32 %v3330, %v3511
        %v3645 = vmul.f32 %v3335, %v3516
        %v3646 = vmul.f32 %v3340, %v3521
        %v3647 = vmul.f32 %v3345, %v3526
        %v3648 = vmul.f32 %v3350, %v3531
        %v3649 = vmul.f32 %v3355, %v3536
        %v3650 = vmul.f32 %v3360, %v3541
        %v3651 = vmul.f32 %v3365, %v3546
        %v3652 = vmul.f32 %v3370, %v3551
        %v3653 = vmul.f32 %v3375, %v3556
        %v3654 = vmul.f32 %v3380, %v3561
        %v3655 = vmul.f32 %v3385, %v3566
        %v3656 = vmul.f32 %v3390, %v3571
        %v3657 = vmul.f32 %v3395, %v3576
        %v3658 = vmul.f32 %v3400, %v3581
        %v3659 = vmul.f32 %v3405, %v3586
        %v3660 = vmul.f32 %v3410, %v3591
        %v3661 = vmul.f32 %v3415, %v3596
        %v3662 = vmul.f32 %v3420, %v3601
        %v3663 = vmul.f32 %v3425, %v3606
        %v3664 = vmul.f32 %v3430, %v3611
        %v3665 = vmul.f32 %v3435, %v3616
        %v3666 = vmul.f32 %v3440, %v3621
        %v3667 = vmul.f32 %v3445, %v3626
        %v3668 = vmul.f32 %v3450, %v3631
        %3669 = vst.msk [vmem:[#allocation2 + $0x10] sm:$0xff] %vm2626, %v3633
        %3670 = vst.msk [vmem:[#allocation2 + $0x18] sm:$0xff] %vm2626, %v3634
        %3671 = vst.msk [vmem:[#allocation2 + $0x20] sm:$0xff] %vm2626, %v3635
        %3672 = vst.msk [vmem:[#allocation2 + $0x28] sm:$0xff] %vm2626, %v3636
        %3673 = vst.msk [vmem:[#allocation2 + $0x30] sm:$0xff] %vm2626, %v3637
        %3674 = vst.msk [vmem:[#allocation2 + $0x38] sm:$0xff] %vm2626, %v3638
        %3675 = vst.msk [vmem:[#allocation2 + $0x40] sm:$0xff] %vm2626, %v3639
        %3676 = vst.msk [vmem:[#allocation2 + $0x48] sm:$0xff] %vm2626, %v3640
        %3677 = vst.msk [vmem:[#allocation2 + $0x50] sm:$0xff] %vm2626, %v3641
        %3678 = vst.msk [vmem:[#allocation2 + $0x58] sm:$0xff] %vm2626, %v3642
        %3679 = vst.msk [vmem:[#allocation2 + $0x60] sm:$0xff] %vm2626, %v3643
        %3680 = vst.msk [vmem:[#allocation2 + $0x68] sm:$0xff] %vm2626, %v3644
        %3681 = vst.msk [vmem:[#allocation2 + $0x70] sm:$0xff] %vm2626, %v3645
        %3682 = vst.msk [vmem:[#allocation2 + $0x78] sm:$0xff] %vm2626, %v3646
        %3683 = vst.msk [vmem:[#allocation2 + $0x80] sm:$0xff] %vm2626, %v3647
        %3684 = vst.msk [vmem:[#allocation2 + $0x88] sm:$0xff] %vm2626, %v3648
        %3685 = vst.msk [vmem:[#allocation2 + $0x90] sm:$0xff] %vm2626, %v3649
        %3686 = vst.msk [vmem:[#allocation2 + $0x98] sm:$0xff] %vm2626, %v3650
        %3687 = vst.msk [vmem:[#allocation2 + $0xa0] sm:$0xff] %vm2626, %v3651
        %3688 = vst.msk [vmem:[#allocation2 + $0xa8] sm:$0xff] %vm2626, %v3652
        %3689 = vst.msk [vmem:[#allocation2 + $0xb0] sm:$0xff] %vm2626, %v3653
        %3690 = vst.msk [vmem:[#allocation2 + $0xb8] sm:$0xff] %vm2626, %v3654
        %3691 = vst.msk [vmem:[#allocation2 + $0xc0] sm:$0xff] %vm2626, %v3655
        %3692 = vst.msk [vmem:[#allocation2 + $0xc8] sm:$0xff] %vm2626, %v3656
        %3693 = vst.msk [vmem:[#allocation2 + $0xd0] sm:$0xff] %vm2626, %v3657
        %3694 = vst.msk [vmem:[#allocation2 + $0xd8] sm:$0xff] %vm2626, %v3658
        %3695 = vst.msk [vmem:[#allocation2 + $0xe0] sm:$0xff] %vm2626, %v3659
        %3696 = vst.msk [vmem:[#allocation2 + $0xe8] sm:$0xff] %vm2626, %v3660
        %3697 = vst.msk [vmem:[#allocation2 + $0xf0] sm:$0xff] %vm2626, %v3661
        %3698 = vst.msk [vmem:[#allocation2 + $0xf8] sm:$0xff] %vm2626, %v3662
        %3699 = vst.msk [vmem:[#allocation2 + $0x100] sm:$0xff] %vm2626, %v3663
        %3700 = vst.msk [vmem:[#allocation2 + $0x108] sm:$0xff] %vm2626, %v3664
        %3701 = vst.msk [vmem:[#allocation2 + $0x110] sm:$0xff] %vm2626, %v3665
        %3702 = vst.msk [vmem:[#allocation2 + $0x118] sm:$0xff] %vm2626, %v3666
        %3703 = vst.msk [vmem:[#allocation2 + $0x120] sm:$0xff] %vm2626, %v3667
        %3704 = vst.msk [vmem:[#allocation2 + $0x128] sm:$0xff] %vm2626, %v3668
      $region56: #{searchable_model_forward.1} parent=47 // pred_fallthru
        _
      %p3705 = scmp.eq.s32.totalorder %s1563, 1
      %p3706 = pnand %p3705, %p1565
      %p3707 = pneg %p3706
      // Predicated region
      $region57: #{searchable_model_forward.1} parent=47 // pred_check
        _
      $region58: #{searchable_model_forward.1} parent=47 // pred_check_branch
        %3709 = sbr.rel (%p3706) target = $region60
      $region59: #{searchable_model_forward.1} parent=47 // pred_region
        %v3710 = vld [vmem:[#allocation2 + $0x3] sm:$0xff]
        %v3711 = vld [vmem:[#allocation2 + $0xb] sm:$0xff]
        %v3712 = vld [vmem:[#allocation2 + $0x13] sm:$0xff]
        %v3713 = vld [vmem:[#allocation2 + $0x1b] sm:$0xff]
        %v3714 = vld [vmem:[#allocation2 + $0x23] sm:$0xff]
        %v3715 = vld [vmem:[#allocation2 + $0x2b] sm:$0xff]
        %v3716 = vld [vmem:[#allocation2 + $0x33] sm:$0xff]
        %v3717 = vld [vmem:[#allocation2 + $0x3b] sm:$0xff]
        %v3718 = vld [vmem:[#allocation2 + $0x43] sm:$0xff]
        %v3719 = vld [vmem:[#allocation2 + $0x4b] sm:$0xff]
        %v3720 = vld [vmem:[#allocation2 + $0x53] sm:$0xff]
        %v3721 = vld [vmem:[#allocation2 + $0x5b] sm:$0xff]
        %v3722 = vld [vmem:[#allocation2 + $0x63] sm:$0xff]
        %v3723 = vld [vmem:[#allocation2 + $0x6b] sm:$0xff]
        %v3724 = vld [vmem:[#allocation2 + $0x73] sm:$0xff]
        %v3725 = vld [vmem:[#allocation2 + $0x7b] sm:$0xff]
        %v3726 = vld [vmem:[#allocation2 + $0x83] sm:$0xff]
        %v3727 = vld [vmem:[#allocation2 + $0x8b] sm:$0xff]
        %v3728 = vld [vmem:[#allocation2 + $0x93] sm:$0xff]
        %v3729 = vld [vmem:[#allocation2 + $0x9b] sm:$0xff]
        %v3730 = vld [vmem:[#allocation2 + $0xa3] sm:$0xff]
        %v3731 = vld [vmem:[#allocation2 + $0xab] sm:$0xff]
        %v3732 = vld [vmem:[#allocation2 + $0xb3] sm:$0xff]
        %v3733 = vld [vmem:[#allocation2 + $0xbb] sm:$0xff]
        %v3734 = vld [vmem:[#allocation2 + $0xc3] sm:$0xff]
        %v3735 = vld [vmem:[#allocation2 + $0xcb] sm:$0xff]
        %v3736 = vld [vmem:[#allocation2 + $0xd3] sm:$0xff]
        %v3737 = vld [vmem:[#allocation2 + $0xdb] sm:$0xff]
        %v3738 = vld [vmem:[#allocation2 + $0xe3] sm:$0xff]
        %v3739 = vld [vmem:[#allocation2 + $0xeb] sm:$0xff]
        %v3740 = vld [vmem:[#allocation2 + $0xf3] sm:$0xff]
        %v3741 = vld [vmem:[#allocation2 + $0xfb] sm:$0xff]
        %v3742 = vld [vmem:[#allocation2 + $0x103] sm:$0xff]
        %v3743 = vld [vmem:[#allocation2 + $0x10b] sm:$0xff]
        %v3744 = vld [vmem:[#allocation2 + $0x113] sm:$0xff]
        %v3745 = vld [vmem:[#allocation2 + $0x11b] sm:$0xff]
        %v3746 = vld [vmem:[#allocation2 + $0x4] sm:$0xff]
        %v3747 = vld [vmem:[#allocation2 + $0xc] sm:$0xff]
        %v3748 = vld [vmem:[#allocation2 + $0x14] sm:$0xff]
        %v3749 = vld [vmem:[#allocation2 + $0x1c] sm:$0xff]
        %v3750 = vld [vmem:[#allocation2 + $0x24] sm:$0xff]
        %v3751 = vld [vmem:[#allocation2 + $0x2c] sm:$0xff]
        %v3752 = vld [vmem:[#allocation2 + $0x34] sm:$0xff]
        %v3753 = vld [vmem:[#allocation2 + $0x3c] sm:$0xff]
        %v3754 = vld [vmem:[#allocation2 + $0x44] sm:$0xff]
        %v3755 = vld [vmem:[#allocation2 + $0x4c] sm:$0xff]
        %v3756 = vld [vmem:[#allocation2 + $0x54] sm:$0xff]
        %v3757 = vld [vmem:[#allocation2 + $0x5c] sm:$0xff]
        %v3758 = vld [vmem:[#allocation2 + $0x64] sm:$0xff]
        %v3759 = vld [vmem:[#allocation2 + $0x6c] sm:$0xff]
        %v3760 = vld [vmem:[#allocation2 + $0x74] sm:$0xff]
        %v3761 = vld [vmem:[#allocation2 + $0x7c] sm:$0xff]
        %v3762 = vld [vmem:[#allocation2 + $0x84] sm:$0xff]
        %v3763 = vld [vmem:[#allocation2 + $0x8c] sm:$0xff]
        %v3764 = vld [vmem:[#allocation2 + $0x94] sm:$0xff]
        %v3765 = vld [vmem:[#allocation2 + $0x9c] sm:$0xff]
        %v3766 = vld [vmem:[#allocation2 + $0xa4] sm:$0xff]
        %v3767 = vld [vmem:[#allocation2 + $0xac] sm:$0xff]
        %v3768 = vld [vmem:[#allocation2 + $0xb4] sm:$0xff]
        %v3769 = vld [vmem:[#allocation2 + $0xbc] sm:$0xff]
        %v3770 = vld [vmem:[#allocation2 + $0xc4] sm:$0xff]
        %v3771 = vld [vmem:[#allocation2 + $0xcc] sm:$0xff]
        %v3772 = vld [vmem:[#allocation2 + $0xd4] sm:$0xff]
        %v3773 = vld [vmem:[#allocation2 + $0xdc] sm:$0xff]
        %v3774 = vld [vmem:[#allocation2 + $0xe4] sm:$0xff]
        %v3775 = vld [vmem:[#allocation2 + $0xec] sm:$0xff]
        %v3776 = vld [vmem:[#allocation2 + $0xf4] sm:$0xff]
        %v3777 = vld [vmem:[#allocation2 + $0xfc] sm:$0xff]
        %v3778 = vld [vmem:[#allocation2 + $0x104] sm:$0xff]
        %v3779 = vld [vmem:[#allocation2 + $0x10c] sm:$0xff]
        %v3780 = vld [vmem:[#allocation2 + $0x114] sm:$0xff]
        %v3781 = vld [vmem:[#allocation2 + $0x11c] sm:$0xff]
        %v3782 = vld [vmem:[#allocation2 + $0x5] sm:$0xff]
        %v3783 = vld [vmem:[#allocation2 + $0xd] sm:$0xff]
        %v3784 = vld [vmem:[#allocation2 + $0x15] sm:$0xff]
        %v3785 = vld [vmem:[#allocation2 + $0x1d] sm:$0xff]
        %v3786 = vld [vmem:[#allocation2 + $0x25] sm:$0xff]
        %v3787 = vld [vmem:[#allocation2 + $0x2d] sm:$0xff]
        %v3788 = vld [vmem:[#allocation2 + $0x35] sm:$0xff]
        %v3789 = vld [vmem:[#allocation2 + $0x3d] sm:$0xff]
        %v3790 = vld [vmem:[#allocation2 + $0x45] sm:$0xff]
        %v3791 = vld [vmem:[#allocation2 + $0x4d] sm:$0xff]
        %v3792 = vld [vmem:[#allocation2 + $0x55] sm:$0xff]
        %v3793 = vld [vmem:[#allocation2 + $0x5d] sm:$0xff]
        %v3794 = vld [vmem:[#allocation2 + $0x65] sm:$0xff]
        %v3795 = vld [vmem:[#allocation2 + $0x6d] sm:$0xff]
        %v3796 = vld [vmem:[#allocation2 + $0x75] sm:$0xff]
        %v3797 = vld [vmem:[#allocation2 + $0x7d] sm:$0xff]
        %v3798 = vld [vmem:[#allocation2 + $0x85] sm:$0xff]
        %v3799 = vld [vmem:[#allocation2 + $0x8d] sm:$0xff]
        %v3800 = vld [vmem:[#allocation2 + $0x95] sm:$0xff]
        %v3801 = vld [vmem:[#allocation2 + $0x9d] sm:$0xff]
        %v3802 = vld [vmem:[#allocation2 + $0xa5] sm:$0xff]
        %v3803 = vld [vmem:[#allocation2 + $0xad] sm:$0xff]
        %v3804 = vld [vmem:[#allocation2 + $0xb5] sm:$0xff]
        %v3805 = vld [vmem:[#allocation2 + $0xbd] sm:$0xff]
        %v3806 = vld [vmem:[#allocation2 + $0xc5] sm:$0xff]
        %v3807 = vld [vmem:[#allocation2 + $0xcd] sm:$0xff]
        %v3808 = vld [vmem:[#allocation2 + $0xd5] sm:$0xff]
        %v3809 = vld [vmem:[#allocation2 + $0xdd] sm:$0xff]
        %v3810 = vld [vmem:[#allocation2 + $0xe5] sm:$0xff]
        %v3811 = vld [vmem:[#allocation2 + $0xed] sm:$0xff]
        %v3812 = vld [vmem:[#allocation2 + $0xf5] sm:$0xff]
        %v3813 = vld [vmem:[#allocation2 + $0xfd] sm:$0xff]
        %v3814 = vld [vmem:[#allocation2 + $0x105] sm:$0xff]
        %v3815 = vld [vmem:[#allocation2 + $0x10d] sm:$0xff]
        %v3816 = vld [vmem:[#allocation2 + $0x115] sm:$0xff]
        %v3817 = vld [vmem:[#allocation2 + $0x11d] sm:$0xff]
        %v3818 = vld [vmem:[#allocation2 + $0xf] sm:$0xff]
        %v3819 = vld [vmem:[#allocation2 + $0x17] sm:$0xff]
        %v3820 = vld [vmem:[#allocation2 + $0x1f] sm:$0xff]
        %v3821 = vld [vmem:[#allocation2 + $0x27] sm:$0xff]
        %v3822 = vld [vmem:[#allocation2 + $0x2f] sm:$0xff]
        %v3823 = vld [vmem:[#allocation2 + $0x37] sm:$0xff]
        %v3824 = vld [vmem:[#allocation2 + $0x3f] sm:$0xff]
        %v3825 = vld [vmem:[#allocation2 + $0x47] sm:$0xff]
        %v3826 = vld [vmem:[#allocation2 + $0x4f] sm:$0xff]
        %v3827 = vld [vmem:[#allocation2 + $0x57] sm:$0xff]
        %v3828 = vld [vmem:[#allocation2 + $0x5f] sm:$0xff]
        %v3829 = vld [vmem:[#allocation2 + $0x67] sm:$0xff]
        %v3830 = vld [vmem:[#allocation2 + $0x6f] sm:$0xff]
        %v3831 = vld [vmem:[#allocation2 + $0x77] sm:$0xff]
        %v3832 = vld [vmem:[#allocation2 + $0x7f] sm:$0xff]
        %v3833 = vld [vmem:[#allocation2 + $0x87] sm:$0xff]
        %v3834 = vld [vmem:[#allocation2 + $0x8f] sm:$0xff]
        %v3835 = vld [vmem:[#allocation2 + $0x97] sm:$0xff]
        %v3836 = vld [vmem:[#allocation2 + $0x9f] sm:$0xff]
        %v3837 = vld [vmem:[#allocation2 + $0xa7] sm:$0xff]
        %v3838 = vld [vmem:[#allocation2 + $0xaf] sm:$0xff]
        %v3839 = vld [vmem:[#allocation2 + $0xb7] sm:$0xff]
        %v3840 = vld [vmem:[#allocation2 + $0xbf] sm:$0xff]
        %v3841 = vld [vmem:[#allocation2 + $0xc7] sm:$0xff]
        %v3842 = vld [vmem:[#allocation2 + $0xcf] sm:$0xff]
        %v3843 = vld [vmem:[#allocation2 + $0xd7] sm:$0xff]
        %v3844 = vld [vmem:[#allocation2 + $0xdf] sm:$0xff]
        %v3845 = vld [vmem:[#allocation2 + $0xe7] sm:$0xff]
        %v3846 = vld [vmem:[#allocation2 + $0xef] sm:$0xff]
        %v3847 = vld [vmem:[#allocation2 + $0xf7] sm:$0xff]
        %v3848 = vld [vmem:[#allocation2 + $0xff] sm:$0xff]
        %v3849 = vld [vmem:[#allocation2 + $0x107] sm:$0xff]
        %v3850 = vld [vmem:[#allocation2 + $0x10f] sm:$0xff]
        %v3851 = vld [vmem:[#allocation2 + $0x117] sm:$0xff]
        %v3852 = vld [vmem:[#allocation2 + $0x11f] sm:$0xff]
        %v3853 = vld [vmem:[#allocation2 + $0x127] sm:$0xff]
        %v3854 = vld [vmem:[#allocation2 + $0x10] sm:$0xff]
        %v3855 = vld [vmem:[#allocation2 + $0x18] sm:$0xff]
        %v3856 = vld [vmem:[#allocation2 + $0x20] sm:$0xff]
        %v3857 = vld [vmem:[#allocation2 + $0x28] sm:$0xff]
        %v3858 = vld [vmem:[#allocation2 + $0x30] sm:$0xff]
        %v3859 = vld [vmem:[#allocation2 + $0x38] sm:$0xff]
        %v3860 = vld [vmem:[#allocation2 + $0x40] sm:$0xff]
        %v3861 = vld [vmem:[#allocation2 + $0x48] sm:$0xff]
        %v3862 = vld [vmem:[#allocation2 + $0x50] sm:$0xff]
        %v3863 = vld [vmem:[#allocation2 + $0x58] sm:$0xff]
        %v3864 = vld [vmem:[#allocation2 + $0x60] sm:$0xff]
        %v3865 = vld [vmem:[#allocation2 + $0x68] sm:$0xff]
        %v3866 = vld [vmem:[#allocation2 + $0x70] sm:$0xff]
        %v3867 = vld [vmem:[#allocation2 + $0x78] sm:$0xff]
        %v3868 = vld [vmem:[#allocation2 + $0x80] sm:$0xff]
        %v3869 = vld [vmem:[#allocation2 + $0x88] sm:$0xff]
        %v3870 = vld [vmem:[#allocation2 + $0x90] sm:$0xff]
        %v3871 = vld [vmem:[#allocation2 + $0x98] sm:$0xff]
        %v3872 = vld [vmem:[#allocation2 + $0xa0] sm:$0xff]
        %v3873 = vld [vmem:[#allocation2 + $0xa8] sm:$0xff]
        %v3874 = vld [vmem:[#allocation2 + $0xb0] sm:$0xff]
        %v3875 = vld [vmem:[#allocation2 + $0xb8] sm:$0xff]
        %v3876 = vld [vmem:[#allocation2 + $0xc0] sm:$0xff]
        %v3877 = vld [vmem:[#allocation2 + $0xc8] sm:$0xff]
        %v3878 = vld [vmem:[#allocation2 + $0xd0] sm:$0xff]
        %v3879 = vld [vmem:[#allocation2 + $0xd8] sm:$0xff]
        %v3880 = vld [vmem:[#allocation2 + $0xe0] sm:$0xff]
        %v3881 = vld [vmem:[#allocation2 + $0xe8] sm:$0xff]
        %v3882 = vld [vmem:[#allocation2 + $0xf0] sm:$0xff]
        %v3883 = vld [vmem:[#allocation2 + $0xf8] sm:$0xff]
        %v3884 = vld [vmem:[#allocation2 + $0x100] sm:$0xff]
        %v3885 = vld [vmem:[#allocation2 + $0x108] sm:$0xff]
        %v3886 = vld [vmem:[#allocation2 + $0x110] sm:$0xff]
        %v3887 = vld [vmem:[#allocation2 + $0x118] sm:$0xff]
        %v3888 = vld [vmem:[#allocation2 + $0x120] sm:$0xff]
        %v3889 = vld [vmem:[#allocation2 + $0x128] sm:$0xff]
        %v3890 = vld [vmem:[#allocation2 + $0x11] sm:$0xff]
        %v3891 = vld [vmem:[#allocation2 + $0x19] sm:$0xff]
        %v3892 = vld [vmem:[#allocation2 + $0x21] sm:$0xff]
        %v3893 = vld [vmem:[#allocation2 + $0x29] sm:$0xff]
        %v3894 = vld [vmem:[#allocation2 + $0x31] sm:$0xff]
        %v3895 = vld [vmem:[#allocation2 + $0x39] sm:$0xff]
        %v3896 = vld [vmem:[#allocation2 + $0x41] sm:$0xff]
        %v3897 = vld [vmem:[#allocation2 + $0x49] sm:$0xff]
        %v3898 = vld [vmem:[#allocation2 + $0x51] sm:$0xff]
        %v3899 = vld [vmem:[#allocation2 + $0x59] sm:$0xff]
        %v3900 = vld [vmem:[#allocation2 + $0x61] sm:$0xff]
        %v3901 = vld [vmem:[#allocation2 + $0x69] sm:$0xff]
        %v3902 = vld [vmem:[#allocation2 + $0x71] sm:$0xff]
        %v3903 = vld [vmem:[#allocation2 + $0x79] sm:$0xff]
        %v3904 = vld [vmem:[#allocation2 + $0x81] sm:$0xff]
        %v3905 = vld [vmem:[#allocation2 + $0x89] sm:$0xff]
        %v3906 = vld [vmem:[#allocation2 + $0x91] sm:$0xff]
        %v3907 = vld [vmem:[#allocation2 + $0x99] sm:$0xff]
        %v3908 = vld [vmem:[#allocation2 + $0xa1] sm:$0xff]
        %v3909 = vld [vmem:[#allocation2 + $0xa9] sm:$0xff]
        %v3910 = vld [vmem:[#allocation2 + $0xb1] sm:$0xff]
        %v3911 = vld [vmem:[#allocation2 + $0xb9] sm:$0xff]
        %v3912 = vld [vmem:[#allocation2 + $0xc1] sm:$0xff]
        %v3913 = vld [vmem:[#allocation2 + $0xc9] sm:$0xff]
        %v3914 = vld [vmem:[#allocation2 + $0xd1] sm:$0xff]
        %v3915 = vld [vmem:[#allocation2 + $0xd9] sm:$0xff]
        %v3916 = vld [vmem:[#allocation2 + $0xe1] sm:$0xff]
        %v3917 = vld [vmem:[#allocation2 + $0xe9] sm:$0xff]
        %v3918 = vld [vmem:[#allocation2 + $0xf1] sm:$0xff]
        %v3919 = vld [vmem:[#allocation2 + $0xf9] sm:$0xff]
        %v3920 = vld [vmem:[#allocation2 + $0x101] sm:$0xff]
        %v3921 = vld [vmem:[#allocation2 + $0x109] sm:$0xff]
        %v3922 = vld [vmem:[#allocation2 + $0x111] sm:$0xff]
        %v3923 = vld [vmem:[#allocation2 + $0x119] sm:$0xff]
        %v3924 = vld [vmem:[#allocation2 + $0x121] sm:$0xff]
        %v3925 = vld [vmem:[#allocation2 + $0x129] sm:$0xff]
        %v3926 = vld [vmem:[#allocation2 + $0x123] sm:$0xff]
        %v3927 = vld [vmem:[#allocation2 + $0x12b] sm:$0xff]
        %v3928 = vld [vmem:[#allocation2 + $0x133] sm:$0xff]
        %v3929 = vld [vmem:[#allocation2 + $0x124] sm:$0xff]
        %v3930 = vld [vmem:[#allocation2 + $0x12c] sm:$0xff]
        %v3931 = vld [vmem:[#allocation2 + $0x134] sm:$0xff]
        %v3932 = vld [vmem:[#allocation2 + $0x125] sm:$0xff]
        %v3933 = vld [vmem:[#allocation2 + $0x12d] sm:$0xff]
        %v3934 = vld [vmem:[#allocation2 + $0x135] sm:$0xff]
        %3971 = vrot.lane.b32.xlu0 %v3746, 32
        %v3972 = vpop.permute.xlu0 %3971
        %3973 = vrot.lane.b32.xlu0 %v3747, 32
        %v3974 = vpop.permute.xlu0 %3973
        %3975 = vrot.lane.b32.xlu0 %v3748, 32
        %v3976 = vpop.permute.xlu0 %3975
        %3977 = vrot.lane.b32.xlu0 %v3749, 32
        %v3978 = vpop.permute.xlu0 %3977
        %3979 = vrot.lane.b32.xlu0 %v3750, 32
        %v3980 = vpop.permute.xlu0 %3979
        %3981 = vrot.lane.b32.xlu0 %v3751, 32
        %v3982 = vpop.permute.xlu0 %3981
        %3983 = vrot.lane.b32.xlu0 %v3752, 32
        %v3984 = vpop.permute.xlu0 %3983
        %3985 = vrot.lane.b32.xlu0 %v3753, 32
        %v3986 = vpop.permute.xlu0 %3985
        %3987 = vrot.lane.b32.xlu0 %v3754, 32
        %v3988 = vpop.permute.xlu0 %3987
        %3989 = vrot.lane.b32.xlu0 %v3755, 32
        %v3990 = vpop.permute.xlu0 %3989
        %3991 = vrot.lane.b32.xlu0 %v3756, 32
        %v3992 = vpop.permute.xlu0 %3991
        %3993 = vrot.lane.b32.xlu0 %v3757, 32
        %v3994 = vpop.permute.xlu0 %3993
        %3995 = vrot.lane.b32.xlu0 %v3758, 32
        %v3996 = vpop.permute.xlu0 %3995
        %3997 = vrot.lane.b32.xlu0 %v3759, 32
        %v3998 = vpop.permute.xlu0 %3997
        %3999 = vrot.lane.b32.xlu0 %v3760, 32
        %v4000 = vpop.permute.xlu0 %3999
        %4001 = vrot.lane.b32.xlu0 %v3761, 32
        %v4002 = vpop.permute.xlu0 %4001
        %4003 = vrot.lane.b32.xlu0 %v3762, 32
        %v4004 = vpop.permute.xlu0 %4003
        %4005 = vrot.lane.b32.xlu0 %v3763, 32
        %v4006 = vpop.permute.xlu0 %4005
        %4007 = vrot.lane.b32.xlu0 %v3764, 32
        %v4008 = vpop.permute.xlu0 %4007
        %4009 = vrot.lane.b32.xlu0 %v3765, 32
        %v4010 = vpop.permute.xlu0 %4009
        %4011 = vrot.lane.b32.xlu0 %v3766, 32
        %v4012 = vpop.permute.xlu0 %4011
        %4013 = vrot.lane.b32.xlu0 %v3767, 32
        %v4014 = vpop.permute.xlu0 %4013
        %4015 = vrot.lane.b32.xlu0 %v3768, 32
        %v4016 = vpop.permute.xlu0 %4015
        %4017 = vrot.lane.b32.xlu0 %v3769, 32
        %v4018 = vpop.permute.xlu0 %4017
        %4019 = vrot.lane.b32.xlu0 %v3770, 32
        %v4020 = vpop.permute.xlu0 %4019
        %4021 = vrot.lane.b32.xlu0 %v3771, 32
        %v4022 = vpop.permute.xlu0 %4021
        %4023 = vrot.lane.b32.xlu0 %v3772, 32
        %v4024 = vpop.permute.xlu0 %4023
        %4025 = vrot.lane.b32.xlu0 %v3773, 32
        %v4026 = vpop.permute.xlu0 %4025
        %4027 = vrot.lane.b32.xlu0 %v3774, 32
        %v4028 = vpop.permute.xlu0 %4027
        %4029 = vrot.lane.b32.xlu0 %v3775, 32
        %v4030 = vpop.permute.xlu0 %4029
        %4031 = vrot.lane.b32.xlu0 %v3776, 32
        %v4032 = vpop.permute.xlu0 %4031
        %4033 = vrot.lane.b32.xlu0 %v3777, 32
        %v4034 = vpop.permute.xlu0 %4033
        %4035 = vrot.lane.b32.xlu0 %v3778, 32
        %v4036 = vpop.permute.xlu0 %4035
        %4037 = vrot.lane.b32.xlu0 %v3779, 32
        %v4038 = vpop.permute.xlu0 %4037
        %4039 = vrot.lane.b32.xlu0 %v3780, 32
        %v4040 = vpop.permute.xlu0 %4039
        %4041 = vrot.lane.b32.xlu0 %v3781, 32
        %v4042 = vpop.permute.xlu0 %4041
        %4115 = vrot.lane.b32.xlu0 %v3782, 64
        %v4116 = vpop.permute.xlu0 %4115
        %4117 = vrot.lane.b32.xlu0 %v3783, 64
        %v4118 = vpop.permute.xlu0 %4117
        %4119 = vrot.lane.b32.xlu0 %v3784, 64
        %v4120 = vpop.permute.xlu0 %4119
        %4121 = vrot.lane.b32.xlu0 %v3785, 64
        %v4122 = vpop.permute.xlu0 %4121
        %4123 = vrot.lane.b32.xlu0 %v3786, 64
        %v4124 = vpop.permute.xlu0 %4123
        %4125 = vrot.lane.b32.xlu0 %v3787, 64
        %v4126 = vpop.permute.xlu0 %4125
        %4127 = vrot.lane.b32.xlu0 %v3788, 64
        %v4128 = vpop.permute.xlu0 %4127
        %4129 = vrot.lane.b32.xlu0 %v3789, 64
        %v4130 = vpop.permute.xlu0 %4129
        %4131 = vrot.lane.b32.xlu0 %v3790, 64
        %v4132 = vpop.permute.xlu0 %4131
        %4133 = vrot.lane.b32.xlu0 %v3791, 64
        %v4134 = vpop.permute.xlu0 %4133
        %4135 = vrot.lane.b32.xlu0 %v3792, 64
        %v4136 = vpop.permute.xlu0 %4135
        %4137 = vrot.lane.b32.xlu0 %v3793, 64
        %v4138 = vpop.permute.xlu0 %4137
        %4139 = vrot.lane.b32.xlu0 %v3794, 64
        %v4140 = vpop.permute.xlu0 %4139
        %4141 = vrot.lane.b32.xlu0 %v3795, 64
        %v4142 = vpop.permute.xlu0 %4141
        %4143 = vrot.lane.b32.xlu0 %v3796, 64
        %v4144 = vpop.permute.xlu0 %4143
        %4145 = vrot.lane.b32.xlu0 %v3797, 64
        %v4146 = vpop.permute.xlu0 %4145
        %4147 = vrot.lane.b32.xlu0 %v3798, 64
        %v4148 = vpop.permute.xlu0 %4147
        %4149 = vrot.lane.b32.xlu0 %v3799, 64
        %v4150 = vpop.permute.xlu0 %4149
        %4151 = vrot.lane.b32.xlu0 %v3800, 64
        %v4152 = vpop.permute.xlu0 %4151
        %4153 = vrot.lane.b32.xlu0 %v3801, 64
        %v4154 = vpop.permute.xlu0 %4153
        %4155 = vrot.lane.b32.xlu0 %v3802, 64
        %v4156 = vpop.permute.xlu0 %4155
        %4157 = vrot.lane.b32.xlu0 %v3803, 64
        %v4158 = vpop.permute.xlu0 %4157
        %4159 = vrot.lane.b32.xlu0 %v3804, 64
        %v4160 = vpop.permute.xlu0 %4159
        %4161 = vrot.lane.b32.xlu0 %v3805, 64
        %v4162 = vpop.permute.xlu0 %4161
        %4163 = vrot.lane.b32.xlu0 %v3806, 64
        %v4164 = vpop.permute.xlu0 %4163
        %4165 = vrot.lane.b32.xlu0 %v3807, 64
        %v4166 = vpop.permute.xlu0 %4165
        %4167 = vrot.lane.b32.xlu0 %v3808, 64
        %v4168 = vpop.permute.xlu0 %4167
        %4169 = vrot.lane.b32.xlu0 %v3809, 64
        %v4170 = vpop.permute.xlu0 %4169
        %4171 = vrot.lane.b32.xlu0 %v3810, 64
        %v4172 = vpop.permute.xlu0 %4171
        %4173 = vrot.lane.b32.xlu0 %v3811, 64
        %v4174 = vpop.permute.xlu0 %4173
        %4175 = vrot.lane.b32.xlu0 %v3812, 64
        %v4176 = vpop.permute.xlu0 %4175
        %4177 = vrot.lane.b32.xlu0 %v3813, 64
        %v4178 = vpop.permute.xlu0 %4177
        %4179 = vrot.lane.b32.xlu0 %v3814, 64
        %v4180 = vpop.permute.xlu0 %4179
        %4181 = vrot.lane.b32.xlu0 %v3815, 64
        %v4182 = vpop.permute.xlu0 %4181
        %4183 = vrot.lane.b32.xlu0 %v3816, 64
        %v4184 = vpop.permute.xlu0 %4183
        %4185 = vrot.lane.b32.xlu0 %v3817, 64
        %v4186 = vpop.permute.xlu0 %4185
        %4259 = vrot.lane.b32.xlu0 %v3818, 96
        %v4260 = vpop.permute.xlu0 %4259
        %4261 = vrot.lane.b32.xlu0 %v3819, 96
        %v4262 = vpop.permute.xlu0 %4261
        %4263 = vrot.lane.b32.xlu0 %v3820, 96
        %v4264 = vpop.permute.xlu0 %4263
        %4265 = vrot.lane.b32.xlu0 %v3821, 96
        %v4266 = vpop.permute.xlu0 %4265
        %4267 = vrot.lane.b32.xlu0 %v3822, 96
        %v4268 = vpop.permute.xlu0 %4267
        %4269 = vrot.lane.b32.xlu0 %v3823, 96
        %v4270 = vpop.permute.xlu0 %4269
        %4271 = vrot.lane.b32.xlu0 %v3824, 96
        %v4272 = vpop.permute.xlu0 %4271
        %4273 = vrot.lane.b32.xlu0 %v3825, 96
        %v4274 = vpop.permute.xlu0 %4273
        %4275 = vrot.lane.b32.xlu0 %v3826, 96
        %v4276 = vpop.permute.xlu0 %4275
        %4277 = vrot.lane.b32.xlu0 %v3827, 96
        %v4278 = vpop.permute.xlu0 %4277
        %4279 = vrot.lane.b32.xlu0 %v3828, 96
        %v4280 = vpop.permute.xlu0 %4279
        %4281 = vrot.lane.b32.xlu0 %v3829, 96
        %v4282 = vpop.permute.xlu0 %4281
        %4283 = vrot.lane.b32.xlu0 %v3830, 96
        %v4284 = vpop.permute.xlu0 %4283
        %4285 = vrot.lane.b32.xlu0 %v3831, 96
        %v4286 = vpop.permute.xlu0 %4285
        %4287 = vrot.lane.b32.xlu0 %v3832, 96
        %v4288 = vpop.permute.xlu0 %4287
        %4289 = vrot.lane.b32.xlu0 %v3833, 96
        %v4290 = vpop.permute.xlu0 %4289
        %4291 = vrot.lane.b32.xlu0 %v3834, 96
        %v4292 = vpop.permute.xlu0 %4291
        %4293 = vrot.lane.b32.xlu0 %v3835, 96
        %v4294 = vpop.permute.xlu0 %4293
        %4295 = vrot.lane.b32.xlu0 %v3836, 96
        %v4296 = vpop.permute.xlu0 %4295
        %4297 = vrot.lane.b32.xlu0 %v3837, 96
        %v4298 = vpop.permute.xlu0 %4297
        %4299 = vrot.lane.b32.xlu0 %v3838, 96
        %v4300 = vpop.permute.xlu0 %4299
        %4301 = vrot.lane.b32.xlu0 %v3839, 96
        %v4302 = vpop.permute.xlu0 %4301
        %4303 = vrot.lane.b32.xlu0 %v3840, 96
        %v4304 = vpop.permute.xlu0 %4303
        %4305 = vrot.lane.b32.xlu0 %v3841, 96
        %v4306 = vpop.permute.xlu0 %4305
        %4307 = vrot.lane.b32.xlu0 %v3842, 96
        %v4308 = vpop.permute.xlu0 %4307
        %4309 = vrot.lane.b32.xlu0 %v3843, 96
        %v4310 = vpop.permute.xlu0 %4309
        %4311 = vrot.lane.b32.xlu0 %v3844, 96
        %v4312 = vpop.permute.xlu0 %4311
        %4313 = vrot.lane.b32.xlu0 %v3845, 96
        %v4314 = vpop.permute.xlu0 %4313
        %4315 = vrot.lane.b32.xlu0 %v3846, 96
        %v4316 = vpop.permute.xlu0 %4315
        %4317 = vrot.lane.b32.xlu0 %v3847, 96
        %v4318 = vpop.permute.xlu0 %4317
        %4319 = vrot.lane.b32.xlu0 %v3848, 96
        %v4320 = vpop.permute.xlu0 %4319
        %4321 = vrot.lane.b32.xlu0 %v3849, 96
        %v4322 = vpop.permute.xlu0 %4321
        %4323 = vrot.lane.b32.xlu0 %v3850, 96
        %v4324 = vpop.permute.xlu0 %4323
        %4325 = vrot.lane.b32.xlu0 %v3851, 96
        %v4326 = vpop.permute.xlu0 %4325
        %4327 = vrot.lane.b32.xlu0 %v3852, 96
        %v4328 = vpop.permute.xlu0 %4327
        %4329 = vrot.lane.b32.xlu0 %v3853, 96
        %v4330 = vpop.permute.xlu0 %4329
        %4403 = vrot.lane.b32.xlu0 %v3890, 32
        %v4404 = vpop.permute.xlu0 %4403
        %4405 = vrot.lane.b32.xlu0 %v3891, 32
        %v4406 = vpop.permute.xlu0 %4405
        %4407 = vrot.lane.b32.xlu0 %v3892, 32
        %v4408 = vpop.permute.xlu0 %4407
        %4409 = vrot.lane.b32.xlu0 %v3893, 32
        %v4410 = vpop.permute.xlu0 %4409
        %4411 = vrot.lane.b32.xlu0 %v3894, 32
        %v4412 = vpop.permute.xlu0 %4411
        %4413 = vrot.lane.b32.xlu0 %v3895, 32
        %v4414 = vpop.permute.xlu0 %4413
        %4415 = vrot.lane.b32.xlu0 %v3896, 32
        %v4416 = vpop.permute.xlu0 %4415
        %4417 = vrot.lane.b32.xlu0 %v3897, 32
        %v4418 = vpop.permute.xlu0 %4417
        %4419 = vrot.lane.b32.xlu0 %v3898, 32
        %v4420 = vpop.permute.xlu0 %4419
        %4421 = vrot.lane.b32.xlu0 %v3899, 32
        %v4422 = vpop.permute.xlu0 %4421
        %4423 = vrot.lane.b32.xlu0 %v3900, 32
        %v4424 = vpop.permute.xlu0 %4423
        %4425 = vrot.lane.b32.xlu0 %v3901, 32
        %v4426 = vpop.permute.xlu0 %4425
        %4427 = vrot.lane.b32.xlu0 %v3902, 32
        %v4428 = vpop.permute.xlu0 %4427
        %4429 = vrot.lane.b32.xlu0 %v3903, 32
        %v4430 = vpop.permute.xlu0 %4429
        %4431 = vrot.lane.b32.xlu0 %v3904, 32
        %v4432 = vpop.permute.xlu0 %4431
        %4433 = vrot.lane.b32.xlu0 %v3905, 32
        %v4434 = vpop.permute.xlu0 %4433
        %4435 = vrot.lane.b32.xlu0 %v3906, 32
        %v4436 = vpop.permute.xlu0 %4435
        %4437 = vrot.lane.b32.xlu0 %v3907, 32
        %v4438 = vpop.permute.xlu0 %4437
        %4439 = vrot.lane.b32.xlu0 %v3908, 32
        %v4440 = vpop.permute.xlu0 %4439
        %4441 = vrot.lane.b32.xlu0 %v3909, 32
        %v4442 = vpop.permute.xlu0 %4441
        %4443 = vrot.lane.b32.xlu0 %v3910, 32
        %v4444 = vpop.permute.xlu0 %4443
        %4445 = vrot.lane.b32.xlu0 %v3911, 32
        %v4446 = vpop.permute.xlu0 %4445
        %4447 = vrot.lane.b32.xlu0 %v3912, 32
        %v4448 = vpop.permute.xlu0 %4447
        %4449 = vrot.lane.b32.xlu0 %v3913, 32
        %v4450 = vpop.permute.xlu0 %4449
        %4451 = vrot.lane.b32.xlu0 %v3914, 32
        %v4452 = vpop.permute.xlu0 %4451
        %4453 = vrot.lane.b32.xlu0 %v3915, 32
        %v4454 = vpop.permute.xlu0 %4453
        %4455 = vrot.lane.b32.xlu0 %v3916, 32
        %v4456 = vpop.permute.xlu0 %4455
        %4457 = vrot.lane.b32.xlu0 %v3917, 32
        %v4458 = vpop.permute.xlu0 %4457
        %4459 = vrot.lane.b32.xlu0 %v3918, 32
        %v4460 = vpop.permute.xlu0 %4459
        %4461 = vrot.lane.b32.xlu0 %v3919, 32
        %v4462 = vpop.permute.xlu0 %4461
        %4463 = vrot.lane.b32.xlu0 %v3920, 32
        %v4464 = vpop.permute.xlu0 %4463
        %4465 = vrot.lane.b32.xlu0 %v3921, 32
        %v4466 = vpop.permute.xlu0 %4465
        %4467 = vrot.lane.b32.xlu0 %v3922, 32
        %v4468 = vpop.permute.xlu0 %4467
        %4469 = vrot.lane.b32.xlu0 %v3923, 32
        %v4470 = vpop.permute.xlu0 %4469
        %4471 = vrot.lane.b32.xlu0 %v3924, 32
        %v4472 = vpop.permute.xlu0 %4471
        %4473 = vrot.lane.b32.xlu0 %v3925, 32
        %v4474 = vpop.permute.xlu0 %4473
        %4547 = vrot.lane.b32.xlu0 %v3713, 64
        %v4548 = vpop.permute.xlu0 %4547
        %4549 = vrot.lane.b32.xlu0 %v3714, 64
        %v4550 = vpop.permute.xlu0 %4549
        %4551 = vrot.lane.b32.xlu0 %v3715, 64
        %v4552 = vpop.permute.xlu0 %4551
        %4553 = vrot.lane.b32.xlu0 %v3716, 64
        %v4554 = vpop.permute.xlu0 %4553
        %4555 = vrot.lane.b32.xlu0 %v3717, 64
        %v4556 = vpop.permute.xlu0 %4555
        %4557 = vrot.lane.b32.xlu0 %v3718, 64
        %v4558 = vpop.permute.xlu0 %4557
        %4559 = vrot.lane.b32.xlu0 %v3719, 64
        %v4560 = vpop.permute.xlu0 %4559
        %4561 = vrot.lane.b32.xlu0 %v3720, 64
        %v4562 = vpop.permute.xlu0 %4561
        %4563 = vrot.lane.b32.xlu0 %v3721, 64
        %v4564 = vpop.permute.xlu0 %4563
        %4565 = vrot.lane.b32.xlu0 %v3722, 64
        %v4566 = vpop.permute.xlu0 %4565
        %4567 = vrot.lane.b32.xlu0 %v3723, 64
        %v4568 = vpop.permute.xlu0 %4567
        %4569 = vrot.lane.b32.xlu0 %v3724, 64
        %v4570 = vpop.permute.xlu0 %4569
        %4571 = vrot.lane.b32.xlu0 %v3725, 64
        %v4572 = vpop.permute.xlu0 %4571
        %4573 = vrot.lane.b32.xlu0 %v3726, 64
        %v4574 = vpop.permute.xlu0 %4573
        %4575 = vrot.lane.b32.xlu0 %v3727, 64
        %v4576 = vpop.permute.xlu0 %4575
        %4577 = vrot.lane.b32.xlu0 %v3728, 64
        %v4578 = vpop.permute.xlu0 %4577
        %4579 = vrot.lane.b32.xlu0 %v3729, 64
        %v4580 = vpop.permute.xlu0 %4579
        %4581 = vrot.lane.b32.xlu0 %v3730, 64
        %v4582 = vpop.permute.xlu0 %4581
        %4583 = vrot.lane.b32.xlu0 %v3731, 64
        %v4584 = vpop.permute.xlu0 %4583
        %4585 = vrot.lane.b32.xlu0 %v3732, 64
        %v4586 = vpop.permute.xlu0 %4585
        %4587 = vrot.lane.b32.xlu0 %v3733, 64
        %v4588 = vpop.permute.xlu0 %4587
        %4589 = vrot.lane.b32.xlu0 %v3734, 64
        %v4590 = vpop.permute.xlu0 %4589
        %4591 = vrot.lane.b32.xlu0 %v3735, 64
        %v4592 = vpop.permute.xlu0 %4591
        %4593 = vrot.lane.b32.xlu0 %v3736, 64
        %v4594 = vpop.permute.xlu0 %4593
        %4595 = vrot.lane.b32.xlu0 %v3737, 64
        %v4596 = vpop.permute.xlu0 %4595
        %4597 = vrot.lane.b32.xlu0 %v3738, 64
        %v4598 = vpop.permute.xlu0 %4597
        %4599 = vrot.lane.b32.xlu0 %v3739, 64
        %v4600 = vpop.permute.xlu0 %4599
        %4601 = vrot.lane.b32.xlu0 %v3740, 64
        %v4602 = vpop.permute.xlu0 %4601
        %4603 = vrot.lane.b32.xlu0 %v3741, 64
        %v4604 = vpop.permute.xlu0 %4603
        %4605 = vrot.lane.b32.xlu0 %v3742, 64
        %v4606 = vpop.permute.xlu0 %4605
        %4607 = vrot.lane.b32.xlu0 %v3743, 64
        %v4608 = vpop.permute.xlu0 %4607
        %4609 = vrot.lane.b32.xlu0 %v3744, 64
        %v4610 = vpop.permute.xlu0 %4609
        %4611 = vrot.lane.b32.xlu0 %v3745, 64
        %v4612 = vpop.permute.xlu0 %4611
        %4613 = vrot.lane.b32.xlu0 %v3926, 64
        %v4614 = vpop.permute.xlu0 %4613
        %4615 = vrot.lane.b32.xlu0 %v3927, 64
        %v4616 = vpop.permute.xlu0 %4615
        %4617 = vrot.lane.b32.xlu0 %v3928, 64
        %v4618 = vpop.permute.xlu0 %4617
        %4658 = vrot.lane.b32.xlu0 %v3749, 96
        %v4659 = vpop.permute.xlu0 %4658
        %4660 = vrot.lane.b32.xlu0 %v3750, 96
        %v4661 = vpop.permute.xlu0 %4660
        %4662 = vrot.lane.b32.xlu0 %v3751, 96
        %v4663 = vpop.permute.xlu0 %4662
        %4664 = vrot.lane.b32.xlu0 %v3752, 96
        %v4665 = vpop.permute.xlu0 %4664
        %4666 = vrot.lane.b32.xlu0 %v3753, 96
        %v4667 = vpop.permute.xlu0 %4666
        %4668 = vrot.lane.b32.xlu0 %v3754, 96
        %v4669 = vpop.permute.xlu0 %4668
        %4670 = vrot.lane.b32.xlu0 %v3755, 96
        %v4671 = vpop.permute.xlu0 %4670
        %4672 = vrot.lane.b32.xlu0 %v3756, 96
        %v4673 = vpop.permute.xlu0 %4672
        %4674 = vrot.lane.b32.xlu0 %v3757, 96
        %v4675 = vpop.permute.xlu0 %4674
        %4676 = vrot.lane.b32.xlu0 %v3758, 96
        %v4677 = vpop.permute.xlu0 %4676
        %4678 = vrot.lane.b32.xlu0 %v3759, 96
        %v4679 = vpop.permute.xlu0 %4678
        %4680 = vrot.lane.b32.xlu0 %v3760, 96
        %v4681 = vpop.permute.xlu0 %4680
        %4682 = vrot.lane.b32.xlu0 %v3761, 96
        %v4683 = vpop.permute.xlu0 %4682
        %4684 = vrot.lane.b32.xlu0 %v3762, 96
        %v4685 = vpop.permute.xlu0 %4684
        %4686 = vrot.lane.b32.xlu0 %v3763, 96
        %v4687 = vpop.permute.xlu0 %4686
        %4688 = vrot.lane.b32.xlu0 %v3764, 96
        %v4689 = vpop.permute.xlu0 %4688
        %4690 = vrot.lane.b32.xlu0 %v3765, 96
        %v4691 = vpop.permute.xlu0 %4690
        %4692 = vrot.lane.b32.xlu0 %v3766, 96
        %v4693 = vpop.permute.xlu0 %4692
        %4694 = vrot.lane.b32.xlu0 %v3767, 96
        %v4695 = vpop.permute.xlu0 %4694
        %4696 = vrot.lane.b32.xlu0 %v3768, 96
        %v4697 = vpop.permute.xlu0 %4696
        %4698 = vrot.lane.b32.xlu0 %v3769, 96
        %v4699 = vpop.permute.xlu0 %4698
        %4700 = vrot.lane.b32.xlu0 %v3770, 96
        %v4701 = vpop.permute.xlu0 %4700
        %4702 = vrot.lane.b32.xlu0 %v3771, 96
        %v4703 = vpop.permute.xlu0 %4702
        %4704 = vrot.lane.b32.xlu0 %v3772, 96
        %v4705 = vpop.permute.xlu0 %4704
        %4706 = vrot.lane.b32.xlu0 %v3773, 96
        %v4707 = vpop.permute.xlu0 %4706
        %4708 = vrot.lane.b32.xlu0 %v3774, 96
        %v4709 = vpop.permute.xlu0 %4708
        %4710 = vrot.lane.b32.xlu0 %v3775, 96
        %v4711 = vpop.permute.xlu0 %4710
        %4712 = vrot.lane.b32.xlu0 %v3776, 96
        %v4713 = vpop.permute.xlu0 %4712
        %4714 = vrot.lane.b32.xlu0 %v3777, 96
        %v4715 = vpop.permute.xlu0 %4714
        %4716 = vrot.lane.b32.xlu0 %v3778, 96
        %v4717 = vpop.permute.xlu0 %4716
        %4718 = vrot.lane.b32.xlu0 %v3779, 96
        %v4719 = vpop.permute.xlu0 %4718
        %4720 = vrot.lane.b32.xlu0 %v3780, 96
        %v4721 = vpop.permute.xlu0 %4720
        %4722 = vrot.lane.b32.xlu0 %v3781, 96
        %v4723 = vpop.permute.xlu0 %4722
        %4724 = vrot.lane.b32.xlu0 %v3929, 96
        %v4725 = vpop.permute.xlu0 %4724
        %4726 = vrot.lane.b32.xlu0 %v3930, 96
        %v4727 = vpop.permute.xlu0 %4726
        %4728 = vrot.lane.b32.xlu0 %v3931, 96
        %v4729 = vpop.permute.xlu0 %4728
        %vm4766 = vcmask 261120
        %v4767 = vsel %vm4766, %v3710, %v3972
        %v4768 = vsel %vm4766, %v3711, %v3974
        %v4769 = vsel %vm4766, %v3712, %v3976
        %v4770 = vsel %vm4766, %v3713, %v3978
        %v4771 = vsel %vm4766, %v3714, %v3980
        %v4772 = vsel %vm4766, %v3715, %v3982
        %v4773 = vsel %vm4766, %v3716, %v3984
        %v4774 = vsel %vm4766, %v3717, %v3986
        %v4775 = vsel %vm4766, %v3718, %v3988
        %v4776 = vsel %vm4766, %v3719, %v3990
        %v4777 = vsel %vm4766, %v3720, %v3992
        %v4778 = vsel %vm4766, %v3721, %v3994
        %v4779 = vsel %vm4766, %v3722, %v3996
        %v4780 = vsel %vm4766, %v3723, %v3998
        %v4781 = vsel %vm4766, %v3724, %v4000
        %v4782 = vsel %vm4766, %v3725, %v4002
        %v4783 = vsel %vm4766, %v3726, %v4004
        %v4784 = vsel %vm4766, %v3727, %v4006
        %v4785 = vsel %vm4766, %v3728, %v4008
        %v4786 = vsel %vm4766, %v3729, %v4010
        %v4787 = vsel %vm4766, %v3730, %v4012
        %v4788 = vsel %vm4766, %v3731, %v4014
        %v4789 = vsel %vm4766, %v3732, %v4016
        %v4790 = vsel %vm4766, %v3733, %v4018
        %v4791 = vsel %vm4766, %v3734, %v4020
        %v4792 = vsel %vm4766, %v3735, %v4022
        %v4793 = vsel %vm4766, %v3736, %v4024
        %v4794 = vsel %vm4766, %v3737, %v4026
        %v4795 = vsel %vm4766, %v3738, %v4028
        %v4796 = vsel %vm4766, %v3739, %v4030
        %v4797 = vsel %vm4766, %v3740, %v4032
        %v4798 = vsel %vm4766, %v3741, %v4034
        %v4799 = vsel %vm4766, %v3742, %v4036
        %v4800 = vsel %vm4766, %v3743, %v4038
        %v4801 = vsel %vm4766, %v3744, %v4040
        %v4802 = vsel %vm4766, %v3745, %v4042
        %vm4803 = vcmask 523264
        %v4804 = vsel %vm4803, %v4767, %v4116
        %v4805 = vsel %vm4803, %v4768, %v4118
        %v4806 = vsel %vm4803, %v4769, %v4120
        %v4807 = vsel %vm4803, %v4770, %v4122
        %v4808 = vsel %vm4803, %v4771, %v4124
        %v4809 = vsel %vm4803, %v4772, %v4126
        %v4810 = vsel %vm4803, %v4773, %v4128
        %v4811 = vsel %vm4803, %v4774, %v4130
        %v4812 = vsel %vm4803, %v4775, %v4132
        %v4813 = vsel %vm4803, %v4776, %v4134
        %v4814 = vsel %vm4803, %v4777, %v4136
        %v4815 = vsel %vm4803, %v4778, %v4138
        %v4816 = vsel %vm4803, %v4779, %v4140
        %v4817 = vsel %vm4803, %v4780, %v4142
        %v4818 = vsel %vm4803, %v4781, %v4144
        %v4819 = vsel %vm4803, %v4782, %v4146
        %v4820 = vsel %vm4803, %v4783, %v4148
        %v4821 = vsel %vm4803, %v4784, %v4150
        %v4822 = vsel %vm4803, %v4785, %v4152
        %v4823 = vsel %vm4803, %v4786, %v4154
        %v4824 = vsel %vm4803, %v4787, %v4156
        %v4825 = vsel %vm4803, %v4788, %v4158
        %v4826 = vsel %vm4803, %v4789, %v4160
        %v4827 = vsel %vm4803, %v4790, %v4162
        %v4828 = vsel %vm4803, %v4791, %v4164
        %v4829 = vsel %vm4803, %v4792, %v4166
        %v4830 = vsel %vm4803, %v4793, %v4168
        %v4831 = vsel %vm4803, %v4794, %v4170
        %v4832 = vsel %vm4803, %v4795, %v4172
        %v4833 = vsel %vm4803, %v4796, %v4174
        %v4834 = vsel %vm4803, %v4797, %v4176
        %v4835 = vsel %vm4803, %v4798, %v4178
        %v4836 = vsel %vm4803, %v4799, %v4180
        %v4837 = vsel %vm4803, %v4800, %v4182
        %v4838 = vsel %vm4803, %v4801, %v4184
        %v4839 = vsel %vm4803, %v4802, %v4186
        %vm4840 = vcmask 785408
        %v4841 = vsel %vm4840, %v4804, %v4260
        %v4842 = vsel %vm4840, %v4805, %v4262
        %v4843 = vsel %vm4840, %v4806, %v4264
        %v4844 = vsel %vm4840, %v4807, %v4266
        %v4845 = vsel %vm4840, %v4808, %v4268
        %v4846 = vsel %vm4840, %v4809, %v4270
        %v4847 = vsel %vm4840, %v4810, %v4272
        %v4848 = vsel %vm4840, %v4811, %v4274
        %v4849 = vsel %vm4840, %v4812, %v4276
        %v4850 = vsel %vm4840, %v4813, %v4278
        %v4851 = vsel %vm4840, %v4814, %v4280
        %v4852 = vsel %vm4840, %v4815, %v4282
        %v4853 = vsel %vm4840, %v4816, %v4284
        %v4854 = vsel %vm4840, %v4817, %v4286
        %v4855 = vsel %vm4840, %v4818, %v4288
        %v4856 = vsel %vm4840, %v4819, %v4290
        %v4857 = vsel %vm4840, %v4820, %v4292
        %v4858 = vsel %vm4840, %v4821, %v4294
        %v4859 = vsel %vm4840, %v4822, %v4296
        %v4860 = vsel %vm4840, %v4823, %v4298
        %v4861 = vsel %vm4840, %v4824, %v4300
        %v4862 = vsel %vm4840, %v4825, %v4302
        %v4863 = vsel %vm4840, %v4826, %v4304
        %v4864 = vsel %vm4840, %v4827, %v4306
        %v4865 = vsel %vm4840, %v4828, %v4308
        %v4866 = vsel %vm4840, %v4829, %v4310
        %v4867 = vsel %vm4840, %v4830, %v4312
        %v4868 = vsel %vm4840, %v4831, %v4314
        %v4869 = vsel %vm4840, %v4832, %v4316
        %v4870 = vsel %vm4840, %v4833, %v4318
        %v4871 = vsel %vm4840, %v4834, %v4320
        %v4872 = vsel %vm4840, %v4835, %v4322
        %v4873 = vsel %vm4840, %v4836, %v4324
        %v4874 = vsel %vm4840, %v4837, %v4326
        %v4875 = vsel %vm4840, %v4838, %v4328
        %v4876 = vsel %vm4840, %v4839, %v4330
        %v4877 = vsel %vm4766, %v3854, %v4404
        %v4878 = vsel %vm4766, %v3855, %v4406
        %v4879 = vsel %vm4766, %v3856, %v4408
        %v4880 = vsel %vm4766, %v3857, %v4410
        %v4881 = vsel %vm4766, %v3858, %v4412
        %v4882 = vsel %vm4766, %v3859, %v4414
        %v4883 = vsel %vm4766, %v3860, %v4416
        %v4884 = vsel %vm4766, %v3861, %v4418
        %v4885 = vsel %vm4766, %v3862, %v4420
        %v4886 = vsel %vm4766, %v3863, %v4422
        %v4887 = vsel %vm4766, %v3864, %v4424
        %v4888 = vsel %vm4766, %v3865, %v4426
        %v4889 = vsel %vm4766, %v3866, %v4428
        %v4890 = vsel %vm4766, %v3867, %v4430
        %v4891 = vsel %vm4766, %v3868, %v4432
        %v4892 = vsel %vm4766, %v3869, %v4434
        %v4893 = vsel %vm4766, %v3870, %v4436
        %v4894 = vsel %vm4766, %v3871, %v4438
        %v4895 = vsel %vm4766, %v3872, %v4440
        %v4896 = vsel %vm4766, %v3873, %v4442
        %v4897 = vsel %vm4766, %v3874, %v4444
        %v4898 = vsel %vm4766, %v3875, %v4446
        %v4899 = vsel %vm4766, %v3876, %v4448
        %v4900 = vsel %vm4766, %v3877, %v4450
        %v4901 = vsel %vm4766, %v3878, %v4452
        %v4902 = vsel %vm4766, %v3879, %v4454
        %v4903 = vsel %vm4766, %v3880, %v4456
        %v4904 = vsel %vm4766, %v3881, %v4458
        %v4905 = vsel %vm4766, %v3882, %v4460
        %v4906 = vsel %vm4766, %v3883, %v4462
        %v4907 = vsel %vm4766, %v3884, %v4464
        %v4908 = vsel %vm4766, %v3885, %v4466
        %v4909 = vsel %vm4766, %v3886, %v4468
        %v4910 = vsel %vm4766, %v3887, %v4470
        %v4911 = vsel %vm4766, %v3888, %v4472
        %v4912 = vsel %vm4766, %v3889, %v4474
        %v4913 = vsel %vm4803, %v4877, %v4548
        %v4914 = vsel %vm4803, %v4878, %v4550
        %v4915 = vsel %vm4803, %v4879, %v4552
        %v4916 = vsel %vm4803, %v4880, %v4554
        %v4917 = vsel %vm4803, %v4881, %v4556
        %v4918 = vsel %vm4803, %v4882, %v4558
        %v4919 = vsel %vm4803, %v4883, %v4560
        %v4920 = vsel %vm4803, %v4884, %v4562
        %v4921 = vsel %vm4803, %v4885, %v4564
        %v4922 = vsel %vm4803, %v4886, %v4566
        %v4923 = vsel %vm4803, %v4887, %v4568
        %v4924 = vsel %vm4803, %v4888, %v4570
        %v4925 = vsel %vm4803, %v4889, %v4572
        %v4926 = vsel %vm4803, %v4890, %v4574
        %v4927 = vsel %vm4803, %v4891, %v4576
        %v4928 = vsel %vm4803, %v4892, %v4578
        %v4929 = vsel %vm4803, %v4893, %v4580
        %v4930 = vsel %vm4803, %v4894, %v4582
        %v4931 = vsel %vm4803, %v4895, %v4584
        %v4932 = vsel %vm4803, %v4896, %v4586
        %v4933 = vsel %vm4803, %v4897, %v4588
        %v4934 = vsel %vm4803, %v4898, %v4590
        %v4935 = vsel %vm4803, %v4899, %v4592
        %v4936 = vsel %vm4803, %v4900, %v4594
        %v4937 = vsel %vm4803, %v4901, %v4596
        %v4938 = vsel %vm4803, %v4902, %v4598
        %v4939 = vsel %vm4803, %v4903, %v4600
        %v4940 = vsel %vm4803, %v4904, %v4602
        %v4941 = vsel %vm4803, %v4905, %v4604
        %v4942 = vsel %vm4803, %v4906, %v4606
        %v4943 = vsel %vm4803, %v4907, %v4608
        %v4944 = vsel %vm4803, %v4908, %v4610
        %v4945 = vsel %vm4803, %v4909, %v4612
        %v4946 = vsel %vm4803, %v4910, %v4614
        %v4947 = vsel %vm4803, %v4911, %v4616
        %v4948 = vsel %vm4803, %v4912, %v4618
        %v4949 = vsel %vm4840, %v4913, %v4659
        %v4950 = vsel %vm4840, %v4914, %v4661
        %v4951 = vsel %vm4840, %v4915, %v4663
        %v4952 = vsel %vm4840, %v4916, %v4665
        %v4953 = vsel %vm4840, %v4917, %v4667
        %v4954 = vsel %vm4840, %v4918, %v4669
        %v4955 = vsel %vm4840, %v4919, %v4671
        %v4956 = vsel %vm4840, %v4920, %v4673
        %v4957 = vsel %vm4840, %v4921, %v4675
        %v4958 = vsel %vm4840, %v4922, %v4677
        %v4959 = vsel %vm4840, %v4923, %v4679
        %v4960 = vsel %vm4840, %v4924, %v4681
        %v4961 = vsel %vm4840, %v4925, %v4683
        %v4962 = vsel %vm4840, %v4926, %v4685
        %v4963 = vsel %vm4840, %v4927, %v4687
        %v4964 = vsel %vm4840, %v4928, %v4689
        %v4965 = vsel %vm4840, %v4929, %v4691
        %v4966 = vsel %vm4840, %v4930, %v4693
        %v4967 = vsel %vm4840, %v4931, %v4695
        %v4968 = vsel %vm4840, %v4932, %v4697
        %v4969 = vsel %vm4840, %v4933, %v4699
        %v4970 = vsel %vm4840, %v4934, %v4701
        %v4971 = vsel %vm4840, %v4935, %v4703
        %v4972 = vsel %vm4840, %v4936, %v4705
        %v4973 = vsel %vm4840, %v4937, %v4707
        %v4974 = vsel %vm4840, %v4938, %v4709
        %v4975 = vsel %vm4840, %v4939, %v4711
        %v4976 = vsel %vm4840, %v4940, %v4713
        %v4977 = vsel %vm4840, %v4941, %v4715
        %v4978 = vsel %vm4840, %v4942, %v4717
        %v4979 = vsel %vm4840, %v4943, %v4719
        %v4980 = vsel %vm4840, %v4944, %v4721
        %v4981 = vsel %vm4840, %v4945, %v4723
        %v4982 = vsel %vm4840, %v4946, %v4725
        %v4983 = vsel %vm4840, %v4947, %v4727
        %v4984 = vsel %vm4840, %v4948, %v4729
        %v4985 = vld [vmem:[%s274] sm:$0xff]
        %v4986 = vld [vmem:[%s274 + $0x8] sm:$0xff]
        %v4987 = vld [vmem:[%s274 + $0x10] sm:$0xff]
        %v4988 = vld [vmem:[%s274 + $0x18] sm:$0xff]
        %v4989 = vld [vmem:[%s274 + $0x20] sm:$0xff]
        %v4990 = vld [vmem:[%s274 + $0x28] sm:$0xff]
        %v4991 = vld [vmem:[%s274 + $0x30] sm:$0xff]
        %v4992 = vld [vmem:[%s274 + $0x38] sm:$0xff]
        %v4993 = vld [vmem:[%s274 + $0x40] sm:$0xff]
        %v4994 = vld [vmem:[%s274 + $0x48] sm:$0xff]
        %v4995 = vld [vmem:[%s274 + $0x50] sm:$0xff]
        %v4996 = vld [vmem:[%s274 + $0x58] sm:$0xff]
        %v4997 = vld [vmem:[%s274 + $0x60] sm:$0xff]
        %v4998 = vld [vmem:[%s274 + $0x68] sm:$0xff]
        %v4999 = vld [vmem:[%s274 + $0x70] sm:$0xff]
        %v5000 = vld [vmem:[%s274 + $0x78] sm:$0xff]
        %v5001 = vld [vmem:[%s274 + $0x80] sm:$0xff]
        %v5002 = vld [vmem:[%s274 + $0x88] sm:$0xff]
        %v5003 = vld [vmem:[%s274 + $0x90] sm:$0xff]
        %v5004 = vld [vmem:[%s274 + $0x98] sm:$0xff]
        %v5005 = vld [vmem:[%s274 + $0xa0] sm:$0xff]
        %v5006 = vld [vmem:[%s274 + $0xa8] sm:$0xff]
        %v5007 = vld [vmem:[%s274 + $0xb0] sm:$0xff]
        %v5008 = vld [vmem:[%s274 + $0xb8] sm:$0xff]
        %v5009 = vld [vmem:[%s274 + $0xc0] sm:$0xff]
        %v5010 = vld [vmem:[%s274 + $0xc8] sm:$0xff]
        %v5011 = vld [vmem:[%s274 + $0xd0] sm:$0xff]
        %v5012 = vld [vmem:[%s274 + $0xd8] sm:$0xff]
        %v5013 = vld [vmem:[%s274 + $0xe0] sm:$0xff]
        %v5014 = vld [vmem:[%s274 + $0xe8] sm:$0xff]
        %v5015 = vld [vmem:[%s274 + $0xf0] sm:$0xff]
        %v5016 = vld [vmem:[%s274 + $0xf8] sm:$0xff]
        %v5017 = vld [vmem:[%s274 + $0x100] sm:$0xff]
        %v5018 = vld [vmem:[%s274 + $0x108] sm:$0xff]
        %v5019 = vld [vmem:[%s274 + $0x110] sm:$0xff]
        %v5020 = vld [vmem:[%s274 + $0x118] sm:$0xff]
        %v5021 = vld [vmem:[%s277] sm:$0x1]
        %v5023 = vlaneseq
        %v5024 = vshrl.u32 %v5023, 7
        %v5025 = vsub.s32 0, %v5024
        %v5026 = vrot.slane %v5021, %v5025
        %v5028 = vsel %vm4766, %v3785, 0
        %v5030 = vsel %vm4766, %v3786, 0
        %v5032 = vsel %vm4766, %v3787, 0
        %v5034 = vsel %vm4766, %v3788, 0
        %v5036 = vsel %vm4766, %v3789, 0
        %v5038 = vsel %vm4766, %v3790, 0
        %v5040 = vsel %vm4766, %v3791, 0
        %v5042 = vsel %vm4766, %v3792, 0
        %v5044 = vsel %vm4766, %v3793, 0
        %v5046 = vsel %vm4766, %v3794, 0
        %v5048 = vsel %vm4766, %v3795, 0
        %v5050 = vsel %vm4766, %v3796, 0
        %v5052 = vsel %vm4766, %v3797, 0
        %v5054 = vsel %vm4766, %v3798, 0
        %v5056 = vsel %vm4766, %v3799, 0
        %v5058 = vsel %vm4766, %v3800, 0
        %v5060 = vsel %vm4766, %v3801, 0
        %v5062 = vsel %vm4766, %v3802, 0
        %v5064 = vsel %vm4766, %v3803, 0
        %v5066 = vsel %vm4766, %v3804, 0
        %v5068 = vsel %vm4766, %v3805, 0
        %v5070 = vsel %vm4766, %v3806, 0
        %v5072 = vsel %vm4766, %v3807, 0
        %v5074 = vsel %vm4766, %v3808, 0
        %v5076 = vsel %vm4766, %v3809, 0
        %v5078 = vsel %vm4766, %v3810, 0
        %v5080 = vsel %vm4766, %v3811, 0
        %v5082 = vsel %vm4766, %v3812, 0
        %v5084 = vsel %vm4766, %v3813, 0
        %v5086 = vsel %vm4766, %v3814, 0
        %v5088 = vsel %vm4766, %v3815, 0
        %v5090 = vsel %vm4766, %v3816, 0
        %v5092 = vsel %vm4766, %v3817, 0
        %v5095 = vsel %vm4766, %v3932, 0
        %v5098 = vsel %vm4766, %v3933, 0
        %v5101 = vsel %vm4766, %v3934, 0
        %5103 = vmatprep.subr.mxu0 0.0
        %5104 = vmatpush1.msra.mxu0 %v4985
        %5105 = vmatprep.subr.mxu0 0.0
        %5106 = vmatpush1.msra.mxu0 %v4986
        %5107 = vmatprep.subr.mxu0 0.0
        %5108 = vmatpush1.msra.mxu0 %v4987
        %5109 = vmatprep.subr.mxu0 0.0
        %5110 = vmatpush1.msra.mxu0 %v4988
        %5111 = vmatprep.subr.mxu0 0.0
        %5112 = vmatpush1.msra.mxu0 %v4989
        %5113 = vmatprep.subr.mxu0 0.0
        %5114 = vmatpush1.msra.mxu0 %v4990
        %5115 = vmatprep.subr.mxu0 0.0
        %5116 = vmatpush1.msra.mxu0 %v4991
        %5117 = vmatprep.subr.mxu0 0.0
        %5118 = vmatpush1.msra.mxu0 %v4992
        %5119 = vmatprep.subr.mxu0 0.0
        %5120 = vmatpush1.msra.mxu0 %v4993
        %5121 = vmatprep.subr.mxu0 0.0
        %5122 = vmatpush1.msra.mxu0 %v4994
        %5123 = vmatprep.subr.mxu0 0.0
        %5124 = vmatpush1.msra.mxu0 %v4995
        %5125 = vmatprep.subr.mxu0 0.0
        %5126 = vmatpush1.msra.mxu0 %v4996
        %5127 = vmatprep.subr.mxu0 0.0
        %5128 = vmatpush1.msra.mxu0 %v4997
        %5129 = vmatprep.subr.mxu0 0.0
        %5130 = vmatpush1.msra.mxu0 %v4998
        %5131 = vmatprep.subr.mxu0 0.0
        %5132 = vmatpush1.msra.mxu0 %v4999
        %5133 = vmatprep.subr.mxu0 0.0
        %5134 = vmatpush1.msra.mxu0 %v5000
        %5135 = vmatprep.subr.mxu0 0.0
        %5136 = vmatpush1.msra.mxu0 %v5001
        %5137 = vmatprep.subr.mxu0 0.0
        %5138 = vmatpush1.msra.mxu0 %v5002
        %5139 = vmatprep.subr.mxu0 0.0
        %5140 = vmatpush1.msra.mxu0 %v5003
        %5141 = vmatprep.subr.mxu0 0.0
        %5142 = vmatpush1.msra.mxu0 %v5004
        %5143 = vmatprep.subr.mxu0 0.0
        %5144 = vmatpush1.msra.mxu0 %v5005
        %5145 = vmatprep.subr.mxu0 0.0
        %5146 = vmatpush1.msra.mxu0 %v5006
        %5147 = vmatprep.subr.mxu0 0.0
        %5148 = vmatpush1.msra.mxu0 %v5007
        %5149 = vmatprep.subr.mxu0 0.0
        %5150 = vmatpush1.msra.mxu0 %v5008
        %5151 = vmatprep.subr.mxu0 0.0
        %5152 = vmatpush1.msra.mxu0 %v5009
        %5153 = vmatprep.subr.mxu0 0.0
        %5154 = vmatpush1.msra.mxu0 %v5010
        %5155 = vmatprep.subr.mxu0 0.0
        %5156 = vmatpush1.msra.mxu0 %v5011
        %5157 = vmatprep.subr.mxu0 0.0
        %5158 = vmatpush1.msra.mxu0 %v5012
        %5159 = vmatprep.subr.mxu0 0.0
        %5160 = vmatpush1.msra.mxu0 %v5013
        %5161 = vmatprep.subr.mxu0 0.0
        %5162 = vmatpush1.msra.mxu0 %v5014
        %5163 = vmatprep.subr.mxu0 0.0
        %5164 = vmatpush1.msra.mxu0 %v5015
        %5165 = vmatprep.subr.mxu0 0.0
        %5166 = vmatpush1.msra.mxu0 %v5016
        %5167 = vmatprep.mubr.f32.mxu0 %v4949
        %5168 = vmatmul.mubr.f32.gmra.mrb[0].mxu0 %v4841
        %v5169 = vpop.f32.mrb[0].mxu0
        %v5170 = vadd.f32 %v5026, %v5169
        %v5171 = vpop.f32.mrb[0].mxu0
        %5172 = vmatprep.mubr.f32.mxu0 %v4950
        %5173 = vmatmul.mubr.f32.gmra.mrb[0].mxu0 %v4842
        %v5174 = vpop.f32.mrb[0].mxu0
        %v5175 = vadd.f32 %v5026, %v5174
        %v5176 = vpop.f32.mrb[0].mxu0
        %5177 = vmatprep.mubr.f32.mxu0 %v4951
        %5178 = vmatmul.mubr.f32.gmra.mrb[0].mxu0 %v4843
        %v5179 = vpop.f32.mrb[0].mxu0
        %v5180 = vadd.f32 %v5026, %v5179
        %v5181 = vpop.f32.mrb[0].mxu0
        %5182 = vmatprep.mubr.f32.mxu0 %v4952
        %5183 = vmatmul.mubr.f32.gmra.mrb[0].mxu0 %v4844
        %v5184 = vpop.f32.mrb[0].mxu0
        %v5185 = vadd.f32 %v5026, %v5184
        %v5186 = vpop.f32.mrb[0].mxu0
        %5187 = vmatprep.mubr.f32.mxu0 %v4953
        %5188 = vmatmul.mubr.f32.gmra.mrb[0].mxu0 %v4845
        %v5189 = vpop.f32.mrb[0].mxu0
        %v5190 = vadd.f32 %v5026, %v5189
        %v5191 = vpop.f32.mrb[0].mxu0
        %5192 = vmatprep.mubr.f32.mxu0 %v4954
        %5193 = vmatmul.mubr.f32.gmra.mrb[0].mxu0 %v4846
        %v5194 = vpop.f32.mrb[0].mxu0
        %v5195 = vadd.f32 %v5026, %v5194
        %v5196 = vpop.f32.mrb[0].mxu0
        %5197 = vmatprep.mubr.f32.mxu0 %v4955
        %5198 = vmatmul.mubr.f32.gmra.mrb[0].mxu0 %v4847
        %v5199 = vpop.f32.mrb[0].mxu0
        %v5200 = vadd.f32 %v5026, %v5199
        %v5201 = vpop.f32.mrb[0].mxu0
        %5202 = vmatprep.mubr.f32.mxu0 %v4956
        %5203 = vmatmul.mubr.f32.gmra.mrb[0].mxu0 %v4848
        %v5204 = vpop.f32.mrb[0].mxu0
        %v5205 = vadd.f32 %v5026, %v5204
        %v5206 = vpop.f32.mrb[0].mxu0
        %5207 = vmatprep.mubr.f32.mxu0 %v4957
        %5208 = vmatmul.mubr.f32.gmra.mrb[0].mxu0 %v4849
        %v5209 = vpop.f32.mrb[0].mxu0
        %v5210 = vadd.f32 %v5026, %v5209
        %v5211 = vpop.f32.mrb[0].mxu0
        %5212 = vmatprep.mubr.f32.mxu0 %v4958
        %5213 = vmatmul.mubr.f32.gmra.mrb[0].mxu0 %v4850
        %v5214 = vpop.f32.mrb[0].mxu0
        %v5215 = vadd.f32 %v5026, %v5214
        %v5216 = vpop.f32.mrb[0].mxu0
        %5217 = vmatprep.mubr.f32.mxu0 %v4959
        %5218 = vmatmul.mubr.f32.gmra.mrb[0].mxu0 %v4851
        %v5219 = vpop.f32.mrb[0].mxu0
        %v5220 = vadd.f32 %v5026, %v5219
        %v5221 = vpop.f32.mrb[0].mxu0
        %5222 = vmatprep.mubr.f32.mxu0 %v4960
        %5223 = vmatmul.mubr.f32.gmra.mrb[0].mxu0 %v4852
        %v5224 = vpop.f32.mrb[0].mxu0
        %v5225 = vadd.f32 %v5026, %v5224
        %v5226 = vpop.f32.mrb[0].mxu0
        %5227 = vmatprep.mubr.f32.mxu0 %v4961
        %5228 = vmatmul.mubr.f32.gmra.mrb[0].mxu0 %v4853
        %v5229 = vpop.f32.mrb[0].mxu0
        %v5230 = vadd.f32 %v5026, %v5229
        %v5231 = vpop.f32.mrb[0].mxu0
        %5232 = vmatprep.mubr.f32.mxu0 %v4962
        %5233 = vmatmul.mubr.f32.gmra.mrb[0].mxu0 %v4854
        %v5234 = vpop.f32.mrb[0].mxu0
        %v5235 = vadd.f32 %v5026, %v5234
        %v5236 = vpop.f32.mrb[0].mxu0
        %5237 = vmatprep.mubr.f32.mxu0 %v4963
        %5238 = vmatmul.mubr.f32.gmra.mrb[0].mxu0 %v4855
        %v5239 = vpop.f32.mrb[0].mxu0
        %v5240 = vadd.f32 %v5026, %v5239
        %v5241 = vpop.f32.mrb[0].mxu0
        %5242 = vmatprep.mubr.f32.mxu0 %v4964
        %5243 = vmatmul.mubr.f32.gmra.mrb[0].mxu0 %v4856
        %v5244 = vpop.f32.mrb[0].mxu0
        %v5245 = vadd.f32 %v5026, %v5244
        %v5246 = vpop.f32.mrb[0].mxu0
        %5247 = vmatprep.mubr.f32.mxu0 %v4965
        %5248 = vmatmul.mubr.f32.gmra.mrb[0].mxu0 %v4857
        %v5249 = vpop.f32.mrb[0].mxu0
        %v5250 = vadd.f32 %v5026, %v5249
        %v5251 = vpop.f32.mrb[0].mxu0
        %5252 = vmatprep.mubr.f32.mxu0 %v4966
        %5253 = vmatmul.mubr.f32.gmra.mrb[0].mxu0 %v4858
        %v5254 = vpop.f32.mrb[0].mxu0
        %v5255 = vadd.f32 %v5026, %v5254
        %v5256 = vpop.f32.mrb[0].mxu0
        %5257 = vmatprep.mubr.f32.mxu0 %v4967
        %5258 = vmatmul.mubr.f32.gmra.mrb[0].mxu0 %v4859
        %v5259 = vpop.f32.mrb[0].mxu0
        %v5260 = vadd.f32 %v5026, %v5259
        %v5261 = vpop.f32.mrb[0].mxu0
        %5262 = vmatprep.mubr.f32.mxu0 %v4968
        %5263 = vmatmul.mubr.f32.gmra.mrb[0].mxu0 %v4860
        %v5264 = vpop.f32.mrb[0].mxu0
        %v5265 = vadd.f32 %v5026, %v5264
        %v5266 = vpop.f32.mrb[0].mxu0
        %5267 = vmatprep.mubr.f32.mxu0 %v4969
        %5268 = vmatmul.mubr.f32.gmra.mrb[0].mxu0 %v4861
        %v5269 = vpop.f32.mrb[0].mxu0
        %v5270 = vadd.f32 %v5026, %v5269
        %v5271 = vpop.f32.mrb[0].mxu0
        %5272 = vmatprep.mubr.f32.mxu0 %v4970
        %5273 = vmatmul.mubr.f32.gmra.mrb[0].mxu0 %v4862
        %v5274 = vpop.f32.mrb[0].mxu0
        %v5275 = vadd.f32 %v5026, %v5274
        %v5276 = vpop.f32.mrb[0].mxu0
        %5277 = vmatprep.mubr.f32.mxu0 %v4971
        %5278 = vmatmul.mubr.f32.gmra.mrb[0].mxu0 %v4863
        %v5279 = vpop.f32.mrb[0].mxu0
        %v5280 = vadd.f32 %v5026, %v5279
        %v5281 = vpop.f32.mrb[0].mxu0
        %5282 = vmatprep.mubr.f32.mxu0 %v4972
        %5283 = vmatmul.mubr.f32.gmra.mrb[0].mxu0 %v4864
        %v5284 = vpop.f32.mrb[0].mxu0
        %v5285 = vadd.f32 %v5026, %v5284
        %v5286 = vpop.f32.mrb[0].mxu0
        %5287 = vmatprep.mubr.f32.mxu0 %v4973
        %5288 = vmatmul.mubr.f32.gmra.mrb[0].mxu0 %v4865
        %v5289 = vpop.f32.mrb[0].mxu0
        %v5290 = vadd.f32 %v5026, %v5289
        %v5291 = vpop.f32.mrb[0].mxu0
        %5292 = vmatprep.mubr.f32.mxu0 %v4974
        %5293 = vmatmul.mubr.f32.gmra.mrb[0].mxu0 %v4866
        %v5294 = vpop.f32.mrb[0].mxu0
        %v5295 = vadd.f32 %v5026, %v5294
        %v5296 = vpop.f32.mrb[0].mxu0
        %5297 = vmatprep.mubr.f32.mxu0 %v4975
        %5298 = vmatmul.mubr.f32.gmra.mrb[0].mxu0 %v4867
        %v5299 = vpop.f32.mrb[0].mxu0
        %v5300 = vadd.f32 %v5026, %v5299
        %v5301 = vpop.f32.mrb[0].mxu0
        %5302 = vmatprep.mubr.f32.mxu0 %v4976
        %5303 = vmatmul.mubr.f32.gmra.mrb[0].mxu0 %v4868
        %v5304 = vpop.f32.mrb[0].mxu0
        %v5305 = vadd.f32 %v5026, %v5304
        %v5306 = vpop.f32.mrb[0].mxu0
        %5307 = vmatprep.mubr.f32.mxu0 %v4977
        %5308 = vmatmul.mubr.f32.gmra.mrb[0].mxu0 %v4869
        %v5309 = vpop.f32.mrb[0].mxu0
        %v5310 = vadd.f32 %v5026, %v5309
        %v5311 = vpop.f32.mrb[0].mxu0
        %5312 = vmatprep.mubr.f32.mxu0 %v4978
        %5313 = vmatmul.mubr.f32.gmra.mrb[0].mxu0 %v4870
        %v5314 = vpop.f32.mrb[0].mxu0
        %v5315 = vadd.f32 %v5026, %v5314
        %v5316 = vpop.f32.mrb[0].mxu0
        %5317 = vmatprep.mubr.f32.mxu0 %v4979
        %5318 = vmatmul.mubr.f32.gmra.mrb[0].mxu0 %v4871
        %v5319 = vpop.f32.mrb[0].mxu0
        %v5320 = vadd.f32 %v5026, %v5319
        %v5321 = vpop.f32.mrb[0].mxu0
        %5322 = vmatprep.mubr.f32.mxu0 %v4980
        %5323 = vmatmul.mubr.f32.gmra.mrb[0].mxu0 %v4872
        %v5324 = vpop.f32.mrb[0].mxu0
        %v5325 = vadd.f32 %v5026, %v5324
        %v5326 = vpop.f32.mrb[0].mxu0
        %5327 = vmatprep.mubr.f32.mxu0 %v4981
        %5328 = vmatmul.mubr.f32.gmra.mrb[0].mxu0 %v4873
        %v5329 = vpop.f32.mrb[0].mxu0
        %v5330 = vadd.f32 %v5026, %v5329
        %v5331 = vpop.f32.mrb[0].mxu0
        %5332 = vmatprep.mubr.f32.mxu0 %v4982
        %5333 = vmatmul.mubr.f32.gmra.mrb[0].mxu0 %v4874
        %v5334 = vpop.f32.mrb[0].mxu0
        %v5335 = vadd.f32 %v5026, %v5334
        %v5336 = vpop.f32.mrb[0].mxu0
        %5337 = vmatprep.mubr.f32.mxu0 %v4983
        %5338 = vmatmul.mubr.f32.gmra.mrb[0].mxu0 %v4875
        %v5339 = vpop.f32.mrb[0].mxu0
        %v5340 = vadd.f32 %v5026, %v5339
        %v5341 = vpop.f32.mrb[0].mxu0
        %5342 = vmatprep.mubr.f32.mxu0 %v4984
        %5343 = vmatmul.mubr.f32.gmra.mrb[0].mxu0 %v4876
        %v5344 = vpop.f32.mrb[0].mxu0
        %v5345 = vadd.f32 %v5026, %v5344
        %v5346 = vpop.f32.mrb[0].mxu0
        %5347 = vdwg.mxu0
        %5348 = vmatprep.subr.mxu0 0.0
        %5349 = vmatpush1.msra.mxu0 %v5017
        %5350 = vmatprep.subr.mxu0 0.0
        %5351 = vmatpush1.msra.mxu0 %v5018
        %5352 = vmatprep.subr.mxu0 0.0
        %5353 = vmatpush1.msra.mxu0 %v5019
        %5354 = vmatprep.subr.mxu0 0.0
        %5355 = vmatpush1.msra.mxu0 %v5020
        %5356 = vmatprep.subr.mxu0 0.0
        %5357 = vmatpush1.msra.mxu0 0.0
        %5358 = vmatprep.subr.mxu0 0.0
        %5359 = vmatpush1.msra.mxu0 0.0
        %5360 = vmatprep.subr.mxu0 0.0
        %5361 = vmatpush1.msra.mxu0 0.0
        %5362 = vmatprep.subr.mxu0 0.0
        %5363 = vmatpush1.msra.mxu0 0.0
        %5364 = vmatprep.subr.mxu0 0.0
        %5365 = vmatpush1.msra.mxu0 0.0
        %5366 = vmatprep.subr.mxu0 0.0
        %5367 = vmatpush1.msra.mxu0 0.0
        %5368 = vmatprep.subr.mxu0 0.0
        %5369 = vmatpush1.msra.mxu0 0.0
        %5370 = vmatprep.subr.mxu0 0.0
        %5371 = vmatpush1.msra.mxu0 0.0
        %5372 = vmatprep.subr.mxu0 0.0
        %5373 = vmatpush1.msra.mxu0 0.0
        %5374 = vmatprep.subr.mxu0 0.0
        %5375 = vmatpush1.msra.mxu0 0.0
        %5376 = vmatprep.subr.mxu0 0.0
        %5377 = vmatpush1.msra.mxu0 0.0
        %5378 = vmatprep.subr.mxu0 0.0
        %5379 = vmatpush1.msra.mxu0 0.0
        %5380 = vmatprep.subr.mxu0 0.0
        %5381 = vmatpush1.msra.mxu0 0.0
        %5382 = vmatprep.subr.mxu0 0.0
        %5383 = vmatpush1.msra.mxu0 0.0
        %5384 = vmatprep.subr.mxu0 0.0
        %5385 = vmatpush1.msra.mxu0 0.0
        %5386 = vmatprep.subr.mxu0 0.0
        %5387 = vmatpush1.msra.mxu0 0.0
        %5388 = vmatprep.subr.mxu0 0.0
        %5389 = vmatpush1.msra.mxu0 0.0
        %5390 = vmatprep.subr.mxu0 0.0
        %5391 = vmatpush1.msra.mxu0 0.0
        %5392 = vmatprep.subr.mxu0 0.0
        %5393 = vmatpush1.msra.mxu0 0.0
        %5394 = vmatprep.subr.mxu0 0.0
        %5395 = vmatpush1.msra.mxu0 0.0
        %5396 = vmatprep.subr.mxu0 0.0
        %5397 = vmatpush1.msra.mxu0 0.0
        %5398 = vmatprep.subr.mxu0 0.0
        %5399 = vmatpush1.msra.mxu0 0.0
        %5400 = vmatprep.subr.mxu0 0.0
        %5401 = vmatpush1.msra.mxu0 0.0
        %5402 = vmatprep.subr.mxu0 0.0
        %5403 = vmatpush1.msra.mxu0 0.0
        %5404 = vmatprep.subr.mxu0 0.0
        %5405 = vmatpush1.msra.mxu0 0.0
        %5406 = vmatprep.subr.mxu0 0.0
        %5407 = vmatpush1.msra.mxu0 0.0
        %5408 = vmatprep.subr.mxu0 0.0
        %5409 = vmatpush1.msra.mxu0 0.0
        %5410 = vmatprep.subr.mxu0 0.0
        %5411 = vmatpush1.msra.mxu0 0.0
        %5412 = vmatprep.mubr.f32.mxu0 0.0
        %5413 = vmatmul.mubr.f32.gmra.mrb[0].mxu0 %v5028
        %v5414 = vpop.f32.mrb[0].mxu0
        %v5415 = vadd.f32 %v5170, %v5414
        %v5416 = vpop.f32.mrb[0].mxu0
        %5417 = vmatprep.mubr.f32.mxu0 0.0
        %5418 = vmatmul.mubr.f32.gmra.mrb[0].mxu0 %v5030
        %v5419 = vpop.f32.mrb[0].mxu0
        %v5420 = vadd.f32 %v5175, %v5419
        %v5421 = vpop.f32.mrb[0].mxu0
        %5422 = vmatprep.mubr.f32.mxu0 0.0
        %5423 = vmatmul.mubr.f32.gmra.mrb[0].mxu0 %v5032
        %v5424 = vpop.f32.mrb[0].mxu0
        %v5425 = vadd.f32 %v5180, %v5424
        %v5426 = vpop.f32.mrb[0].mxu0
        %5427 = vmatprep.mubr.f32.mxu0 0.0
        %5428 = vmatmul.mubr.f32.gmra.mrb[0].mxu0 %v5034
        %v5429 = vpop.f32.mrb[0].mxu0
        %v5430 = vadd.f32 %v5185, %v5429
        %v5431 = vpop.f32.mrb[0].mxu0
        %5432 = vmatprep.mubr.f32.mxu0 0.0
        %5433 = vmatmul.mubr.f32.gmra.mrb[0].mxu0 %v5036
        %v5434 = vpop.f32.mrb[0].mxu0
        %v5435 = vadd.f32 %v5190, %v5434
        %v5436 = vpop.f32.mrb[0].mxu0
        %5437 = vmatprep.mubr.f32.mxu0 0.0
        %5438 = vmatmul.mubr.f32.gmra.mrb[0].mxu0 %v5038
        %v5439 = vpop.f32.mrb[0].mxu0
        %v5440 = vadd.f32 %v5195, %v5439
        %v5441 = vpop.f32.mrb[0].mxu0
        %5442 = vmatprep.mubr.f32.mxu0 0.0
        %5443 = vmatmul.mubr.f32.gmra.mrb[0].mxu0 %v5040
        %v5444 = vpop.f32.mrb[0].mxu0
        %v5445 = vadd.f32 %v5200, %v5444
        %v5446 = vpop.f32.mrb[0].mxu0
        %5447 = vmatprep.mubr.f32.mxu0 0.0
        %5448 = vmatmul.mubr.f32.gmra.mrb[0].mxu0 %v5042
        %v5449 = vpop.f32.mrb[0].mxu0
        %v5450 = vadd.f32 %v5205, %v5449
        %v5451 = vpop.f32.mrb[0].mxu0
        %5452 = vmatprep.mubr.f32.mxu0 0.0
        %5453 = vmatmul.mubr.f32.gmra.mrb[0].mxu0 %v5044
        %v5454 = vpop.f32.mrb[0].mxu0
        %v5455 = vadd.f32 %v5210, %v5454
        %v5456 = vpop.f32.mrb[0].mxu0
        %5457 = vmatprep.mubr.f32.mxu0 0.0
        %5458 = vmatmul.mubr.f32.gmra.mrb[0].mxu0 %v5046
        %v5459 = vpop.f32.mrb[0].mxu0
        %v5460 = vadd.f32 %v5215, %v5459
        %v5461 = vpop.f32.mrb[0].mxu0
        %5462 = vmatprep.mubr.f32.mxu0 0.0
        %5463 = vmatmul.mubr.f32.gmra.mrb[0].mxu0 %v5048
        %v5464 = vpop.f32.mrb[0].mxu0
        %v5465 = vadd.f32 %v5220, %v5464
        %v5466 = vpop.f32.mrb[0].mxu0
        %5467 = vmatprep.mubr.f32.mxu0 0.0
        %5468 = vmatmul.mubr.f32.gmra.mrb[0].mxu0 %v5050
        %v5469 = vpop.f32.mrb[0].mxu0
        %v5470 = vadd.f32 %v5225, %v5469
        %v5471 = vpop.f32.mrb[0].mxu0
        %5472 = vmatprep.mubr.f32.mxu0 0.0
        %5473 = vmatmul.mubr.f32.gmra.mrb[0].mxu0 %v5052
        %v5474 = vpop.f32.mrb[0].mxu0
        %v5475 = vadd.f32 %v5230, %v5474
        %v5476 = vpop.f32.mrb[0].mxu0
        %5477 = vmatprep.mubr.f32.mxu0 0.0
        %5478 = vmatmul.mubr.f32.gmra.mrb[0].mxu0 %v5054
        %v5479 = vpop.f32.mrb[0].mxu0
        %v5480 = vadd.f32 %v5235, %v5479
        %v5481 = vpop.f32.mrb[0].mxu0
        %5482 = vmatprep.mubr.f32.mxu0 0.0
        %5483 = vmatmul.mubr.f32.gmra.mrb[0].mxu0 %v5056
        %v5484 = vpop.f32.mrb[0].mxu0
        %v5485 = vadd.f32 %v5240, %v5484
        %v5486 = vpop.f32.mrb[0].mxu0
        %5487 = vmatprep.mubr.f32.mxu0 0.0
        %5488 = vmatmul.mubr.f32.gmra.mrb[0].mxu0 %v5058
        %v5489 = vpop.f32.mrb[0].mxu0
        %v5490 = vadd.f32 %v5245, %v5489
        %v5491 = vpop.f32.mrb[0].mxu0
        %5492 = vmatprep.mubr.f32.mxu0 0.0
        %5493 = vmatmul.mubr.f32.gmra.mrb[0].mxu0 %v5060
        %v5494 = vpop.f32.mrb[0].mxu0
        %v5495 = vadd.f32 %v5250, %v5494
        %v5496 = vpop.f32.mrb[0].mxu0
        %5497 = vmatprep.mubr.f32.mxu0 0.0
        %5498 = vmatmul.mubr.f32.gmra.mrb[0].mxu0 %v5062
        %v5499 = vpop.f32.mrb[0].mxu0
        %v5500 = vadd.f32 %v5255, %v5499
        %v5501 = vpop.f32.mrb[0].mxu0
        %5502 = vmatprep.mubr.f32.mxu0 0.0
        %5503 = vmatmul.mubr.f32.gmra.mrb[0].mxu0 %v5064
        %v5504 = vpop.f32.mrb[0].mxu0
        %v5505 = vadd.f32 %v5260, %v5504
        %v5506 = vpop.f32.mrb[0].mxu0
        %5507 = vmatprep.mubr.f32.mxu0 0.0
        %5508 = vmatmul.mubr.f32.gmra.mrb[0].mxu0 %v5066
        %v5509 = vpop.f32.mrb[0].mxu0
        %v5510 = vadd.f32 %v5265, %v5509
        %v5511 = vpop.f32.mrb[0].mxu0
        %5512 = vmatprep.mubr.f32.mxu0 0.0
        %5513 = vmatmul.mubr.f32.gmra.mrb[0].mxu0 %v5068
        %v5514 = vpop.f32.mrb[0].mxu0
        %v5515 = vadd.f32 %v5270, %v5514
        %v5516 = vpop.f32.mrb[0].mxu0
        %5517 = vmatprep.mubr.f32.mxu0 0.0
        %5518 = vmatmul.mubr.f32.gmra.mrb[0].mxu0 %v5070
        %v5519 = vpop.f32.mrb[0].mxu0
        %v5520 = vadd.f32 %v5275, %v5519
        %v5521 = vpop.f32.mrb[0].mxu0
        %5522 = vmatprep.mubr.f32.mxu0 0.0
        %5523 = vmatmul.mubr.f32.gmra.mrb[0].mxu0 %v5072
        %v5524 = vpop.f32.mrb[0].mxu0
        %v5525 = vadd.f32 %v5280, %v5524
        %v5526 = vpop.f32.mrb[0].mxu0
        %5527 = vmatprep.mubr.f32.mxu0 0.0
        %5528 = vmatmul.mubr.f32.gmra.mrb[0].mxu0 %v5074
        %v5529 = vpop.f32.mrb[0].mxu0
        %v5530 = vadd.f32 %v5285, %v5529
        %v5531 = vpop.f32.mrb[0].mxu0
        %5532 = vmatprep.mubr.f32.mxu0 0.0
        %5533 = vmatmul.mubr.f32.gmra.mrb[0].mxu0 %v5076
        %v5534 = vpop.f32.mrb[0].mxu0
        %v5535 = vadd.f32 %v5290, %v5534
        %v5536 = vpop.f32.mrb[0].mxu0
        %5537 = vmatprep.mubr.f32.mxu0 0.0
        %5538 = vmatmul.mubr.f32.gmra.mrb[0].mxu0 %v5078
        %v5539 = vpop.f32.mrb[0].mxu0
        %v5540 = vadd.f32 %v5295, %v5539
        %v5541 = vpop.f32.mrb[0].mxu0
        %5542 = vmatprep.mubr.f32.mxu0 0.0
        %5543 = vmatmul.mubr.f32.gmra.mrb[0].mxu0 %v5080
        %v5544 = vpop.f32.mrb[0].mxu0
        %v5545 = vadd.f32 %v5300, %v5544
        %v5546 = vpop.f32.mrb[0].mxu0
        %5547 = vmatprep.mubr.f32.mxu0 0.0
        %5548 = vmatmul.mubr.f32.gmra.mrb[0].mxu0 %v5082
        %v5549 = vpop.f32.mrb[0].mxu0
        %v5550 = vadd.f32 %v5305, %v5549
        %v5551 = vpop.f32.mrb[0].mxu0
        %5552 = vmatprep.mubr.f32.mxu0 0.0
        %5553 = vmatmul.mubr.f32.gmra.mrb[0].mxu0 %v5084
        %v5554 = vpop.f32.mrb[0].mxu0
        %v5555 = vadd.f32 %v5310, %v5554
        %v5556 = vpop.f32.mrb[0].mxu0
        %5557 = vmatprep.mubr.f32.mxu0 0.0
        %5558 = vmatmul.mubr.f32.gmra.mrb[0].mxu0 %v5086
        %v5559 = vpop.f32.mrb[0].mxu0
        %v5560 = vadd.f32 %v5315, %v5559
        %v5561 = vpop.f32.mrb[0].mxu0
        %5562 = vmatprep.mubr.f32.mxu0 0.0
        %5563 = vmatmul.mubr.f32.gmra.mrb[0].mxu0 %v5088
        %v5564 = vpop.f32.mrb[0].mxu0
        %v5565 = vadd.f32 %v5320, %v5564
        %v5566 = vpop.f32.mrb[0].mxu0
        %5567 = vmatprep.mubr.f32.mxu0 0.0
        %5568 = vmatmul.mubr.f32.gmra.mrb[0].mxu0 %v5090
        %v5569 = vpop.f32.mrb[0].mxu0
        %v5570 = vadd.f32 %v5325, %v5569
        %v5571 = vpop.f32.mrb[0].mxu0
        %5572 = vmatprep.mubr.f32.mxu0 0.0
        %5573 = vmatmul.mubr.f32.gmra.mrb[0].mxu0 %v5092
        %v5574 = vpop.f32.mrb[0].mxu0
        %v5575 = vadd.f32 %v5330, %v5574
        %v5576 = vpop.f32.mrb[0].mxu0
        %5577 = vmatprep.mubr.f32.mxu0 0.0
        %5578 = vmatmul.mubr.f32.gmra.mrb[0].mxu0 %v5095
        %v5579 = vpop.f32.mrb[0].mxu0
        %v5580 = vadd.f32 %v5335, %v5579
        %v5581 = vpop.f32.mrb[0].mxu0
        %5582 = vmatprep.mubr.f32.mxu0 0.0
        %5583 = vmatmul.mubr.f32.gmra.mrb[0].mxu0 %v5098
        %v5584 = vpop.f32.mrb[0].mxu0
        %v5585 = vadd.f32 %v5340, %v5584
        %v5586 = vpop.f32.mrb[0].mxu0
        %5587 = vmatprep.mubr.f32.mxu0 0.0
        %5588 = vmatmul.mubr.f32.gmra.mrb[0].mxu0 %v5101
        %v5589 = vpop.f32.mrb[0].mxu0
        %v5590 = vadd.f32 %v5345, %v5589
        %v5591 = vpop.f32.mrb[0].mxu0
        %5592 = vdwg.mxu0
        %5594 = vset.pattern.permute.xlu0 0
        %5595 = vperm.xlu0 %5594, %v278
        %v5596 = vpop.permute.xlu0 %5595
        %5599 = vset.pattern.permute.xlu0 0
        %5600 = vperm.xlu0 %5599, %v279
        %v5601 = vpop.permute.xlu0 %5600
        %5604 = vset.pattern.permute.xlu0 0
        %5605 = vperm.xlu0 %5604, %v280
        %v5606 = vpop.permute.xlu0 %5605
        %5609 = vset.pattern.permute.xlu0 0
        %5610 = vperm.xlu0 %5609, %v281
        %v5611 = vpop.permute.xlu0 %5610
        %5614 = vset.pattern.permute.xlu0 0
        %5615 = vperm.xlu0 %5614, %v282
        %v5616 = vpop.permute.xlu0 %5615
        %5619 = vset.pattern.permute.xlu0 0
        %5620 = vperm.xlu0 %5619, %v283
        %v5621 = vpop.permute.xlu0 %5620
        %5624 = vset.pattern.permute.xlu0 0
        %5625 = vperm.xlu0 %5624, %v284
        %v5626 = vpop.permute.xlu0 %5625
        %5629 = vset.pattern.permute.xlu0 0
        %5630 = vperm.xlu0 %5629, %v285
        %v5631 = vpop.permute.xlu0 %5630
        %5634 = vset.pattern.permute.xlu0 0
        %5635 = vperm.xlu0 %5634, %v286
        %v5636 = vpop.permute.xlu0 %5635
        %5639 = vset.pattern.permute.xlu0 0
        %5640 = vperm.xlu0 %5639, %v287
        %v5641 = vpop.permute.xlu0 %5640
        %5644 = vset.pattern.permute.xlu0 0
        %5645 = vperm.xlu0 %5644, %v288
        %v5646 = vpop.permute.xlu0 %5645
        %5649 = vset.pattern.permute.xlu0 0
        %5650 = vperm.xlu0 %5649, %v289
        %v5651 = vpop.permute.xlu0 %5650
        %5654 = vset.pattern.permute.xlu0 0
        %5655 = vperm.xlu0 %5654, %v290
        %v5656 = vpop.permute.xlu0 %5655
        %5659 = vset.pattern.permute.xlu0 0
        %5660 = vperm.xlu0 %5659, %v291
        %v5661 = vpop.permute.xlu0 %5660
        %5664 = vset.pattern.permute.xlu0 0
        %5665 = vperm.xlu0 %5664, %v292
        %v5666 = vpop.permute.xlu0 %5665
        %5669 = vset.pattern.permute.xlu0 0
        %5670 = vperm.xlu0 %5669, %v293
        %v5671 = vpop.permute.xlu0 %5670
        %5674 = vset.pattern.permute.xlu0 0
        %5675 = vperm.xlu0 %5674, %v294
        %v5676 = vpop.permute.xlu0 %5675
        %5679 = vset.pattern.permute.xlu0 0
        %5680 = vperm.xlu0 %5679, %v295
        %v5681 = vpop.permute.xlu0 %5680
        %5684 = vset.pattern.permute.xlu0 0
        %5685 = vperm.xlu0 %5684, %v296
        %v5686 = vpop.permute.xlu0 %5685
        %5689 = vset.pattern.permute.xlu0 0
        %5690 = vperm.xlu0 %5689, %v297
        %v5691 = vpop.permute.xlu0 %5690
        %5694 = vset.pattern.permute.xlu0 0
        %5695 = vperm.xlu0 %5694, %v298
        %v5696 = vpop.permute.xlu0 %5695
        %5699 = vset.pattern.permute.xlu0 0
        %5700 = vperm.xlu0 %5699, %v299
        %v5701 = vpop.permute.xlu0 %5700
        %5704 = vset.pattern.permute.xlu0 0
        %5705 = vperm.xlu0 %5704, %v300
        %v5706 = vpop.permute.xlu0 %5705
        %5709 = vset.pattern.permute.xlu0 0
        %5710 = vperm.xlu0 %5709, %v301
        %v5711 = vpop.permute.xlu0 %5710
        %5714 = vset.pattern.permute.xlu0 0
        %5715 = vperm.xlu0 %5714, %v302
        %v5716 = vpop.permute.xlu0 %5715
        %5719 = vset.pattern.permute.xlu0 0
        %5720 = vperm.xlu0 %5719, %v303
        %v5721 = vpop.permute.xlu0 %5720
        %5724 = vset.pattern.permute.xlu0 0
        %5725 = vperm.xlu0 %5724, %v304
        %v5726 = vpop.permute.xlu0 %5725
        %5729 = vset.pattern.permute.xlu0 0
        %5730 = vperm.xlu0 %5729, %v305
        %v5731 = vpop.permute.xlu0 %5730
        %5734 = vset.pattern.permute.xlu0 0
        %5735 = vperm.xlu0 %5734, %v306
        %v5736 = vpop.permute.xlu0 %5735
        %5739 = vset.pattern.permute.xlu0 0
        %5740 = vperm.xlu0 %5739, %v307
        %v5741 = vpop.permute.xlu0 %5740
        %5744 = vset.pattern.permute.xlu0 0
        %5745 = vperm.xlu0 %5744, %v308
        %v5746 = vpop.permute.xlu0 %5745
        %5749 = vset.pattern.permute.xlu0 0
        %5750 = vperm.xlu0 %5749, %v309
        %v5751 = vpop.permute.xlu0 %5750
        %5754 = vset.pattern.permute.xlu0 0
        %5755 = vperm.xlu0 %5754, %v310
        %v5756 = vpop.permute.xlu0 %5755
        %5759 = vset.pattern.permute.xlu0 0
        %5760 = vperm.xlu0 %5759, %v311
        %v5761 = vpop.permute.xlu0 %5760
        %5764 = vset.pattern.permute.xlu0 0
        %5765 = vperm.xlu0 %5764, %v312
        %v5766 = vpop.permute.xlu0 %5765
        %5769 = vset.pattern.permute.xlu0 0
        %5770 = vperm.xlu0 %5769, %v313
        %v5771 = vpop.permute.xlu0 %5770
        %v5773 = vmul.f32 %v5415, %v5596
        %v5774 = vmul.f32 %v5420, %v5601
        %v5775 = vmul.f32 %v5425, %v5606
        %v5776 = vmul.f32 %v5430, %v5611
        %v5777 = vmul.f32 %v5435, %v5616
        %v5778 = vmul.f32 %v5440, %v5621
        %v5779 = vmul.f32 %v5445, %v5626
        %v5780 = vmul.f32 %v5450, %v5631
        %v5781 = vmul.f32 %v5455, %v5636
        %v5782 = vmul.f32 %v5460, %v5641
        %v5783 = vmul.f32 %v5465, %v5646
        %v5784 = vmul.f32 %v5470, %v5651
        %v5785 = vmul.f32 %v5475, %v5656
        %v5786 = vmul.f32 %v5480, %v5661
        %v5787 = vmul.f32 %v5485, %v5666
        %v5788 = vmul.f32 %v5490, %v5671
        %v5789 = vmul.f32 %v5495, %v5676
        %v5790 = vmul.f32 %v5500, %v5681
        %v5791 = vmul.f32 %v5505, %v5686
        %v5792 = vmul.f32 %v5510, %v5691
        %v5793 = vmul.f32 %v5515, %v5696
        %v5794 = vmul.f32 %v5520, %v5701
        %v5795 = vmul.f32 %v5525, %v5706
        %v5796 = vmul.f32 %v5530, %v5711
        %v5797 = vmul.f32 %v5535, %v5716
        %v5798 = vmul.f32 %v5540, %v5721
        %v5799 = vmul.f32 %v5545, %v5726
        %v5800 = vmul.f32 %v5550, %v5731
        %v5801 = vmul.f32 %v5555, %v5736
        %v5802 = vmul.f32 %v5560, %v5741
        %v5803 = vmul.f32 %v5565, %v5746
        %v5804 = vmul.f32 %v5570, %v5751
        %v5805 = vmul.f32 %v5575, %v5756
        %v5806 = vmul.f32 %v5580, %v5761
        %v5807 = vmul.f32 %v5585, %v5766
        %v5808 = vmul.f32 %v5590, %v5771
        %5809 = vst.msk [vmem:[#allocation3 + $0x10] sm:$0xff] %vm4766, %v5773
        %5810 = vst.msk [vmem:[#allocation3 + $0x18] sm:$0xff] %vm4766, %v5774
        %5811 = vst.msk [vmem:[#allocation3 + $0x20] sm:$0xff] %vm4766, %v5775
        %5812 = vst.msk [vmem:[#allocation3 + $0x28] sm:$0xff] %vm4766, %v5776
        %5813 = vst.msk [vmem:[#allocation3 + $0x30] sm:$0xff] %vm4766, %v5777
        %5814 = vst.msk [vmem:[#allocation3 + $0x38] sm:$0xff] %vm4766, %v5778
        %5815 = vst.msk [vmem:[#allocation3 + $0x40] sm:$0xff] %vm4766, %v5779
        %5816 = vst.msk [vmem:[#allocation3 + $0x48] sm:$0xff] %vm4766, %v5780
        %5817 = vst.msk [vmem:[#allocation3 + $0x50] sm:$0xff] %vm4766, %v5781
        %5818 = vst.msk [vmem:[#allocation3 + $0x58] sm:$0xff] %vm4766, %v5782
        %5819 = vst.msk [vmem:[#allocation3 + $0x60] sm:$0xff] %vm4766, %v5783
        %5820 = vst.msk [vmem:[#allocation3 + $0x68] sm:$0xff] %vm4766, %v5784
        %5821 = vst.msk [vmem:[#allocation3 + $0x70] sm:$0xff] %vm4766, %v5785
        %5822 = vst.msk [vmem:[#allocation3 + $0x78] sm:$0xff] %vm4766, %v5786
        %5823 = vst.msk [vmem:[#allocation3 + $0x80] sm:$0xff] %vm4766, %v5787
        %5824 = vst.msk [vmem:[#allocation3 + $0x88] sm:$0xff] %vm4766, %v5788
        %5825 = vst.msk [vmem:[#allocation3 + $0x90] sm:$0xff] %vm4766, %v5789
        %5826 = vst.msk [vmem:[#allocation3 + $0x98] sm:$0xff] %vm4766, %v5790
        %5827 = vst.msk [vmem:[#allocation3 + $0xa0] sm:$0xff] %vm4766, %v5791
        %5828 = vst.msk [vmem:[#allocation3 + $0xa8] sm:$0xff] %vm4766, %v5792
        %5829 = vst.msk [vmem:[#allocation3 + $0xb0] sm:$0xff] %vm4766, %v5793
        %5830 = vst.msk [vmem:[#allocation3 + $0xb8] sm:$0xff] %vm4766, %v5794
        %5831 = vst.msk [vmem:[#allocation3 + $0xc0] sm:$0xff] %vm4766, %v5795
        %5832 = vst.msk [vmem:[#allocation3 + $0xc8] sm:$0xff] %vm4766, %v5796
        %5833 = vst.msk [vmem:[#allocation3 + $0xd0] sm:$0xff] %vm4766, %v5797
        %5834 = vst.msk [vmem:[#allocation3 + $0xd8] sm:$0xff] %vm4766, %v5798
        %5835 = vst.msk [vmem:[#allocation3 + $0xe0] sm:$0xff] %vm4766, %v5799
        %5836 = vst.msk [vmem:[#allocation3 + $0xe8] sm:$0xff] %vm4766, %v5800
        %5837 = vst.msk [vmem:[#allocation3 + $0xf0] sm:$0xff] %vm4766, %v5801
        %5838 = vst.msk [vmem:[#allocation3 + $0xf8] sm:$0xff] %vm4766, %v5802
        %5839 = vst.msk [vmem:[#allocation3 + $0x100] sm:$0xff] %vm4766, %v5803
        %5840 = vst.msk [vmem:[#allocation3 + $0x108] sm:$0xff] %vm4766, %v5804
        %5841 = vst.msk [vmem:[#allocation3 + $0x110] sm:$0xff] %vm4766, %v5805
        %5842 = vst.msk [vmem:[#allocation3 + $0x118] sm:$0xff] %vm4766, %v5806
        %5843 = vst.msk [vmem:[#allocation3 + $0x120] sm:$0xff] %vm4766, %v5807
        %5844 = vst.msk [vmem:[#allocation3 + $0x128] sm:$0xff] %vm4766, %v5808
      $region60: #{searchable_model_forward.1} parent=47 // pred_fallthru
        _
      %p5845 = scmp.eq.s32.totalorder %s18, 8
      // Predicated region
      $region61: #{searchable_model_forward.1} parent=47 // pred_check
        %p5846 = pneg %p5845
      $region62: #{searchable_model_forward.1} parent=47 // pred_check_branch
        %5848 = sbr.rel (%p5846) target = $region64
      $region63: #{searchable_model_forward.1} parent=47 // pred_region
        %v5849 = vld [vmem:[#allocation3 + $0x3] sm:$0xff]
        %v5850 = vld [vmem:[#allocation3 + $0xb] sm:$0xff]
        %v5851 = vld [vmem:[#allocation3 + $0x13] sm:$0xff]
        %v5852 = vld [vmem:[#allocation3 + $0x1b] sm:$0xff]
        %v5853 = vld [vmem:[#allocation3 + $0x23] sm:$0xff]
        %v5854 = vld [vmem:[#allocation3 + $0x2b] sm:$0xff]
        %v5855 = vld [vmem:[#allocation3 + $0x33] sm:$0xff]
        %v5856 = vld [vmem:[#allocation3 + $0x3b] sm:$0xff]
        %v5857 = vld [vmem:[#allocation3 + $0x43] sm:$0xff]
        %v5858 = vld [vmem:[#allocation3 + $0x4b] sm:$0xff]
        %v5859 = vld [vmem:[#allocation3 + $0x53] sm:$0xff]
        %v5860 = vld [vmem:[#allocation3 + $0x5b] sm:$0xff]
        %v5861 = vld [vmem:[#allocation3 + $0x63] sm:$0xff]
        %v5862 = vld [vmem:[#allocation3 + $0x6b] sm:$0xff]
        %v5863 = vld [vmem:[#allocation3 + $0x73] sm:$0xff]
        %v5864 = vld [vmem:[#allocation3 + $0x7b] sm:$0xff]
        %v5865 = vld [vmem:[#allocation3 + $0x83] sm:$0xff]
        %v5866 = vld [vmem:[#allocation3 + $0x8b] sm:$0xff]
        %v5867 = vld [vmem:[#allocation3 + $0x93] sm:$0xff]
        %v5868 = vld [vmem:[#allocation3 + $0x9b] sm:$0xff]
        %v5869 = vld [vmem:[#allocation3 + $0xa3] sm:$0xff]
        %v5870 = vld [vmem:[#allocation3 + $0xab] sm:$0xff]
        %v5871 = vld [vmem:[#allocation3 + $0xb3] sm:$0xff]
        %v5872 = vld [vmem:[#allocation3 + $0xbb] sm:$0xff]
        %v5873 = vld [vmem:[#allocation3 + $0xc3] sm:$0xff]
        %v5874 = vld [vmem:[#allocation3 + $0xcb] sm:$0xff]
        %v5875 = vld [vmem:[#allocation3 + $0xd3] sm:$0xff]
        %v5876 = vld [vmem:[#allocation3 + $0xdb] sm:$0xff]
        %v5877 = vld [vmem:[#allocation3 + $0xe3] sm:$0xff]
        %v5878 = vld [vmem:[#allocation3 + $0xeb] sm:$0xff]
        %v5879 = vld [vmem:[#allocation3 + $0xf3] sm:$0xff]
        %v5880 = vld [vmem:[#allocation3 + $0xfb] sm:$0xff]
        %v5881 = vld [vmem:[#allocation3 + $0x103] sm:$0xff]
        %v5882 = vld [vmem:[#allocation3 + $0x10b] sm:$0xff]
        %v5883 = vld [vmem:[#allocation3 + $0x113] sm:$0xff]
        %v5884 = vld [vmem:[#allocation3 + $0x11b] sm:$0xff]
        %v5885 = vld [vmem:[#allocation3 + $0x4] sm:$0xff]
        %v5886 = vld [vmem:[#allocation3 + $0xc] sm:$0xff]
        %v5887 = vld [vmem:[#allocation3 + $0x14] sm:$0xff]
        %v5888 = vld [vmem:[#allocation3 + $0x1c] sm:$0xff]
        %v5889 = vld [vmem:[#allocation3 + $0x24] sm:$0xff]
        %v5890 = vld [vmem:[#allocation3 + $0x2c] sm:$0xff]
        %v5891 = vld [vmem:[#allocation3 + $0x34] sm:$0xff]
        %v5892 = vld [vmem:[#allocation3 + $0x3c] sm:$0xff]
        %v5893 = vld [vmem:[#allocation3 + $0x44] sm:$0xff]
        %v5894 = vld [vmem:[#allocation3 + $0x4c] sm:$0xff]
        %v5895 = vld [vmem:[#allocation3 + $0x54] sm:$0xff]
        %v5896 = vld [vmem:[#allocation3 + $0x5c] sm:$0xff]
        %v5897 = vld [vmem:[#allocation3 + $0x64] sm:$0xff]
        %v5898 = vld [vmem:[#allocation3 + $0x6c] sm:$0xff]
        %v5899 = vld [vmem:[#allocation3 + $0x74] sm:$0xff]
        %v5900 = vld [vmem:[#allocation3 + $0x7c] sm:$0xff]
        %v5901 = vld [vmem:[#allocation3 + $0x84] sm:$0xff]
        %v5902 = vld [vmem:[#allocation3 + $0x8c] sm:$0xff]
        %v5903 = vld [vmem:[#allocation3 + $0x94] sm:$0xff]
        %v5904 = vld [vmem:[#allocation3 + $0x9c] sm:$0xff]
        %v5905 = vld [vmem:[#allocation3 + $0xa4] sm:$0xff]
        %v5906 = vld [vmem:[#allocation3 + $0xac] sm:$0xff]
        %v5907 = vld [vmem:[#allocation3 + $0xb4] sm:$0xff]
        %v5908 = vld [vmem:[#allocation3 + $0xbc] sm:$0xff]
        %v5909 = vld [vmem:[#allocation3 + $0xc4] sm:$0xff]
        %v5910 = vld [vmem:[#allocation3 + $0xcc] sm:$0xff]
        %v5911 = vld [vmem:[#allocation3 + $0xd4] sm:$0xff]
        %v5912 = vld [vmem:[#allocation3 + $0xdc] sm:$0xff]
        %v5913 = vld [vmem:[#allocation3 + $0xe4] sm:$0xff]
        %v5914 = vld [vmem:[#allocation3 + $0xec] sm:$0xff]
        %v5915 = vld [vmem:[#allocation3 + $0xf4] sm:$0xff]
        %v5916 = vld [vmem:[#allocation3 + $0xfc] sm:$0xff]
        %v5917 = vld [vmem:[#allocation3 + $0x104] sm:$0xff]
        %v5918 = vld [vmem:[#allocation3 + $0x10c] sm:$0xff]
        %v5919 = vld [vmem:[#allocation3 + $0x114] sm:$0xff]
        %v5920 = vld [vmem:[#allocation3 + $0x11c] sm:$0xff]
        %v5921 = vld [vmem:[#allocation3 + $0x5] sm:$0xff]
        %v5922 = vld [vmem:[#allocation3 + $0xd] sm:$0xff]
        %v5923 = vld [vmem:[#allocation3 + $0x15] sm:$0xff]
        %v5924 = vld [vmem:[#allocation3 + $0x1d] sm:$0xff]
        %v5925 = vld [vmem:[#allocation3 + $0x25] sm:$0xff]
        %v5926 = vld [vmem:[#allocation3 + $0x2d] sm:$0xff]
        %v5927 = vld [vmem:[#allocation3 + $0x35] sm:$0xff]
        %v5928 = vld [vmem:[#allocation3 + $0x3d] sm:$0xff]
        %v5929 = vld [vmem:[#allocation3 + $0x45] sm:$0xff]
        %v5930 = vld [vmem:[#allocation3 + $0x4d] sm:$0xff]
        %v5931 = vld [vmem:[#allocation3 + $0x55] sm:$0xff]
        %v5932 = vld [vmem:[#allocation3 + $0x5d] sm:$0xff]
        %v5933 = vld [vmem:[#allocation3 + $0x65] sm:$0xff]
        %v5934 = vld [vmem:[#allocation3 + $0x6d] sm:$0xff]
        %v5935 = vld [vmem:[#allocation3 + $0x75] sm:$0xff]
        %v5936 = vld [vmem:[#allocation3 + $0x7d] sm:$0xff]
        %v5937 = vld [vmem:[#allocation3 + $0x85] sm:$0xff]
        %v5938 = vld [vmem:[#allocation3 + $0x8d] sm:$0xff]
        %v5939 = vld [vmem:[#allocation3 + $0x95] sm:$0xff]
        %v5940 = vld [vmem:[#allocation3 + $0x9d] sm:$0xff]
        %v5941 = vld [vmem:[#allocation3 + $0xa5] sm:$0xff]
        %v5942 = vld [vmem:[#allocation3 + $0xad] sm:$0xff]
        %v5943 = vld [vmem:[#allocation3 + $0xb5] sm:$0xff]
        %v5944 = vld [vmem:[#allocation3 + $0xbd] sm:$0xff]
        %v5945 = vld [vmem:[#allocation3 + $0xc5] sm:$0xff]
        %v5946 = vld [vmem:[#allocation3 + $0xcd] sm:$0xff]
        %v5947 = vld [vmem:[#allocation3 + $0xd5] sm:$0xff]
        %v5948 = vld [vmem:[#allocation3 + $0xdd] sm:$0xff]
        %v5949 = vld [vmem:[#allocation3 + $0xe5] sm:$0xff]
        %v5950 = vld [vmem:[#allocation3 + $0xed] sm:$0xff]
        %v5951 = vld [vmem:[#allocation3 + $0xf5] sm:$0xff]
        %v5952 = vld [vmem:[#allocation3 + $0xfd] sm:$0xff]
        %v5953 = vld [vmem:[#allocation3 + $0x105] sm:$0xff]
        %v5954 = vld [vmem:[#allocation3 + $0x10d] sm:$0xff]
        %v5955 = vld [vmem:[#allocation3 + $0x115] sm:$0xff]
        %v5956 = vld [vmem:[#allocation3 + $0x11d] sm:$0xff]
        %v5957 = vld [vmem:[#allocation3 + $0xf] sm:$0xff]
        %v5958 = vld [vmem:[#allocation3 + $0x17] sm:$0xff]
        %v5959 = vld [vmem:[#allocation3 + $0x1f] sm:$0xff]
        %v5960 = vld [vmem:[#allocation3 + $0x27] sm:$0xff]
        %v5961 = vld [vmem:[#allocation3 + $0x2f] sm:$0xff]
        %v5962 = vld [vmem:[#allocation3 + $0x37] sm:$0xff]
        %v5963 = vld [vmem:[#allocation3 + $0x3f] sm:$0xff]
        %v5964 = vld [vmem:[#allocation3 + $0x47] sm:$0xff]
        %v5965 = vld [vmem:[#allocation3 + $0x4f] sm:$0xff]
        %v5966 = vld [vmem:[#allocation3 + $0x57] sm:$0xff]
        %v5967 = vld [vmem:[#allocation3 + $0x5f] sm:$0xff]
        %v5968 = vld [vmem:[#allocation3 + $0x67] sm:$0xff]
        %v5969 = vld [vmem:[#allocation3 + $0x6f] sm:$0xff]
        %v5970 = vld [vmem:[#allocation3 + $0x77] sm:$0xff]
        %v5971 = vld [vmem:[#allocation3 + $0x7f] sm:$0xff]
        %v5972 = vld [vmem:[#allocation3 + $0x87] sm:$0xff]
        %v5973 = vld [vmem:[#allocation3 + $0x8f] sm:$0xff]
        %v5974 = vld [vmem:[#allocation3 + $0x97] sm:$0xff]
        %v5975 = vld [vmem:[#allocation3 + $0x9f] sm:$0xff]
        %v5976 = vld [vmem:[#allocation3 + $0xa7] sm:$0xff]
        %v5977 = vld [vmem:[#allocation3 + $0xaf] sm:$0xff]
        %v5978 = vld [vmem:[#allocation3 + $0xb7] sm:$0xff]
        %v5979 = vld [vmem:[#allocation3 + $0xbf] sm:$0xff]
        %v5980 = vld [vmem:[#allocation3 + $0xc7] sm:$0xff]
        %v5981 = vld [vmem:[#allocation3 + $0xcf] sm:$0xff]
        %v5982 = vld [vmem:[#allocation3 + $0xd7] sm:$0xff]
        %v5983 = vld [vmem:[#allocation3 + $0xdf] sm:$0xff]
        %v5984 = vld [vmem:[#allocation3 + $0xe7] sm:$0xff]
        %v5985 = vld [vmem:[#allocation3 + $0xef] sm:$0xff]
        %v5986 = vld [vmem:[#allocation3 + $0xf7] sm:$0xff]
        %v5987 = vld [vmem:[#allocation3 + $0xff] sm:$0xff]
        %v5988 = vld [vmem:[#allocation3 + $0x107] sm:$0xff]
        %v5989 = vld [vmem:[#allocation3 + $0x10f] sm:$0xff]
        %v5990 = vld [vmem:[#allocation3 + $0x117] sm:$0xff]
        %v5991 = vld [vmem:[#allocation3 + $0x11f] sm:$0xff]
        %v5992 = vld [vmem:[#allocation3 + $0x127] sm:$0xff]
        %v5993 = vld [vmem:[#allocation3 + $0x10] sm:$0xff]
        %v5994 = vld [vmem:[#allocation3 + $0x18] sm:$0xff]
        %v5995 = vld [vmem:[#allocation3 + $0x20] sm:$0xff]
        %v5996 = vld [vmem:[#allocation3 + $0x28] sm:$0xff]
        %v5997 = vld [vmem:[#allocation3 + $0x30] sm:$0xff]
        %v5998 = vld [vmem:[#allocation3 + $0x38] sm:$0xff]
        %v5999 = vld [vmem:[#allocation3 + $0x40] sm:$0xff]
        %v6000 = vld [vmem:[#allocation3 + $0x48] sm:$0xff]
        %v6001 = vld [vmem:[#allocation3 + $0x50] sm:$0xff]
        %v6002 = vld [vmem:[#allocation3 + $0x58] sm:$0xff]
        %v6003 = vld [vmem:[#allocation3 + $0x60] sm:$0xff]
        %v6004 = vld [vmem:[#allocation3 + $0x68] sm:$0xff]
        %v6005 = vld [vmem:[#allocation3 + $0x70] sm:$0xff]
        %v6006 = vld [vmem:[#allocation3 + $0x78] sm:$0xff]
        %v6007 = vld [vmem:[#allocation3 + $0x80] sm:$0xff]
        %v6008 = vld [vmem:[#allocation3 + $0x88] sm:$0xff]
        %v6009 = vld [vmem:[#allocation3 + $0x90] sm:$0xff]
        %v6010 = vld [vmem:[#allocation3 + $0x98] sm:$0xff]
        %v6011 = vld [vmem:[#allocation3 + $0xa0] sm:$0xff]
        %v6012 = vld [vmem:[#allocation3 + $0xa8] sm:$0xff]
        %v6013 = vld [vmem:[#allocation3 + $0xb0] sm:$0xff]
        %v6014 = vld [vmem:[#allocation3 + $0xb8] sm:$0xff]
        %v6015 = vld [vmem:[#allocation3 + $0xc0] sm:$0xff]
        %v6016 = vld [vmem:[#allocation3 + $0xc8] sm:$0xff]
        %v6017 = vld [vmem:[#allocation3 + $0xd0] sm:$0xff]
        %v6018 = vld [vmem:[#allocation3 + $0xd8] sm:$0xff]
        %v6019 = vld [vmem:[#allocation3 + $0xe0] sm:$0xff]
        %v6020 = vld [vmem:[#allocation3 + $0xe8] sm:$0xff]
        %v6021 = vld [vmem:[#allocation3 + $0xf0] sm:$0xff]
        %v6022 = vld [vmem:[#allocation3 + $0xf8] sm:$0xff]
        %v6023 = vld [vmem:[#allocation3 + $0x100] sm:$0xff]
        %v6024 = vld [vmem:[#allocation3 + $0x108] sm:$0xff]
        %v6025 = vld [vmem:[#allocation3 + $0x110] sm:$0xff]
        %v6026 = vld [vmem:[#allocation3 + $0x118] sm:$0xff]
        %v6027 = vld [vmem:[#allocation3 + $0x120] sm:$0xff]
        %v6028 = vld [vmem:[#allocation3 + $0x128] sm:$0xff]
        %v6029 = vld [vmem:[#allocation3 + $0x11] sm:$0xff]
        %v6030 = vld [vmem:[#allocation3 + $0x19] sm:$0xff]
        %v6031 = vld [vmem:[#allocation3 + $0x21] sm:$0xff]
        %v6032 = vld [vmem:[#allocation3 + $0x29] sm:$0xff]
        %v6033 = vld [vmem:[#allocation3 + $0x31] sm:$0xff]
        %v6034 = vld [vmem:[#allocation3 + $0x39] sm:$0xff]
        %v6035 = vld [vmem:[#allocation3 + $0x41] sm:$0xff]
        %v6036 = vld [vmem:[#allocation3 + $0x49] sm:$0xff]
        %v6037 = vld [vmem:[#allocation3 + $0x51] sm:$0xff]
        %v6038 = vld [vmem:[#allocation3 + $0x59] sm:$0xff]
        %v6039 = vld [vmem:[#allocation3 + $0x61] sm:$0xff]
        %v6040 = vld [vmem:[#allocation3 + $0x69] sm:$0xff]
        %v6041 = vld [vmem:[#allocation3 + $0x71] sm:$0xff]
        %v6042 = vld [vmem:[#allocation3 + $0x79] sm:$0xff]
        %v6043 = vld [vmem:[#allocation3 + $0x81] sm:$0xff]
        %v6044 = vld [vmem:[#allocation3 + $0x89] sm:$0xff]
        %v6045 = vld [vmem:[#allocation3 + $0x91] sm:$0xff]
        %v6046 = vld [vmem:[#allocation3 + $0x99] sm:$0xff]
        %v6047 = vld [vmem:[#allocation3 + $0xa1] sm:$0xff]
        %v6048 = vld [vmem:[#allocation3 + $0xa9] sm:$0xff]
        %v6049 = vld [vmem:[#allocation3 + $0xb1] sm:$0xff]
        %v6050 = vld [vmem:[#allocation3 + $0xb9] sm:$0xff]
        %v6051 = vld [vmem:[#allocation3 + $0xc1] sm:$0xff]
        %v6052 = vld [vmem:[#allocation3 + $0xc9] sm:$0xff]
        %v6053 = vld [vmem:[#allocation3 + $0xd1] sm:$0xff]
        %v6054 = vld [vmem:[#allocation3 + $0xd9] sm:$0xff]
        %v6055 = vld [vmem:[#allocation3 + $0xe1] sm:$0xff]
        %v6056 = vld [vmem:[#allocation3 + $0xe9] sm:$0xff]
        %v6057 = vld [vmem:[#allocation3 + $0xf1] sm:$0xff]
        %v6058 = vld [vmem:[#allocation3 + $0xf9] sm:$0xff]
        %v6059 = vld [vmem:[#allocation3 + $0x101] sm:$0xff]
        %v6060 = vld [vmem:[#allocation3 + $0x109] sm:$0xff]
        %v6061 = vld [vmem:[#allocation3 + $0x111] sm:$0xff]
        %v6062 = vld [vmem:[#allocation3 + $0x119] sm:$0xff]
        %v6063 = vld [vmem:[#allocation3 + $0x121] sm:$0xff]
        %v6064 = vld [vmem:[#allocation3 + $0x129] sm:$0xff]
        %v6065 = vld [vmem:[#allocation3 + $0x123] sm:$0xff]
        %v6066 = vld [vmem:[#allocation3 + $0x12b] sm:$0xff]
        %v6067 = vld [vmem:[#allocation3 + $0x133] sm:$0xff]
        %v6068 = vld [vmem:[#allocation3 + $0x124] sm:$0xff]
        %v6069 = vld [vmem:[#allocation3 + $0x12c] sm:$0xff]
        %v6070 = vld [vmem:[#allocation3 + $0x134] sm:$0xff]
        %v6071 = vld [vmem:[#allocation3 + $0x125] sm:$0xff]
        %v6072 = vld [vmem:[#allocation3 + $0x12d] sm:$0xff]
        %v6073 = vld [vmem:[#allocation3 + $0x135] sm:$0xff]
        %6110 = vrot.lane.b32.xlu0 %v5885, 32
        %v6111 = vpop.permute.xlu0 %6110
        %6112 = vrot.lane.b32.xlu0 %v5886, 32
        %v6113 = vpop.permute.xlu0 %6112
        %6114 = vrot.lane.b32.xlu0 %v5887, 32
        %v6115 = vpop.permute.xlu0 %6114
        %6116 = vrot.lane.b32.xlu0 %v5888, 32
        %v6117 = vpop.permute.xlu0 %6116
        %6118 = vrot.lane.b32.xlu0 %v5889, 32
        %v6119 = vpop.permute.xlu0 %6118
        %6120 = vrot.lane.b32.xlu0 %v5890, 32
        %v6121 = vpop.permute.xlu0 %6120
        %6122 = vrot.lane.b32.xlu0 %v5891, 32
        %v6123 = vpop.permute.xlu0 %6122
        %6124 = vrot.lane.b32.xlu0 %v5892, 32
        %v6125 = vpop.permute.xlu0 %6124
        %6126 = vrot.lane.b32.xlu0 %v5893, 32
        %v6127 = vpop.permute.xlu0 %6126
        %6128 = vrot.lane.b32.xlu0 %v5894, 32
        %v6129 = vpop.permute.xlu0 %6128
        %6130 = vrot.lane.b32.xlu0 %v5895, 32
        %v6131 = vpop.permute.xlu0 %6130
        %6132 = vrot.lane.b32.xlu0 %v5896, 32
        %v6133 = vpop.permute.xlu0 %6132
        %6134 = vrot.lane.b32.xlu0 %v5897, 32
        %v6135 = vpop.permute.xlu0 %6134
        %6136 = vrot.lane.b32.xlu0 %v5898, 32
        %v6137 = vpop.permute.xlu0 %6136
        %6138 = vrot.lane.b32.xlu0 %v5899, 32
        %v6139 = vpop.permute.xlu0 %6138
        %6140 = vrot.lane.b32.xlu0 %v5900, 32
        %v6141 = vpop.permute.xlu0 %6140
        %6142 = vrot.lane.b32.xlu0 %v5901, 32
        %v6143 = vpop.permute.xlu0 %6142
        %6144 = vrot.lane.b32.xlu0 %v5902, 32
        %v6145 = vpop.permute.xlu0 %6144
        %6146 = vrot.lane.b32.xlu0 %v5903, 32
        %v6147 = vpop.permute.xlu0 %6146
        %6148 = vrot.lane.b32.xlu0 %v5904, 32
        %v6149 = vpop.permute.xlu0 %6148
        %6150 = vrot.lane.b32.xlu0 %v5905, 32
        %v6151 = vpop.permute.xlu0 %6150
        %6152 = vrot.lane.b32.xlu0 %v5906, 32
        %v6153 = vpop.permute.xlu0 %6152
        %6154 = vrot.lane.b32.xlu0 %v5907, 32
        %v6155 = vpop.permute.xlu0 %6154
        %6156 = vrot.lane.b32.xlu0 %v5908, 32
        %v6157 = vpop.permute.xlu0 %6156
        %6158 = vrot.lane.b32.xlu0 %v5909, 32
        %v6159 = vpop.permute.xlu0 %6158
        %6160 = vrot.lane.b32.xlu0 %v5910, 32
        %v6161 = vpop.permute.xlu0 %6160
        %6162 = vrot.lane.b32.xlu0 %v5911, 32
        %v6163 = vpop.permute.xlu0 %6162
        %6164 = vrot.lane.b32.xlu0 %v5912, 32
        %v6165 = vpop.permute.xlu0 %6164
        %6166 = vrot.lane.b32.xlu0 %v5913, 32
        %v6167 = vpop.permute.xlu0 %6166
        %6168 = vrot.lane.b32.xlu0 %v5914, 32
        %v6169 = vpop.permute.xlu0 %6168
        %6170 = vrot.lane.b32.xlu0 %v5915, 32
        %v6171 = vpop.permute.xlu0 %6170
        %6172 = vrot.lane.b32.xlu0 %v5916, 32
        %v6173 = vpop.permute.xlu0 %6172
        %6174 = vrot.lane.b32.xlu0 %v5917, 32
        %v6175 = vpop.permute.xlu0 %6174
        %6176 = vrot.lane.b32.xlu0 %v5918, 32
        %v6177 = vpop.permute.xlu0 %6176
        %6178 = vrot.lane.b32.xlu0 %v5919, 32
        %v6179 = vpop.permute.xlu0 %6178
        %6180 = vrot.lane.b32.xlu0 %v5920, 32
        %v6181 = vpop.permute.xlu0 %6180
        %6254 = vrot.lane.b32.xlu0 %v5921, 64
        %v6255 = vpop.permute.xlu0 %6254
        %6256 = vrot.lane.b32.xlu0 %v5922, 64
        %v6257 = vpop.permute.xlu0 %6256
        %6258 = vrot.lane.b32.xlu0 %v5923, 64
        %v6259 = vpop.permute.xlu0 %6258
        %6260 = vrot.lane.b32.xlu0 %v5924, 64
        %v6261 = vpop.permute.xlu0 %6260
        %6262 = vrot.lane.b32.xlu0 %v5925, 64
        %v6263 = vpop.permute.xlu0 %6262
        %6264 = vrot.lane.b32.xlu0 %v5926, 64
        %v6265 = vpop.permute.xlu0 %6264
        %6266 = vrot.lane.b32.xlu0 %v5927, 64
        %v6267 = vpop.permute.xlu0 %6266
        %6268 = vrot.lane.b32.xlu0 %v5928, 64
        %v6269 = vpop.permute.xlu0 %6268
        %6270 = vrot.lane.b32.xlu0 %v5929, 64
        %v6271 = vpop.permute.xlu0 %6270
        %6272 = vrot.lane.b32.xlu0 %v5930, 64
        %v6273 = vpop.permute.xlu0 %6272
        %6274 = vrot.lane.b32.xlu0 %v5931, 64
        %v6275 = vpop.permute.xlu0 %6274
        %6276 = vrot.lane.b32.xlu0 %v5932, 64
        %v6277 = vpop.permute.xlu0 %6276
        %6278 = vrot.lane.b32.xlu0 %v5933, 64
        %v6279 = vpop.permute.xlu0 %6278
        %6280 = vrot.lane.b32.xlu0 %v5934, 64
        %v6281 = vpop.permute.xlu0 %6280
        %6282 = vrot.lane.b32.xlu0 %v5935, 64
        %v6283 = vpop.permute.xlu0 %6282
        %6284 = vrot.lane.b32.xlu0 %v5936, 64
        %v6285 = vpop.permute.xlu0 %6284
        %6286 = vrot.lane.b32.xlu0 %v5937, 64
        %v6287 = vpop.permute.xlu0 %6286
        %6288 = vrot.lane.b32.xlu0 %v5938, 64
        %v6289 = vpop.permute.xlu0 %6288
        %6290 = vrot.lane.b32.xlu0 %v5939, 64
        %v6291 = vpop.permute.xlu0 %6290
        %6292 = vrot.lane.b32.xlu0 %v5940, 64
        %v6293 = vpop.permute.xlu0 %6292
        %6294 = vrot.lane.b32.xlu0 %v5941, 64
        %v6295 = vpop.permute.xlu0 %6294
        %6296 = vrot.lane.b32.xlu0 %v5942, 64
        %v6297 = vpop.permute.xlu0 %6296
        %6298 = vrot.lane.b32.xlu0 %v5943, 64
        %v6299 = vpop.permute.xlu0 %6298
        %6300 = vrot.lane.b32.xlu0 %v5944, 64
        %v6301 = vpop.permute.xlu0 %6300
        %6302 = vrot.lane.b32.xlu0 %v5945, 64
        %v6303 = vpop.permute.xlu0 %6302
        %6304 = vrot.lane.b32.xlu0 %v5946, 64
        %v6305 = vpop.permute.xlu0 %6304
        %6306 = vrot.lane.b32.xlu0 %v5947, 64
        %v6307 = vpop.permute.xlu0 %6306
        %6308 = vrot.lane.b32.xlu0 %v5948, 64
        %v6309 = vpop.permute.xlu0 %6308
        %6310 = vrot.lane.b32.xlu0 %v5949, 64
        %v6311 = vpop.permute.xlu0 %6310
        %6312 = vrot.lane.b32.xlu0 %v5950, 64
        %v6313 = vpop.permute.xlu0 %6312
        %6314 = vrot.lane.b32.xlu0 %v5951, 64
        %v6315 = vpop.permute.xlu0 %6314
        %6316 = vrot.lane.b32.xlu0 %v5952, 64
        %v6317 = vpop.permute.xlu0 %6316
        %6318 = vrot.lane.b32.xlu0 %v5953, 64
        %v6319 = vpop.permute.xlu0 %6318
        %6320 = vrot.lane.b32.xlu0 %v5954, 64
        %v6321 = vpop.permute.xlu0 %6320
        %6322 = vrot.lane.b32.xlu0 %v5955, 64
        %v6323 = vpop.permute.xlu0 %6322
        %6324 = vrot.lane.b32.xlu0 %v5956, 64
        %v6325 = vpop.permute.xlu0 %6324
        %6398 = vrot.lane.b32.xlu0 %v5957, 96
        %v6399 = vpop.permute.xlu0 %6398
        %6400 = vrot.lane.b32.xlu0 %v5958, 96
        %v6401 = vpop.permute.xlu0 %6400
        %6402 = vrot.lane.b32.xlu0 %v5959, 96
        %v6403 = vpop.permute.xlu0 %6402
        %6404 = vrot.lane.b32.xlu0 %v5960, 96
        %v6405 = vpop.permute.xlu0 %6404
        %6406 = vrot.lane.b32.xlu0 %v5961, 96
        %v6407 = vpop.permute.xlu0 %6406
        %6408 = vrot.lane.b32.xlu0 %v5962, 96
        %v6409 = vpop.permute.xlu0 %6408
        %6410 = vrot.lane.b32.xlu0 %v5963, 96
        %v6411 = vpop.permute.xlu0 %6410
        %6412 = vrot.lane.b32.xlu0 %v5964, 96
        %v6413 = vpop.permute.xlu0 %6412
        %6414 = vrot.lane.b32.xlu0 %v5965, 96
        %v6415 = vpop.permute.xlu0 %6414
        %6416 = vrot.lane.b32.xlu0 %v5966, 96
        %v6417 = vpop.permute.xlu0 %6416
        %6418 = vrot.lane.b32.xlu0 %v5967, 96
        %v6419 = vpop.permute.xlu0 %6418
        %6420 = vrot.lane.b32.xlu0 %v5968, 96
        %v6421 = vpop.permute.xlu0 %6420
        %6422 = vrot.lane.b32.xlu0 %v5969, 96
        %v6423 = vpop.permute.xlu0 %6422
        %6424 = vrot.lane.b32.xlu0 %v5970, 96
        %v6425 = vpop.permute.xlu0 %6424
        %6426 = vrot.lane.b32.xlu0 %v5971, 96
        %v6427 = vpop.permute.xlu0 %6426
        %6428 = vrot.lane.b32.xlu0 %v5972, 96
        %v6429 = vpop.permute.xlu0 %6428
        %6430 = vrot.lane.b32.xlu0 %v5973, 96
        %v6431 = vpop.permute.xlu0 %6430
        %6432 = vrot.lane.b32.xlu0 %v5974, 96
        %v6433 = vpop.permute.xlu0 %6432
        %6434 = vrot.lane.b32.xlu0 %v5975, 96
        %v6435 = vpop.permute.xlu0 %6434
        %6436 = vrot.lane.b32.xlu0 %v5976, 96
        %v6437 = vpop.permute.xlu0 %6436
        %6438 = vrot.lane.b32.xlu0 %v5977, 96
        %v6439 = vpop.permute.xlu0 %6438
        %6440 = vrot.lane.b32.xlu0 %v5978, 96
        %v6441 = vpop.permute.xlu0 %6440
        %6442 = vrot.lane.b32.xlu0 %v5979, 96
        %v6443 = vpop.permute.xlu0 %6442
        %6444 = vrot.lane.b32.xlu0 %v5980, 96
        %v6445 = vpop.permute.xlu0 %6444
        %6446 = vrot.lane.b32.xlu0 %v5981, 96
        %v6447 = vpop.permute.xlu0 %6446
        %6448 = vrot.lane.b32.xlu0 %v5982, 96
        %v6449 = vpop.permute.xlu0 %6448
        %6450 = vrot.lane.b32.xlu0 %v5983, 96
        %v6451 = vpop.permute.xlu0 %6450
        %6452 = vrot.lane.b32.xlu0 %v5984, 96
        %v6453 = vpop.permute.xlu0 %6452
        %6454 = vrot.lane.b32.xlu0 %v5985, 96
        %v6455 = vpop.permute.xlu0 %6454
        %6456 = vrot.lane.b32.xlu0 %v5986, 96
        %v6457 = vpop.permute.xlu0 %6456
        %6458 = vrot.lane.b32.xlu0 %v5987, 96
        %v6459 = vpop.permute.xlu0 %6458
        %6460 = vrot.lane.b32.xlu0 %v5988, 96
        %v6461 = vpop.permute.xlu0 %6460
        %6462 = vrot.lane.b32.xlu0 %v5989, 96
        %v6463 = vpop.permute.xlu0 %6462
        %6464 = vrot.lane.b32.xlu0 %v5990, 96
        %v6465 = vpop.permute.xlu0 %6464
        %6466 = vrot.lane.b32.xlu0 %v5991, 96
        %v6467 = vpop.permute.xlu0 %6466
        %6468 = vrot.lane.b32.xlu0 %v5992, 96
        %v6469 = vpop.permute.xlu0 %6468
        %6542 = vrot.lane.b32.xlu0 %v6029, 32
        %v6543 = vpop.permute.xlu0 %6542
        %6544 = vrot.lane.b32.xlu0 %v6030, 32
        %v6545 = vpop.permute.xlu0 %6544
        %6546 = vrot.lane.b32.xlu0 %v6031, 32
        %v6547 = vpop.permute.xlu0 %6546
        %6548 = vrot.lane.b32.xlu0 %v6032, 32
        %v6549 = vpop.permute.xlu0 %6548
        %6550 = vrot.lane.b32.xlu0 %v6033, 32
        %v6551 = vpop.permute.xlu0 %6550
        %6552 = vrot.lane.b32.xlu0 %v6034, 32
        %v6553 = vpop.permute.xlu0 %6552
        %6554 = vrot.lane.b32.xlu0 %v6035, 32
        %v6555 = vpop.permute.xlu0 %6554
        %6556 = vrot.lane.b32.xlu0 %v6036, 32
        %v6557 = vpop.permute.xlu0 %6556
        %6558 = vrot.lane.b32.xlu0 %v6037, 32
        %v6559 = vpop.permute.xlu0 %6558
        %6560 = vrot.lane.b32.xlu0 %v6038, 32
        %v6561 = vpop.permute.xlu0 %6560
        %6562 = vrot.lane.b32.xlu0 %v6039, 32
        %v6563 = vpop.permute.xlu0 %6562
        %6564 = vrot.lane.b32.xlu0 %v6040, 32
        %v6565 = vpop.permute.xlu0 %6564
        %6566 = vrot.lane.b32.xlu0 %v6041, 32
        %v6567 = vpop.permute.xlu0 %6566
        %6568 = vrot.lane.b32.xlu0 %v6042, 32
        %v6569 = vpop.permute.xlu0 %6568
        %6570 = vrot.lane.b32.xlu0 %v6043, 32
        %v6571 = vpop.permute.xlu0 %6570
        %6572 = vrot.lane.b32.xlu0 %v6044, 32
        %v6573 = vpop.permute.xlu0 %6572
        %6574 = vrot.lane.b32.xlu0 %v6045, 32
        %v6575 = vpop.permute.xlu0 %6574
        %6576 = vrot.lane.b32.xlu0 %v6046, 32
        %v6577 = vpop.permute.xlu0 %6576
        %6578 = vrot.lane.b32.xlu0 %v6047, 32
        %v6579 = vpop.permute.xlu0 %6578
        %6580 = vrot.lane.b32.xlu0 %v6048, 32
        %v6581 = vpop.permute.xlu0 %6580
        %6582 = vrot.lane.b32.xlu0 %v6049, 32
        %v6583 = vpop.permute.xlu0 %6582
        %6584 = vrot.lane.b32.xlu0 %v6050, 32
        %v6585 = vpop.permute.xlu0 %6584
        %6586 = vrot.lane.b32.xlu0 %v6051, 32
        %v6587 = vpop.permute.xlu0 %6586
        %6588 = vrot.lane.b32.xlu0 %v6052, 32
        %v6589 = vpop.permute.xlu0 %6588
        %6590 = vrot.lane.b32.xlu0 %v6053, 32
        %v6591 = vpop.permute.xlu0 %6590
        %6592 = vrot.lane.b32.xlu0 %v6054, 32
        %v6593 = vpop.permute.xlu0 %6592
        %6594 = vrot.lane.b32.xlu0 %v6055, 32
        %v6595 = vpop.permute.xlu0 %6594
        %6596 = vrot.lane.b32.xlu0 %v6056, 32
        %v6597 = vpop.permute.xlu0 %6596
        %6598 = vrot.lane.b32.xlu0 %v6057, 32
        %v6599 = vpop.permute.xlu0 %6598
        %6600 = vrot.lane.b32.xlu0 %v6058, 32
        %v6601 = vpop.permute.xlu0 %6600
        %6602 = vrot.lane.b32.xlu0 %v6059, 32
        %v6603 = vpop.permute.xlu0 %6602
        %6604 = vrot.lane.b32.xlu0 %v6060, 32
        %v6605 = vpop.permute.xlu0 %6604
        %6606 = vrot.lane.b32.xlu0 %v6061, 32
        %v6607 = vpop.permute.xlu0 %6606
        %6608 = vrot.lane.b32.xlu0 %v6062, 32
        %v6609 = vpop.permute.xlu0 %6608
        %6610 = vrot.lane.b32.xlu0 %v6063, 32
        %v6611 = vpop.permute.xlu0 %6610
        %6612 = vrot.lane.b32.xlu0 %v6064, 32
        %v6613 = vpop.permute.xlu0 %6612
        %6686 = vrot.lane.b32.xlu0 %v5852, 64
        %v6687 = vpop.permute.xlu0 %6686
        %6688 = vrot.lane.b32.xlu0 %v5853, 64
        %v6689 = vpop.permute.xlu0 %6688
        %6690 = vrot.lane.b32.xlu0 %v5854, 64
        %v6691 = vpop.permute.xlu0 %6690
        %6692 = vrot.lane.b32.xlu0 %v5855, 64
        %v6693 = vpop.permute.xlu0 %6692
        %6694 = vrot.lane.b32.xlu0 %v5856, 64
        %v6695 = vpop.permute.xlu0 %6694
        %6696 = vrot.lane.b32.xlu0 %v5857, 64
        %v6697 = vpop.permute.xlu0 %6696
        %6698 = vrot.lane.b32.xlu0 %v5858, 64
        %v6699 = vpop.permute.xlu0 %6698
        %6700 = vrot.lane.b32.xlu0 %v5859, 64
        %v6701 = vpop.permute.xlu0 %6700
        %6702 = vrot.lane.b32.xlu0 %v5860, 64
        %v6703 = vpop.permute.xlu0 %6702
        %6704 = vrot.lane.b32.xlu0 %v5861, 64
        %v6705 = vpop.permute.xlu0 %6704
        %6706 = vrot.lane.b32.xlu0 %v5862, 64
        %v6707 = vpop.permute.xlu0 %6706
        %6708 = vrot.lane.b32.xlu0 %v5863, 64
        %v6709 = vpop.permute.xlu0 %6708
        %6710 = vrot.lane.b32.xlu0 %v5864, 64
        %v6711 = vpop.permute.xlu0 %6710
        %6712 = vrot.lane.b32.xlu0 %v5865, 64
        %v6713 = vpop.permute.xlu0 %6712
        %6714 = vrot.lane.b32.xlu0 %v5866, 64
        %v6715 = vpop.permute.xlu0 %6714
        %6716 = vrot.lane.b32.xlu0 %v5867, 64
        %v6717 = vpop.permute.xlu0 %6716
        %6718 = vrot.lane.b32.xlu0 %v5868, 64
        %v6719 = vpop.permute.xlu0 %6718
        %6720 = vrot.lane.b32.xlu0 %v5869, 64
        %v6721 = vpop.permute.xlu0 %6720
        %6722 = vrot.lane.b32.xlu0 %v5870, 64
        %v6723 = vpop.permute.xlu0 %6722
        %6724 = vrot.lane.b32.xlu0 %v5871, 64
        %v6725 = vpop.permute.xlu0 %6724
        %6726 = vrot.lane.b32.xlu0 %v5872, 64
        %v6727 = vpop.permute.xlu0 %6726
        %6728 = vrot.lane.b32.xlu0 %v5873, 64
        %v6729 = vpop.permute.xlu0 %6728
        %6730 = vrot.lane.b32.xlu0 %v5874, 64
        %v6731 = vpop.permute.xlu0 %6730
        %6732 = vrot.lane.b32.xlu0 %v5875, 64
        %v6733 = vpop.permute.xlu0 %6732
        %6734 = vrot.lane.b32.xlu0 %v5876, 64
        %v6735 = vpop.permute.xlu0 %6734
        %6736 = vrot.lane.b32.xlu0 %v5877, 64
        %v6737 = vpop.permute.xlu0 %6736
        %6738 = vrot.lane.b32.xlu0 %v5878, 64
        %v6739 = vpop.permute.xlu0 %6738
        %6740 = vrot.lane.b32.xlu0 %v5879, 64
        %v6741 = vpop.permute.xlu0 %6740
        %6742 = vrot.lane.b32.xlu0 %v5880, 64
        %v6743 = vpop.permute.xlu0 %6742
        %6744 = vrot.lane.b32.xlu0 %v5881, 64
        %v6745 = vpop.permute.xlu0 %6744
        %6746 = vrot.lane.b32.xlu0 %v5882, 64
        %v6747 = vpop.permute.xlu0 %6746
        %6748 = vrot.lane.b32.xlu0 %v5883, 64
        %v6749 = vpop.permute.xlu0 %6748
        %6750 = vrot.lane.b32.xlu0 %v5884, 64
        %v6751 = vpop.permute.xlu0 %6750
        %6752 = vrot.lane.b32.xlu0 %v6065, 64
        %v6753 = vpop.permute.xlu0 %6752
        %6754 = vrot.lane.b32.xlu0 %v6066, 64
        %v6755 = vpop.permute.xlu0 %6754
        %6756 = vrot.lane.b32.xlu0 %v6067, 64
        %v6757 = vpop.permute.xlu0 %6756
        %6797 = vrot.lane.b32.xlu0 %v5888, 96
        %v6798 = vpop.permute.xlu0 %6797
        %6799 = vrot.lane.b32.xlu0 %v5889, 96
        %v6800 = vpop.permute.xlu0 %6799
        %6801 = vrot.lane.b32.xlu0 %v5890, 96
        %v6802 = vpop.permute.xlu0 %6801
        %6803 = vrot.lane.b32.xlu0 %v5891, 96
        %v6804 = vpop.permute.xlu0 %6803
        %6805 = vrot.lane.b32.xlu0 %v5892, 96
        %v6806 = vpop.permute.xlu0 %6805
        %6807 = vrot.lane.b32.xlu0 %v5893, 96
        %v6808 = vpop.permute.xlu0 %6807
        %6809 = vrot.lane.b32.xlu0 %v5894, 96
        %v6810 = vpop.permute.xlu0 %6809
        %6811 = vrot.lane.b32.xlu0 %v5895, 96
        %v6812 = vpop.permute.xlu0 %6811
        %6813 = vrot.lane.b32.xlu0 %v5896, 96
        %v6814 = vpop.permute.xlu0 %6813
        %6815 = vrot.lane.b32.xlu0 %v5897, 96
        %v6816 = vpop.permute.xlu0 %6815
        %6817 = vrot.lane.b32.xlu0 %v5898, 96
        %v6818 = vpop.permute.xlu0 %6817
        %6819 = vrot.lane.b32.xlu0 %v5899, 96
        %v6820 = vpop.permute.xlu0 %6819
        %6821 = vrot.lane.b32.xlu0 %v5900, 96
        %v6822 = vpop.permute.xlu0 %6821
        %6823 = vrot.lane.b32.xlu0 %v5901, 96
        %v6824 = vpop.permute.xlu0 %6823
        %6825 = vrot.lane.b32.xlu0 %v5902, 96
        %v6826 = vpop.permute.xlu0 %6825
        %6827 = vrot.lane.b32.xlu0 %v5903, 96
        %v6828 = vpop.permute.xlu0 %6827
        %6829 = vrot.lane.b32.xlu0 %v5904, 96
        %v6830 = vpop.permute.xlu0 %6829
        %6831 = vrot.lane.b32.xlu0 %v5905, 96
        %v6832 = vpop.permute.xlu0 %6831
        %6833 = vrot.lane.b32.xlu0 %v5906, 96
        %v6834 = vpop.permute.xlu0 %6833
        %6835 = vrot.lane.b32.xlu0 %v5907, 96
        %v6836 = vpop.permute.xlu0 %6835
        %6837 = vrot.lane.b32.xlu0 %v5908, 96
        %v6838 = vpop.permute.xlu0 %6837
        %6839 = vrot.lane.b32.xlu0 %v5909, 96
        %v6840 = vpop.permute.xlu0 %6839
        %6841 = vrot.lane.b32.xlu0 %v5910, 96
        %v6842 = vpop.permute.xlu0 %6841
        %6843 = vrot.lane.b32.xlu0 %v5911, 96
        %v6844 = vpop.permute.xlu0 %6843
        %6845 = vrot.lane.b32.xlu0 %v5912, 96
        %v6846 = vpop.permute.xlu0 %6845
        %6847 = vrot.lane.b32.xlu0 %v5913, 96
        %v6848 = vpop.permute.xlu0 %6847
        %6849 = vrot.lane.b32.xlu0 %v5914, 96
        %v6850 = vpop.permute.xlu0 %6849
        %6851 = vrot.lane.b32.xlu0 %v5915, 96
        %v6852 = vpop.permute.xlu0 %6851
        %6853 = vrot.lane.b32.xlu0 %v5916, 96
        %v6854 = vpop.permute.xlu0 %6853
        %6855 = vrot.lane.b32.xlu0 %v5917, 96
        %v6856 = vpop.permute.xlu0 %6855
        %6857 = vrot.lane.b32.xlu0 %v5918, 96
        %v6858 = vpop.permute.xlu0 %6857
        %6859 = vrot.lane.b32.xlu0 %v5919, 96
        %v6860 = vpop.permute.xlu0 %6859
        %6861 = vrot.lane.b32.xlu0 %v5920, 96
        %v6862 = vpop.permute.xlu0 %6861
        %6863 = vrot.lane.b32.xlu0 %v6068, 96
        %v6864 = vpop.permute.xlu0 %6863
        %6865 = vrot.lane.b32.xlu0 %v6069, 96
        %v6866 = vpop.permute.xlu0 %6865
        %6867 = vrot.lane.b32.xlu0 %v6070, 96
        %v6868 = vpop.permute.xlu0 %6867
        %vm6905 = vcmask 261120
        %v6906 = vsel %vm6905, %v5849, %v6111
        %v6907 = vsel %vm6905, %v5850, %v6113
        %v6908 = vsel %vm6905, %v5851, %v6115
        %v6909 = vsel %vm6905, %v5852, %v6117
        %v6910 = vsel %vm6905, %v5853, %v6119
        %v6911 = vsel %vm6905, %v5854, %v6121
        %v6912 = vsel %vm6905, %v5855, %v6123
        %v6913 = vsel %vm6905, %v5856, %v6125
        %v6914 = vsel %vm6905, %v5857, %v6127
        %v6915 = vsel %vm6905, %v5858, %v6129
        %v6916 = vsel %vm6905, %v5859, %v6131
        %v6917 = vsel %vm6905, %v5860, %v6133
        %v6918 = vsel %vm6905, %v5861, %v6135
        %v6919 = vsel %vm6905, %v5862, %v6137
        %v6920 = vsel %vm6905, %v5863, %v6139
        %v6921 = vsel %vm6905, %v5864, %v6141
        %v6922 = vsel %vm6905, %v5865, %v6143
        %v6923 = vsel %vm6905, %v5866, %v6145
        %v6924 = vsel %vm6905, %v5867, %v6147
        %v6925 = vsel %vm6905, %v5868, %v6149
        %v6926 = vsel %vm6905, %v5869, %v6151
        %v6927 = vsel %vm6905, %v5870, %v6153
        %v6928 = vsel %vm6905, %v5871, %v6155
        %v6929 = vsel %vm6905, %v5872, %v6157
        %v6930 = vsel %vm6905, %v5873, %v6159
        %v6931 = vsel %vm6905, %v5874, %v6161
        %v6932 = vsel %vm6905, %v5875, %v6163
        %v6933 = vsel %vm6905, %v5876, %v6165
        %v6934 = vsel %vm6905, %v5877, %v6167
        %v6935 = vsel %vm6905, %v5878, %v6169
        %v6936 = vsel %vm6905, %v5879, %v6171
        %v6937 = vsel %vm6905, %v5880, %v6173
        %v6938 = vsel %vm6905, %v5881, %v6175
        %v6939 = vsel %vm6905, %v5882, %v6177
        %v6940 = vsel %vm6905, %v5883, %v6179
        %v6941 = vsel %vm6905, %v5884, %v6181
        %vm6942 = vcmask 523264
        %v6943 = vsel %vm6942, %v6906, %v6255
        %v6944 = vsel %vm6942, %v6907, %v6257
        %v6945 = vsel %vm6942, %v6908, %v6259
        %v6946 = vsel %vm6942, %v6909, %v6261
        %v6947 = vsel %vm6942, %v6910, %v6263
        %v6948 = vsel %vm6942, %v6911, %v6265
        %v6949 = vsel %vm6942, %v6912, %v6267
        %v6950 = vsel %vm6942, %v6913, %v6269
        %v6951 = vsel %vm6942, %v6914, %v6271
        %v6952 = vsel %vm6942, %v6915, %v6273
        %v6953 = vsel %vm6942, %v6916, %v6275
        %v6954 = vsel %vm6942, %v6917, %v6277
        %v6955 = vsel %vm6942, %v6918, %v6279
        %v6956 = vsel %vm6942, %v6919, %v6281
        %v6957 = vsel %vm6942, %v6920, %v6283
        %v6958 = vsel %vm6942, %v6921, %v6285
        %v6959 = vsel %vm6942, %v6922, %v6287
        %v6960 = vsel %vm6942, %v6923, %v6289
        %v6961 = vsel %vm6942, %v6924, %v6291
        %v6962 = vsel %vm6942, %v6925, %v6293
        %v6963 = vsel %vm6942, %v6926, %v6295
        %v6964 = vsel %vm6942, %v6927, %v6297
        %v6965 = vsel %vm6942, %v6928, %v6299
        %v6966 = vsel %vm6942, %v6929, %v6301
        %v6967 = vsel %vm6942, %v6930, %v6303
        %v6968 = vsel %vm6942, %v6931, %v6305
        %v6969 = vsel %vm6942, %v6932, %v6307
        %v6970 = vsel %vm6942, %v6933, %v6309
        %v6971 = vsel %vm6942, %v6934, %v6311
        %v6972 = vsel %vm6942, %v6935, %v6313
        %v6973 = vsel %vm6942, %v6936, %v6315
        %v6974 = vsel %vm6942, %v6937, %v6317
        %v6975 = vsel %vm6942, %v6938, %v6319
        %v6976 = vsel %vm6942, %v6939, %v6321
        %v6977 = vsel %vm6942, %v6940, %v6323
        %v6978 = vsel %vm6942, %v6941, %v6325
        %vm6979 = vcmask 785408
        %v6980 = vsel %vm6979, %v6943, %v6399
        %v6981 = vsel %vm6979, %v6944, %v6401
        %v6982 = vsel %vm6979, %v6945, %v6403
        %v6983 = vsel %vm6979, %v6946, %v6405
        %v6984 = vsel %vm6979, %v6947, %v6407
        %v6985 = vsel %vm6979, %v6948, %v6409
        %v6986 = vsel %vm6979, %v6949, %v6411
        %v6987 = vsel %vm6979, %v6950, %v6413
        %v6988 = vsel %vm6979, %v6951, %v6415
        %v6989 = vsel %vm6979, %v6952, %v6417
        %v6990 = vsel %vm6979, %v6953, %v6419
        %v6991 = vsel %vm6979, %v6954, %v6421
        %v6992 = vsel %vm6979, %v6955, %v6423
        %v6993 = vsel %vm6979, %v6956, %v6425
        %v6994 = vsel %vm6979, %v6957, %v6427
        %v6995 = vsel %vm6979, %v6958, %v6429
        %v6996 = vsel %vm6979, %v6959, %v6431
        %v6997 = vsel %vm6979, %v6960, %v6433
        %v6998 = vsel %vm6979, %v6961, %v6435
        %v6999 = vsel %vm6979, %v6962, %v6437
        %v7000 = vsel %vm6979, %v6963, %v6439
        %v7001 = vsel %vm6979, %v6964, %v6441
        %v7002 = vsel %vm6979, %v6965, %v6443
        %v7003 = vsel %vm6979, %v6966, %v6445
        %v7004 = vsel %vm6979, %v6967, %v6447
        %v7005 = vsel %vm6979, %v6968, %v6449
        %v7006 = vsel %vm6979, %v6969, %v6451
        %v7007 = vsel %vm6979, %v6970, %v6453
        %v7008 = vsel %vm6979, %v6971, %v6455
        %v7009 = vsel %vm6979, %v6972, %v6457
        %v7010 = vsel %vm6979, %v6973, %v6459
        %v7011 = vsel %vm6979, %v6974, %v6461
        %v7012 = vsel %vm6979, %v6975, %v6463
        %v7013 = vsel %vm6979, %v6976, %v6465
        %v7014 = vsel %vm6979, %v6977, %v6467
        %v7015 = vsel %vm6979, %v6978, %v6469
        %v7016 = vsel %vm6905, %v5993, %v6543
        %v7017 = vsel %vm6905, %v5994, %v6545
        %v7018 = vsel %vm6905, %v5995, %v6547
        %v7019 = vsel %vm6905, %v5996, %v6549
        %v7020 = vsel %vm6905, %v5997, %v6551
        %v7021 = vsel %vm6905, %v5998, %v6553
        %v7022 = vsel %vm6905, %v5999, %v6555
        %v7023 = vsel %vm6905, %v6000, %v6557
        %v7024 = vsel %vm6905, %v6001, %v6559
        %v7025 = vsel %vm6905, %v6002, %v6561
        %v7026 = vsel %vm6905, %v6003, %v6563
        %v7027 = vsel %vm6905, %v6004, %v6565
        %v7028 = vsel %vm6905, %v6005, %v6567
        %v7029 = vsel %vm6905, %v6006, %v6569
        %v7030 = vsel %vm6905, %v6007, %v6571
        %v7031 = vsel %vm6905, %v6008, %v6573
        %v7032 = vsel %vm6905, %v6009, %v6575
        %v7033 = vsel %vm6905, %v6010, %v6577
        %v7034 = vsel %vm6905, %v6011, %v6579
        %v7035 = vsel %vm6905, %v6012, %v6581
        %v7036 = vsel %vm6905, %v6013, %v6583
        %v7037 = vsel %vm6905, %v6014, %v6585
        %v7038 = vsel %vm6905, %v6015, %v6587
        %v7039 = vsel %vm6905, %v6016, %v6589
        %v7040 = vsel %vm6905, %v6017, %v6591
        %v7041 = vsel %vm6905, %v6018, %v6593
        %v7042 = vsel %vm6905, %v6019, %v6595
        %v7043 = vsel %vm6905, %v6020, %v6597
        %v7044 = vsel %vm6905, %v6021, %v6599
        %v7045 = vsel %vm6905, %v6022, %v6601
        %v7046 = vsel %vm6905, %v6023, %v6603
        %v7047 = vsel %vm6905, %v6024, %v6605
        %v7048 = vsel %vm6905, %v6025, %v6607
        %v7049 = vsel %vm6905, %v6026, %v6609
        %v7050 = vsel %vm6905, %v6027, %v6611
        %v7051 = vsel %vm6905, %v6028, %v6613
        %v7052 = vsel %vm6942, %v7016, %v6687
        %v7053 = vsel %vm6942, %v7017, %v6689
        %v7054 = vsel %vm6942, %v7018, %v6691
        %v7055 = vsel %vm6942, %v7019, %v6693
        %v7056 = vsel %vm6942, %v7020, %v6695
        %v7057 = vsel %vm6942, %v7021, %v6697
        %v7058 = vsel %vm6942, %v7022, %v6699
        %v7059 = vsel %vm6942, %v7023, %v6701
        %v7060 = vsel %vm6942, %v7024, %v6703
        %v7061 = vsel %vm6942, %v7025, %v6705
        %v7062 = vsel %vm6942, %v7026, %v6707
        %v7063 = vsel %vm6942, %v7027, %v6709
        %v7064 = vsel %vm6942, %v7028, %v6711
        %v7065 = vsel %vm6942, %v7029, %v6713
        %v7066 = vsel %vm6942, %v7030, %v6715
        %v7067 = vsel %vm6942, %v7031, %v6717
        %v7068 = vsel %vm6942, %v7032, %v6719
        %v7069 = vsel %vm6942, %v7033, %v6721
        %v7070 = vsel %vm6942, %v7034, %v6723
        %v7071 = vsel %vm6942, %v7035, %v6725
        %v7072 = vsel %vm6942, %v7036, %v6727
        %v7073 = vsel %vm6942, %v7037, %v6729
        %v7074 = vsel %vm6942, %v7038, %v6731
        %v7075 = vsel %vm6942, %v7039, %v6733
        %v7076 = vsel %vm6942, %v7040, %v6735
        %v7077 = vsel %vm6942, %v7041, %v6737
        %v7078 = vsel %vm6942, %v7042, %v6739
        %v7079 = vsel %vm6942, %v7043, %v6741
        %v7080 = vsel %vm6942, %v7044, %v6743
        %v7081 = vsel %vm6942, %v7045, %v6745
        %v7082 = vsel %vm6942, %v7046, %v6747
        %v7083 = vsel %vm6942, %v7047, %v6749
        %v7084 = vsel %vm6942, %v7048, %v6751
        %v7085 = vsel %vm6942, %v7049, %v6753
        %v7086 = vsel %vm6942, %v7050, %v6755
        %v7087 = vsel %vm6942, %v7051, %v6757
        %v7088 = vsel %vm6979, %v7052, %v6798
        %v7089 = vsel %vm6979, %v7053, %v6800
        %v7090 = vsel %vm6979, %v7054, %v6802
        %v7091 = vsel %vm6979, %v7055, %v6804
        %v7092 = vsel %vm6979, %v7056, %v6806
        %v7093 = vsel %vm6979, %v7057, %v6808
        %v7094 = vsel %vm6979, %v7058, %v6810
        %v7095 = vsel %vm6979, %v7059, %v6812
        %v7096 = vsel %vm6979, %v7060, %v6814
        %v7097 = vsel %vm6979, %v7061, %v6816
        %v7098 = vsel %vm6979, %v7062, %v6818
        %v7099 = vsel %vm6979, %v7063, %v6820
        %v7100 = vsel %vm6979, %v7064, %v6822
        %v7101 = vsel %vm6979, %v7065, %v6824
        %v7102 = vsel %vm6979, %v7066, %v6826
        %v7103 = vsel %vm6979, %v7067, %v6828
        %v7104 = vsel %vm6979, %v7068, %v6830
        %v7105 = vsel %vm6979, %v7069, %v6832
        %v7106 = vsel %vm6979, %v7070, %v6834
        %v7107 = vsel %vm6979, %v7071, %v6836
        %v7108 = vsel %vm6979, %v7072, %v6838
        %v7109 = vsel %vm6979, %v7073, %v6840
        %v7110 = vsel %vm6979, %v7074, %v6842
        %v7111 = vsel %vm6979, %v7075, %v6844
        %v7112 = vsel %vm6979, %v7076, %v6846
        %v7113 = vsel %vm6979, %v7077, %v6848
        %v7114 = vsel %vm6979, %v7078, %v6850
        %v7115 = vsel %vm6979, %v7079, %v6852
        %v7116 = vsel %vm6979, %v7080, %v6854
        %v7117 = vsel %vm6979, %v7081, %v6856
        %v7118 = vsel %vm6979, %v7082, %v6858
        %v7119 = vsel %vm6979, %v7083, %v6860
        %v7120 = vsel %vm6979, %v7084, %v6862
        %v7121 = vsel %vm6979, %v7085, %v6864
        %v7122 = vsel %vm6979, %v7086, %v6866
        %v7123 = vsel %vm6979, %v7087, %v6868
        %v7124 = vld [vmem:[%s274] sm:$0xff]
        %v7125 = vld [vmem:[%s274 + $0x8] sm:$0xff]
        %v7126 = vld [vmem:[%s274 + $0x10] sm:$0xff]
        %v7127 = vld [vmem:[%s274 + $0x18] sm:$0xff]
        %v7128 = vld [vmem:[%s274 + $0x20] sm:$0xff]
        %v7129 = vld [vmem:[%s274 + $0x28] sm:$0xff]
        %v7130 = vld [vmem:[%s274 + $0x30] sm:$0xff]
        %v7131 = vld [vmem:[%s274 + $0x38] sm:$0xff]
        %v7132 = vld [vmem:[%s274 + $0x40] sm:$0xff]
        %v7133 = vld [vmem:[%s274 + $0x48] sm:$0xff]
        %v7134 = vld [vmem:[%s274 + $0x50] sm:$0xff]
        %v7135 = vld [vmem:[%s274 + $0x58] sm:$0xff]
        %v7136 = vld [vmem:[%s274 + $0x60] sm:$0xff]
        %v7137 = vld [vmem:[%s274 + $0x68] sm:$0xff]
        %v7138 = vld [vmem:[%s274 + $0x70] sm:$0xff]
        %v7139 = vld [vmem:[%s274 + $0x78] sm:$0xff]
        %v7140 = vld [vmem:[%s274 + $0x80] sm:$0xff]
        %v7141 = vld [vmem:[%s274 + $0x88] sm:$0xff]
        %v7142 = vld [vmem:[%s274 + $0x90] sm:$0xff]
        %v7143 = vld [vmem:[%s274 + $0x98] sm:$0xff]
        %v7144 = vld [vmem:[%s274 + $0xa0] sm:$0xff]
        %v7145 = vld [vmem:[%s274 + $0xa8] sm:$0xff]
        %v7146 = vld [vmem:[%s274 + $0xb0] sm:$0xff]
        %v7147 = vld [vmem:[%s274 + $0xb8] sm:$0xff]
        %v7148 = vld [vmem:[%s274 + $0xc0] sm:$0xff]
        %v7149 = vld [vmem:[%s274 + $0xc8] sm:$0xff]
        %v7150 = vld [vmem:[%s274 + $0xd0] sm:$0xff]
        %v7151 = vld [vmem:[%s274 + $0xd8] sm:$0xff]
        %v7152 = vld [vmem:[%s274 + $0xe0] sm:$0xff]
        %v7153 = vld [vmem:[%s274 + $0xe8] sm:$0xff]
        %v7154 = vld [vmem:[%s274 + $0xf0] sm:$0xff]
        %v7155 = vld [vmem:[%s274 + $0xf8] sm:$0xff]
        %v7156 = vld [vmem:[%s274 + $0x100] sm:$0xff]
        %v7157 = vld [vmem:[%s274 + $0x108] sm:$0xff]
        %v7158 = vld [vmem:[%s274 + $0x110] sm:$0xff]
        %v7159 = vld [vmem:[%s274 + $0x118] sm:$0xff]
        %v7160 = vld [vmem:[%s277] sm:$0x1]
        %v7162 = vlaneseq
        %v7163 = vshrl.u32 %v7162, 7
        %v7164 = vsub.s32 0, %v7163
        %v7165 = vrot.slane %v7160, %v7164
        %v7167 = vsel %vm6905, %v5924, 0
        %v7169 = vsel %vm6905, %v5925, 0
        %v7171 = vsel %vm6905, %v5926, 0
        %v7173 = vsel %vm6905, %v5927, 0
        %v7175 = vsel %vm6905, %v5928, 0
        %v7177 = vsel %vm6905, %v5929, 0
        %v7179 = vsel %vm6905, %v5930, 0
        %v7181 = vsel %vm6905, %v5931, 0
        %v7183 = vsel %vm6905, %v5932, 0
        %v7185 = vsel %vm6905, %v5933, 0
        %v7187 = vsel %vm6905, %v5934, 0
        %v7189 = vsel %vm6905, %v5935, 0
        %v7191 = vsel %vm6905, %v5936, 0
        %v7193 = vsel %vm6905, %v5937, 0
        %v7195 = vsel %vm6905, %v5938, 0
        %v7197 = vsel %vm6905, %v5939, 0
        %v7199 = vsel %vm6905, %v5940, 0
        %v7201 = vsel %vm6905, %v5941, 0
        %v7203 = vsel %vm6905, %v5942, 0
        %v7205 = vsel %vm6905, %v5943, 0
        %v7207 = vsel %vm6905, %v5944, 0
        %v7209 = vsel %vm6905, %v5945, 0
        %v7211 = vsel %vm6905, %v5946, 0
        %v7213 = vsel %vm6905, %v5947, 0
        %v7215 = vsel %vm6905, %v5948, 0
        %v7217 = vsel %vm6905, %v5949, 0
        %v7219 = vsel %vm6905, %v5950, 0
        %v7221 = vsel %vm6905, %v5951, 0
        %v7223 = vsel %vm6905, %v5952, 0
        %v7225 = vsel %vm6905, %v5953, 0
        %v7227 = vsel %vm6905, %v5954, 0
        %v7229 = vsel %vm6905, %v5955, 0
        %v7231 = vsel %vm6905, %v5956, 0
        %v7234 = vsel %vm6905, %v6071, 0
        %v7237 = vsel %vm6905, %v6072, 0
        %v7240 = vsel %vm6905, %v6073, 0
        %7242 = vmatprep.subr.mxu0 0.0
        %7243 = vmatpush1.msra.mxu0 %v7124
        %7244 = vmatprep.subr.mxu0 0.0
        %7245 = vmatpush1.msra.mxu0 %v7125
        %7246 = vmatprep.subr.mxu0 0.0
        %7247 = vmatpush1.msra.mxu0 %v7126
        %7248 = vmatprep.subr.mxu0 0.0
        %7249 = vmatpush1.msra.mxu0 %v7127
        %7250 = vmatprep.subr.mxu0 0.0
        %7251 = vmatpush1.msra.mxu0 %v7128
        %7252 = vmatprep.subr.mxu0 0.0
        %7253 = vmatpush1.msra.mxu0 %v7129
        %7254 = vmatprep.subr.mxu0 0.0
        %7255 = vmatpush1.msra.mxu0 %v7130
        %7256 = vmatprep.subr.mxu0 0.0
        %7257 = vmatpush1.msra.mxu0 %v7131
        %7258 = vmatprep.subr.mxu0 0.0
        %7259 = vmatpush1.msra.mxu0 %v7132
        %7260 = vmatprep.subr.mxu0 0.0
        %7261 = vmatpush1.msra.mxu0 %v7133
        %7262 = vmatprep.subr.mxu0 0.0
        %7263 = vmatpush1.msra.mxu0 %v7134
        %7264 = vmatprep.subr.mxu0 0.0
        %7265 = vmatpush1.msra.mxu0 %v7135
        %7266 = vmatprep.subr.mxu0 0.0
        %7267 = vmatpush1.msra.mxu0 %v7136
        %7268 = vmatprep.subr.mxu0 0.0
        %7269 = vmatpush1.msra.mxu0 %v7137
        %7270 = vmatprep.subr.mxu0 0.0
        %7271 = vmatpush1.msra.mxu0 %v7138
        %7272 = vmatprep.subr.mxu0 0.0
        %7273 = vmatpush1.msra.mxu0 %v7139
        %7274 = vmatprep.subr.mxu0 0.0
        %7275 = vmatpush1.msra.mxu0 %v7140
        %7276 = vmatprep.subr.mxu0 0.0
        %7277 = vmatpush1.msra.mxu0 %v7141
        %7278 = vmatprep.subr.mxu0 0.0
        %7279 = vmatpush1.msra.mxu0 %v7142
        %7280 = vmatprep.subr.mxu0 0.0
        %7281 = vmatpush1.msra.mxu0 %v7143
        %7282 = vmatprep.subr.mxu0 0.0
        %7283 = vmatpush1.msra.mxu0 %v7144
        %7284 = vmatprep.subr.mxu0 0.0
        %7285 = vmatpush1.msra.mxu0 %v7145
        %7286 = vmatprep.subr.mxu0 0.0
        %7287 = vmatpush1.msra.mxu0 %v7146
        %7288 = vmatprep.subr.mxu0 0.0
        %7289 = vmatpush1.msra.mxu0 %v7147
        %7290 = vmatprep.subr.mxu0 0.0
        %7291 = vmatpush1.msra.mxu0 %v7148
        %7292 = vmatprep.subr.mxu0 0.0
        %7293 = vmatpush1.msra.mxu0 %v7149
        %7294 = vmatprep.subr.mxu0 0.0
        %7295 = vmatpush1.msra.mxu0 %v7150
        %7296 = vmatprep.subr.mxu0 0.0
        %7297 = vmatpush1.msra.mxu0 %v7151
        %7298 = vmatprep.subr.mxu0 0.0
        %7299 = vmatpush1.msra.mxu0 %v7152
        %7300 = vmatprep.subr.mxu0 0.0
        %7301 = vmatpush1.msra.mxu0 %v7153
        %7302 = vmatprep.subr.mxu0 0.0
        %7303 = vmatpush1.msra.mxu0 %v7154
        %7304 = vmatprep.subr.mxu0 0.0
        %7305 = vmatpush1.msra.mxu0 %v7155
        %7306 = vmatprep.mubr.f32.mxu0 %v7088
        %7307 = vmatmul.mubr.f32.gmra.mrb[0].mxu0 %v6980
        %v7308 = vpop.f32.mrb[0].mxu0
        %v7309 = vadd.f32 %v7165, %v7308
        %v7310 = vpop.f32.mrb[0].mxu0
        %7311 = vmatprep.mubr.f32.mxu0 %v7089
        %7312 = vmatmul.mubr.f32.gmra.mrb[0].mxu0 %v6981
        %v7313 = vpop.f32.mrb[0].mxu0
        %v7314 = vadd.f32 %v7165, %v7313
        %v7315 = vpop.f32.mrb[0].mxu0
        %7316 = vmatprep.mubr.f32.mxu0 %v7090
        %7317 = vmatmul.mubr.f32.gmra.mrb[0].mxu0 %v6982
        %v7318 = vpop.f32.mrb[0].mxu0
        %v7319 = vadd.f32 %v7165, %v7318
        %v7320 = vpop.f32.mrb[0].mxu0
        %7321 = vmatprep.mubr.f32.mxu0 %v7091
        %7322 = vmatmul.mubr.f32.gmra.mrb[0].mxu0 %v6983
        %v7323 = vpop.f32.mrb[0].mxu0
        %v7324 = vadd.f32 %v7165, %v7323
        %v7325 = vpop.f32.mrb[0].mxu0
        %7326 = vmatprep.mubr.f32.mxu0 %v7092
        %7327 = vmatmul.mubr.f32.gmra.mrb[0].mxu0 %v6984
        %v7328 = vpop.f32.mrb[0].mxu0
        %v7329 = vadd.f32 %v7165, %v7328
        %v7330 = vpop.f32.mrb[0].mxu0
        %7331 = vmatprep.mubr.f32.mxu0 %v7093
        %7332 = vmatmul.mubr.f32.gmra.mrb[0].mxu0 %v6985
        %v7333 = vpop.f32.mrb[0].mxu0
        %v7334 = vadd.f32 %v7165, %v7333
        %v7335 = vpop.f32.mrb[0].mxu0
        %7336 = vmatprep.mubr.f32.mxu0 %v7094
        %7337 = vmatmul.mubr.f32.gmra.mrb[0].mxu0 %v6986
        %v7338 = vpop.f32.mrb[0].mxu0
        %v7339 = vadd.f32 %v7165, %v7338
        %v7340 = vpop.f32.mrb[0].mxu0
        %7341 = vmatprep.mubr.f32.mxu0 %v7095
        %7342 = vmatmul.mubr.f32.gmra.mrb[0].mxu0 %v6987
        %v7343 = vpop.f32.mrb[0].mxu0
        %v7344 = vadd.f32 %v7165, %v7343
        %v7345 = vpop.f32.mrb[0].mxu0
        %7346 = vmatprep.mubr.f32.mxu0 %v7096
        %7347 = vmatmul.mubr.f32.gmra.mrb[0].mxu0 %v6988
        %v7348 = vpop.f32.mrb[0].mxu0
        %v7349 = vadd.f32 %v7165, %v7348
        %v7350 = vpop.f32.mrb[0].mxu0
        %7351 = vmatprep.mubr.f32.mxu0 %v7097
        %7352 = vmatmul.mubr.f32.gmra.mrb[0].mxu0 %v6989
        %v7353 = vpop.f32.mrb[0].mxu0
        %v7354 = vadd.f32 %v7165, %v7353
        %v7355 = vpop.f32.mrb[0].mxu0
        %7356 = vmatprep.mubr.f32.mxu0 %v7098
        %7357 = vmatmul.mubr.f32.gmra.mrb[0].mxu0 %v6990
        %v7358 = vpop.f32.mrb[0].mxu0
        %v7359 = vadd.f32 %v7165, %v7358
        %v7360 = vpop.f32.mrb[0].mxu0
        %7361 = vmatprep.mubr.f32.mxu0 %v7099
        %7362 = vmatmul.mubr.f32.gmra.mrb[0].mxu0 %v6991
        %v7363 = vpop.f32.mrb[0].mxu0
        %v7364 = vadd.f32 %v7165, %v7363
        %v7365 = vpop.f32.mrb[0].mxu0
        %7366 = vmatprep.mubr.f32.mxu0 %v7100
        %7367 = vmatmul.mubr.f32.gmra.mrb[0].mxu0 %v6992
        %v7368 = vpop.f32.mrb[0].mxu0
        %v7369 = vadd.f32 %v7165, %v7368
        %v7370 = vpop.f32.mrb[0].mxu0
        %7371 = vmatprep.mubr.f32.mxu0 %v7101
        %7372 = vmatmul.mubr.f32.gmra.mrb[0].mxu0 %v6993
        %v7373 = vpop.f32.mrb[0].mxu0
        %v7374 = vadd.f32 %v7165, %v7373
        %v7375 = vpop.f32.mrb[0].mxu0
        %7376 = vmatprep.mubr.f32.mxu0 %v7102
        %7377 = vmatmul.mubr.f32.gmra.mrb[0].mxu0 %v6994
        %v7378 = vpop.f32.mrb[0].mxu0
        %v7379 = vadd.f32 %v7165, %v7378
        %v7380 = vpop.f32.mrb[0].mxu0
        %7381 = vmatprep.mubr.f32.mxu0 %v7103
        %7382 = vmatmul.mubr.f32.gmra.mrb[0].mxu0 %v6995
        %v7383 = vpop.f32.mrb[0].mxu0
        %v7384 = vadd.f32 %v7165, %v7383
        %v7385 = vpop.f32.mrb[0].mxu0
        %7386 = vmatprep.mubr.f32.mxu0 %v7104
        %7387 = vmatmul.mubr.f32.gmra.mrb[0].mxu0 %v6996
        %v7388 = vpop.f32.mrb[0].mxu0
        %v7389 = vadd.f32 %v7165, %v7388
        %v7390 = vpop.f32.mrb[0].mxu0
        %7391 = vmatprep.mubr.f32.mxu0 %v7105
        %7392 = vmatmul.mubr.f32.gmra.mrb[0].mxu0 %v6997
        %v7393 = vpop.f32.mrb[0].mxu0
        %v7394 = vadd.f32 %v7165, %v7393
        %v7395 = vpop.f32.mrb[0].mxu0
        %7396 = vmatprep.mubr.f32.mxu0 %v7106
        %7397 = vmatmul.mubr.f32.gmra.mrb[0].mxu0 %v6998
        %v7398 = vpop.f32.mrb[0].mxu0
        %v7399 = vadd.f32 %v7165, %v7398
        %v7400 = vpop.f32.mrb[0].mxu0
        %7401 = vmatprep.mubr.f32.mxu0 %v7107
        %7402 = vmatmul.mubr.f32.gmra.mrb[0].mxu0 %v6999
        %v7403 = vpop.f32.mrb[0].mxu0
        %v7404 = vadd.f32 %v7165, %v7403
        %v7405 = vpop.f32.mrb[0].mxu0
        %7406 = vmatprep.mubr.f32.mxu0 %v7108
        %7407 = vmatmul.mubr.f32.gmra.mrb[0].mxu0 %v7000
        %v7408 = vpop.f32.mrb[0].mxu0
        %v7409 = vadd.f32 %v7165, %v7408
        %v7410 = vpop.f32.mrb[0].mxu0
        %7411 = vmatprep.mubr.f32.mxu0 %v7109
        %7412 = vmatmul.mubr.f32.gmra.mrb[0].mxu0 %v7001
        %v7413 = vpop.f32.mrb[0].mxu0
        %v7414 = vadd.f32 %v7165, %v7413
        %v7415 = vpop.f32.mrb[0].mxu0
        %7416 = vmatprep.mubr.f32.mxu0 %v7110
        %7417 = vmatmul.mubr.f32.gmra.mrb[0].mxu0 %v7002
        %v7418 = vpop.f32.mrb[0].mxu0
        %v7419 = vadd.f32 %v7165, %v7418
        %v7420 = vpop.f32.mrb[0].mxu0
        %7421 = vmatprep.mubr.f32.mxu0 %v7111
        %7422 = vmatmul.mubr.f32.gmra.mrb[0].mxu0 %v7003
        %v7423 = vpop.f32.mrb[0].mxu0
        %v7424 = vadd.f32 %v7165, %v7423
        %v7425 = vpop.f32.mrb[0].mxu0
        %7426 = vmatprep.mubr.f32.mxu0 %v7112
        %7427 = vmatmul.mubr.f32.gmra.mrb[0].mxu0 %v7004
        %v7428 = vpop.f32.mrb[0].mxu0
        %v7429 = vadd.f32 %v7165, %v7428
        %v7430 = vpop.f32.mrb[0].mxu0
        %7431 = vmatprep.mubr.f32.mxu0 %v7113
        %7432 = vmatmul.mubr.f32.gmra.mrb[0].mxu0 %v7005
        %v7433 = vpop.f32.mrb[0].mxu0
        %v7434 = vadd.f32 %v7165, %v7433
        %v7435 = vpop.f32.mrb[0].mxu0
        %7436 = vmatprep.mubr.f32.mxu0 %v7114
        %7437 = vmatmul.mubr.f32.gmra.mrb[0].mxu0 %v7006
        %v7438 = vpop.f32.mrb[0].mxu0
        %v7439 = vadd.f32 %v7165, %v7438
        %v7440 = vpop.f32.mrb[0].mxu0
        %7441 = vmatprep.mubr.f32.mxu0 %v7115
        %7442 = vmatmul.mubr.f32.gmra.mrb[0].mxu0 %v7007
        %v7443 = vpop.f32.mrb[0].mxu0
        %v7444 = vadd.f32 %v7165, %v7443
        %v7445 = vpop.f32.mrb[0].mxu0
        %7446 = vmatprep.mubr.f32.mxu0 %v7116
        %7447 = vmatmul.mubr.f32.gmra.mrb[0].mxu0 %v7008
        %v7448 = vpop.f32.mrb[0].mxu0
        %v7449 = vadd.f32 %v7165, %v7448
        %v7450 = vpop.f32.mrb[0].mxu0
        %7451 = vmatprep.mubr.f32.mxu0 %v7117
        %7452 = vmatmul.mubr.f32.gmra.mrb[0].mxu0 %v7009
        %v7453 = vpop.f32.mrb[0].mxu0
        %v7454 = vadd.f32 %v7165, %v7453
        %v7455 = vpop.f32.mrb[0].mxu0
        %7456 = vmatprep.mubr.f32.mxu0 %v7118
        %7457 = vmatmul.mubr.f32.gmra.mrb[0].mxu0 %v7010
        %v7458 = vpop.f32.mrb[0].mxu0
        %v7459 = vadd.f32 %v7165, %v7458
        %v7460 = vpop.f32.mrb[0].mxu0
        %7461 = vmatprep.mubr.f32.mxu0 %v7119
        %7462 = vmatmul.mubr.f32.gmra.mrb[0].mxu0 %v7011
        %v7463 = vpop.f32.mrb[0].mxu0
        %v7464 = vadd.f32 %v7165, %v7463
        %v7465 = vpop.f32.mrb[0].mxu0
        %7466 = vmatprep.mubr.f32.mxu0 %v7120
        %7467 = vmatmul.mubr.f32.gmra.mrb[0].mxu0 %v7012
        %v7468 = vpop.f32.mrb[0].mxu0
        %v7469 = vadd.f32 %v7165, %v7468
        %v7470 = vpop.f32.mrb[0].mxu0
        %7471 = vmatprep.mubr.f32.mxu0 %v7121
        %7472 = vmatmul.mubr.f32.gmra.mrb[0].mxu0 %v7013
        %v7473 = vpop.f32.mrb[0].mxu0
        %v7474 = vadd.f32 %v7165, %v7473
        %v7475 = vpop.f32.mrb[0].mxu0
        %7476 = vmatprep.mubr.f32.mxu0 %v7122
        %7477 = vmatmul.mubr.f32.gmra.mrb[0].mxu0 %v7014
        %v7478 = vpop.f32.mrb[0].mxu0
        %v7479 = vadd.f32 %v7165, %v7478
        %v7480 = vpop.f32.mrb[0].mxu0
        %7481 = vmatprep.mubr.f32.mxu0 %v7123
        %7482 = vmatmul.mubr.f32.gmra.mrb[0].mxu0 %v7015
        %v7483 = vpop.f32.mrb[0].mxu0
        %v7484 = vadd.f32 %v7165, %v7483
        %v7485 = vpop.f32.mrb[0].mxu0
        %7486 = vdwg.mxu0
        %7487 = vmatprep.subr.mxu0 0.0
        %7488 = vmatpush1.msra.mxu0 %v7156
        %7489 = vmatprep.subr.mxu0 0.0
        %7490 = vmatpush1.msra.mxu0 %v7157
        %7491 = vmatprep.subr.mxu0 0.0
        %7492 = vmatpush1.msra.mxu0 %v7158
        %7493 = vmatprep.subr.mxu0 0.0
        %7494 = vmatpush1.msra.mxu0 %v7159
        %7495 = vmatprep.subr.mxu0 0.0
        %7496 = vmatpush1.msra.mxu0 0.0
        %7497 = vmatprep.subr.mxu0 0.0
        %7498 = vmatpush1.msra.mxu0 0.0
        %7499 = vmatprep.subr.mxu0 0.0
        %7500 = vmatpush1.msra.mxu0 0.0
        %7501 = vmatprep.subr.mxu0 0.0
        %7502 = vmatpush1.msra.mxu0 0.0
        %7503 = vmatprep.subr.mxu0 0.0
        %7504 = vmatpush1.msra.mxu0 0.0
        %7505 = vmatprep.subr.mxu0 0.0
        %7506 = vmatpush1.msra.mxu0 0.0
        %7507 = vmatprep.subr.mxu0 0.0
        %7508 = vmatpush1.msra.mxu0 0.0
        %7509 = vmatprep.subr.mxu0 0.0
        %7510 = vmatpush1.msra.mxu0 0.0
        %7511 = vmatprep.subr.mxu0 0.0
        %7512 = vmatpush1.msra.mxu0 0.0
        %7513 = vmatprep.subr.mxu0 0.0
        %7514 = vmatpush1.msra.mxu0 0.0
        %7515 = vmatprep.subr.mxu0 0.0
        %7516 = vmatpush1.msra.mxu0 0.0
        %7517 = vmatprep.subr.mxu0 0.0
        %7518 = vmatpush1.msra.mxu0 0.0
        %7519 = vmatprep.subr.mxu0 0.0
        %7520 = vmatpush1.msra.mxu0 0.0
        %7521 = vmatprep.subr.mxu0 0.0
        %7522 = vmatpush1.msra.mxu0 0.0
        %7523 = vmatprep.subr.mxu0 0.0
        %7524 = vmatpush1.msra.mxu0 0.0
        %7525 = vmatprep.subr.mxu0 0.0
        %7526 = vmatpush1.msra.mxu0 0.0
        %7527 = vmatprep.subr.mxu0 0.0
        %7528 = vmatpush1.msra.mxu0 0.0
        %7529 = vmatprep.subr.mxu0 0.0
        %7530 = vmatpush1.msra.mxu0 0.0
        %7531 = vmatprep.subr.mxu0 0.0
        %7532 = vmatpush1.msra.mxu0 0.0
        %7533 = vmatprep.subr.mxu0 0.0
        %7534 = vmatpush1.msra.mxu0 0.0
        %7535 = vmatprep.subr.mxu0 0.0
        %7536 = vmatpush1.msra.mxu0 0.0
        %7537 = vmatprep.subr.mxu0 0.0
        %7538 = vmatpush1.msra.mxu0 0.0
        %7539 = vmatprep.subr.mxu0 0.0
        %7540 = vmatpush1.msra.mxu0 0.0
        %7541 = vmatprep.subr.mxu0 0.0
        %7542 = vmatpush1.msra.mxu0 0.0
        %7543 = vmatprep.subr.mxu0 0.0
        %7544 = vmatpush1.msra.mxu0 0.0
        %7545 = vmatprep.subr.mxu0 0.0
        %7546 = vmatpush1.msra.mxu0 0.0
        %7547 = vmatprep.subr.mxu0 0.0
        %7548 = vmatpush1.msra.mxu0 0.0
        %7549 = vmatprep.subr.mxu0 0.0
        %7550 = vmatpush1.msra.mxu0 0.0
        %7551 = vmatprep.mubr.f32.mxu0 0.0
        %7552 = vmatmul.mubr.f32.gmra.mrb[0].mxu0 %v7167
        %v7553 = vpop.f32.mrb[0].mxu0
        %v7554 = vadd.f32 %v7309, %v7553
        %v7555 = vpop.f32.mrb[0].mxu0
        %7556 = vmatprep.mubr.f32.mxu0 0.0
        %7557 = vmatmul.mubr.f32.gmra.mrb[0].mxu0 %v7169
        %v7558 = vpop.f32.mrb[0].mxu0
        %v7559 = vadd.f32 %v7314, %v7558
        %v7560 = vpop.f32.mrb[0].mxu0
        %7561 = vmatprep.mubr.f32.mxu0 0.0
        %7562 = vmatmul.mubr.f32.gmra.mrb[0].mxu0 %v7171
        %v7563 = vpop.f32.mrb[0].mxu0
        %v7564 = vadd.f32 %v7319, %v7563
        %v7565 = vpop.f32.mrb[0].mxu0
        %7566 = vmatprep.mubr.f32.mxu0 0.0
        %7567 = vmatmul.mubr.f32.gmra.mrb[0].mxu0 %v7173
        %v7568 = vpop.f32.mrb[0].mxu0
        %v7569 = vadd.f32 %v7324, %v7568
        %v7570 = vpop.f32.mrb[0].mxu0
        %7571 = vmatprep.mubr.f32.mxu0 0.0
        %7572 = vmatmul.mubr.f32.gmra.mrb[0].mxu0 %v7175
        %v7573 = vpop.f32.mrb[0].mxu0
        %v7574 = vadd.f32 %v7329, %v7573
        %v7575 = vpop.f32.mrb[0].mxu0
        %7576 = vmatprep.mubr.f32.mxu0 0.0
        %7577 = vmatmul.mubr.f32.gmra.mrb[0].mxu0 %v7177
        %v7578 = vpop.f32.mrb[0].mxu0
        %v7579 = vadd.f32 %v7334, %v7578
        %v7580 = vpop.f32.mrb[0].mxu0
        %7581 = vmatprep.mubr.f32.mxu0 0.0
        %7582 = vmatmul.mubr.f32.gmra.mrb[0].mxu0 %v7179
        %v7583 = vpop.f32.mrb[0].mxu0
        %v7584 = vadd.f32 %v7339, %v7583
        %v7585 = vpop.f32.mrb[0].mxu0
        %7586 = vmatprep.mubr.f32.mxu0 0.0
        %7587 = vmatmul.mubr.f32.gmra.mrb[0].mxu0 %v7181
        %v7588 = vpop.f32.mrb[0].mxu0
        %v7589 = vadd.f32 %v7344, %v7588
        %v7590 = vpop.f32.mrb[0].mxu0
        %7591 = vmatprep.mubr.f32.mxu0 0.0
        %7592 = vmatmul.mubr.f32.gmra.mrb[0].mxu0 %v7183
        %v7593 = vpop.f32.mrb[0].mxu0
        %v7594 = vadd.f32 %v7349, %v7593
        %v7595 = vpop.f32.mrb[0].mxu0
        %7596 = vmatprep.mubr.f32.mxu0 0.0
        %7597 = vmatmul.mubr.f32.gmra.mrb[0].mxu0 %v7185
        %v7598 = vpop.f32.mrb[0].mxu0
        %v7599 = vadd.f32 %v7354, %v7598
        %v7600 = vpop.f32.mrb[0].mxu0
        %7601 = vmatprep.mubr.f32.mxu0 0.0
        %7602 = vmatmul.mubr.f32.gmra.mrb[0].mxu0 %v7187
        %v7603 = vpop.f32.mrb[0].mxu0
        %v7604 = vadd.f32 %v7359, %v7603
        %v7605 = vpop.f32.mrb[0].mxu0
        %7606 = vmatprep.mubr.f32.mxu0 0.0
        %7607 = vmatmul.mubr.f32.gmra.mrb[0].mxu0 %v7189
        %v7608 = vpop.f32.mrb[0].mxu0
        %v7609 = vadd.f32 %v7364, %v7608
        %v7610 = vpop.f32.mrb[0].mxu0
        %7611 = vmatprep.mubr.f32.mxu0 0.0
        %7612 = vmatmul.mubr.f32.gmra.mrb[0].mxu0 %v7191
        %v7613 = vpop.f32.mrb[0].mxu0
        %v7614 = vadd.f32 %v7369, %v7613
        %v7615 = vpop.f32.mrb[0].mxu0
        %7616 = vmatprep.mubr.f32.mxu0 0.0
        %7617 = vmatmul.mubr.f32.gmra.mrb[0].mxu0 %v7193
        %v7618 = vpop.f32.mrb[0].mxu0
        %v7619 = vadd.f32 %v7374, %v7618
        %v7620 = vpop.f32.mrb[0].mxu0
        %7621 = vmatprep.mubr.f32.mxu0 0.0
        %7622 = vmatmul.mubr.f32.gmra.mrb[0].mxu0 %v7195
        %v7623 = vpop.f32.mrb[0].mxu0
        %v7624 = vadd.f32 %v7379, %v7623
        %v7625 = vpop.f32.mrb[0].mxu0
        %7626 = vmatprep.mubr.f32.mxu0 0.0
        %7627 = vmatmul.mubr.f32.gmra.mrb[0].mxu0 %v7197
        %v7628 = vpop.f32.mrb[0].mxu0
        %v7629 = vadd.f32 %v7384, %v7628
        %v7630 = vpop.f32.mrb[0].mxu0
        %7631 = vmatprep.mubr.f32.mxu0 0.0
        %7632 = vmatmul.mubr.f32.gmra.mrb[0].mxu0 %v7199
        %v7633 = vpop.f32.mrb[0].mxu0
        %v7634 = vadd.f32 %v7389, %v7633
        %v7635 = vpop.f32.mrb[0].mxu0
        %7636 = vmatprep.mubr.f32.mxu0 0.0
        %7637 = vmatmul.mubr.f32.gmra.mrb[0].mxu0 %v7201
        %v7638 = vpop.f32.mrb[0].mxu0
        %v7639 = vadd.f32 %v7394, %v7638
        %v7640 = vpop.f32.mrb[0].mxu0
        %7641 = vmatprep.mubr.f32.mxu0 0.0
        %7642 = vmatmul.mubr.f32.gmra.mrb[0].mxu0 %v7203
        %v7643 = vpop.f32.mrb[0].mxu0
        %v7644 = vadd.f32 %v7399, %v7643
        %v7645 = vpop.f32.mrb[0].mxu0
        %7646 = vmatprep.mubr.f32.mxu0 0.0
        %7647 = vmatmul.mubr.f32.gmra.mrb[0].mxu0 %v7205
        %v7648 = vpop.f32.mrb[0].mxu0
        %v7649 = vadd.f32 %v7404, %v7648
        %v7650 = vpop.f32.mrb[0].mxu0
        %7651 = vmatprep.mubr.f32.mxu0 0.0
        %7652 = vmatmul.mubr.f32.gmra.mrb[0].mxu0 %v7207
        %v7653 = vpop.f32.mrb[0].mxu0
        %v7654 = vadd.f32 %v7409, %v7653
        %v7655 = vpop.f32.mrb[0].mxu0
        %7656 = vmatprep.mubr.f32.mxu0 0.0
        %7657 = vmatmul.mubr.f32.gmra.mrb[0].mxu0 %v7209
        %v7658 = vpop.f32.mrb[0].mxu0
        %v7659 = vadd.f32 %v7414, %v7658
        %v7660 = vpop.f32.mrb[0].mxu0
        %7661 = vmatprep.mubr.f32.mxu0 0.0
        %7662 = vmatmul.mubr.f32.gmra.mrb[0].mxu0 %v7211
        %v7663 = vpop.f32.mrb[0].mxu0
        %v7664 = vadd.f32 %v7419, %v7663
        %v7665 = vpop.f32.mrb[0].mxu0
        %7666 = vmatprep.mubr.f32.mxu0 0.0
        %7667 = vmatmul.mubr.f32.gmra.mrb[0].mxu0 %v7213
        %v7668 = vpop.f32.mrb[0].mxu0
        %v7669 = vadd.f32 %v7424, %v7668
        %v7670 = vpop.f32.mrb[0].mxu0
        %7671 = vmatprep.mubr.f32.mxu0 0.0
        %7672 = vmatmul.mubr.f32.gmra.mrb[0].mxu0 %v7215
        %v7673 = vpop.f32.mrb[0].mxu0
        %v7674 = vadd.f32 %v7429, %v7673
        %v7675 = vpop.f32.mrb[0].mxu0
        %7676 = vmatprep.mubr.f32.mxu0 0.0
        %7677 = vmatmul.mubr.f32.gmra.mrb[0].mxu0 %v7217
        %v7678 = vpop.f32.mrb[0].mxu0
        %v7679 = vadd.f32 %v7434, %v7678
        %v7680 = vpop.f32.mrb[0].mxu0
        %7681 = vmatprep.mubr.f32.mxu0 0.0
        %7682 = vmatmul.mubr.f32.gmra.mrb[0].mxu0 %v7219
        %v7683 = vpop.f32.mrb[0].mxu0
        %v7684 = vadd.f32 %v7439, %v7683
        %v7685 = vpop.f32.mrb[0].mxu0
        %7686 = vmatprep.mubr.f32.mxu0 0.0
        %7687 = vmatmul.mubr.f32.gmra.mrb[0].mxu0 %v7221
        %v7688 = vpop.f32.mrb[0].mxu0
        %v7689 = vadd.f32 %v7444, %v7688
        %v7690 = vpop.f32.mrb[0].mxu0
        %7691 = vmatprep.mubr.f32.mxu0 0.0
        %7692 = vmatmul.mubr.f32.gmra.mrb[0].mxu0 %v7223
        %v7693 = vpop.f32.mrb[0].mxu0
        %v7694 = vadd.f32 %v7449, %v7693
        %v7695 = vpop.f32.mrb[0].mxu0
        %7696 = vmatprep.mubr.f32.mxu0 0.0
        %7697 = vmatmul.mubr.f32.gmra.mrb[0].mxu0 %v7225
        %v7698 = vpop.f32.mrb[0].mxu0
        %v7699 = vadd.f32 %v7454, %v7698
        %v7700 = vpop.f32.mrb[0].mxu0
        %7701 = vmatprep.mubr.f32.mxu0 0.0
        %7702 = vmatmul.mubr.f32.gmra.mrb[0].mxu0 %v7227
        %v7703 = vpop.f32.mrb[0].mxu0
        %v7704 = vadd.f32 %v7459, %v7703
        %v7705 = vpop.f32.mrb[0].mxu0
        %7706 = vmatprep.mubr.f32.mxu0 0.0
        %7707 = vmatmul.mubr.f32.gmra.mrb[0].mxu0 %v7229
        %v7708 = vpop.f32.mrb[0].mxu0
        %v7709 = vadd.f32 %v7464, %v7708
        %v7710 = vpop.f32.mrb[0].mxu0
        %7711 = vmatprep.mubr.f32.mxu0 0.0
        %7712 = vmatmul.mubr.f32.gmra.mrb[0].mxu0 %v7231
        %v7713 = vpop.f32.mrb[0].mxu0
        %v7714 = vadd.f32 %v7469, %v7713
        %v7715 = vpop.f32.mrb[0].mxu0
        %7716 = vmatprep.mubr.f32.mxu0 0.0
        %7717 = vmatmul.mubr.f32.gmra.mrb[0].mxu0 %v7234
        %v7718 = vpop.f32.mrb[0].mxu0
        %v7719 = vadd.f32 %v7474, %v7718
        %v7720 = vpop.f32.mrb[0].mxu0
        %7721 = vmatprep.mubr.f32.mxu0 0.0
        %7722 = vmatmul.mubr.f32.gmra.mrb[0].mxu0 %v7237
        %v7723 = vpop.f32.mrb[0].mxu0
        %v7724 = vadd.f32 %v7479, %v7723
        %v7725 = vpop.f32.mrb[0].mxu0
        %7726 = vmatprep.mubr.f32.mxu0 0.0
        %7727 = vmatmul.mubr.f32.gmra.mrb[0].mxu0 %v7240
        %v7728 = vpop.f32.mrb[0].mxu0
        %v7729 = vadd.f32 %v7484, %v7728
        %v7730 = vpop.f32.mrb[0].mxu0
        %7731 = vdwg.mxu0
        %7732 = vst.msk [vmem:[%s7] sm:$0xff] %vm6905, %v7554
        %7733 = vst.msk [vmem:[%s7 + $0x8] sm:$0xff] %vm6905, %v7559
        %7734 = vst.msk [vmem:[%s7 + $0x10] sm:$0xff] %vm6905, %v7564
        %7735 = vst.msk [vmem:[%s7 + $0x18] sm:$0xff] %vm6905, %v7569
        %7736 = vst.msk [vmem:[%s7 + $0x20] sm:$0xff] %vm6905, %v7574
        %7737 = vst.msk [vmem:[%s7 + $0x28] sm:$0xff] %vm6905, %v7579
        %7738 = vst.msk [vmem:[%s7 + $0x30] sm:$0xff] %vm6905, %v7584
        %7739 = vst.msk [vmem:[%s7 + $0x38] sm:$0xff] %vm6905, %v7589
        %7740 = vst.msk [vmem:[%s7 + $0x40] sm:$0xff] %vm6905, %v7594
        %7741 = vst.msk [vmem:[%s7 + $0x48] sm:$0xff] %vm6905, %v7599
        %7742 = vst.msk [vmem:[%s7 + $0x50] sm:$0xff] %vm6905, %v7604
        %7743 = vst.msk [vmem:[%s7 + $0x58] sm:$0xff] %vm6905, %v7609
        %7744 = vst.msk [vmem:[%s7 + $0x60] sm:$0xff] %vm6905, %v7614
        %7745 = vst.msk [vmem:[%s7 + $0x68] sm:$0xff] %vm6905, %v7619
        %7746 = vst.msk [vmem:[%s7 + $0x70] sm:$0xff] %vm6905, %v7624
        %7747 = vst.msk [vmem:[%s7 + $0x78] sm:$0xff] %vm6905, %v7629
        %7748 = vst.msk [vmem:[%s7 + $0x80] sm:$0xff] %vm6905, %v7634
        %7749 = vst.msk [vmem:[%s7 + $0x88] sm:$0xff] %vm6905, %v7639
        %7750 = vst.msk [vmem:[%s7 + $0x90] sm:$0xff] %vm6905, %v7644
        %7751 = vst.msk [vmem:[%s7 + $0x98] sm:$0xff] %vm6905, %v7649
        %7752 = vst.msk [vmem:[%s7 + $0xa0] sm:$0xff] %vm6905, %v7654
        %7753 = vst.msk [vmem:[%s7 + $0xa8] sm:$0xff] %vm6905, %v7659
        %7754 = vst.msk [vmem:[%s7 + $0xb0] sm:$0xff] %vm6905, %v7664
        %7755 = vst.msk [vmem:[%s7 + $0xb8] sm:$0xff] %vm6905, %v7669
        %7756 = vst.msk [vmem:[%s7 + $0xc0] sm:$0xff] %vm6905, %v7674
        %7757 = vst.msk [vmem:[%s7 + $0xc8] sm:$0xff] %vm6905, %v7679
        %7758 = vst.msk [vmem:[%s7 + $0xd0] sm:$0xff] %vm6905, %v7684
        %7759 = vst.msk [vmem:[%s7 + $0xd8] sm:$0xff] %vm6905, %v7689
        %7760 = vst.msk [vmem:[%s7 + $0xe0] sm:$0xff] %vm6905, %v7694
        %7761 = vst.msk [vmem:[%s7 + $0xe8] sm:$0xff] %vm6905, %v7699
        %7762 = vst.msk [vmem:[%s7 + $0xf0] sm:$0xff] %vm6905, %v7704
        %7763 = vst.msk [vmem:[%s7 + $0xf8] sm:$0xff] %vm6905, %v7709
        %7764 = vst.msk [vmem:[%s7 + $0x100] sm:$0xff] %vm6905, %v7714
        %7765 = vst.msk [vmem:[%s7 + $0x108] sm:$0xff] %vm6905, %v7719
        %7766 = vst.msk [vmem:[%s7 + $0x110] sm:$0xff] %vm6905, %v7724
        %7767 = vst.msk [vmem:[%s7 + $0x118] sm:$0xff] %vm6905, %v7729
      $region64: #{searchable_model_forward.1} parent=47 // pred_fallthru
        _
      // Predicated region
      $region65: #{searchable_model_forward.1} parent=47 // pred_check
        %p7768 = pneg %p188
      $region66: #{searchable_model_forward.1} parent=47 // pred_check_branch
        %7770 = sbr.rel (%p7768) target = $region68
      $region67: #{searchable_model_forward.1} parent=47 // pred_region
        _
      $region68: #{searchable_model_forward.1} parent=47 // pred_fallthru
        _
      // Predicated region
      $region69: #{searchable_model_forward.1} parent=47 // pred_check
        %p7771 = pneg %p188
      $region70: #{searchable_model_forward.1} parent=47 // pred_check_branch
        %7773 = sbr.rel (%p7771) target = $region72
      $region71: #{searchable_model_forward.1} parent=47 // pred_region
        _
      $region72: #{searchable_model_forward.1} parent=47 // pred_fallthru
        _
    $region48: #{searchable_model_forward.1} parent=5 // pred_fallthru
      _
    %p7774 = scmp.le.s32.totalorder 2, %s13
    // Predicated region
    $region73: #{searchable_model_forward.1} parent=5 // pred_check
      %p7775 = pneg %p7774
    $region74: #{searchable_model_forward.1} parent=5 // pred_check_branch
      %7777 = sbr.rel (%p7775) target = $region76
    $region75: #{searchable_model_forward.1} parent=5 // pred_region
      %s7778 = ssub.s32 %s13, 2
    $region76: #{searchable_model_forward.1} parent=5 // pred_fallthru
      _
  $region6: #{searchable_model_forward.1} parent=0 // loop_footer
    %s17 = sadd.s32 1, %s13
  $region7: #{searchable_model_forward.1} parent=0 // loop_footer_branch
    %12 = sbr.rel target = $region3
  $region8: #{searchable_model_forward.1} parent=0 // loop_exit
    _

</llo_original>
